<compile_context>
chip_gen: v7x
topology: tpu7x:2x2x1
jax: 0.10.0
libtpu: 0.0.40
codegen_flags: <defaults>
</compile_context>

<pallas_src>
import jax
import jax.numpy as jnp
from jax import lax
from jax.experimental import pallas as pl
from jax.experimental.pallas import tpu as pltpu

EPS = 1e-5
_TAPS = tuple((dy, dx) for dy in range(3) for dx in range(3))


def double_conv_se_kernel(x_ref, w1_ref, c1_ref, w2_ref, c2_ref,
                          wse1_ref, wse2_ref, out_ref,
                          xpad_ref, h1p_ref):
    BB, H, W, Cin = x_ref.shape
    Cout = c1_ref.shape[-1]
    M = BB * H * W
    cdt = jnp.bfloat16

    # ---- in-kernel zero-pad of the input (1-px halo); border-only zeroing ----
    xpad_ref[:, 0:1, :, :] = jnp.zeros((BB, 1, W + 2, Cin), cdt)
    xpad_ref[:, H + 1:H + 2, :, :] = jnp.zeros((BB, 1, W + 2, Cin), cdt)
    xpad_ref[:, :, 0:1, :] = jnp.zeros((BB, H + 2, 1, Cin), cdt)
    xpad_ref[:, :, W + 1:W + 2, :] = jnp.zeros((BB, H + 2, 1, Cin), cdt)
    xpad_ref[:, 1:H + 1, 1:W + 1, :] = x_ref[...].astype(cdt)

    # ---- conv1 (+ folded BN scale) + bias + ReLU: 9 accumulating tap dots ----
    acc1 = jnp.zeros((M, Cout), jnp.float32)
    for t, (dy, dx) in enumerate(_TAPS):
        sl = xpad_ref[:, dy:dy + H, dx:dx + W, :].reshape(M, Cin)   # bf16
        acc1 = acc1 + jnp.dot(sl, w1_ref[t],
                              preferred_element_type=jnp.float32)
    h1 = jnp.maximum(acc1 + c1_ref[...], 0.0)                       # (M, Cout) f32

    # ---- re-pad intermediate in bf16; zero only the 1-px border ----
    h1p_ref[:, 0:1, :, :] = jnp.zeros((BB, 1, W + 2, Cout), cdt)
    h1p_ref[:, H + 1:H + 2, :, :] = jnp.zeros((BB, 1, W + 2, Cout), cdt)
    h1p_ref[:, :, 0:1, :] = jnp.zeros((BB, H + 2, 1, Cout), cdt)
    h1p_ref[:, :, W + 1:W + 2, :] = jnp.zeros((BB, H + 2, 1, Cout), cdt)
    h1p_ref[:, 1:H + 1, 1:W + 1, :] = h1.reshape(BB, H, W, Cout).astype(cdt)

    # ---- conv2 (+ folded BN scale) + bias + ReLU ----
    acc2 = jnp.zeros((M, Cout), jnp.float32)
    for t, (dy, dx) in enumerate(_TAPS):
        sl = h1p_ref[:, dy:dy + H, dx:dx + W, :].reshape(M, Cout)   # bf16
        acc2 = acc2 + jnp.dot(sl, w2_ref[t],
                              preferred_element_type=jnp.float32)
    h2 = jnp.maximum(acc2 + c2_ref[...], 0.0)                       # (M, Cout) f32

    # ---- SE: per-image GAP -> FC -> ReLU -> FC -> sigmoid -> channel scale ----
    h2b = h2.reshape(BB, H * W, Cout)
    y = jnp.mean(h2b, axis=1)                                       # (BB, Cout)
    z = jnp.maximum(jnp.dot(y, wse1_ref[...],
                            preferred_element_type=jnp.float32), 0.0)   # (BB, Cr)
    s = jax.nn.sigmoid(jnp.dot(z, wse2_ref[...],
                               preferred_element_type=jnp.float32))     # (BB, Cout)

    # ---- channel-major lane-dense store: (BB*Cout, H*W); XLU transpose ----
    for b in range(BB):
        img = h2b[b] * s[b:b + 1, :]                                # (H*W, Cout)
        out_ref[b * Cout:(b + 1) * Cout, :] = img.T.astype(out_ref.dtype)


def double_conv_se(x_nchw, w1_pt, b1_pt, bn1, w2_pt, b2_pt, bn2,
                   wse1_pt, wse2_pt, *, batch_block=None):
    B, Cin, H, W = x_nchw.shape
    Cout = w1_pt.shape[0]
    Cr = wse1_pt.shape[0]
    if batch_block is None:
        # >= 2 grid steps so the "parallel" axis can shard over both v7x TCs.
        BB = B // 2 if (B % 2 == 0 and B >= 2) else B
    else:
        BB = batch_block
    assert B % BB == 0

    def fold(bn, conv_bias):
        gamma, beta, mean, var = bn
        scale = gamma / jnp.sqrt(var + EPS)                 # (Cout,)
        bias = beta + scale * (conv_bias - mean)
        return scale, bias

    s1, c1 = fold(bn1, b1_pt)
    s2, c2 = fold(bn2, b2_pt)

    # OIHW -> (tap, I, O); fold BN scale into the O axis; pre-cast to bf16.
    w1t = (jnp.transpose(w1_pt, (2, 3, 1, 0)) * s1).reshape(9, Cin, Cout)
    w2t = (jnp.transpose(w2_pt, (2, 3, 1, 0)) * s2).reshape(9, Cout, Cout)
    w1t = w1t.astype(jnp.bfloat16)
    w2t = w2t.astype(jnp.bfloat16)
    c1 = c1.reshape(1, Cout).astype(jnp.float32)
    c2 = c2.reshape(1, Cout).astype(jnp.float32)

    # PyTorch Linear weights (out, in) -> (in, out) for y @ W (tiny; keep f32).
    wse1 = wse1_pt.T.astype(jnp.float32)                    # (Cout, Cr)
    wse2 = wse2_pt.T.astype(jnp.float32)                    # (Cr, Cout)

    x_nhwc = jnp.transpose(x_nchw, (0, 2, 3, 1))            # pad happens in-kernel

    out2d = pl.pallas_call(
        double_conv_se_kernel,
        out_shape=jax.ShapeDtypeStruct((B * Cout, H * W), jnp.float32),
        grid_spec=pltpu.PrefetchScalarGridSpec(
            num_scalar_prefetch=0,
            grid=(B // BB,),
            in_specs=[
                pl.BlockSpec((BB, H, W, Cin), lambda i: (i, 0, 0, 0)),
                pl.BlockSpec((9, Cin, Cout), lambda i: (0, 0, 0)),
                pl.BlockSpec((1, Cout), lambda i: (0, 0)),
                pl.BlockSpec((9, Cout, Cout), lambda i: (0, 0, 0)),
                pl.BlockSpec((1, Cout), lambda i: (0, 0)),
                pl.BlockSpec((Cout, Cr), lambda i: (0, 0)),
                pl.BlockSpec((Cr, Cout), lambda i: (0, 0)),
            ],
            out_specs=pl.BlockSpec((BB * Cout, H * W), lambda i: (i, 0)),
            scratch_shapes=[
                pltpu.VMEM((BB, H + 2, W + 2, Cin), jnp.bfloat16),   # padded input
                pltpu.VMEM((BB, H + 2, W + 2, Cout), jnp.bfloat16),  # padded h1
            ],
        ),
        compiler_params=pltpu.CompilerParams(
            dimension_semantics=("parallel",)),
    )(x_nhwc, w1t, c1, w2t, c2, wse1, wse2)

    # (B*Cout, H*W) is already channel-major: a pure reshape gives NCHW.
    return out2d.reshape(B, Cout, H, W)


def ref_forward(x_nchw, w1_pt, b1_pt, bn1, w2_pt, b2_pt, bn2, wse1_pt, wse2_pt):
    """Pure-JAX f32 reference (eval-mode BN), NCHW in / NCHW out."""
    w1 = jnp.transpose(w1_pt, (2, 3, 1, 0))
    w2 = jnp.transpose(w2_pt, (2, 3, 1, 0))

    def fold(bn, conv_bias):
        gamma, beta, mean, var = bn
        scale = gamma / jnp.sqrt(var + EPS)
        return scale, beta + scale * (conv_bias - mean)

    s1, c1 = fold(bn1, b1_pt)
    s2, c2 = fold(bn2, b2_pt)

    x = jnp.transpose(x_nchw, (0, 2, 3, 1))
    dn = ('NHWC', 'HWIO', 'NHWC')
    y = lax.conv_general_dilated(x, w1, (1, 1), 'SAME', dimension_numbers=dn)
    y = jnp.maximum(y * s1 + c1, 0.0)
    y = lax.conv_general_dilated(y, w2, (1, 1), 'SAME', dimension_numbers=dn)
    y = jnp.maximum(y * s2 + c2, 0.0)
    p = jnp.mean(y, axis=(1, 2))                            # (B, Cout)
    z = jnp.maximum(p @ wse1_pt.T, 0.0)
    s = jax.nn.sigmoid(z @ wse2_pt.T)
    out = y * s[:, None, None, :]
    return jnp.transpose(out, (0, 3, 1, 2))


if __name__ == "__main__":
    B, Cin, H, W = 2, 4, 16, 16
    Cout, reduction = 32, 16
    Cr = Cout // reduction

    key = jax.random.PRNGKey(0)
    ks = jax.random.split(key, 16)

    x = jax.random.normal(ks[0], (B, Cin, H, W), jnp.float32)

    # conv1 / bn1
    w1_pt = jax.random.normal(ks[1], (Cout, Cin, 3, 3), jnp.float32) * 0.1
    b1_pt = jax.random.normal(ks[2], (Cout,), jnp.float32) * 0.1
    bn1 = (jax.random.uniform(ks[3], (Cout,), jnp.float32, 0.5, 1.5),
           jax.random.normal(ks[4], (Cout,), jnp.float32) * 0.1,
           jax.random.normal(ks[5], (Cout,), jnp.float32) * 0.1,
           jax.random.uniform(ks[6], (Cout,), jnp.float32, 0.5, 1.5))
    # conv2 / bn2
    w2_pt = jax.random.normal(ks[7], (Cout, Cout, 3, 3), jnp.float32) * 0.05
    b2_pt = jax.random.normal(ks[8], (Cout,), jnp.float32) * 0.1
    bn2 = (jax.random.uniform(ks[9], (Cout,), jnp.float32, 0.5, 1.5),
           jax.random.normal(ks[10], (Cout,), jnp.float32) * 0.1,
           jax.random.normal(ks[11], (Cout,), jnp.float32) * 0.1,
           jax.random.uniform(ks[12], (Cout,), jnp.float32, 0.5, 1.5))
    # SE FC weights (PyTorch Linear layout: (out_features, in_features))
    wse1_pt = jax.random.normal(ks[13], (Cr, Cout), jnp.float32) * 0.2
    wse2_pt = jax.random.normal(ks[14], (Cout, Cr), jnp.float32) * 0.2

    out = double_conv_se(x, w1_pt, b1_pt, bn1, w2_pt, b2_pt, bn2,
                         wse1_pt, wse2_pt)
    out = jax.block_until_ready(out)

    ref = ref_forward(x, w1_pt, b1_pt, bn1, w2_pt, b2_pt, bn2,
                      wse1_pt, wse2_pt)
    assert out.shape == (B, Cout, H, W)
    # bf16 MXU operands through two chained convs: tolerance widened vs f32.
    assert jnp.allclose(out, ref, atol=3e-2, rtol=3e-2), (
        float(jnp.max(jnp.abs(out - ref))))

    print("KERNEL_OK")
</pallas_src>

<mosaic_0001>
module attributes {stable_mosaic.version = 11 : i64} {
  func.func @double_conv_se_kernel(%arg0: i32, %arg1: memref<1x16x16x4xf32, #tpu.memory_space<vmem>>, %arg2: memref<9x4x32xbf16, #tpu.memory_space<vmem>>, %arg3: memref<1x32xf32, #tpu.memory_space<vmem>>, %arg4: memref<9x32x32xbf16, #tpu.memory_space<vmem>>, %arg5: memref<1x32xf32, #tpu.memory_space<vmem>>, %arg6: memref<32x2xf32, #tpu.memory_space<vmem>>, %arg7: memref<2x32xf32, #tpu.memory_space<vmem>>, %arg8: memref<32x256xf32, #tpu.memory_space<vmem>>, %arg9: memref<1x18x18x4xbf16, #tpu.memory_space<vmem>>, %arg10: memref<1x18x18x32xbf16, #tpu.memory_space<vmem>>) attributes {dimension_semantics = [#tpu.dimension_semantics<parallel>], iteration_bounds = array<i64: 2>, scalar_prefetch = 0 : i64, scratch_operands = 2 : i64, tpu.core_type = #tpu.core_type<tc>, window_params = [{transform_indices = @transform_0, window_bounds = array<i64: 1, 16, 16, 4>}, {pipeline_mode = #tpu.pipeline_mode<synchronous>, transform_indices = @transform_1, window_bounds = array<i64: 9, 4, 32>}, {pipeline_mode = #tpu.pipeline_mode<synchronous>, transform_indices = @transform_2, window_bounds = array<i64: 1, 32>}, {pipeline_mode = #tpu.pipeline_mode<synchronous>, transform_indices = @transform_3, window_bounds = array<i64: 9, 32, 32>}, {pipeline_mode = #tpu.pipeline_mode<synchronous>, transform_indices = @transform_4, window_bounds = array<i64: 1, 32>}, {pipeline_mode = #tpu.pipeline_mode<synchronous>, transform_indices = @transform_5, window_bounds = array<i64: 32, 2>}, {pipeline_mode = #tpu.pipeline_mode<synchronous>, transform_indices = @transform_6, window_bounds = array<i64: 2, 32>}, {transform_indices = @transform_7, window_bounds = array<i64: 32, 256>}]} {
    %cst = arith.constant 0.000000e+00 : bf16
    %0 = vector.broadcast %cst : bf16 to vector<1x1x18x4xbf16>
    %c0 = arith.constant 0 : index
    %c0_0 = arith.constant 0 : index
    %c0_1 = arith.constant 0 : index
    %c0_2 = arith.constant 0 : index
    %1 = vector.load %arg9[%c0, %c0_0, %c0_1, %c0_2] : memref<1x18x18x4xbf16, #tpu.memory_space<vmem>>, vector<1x1x18x4xbf16>
    tpu.vector_store %arg9[%c0, %c0_0, %c0_1, %c0_2], %0 {strides = array<i32>} : memref<1x18x18x4xbf16, #tpu.memory_space<vmem>>, vector<1x1x18x4xbf16>,
    %cst_3 = arith.constant 0.000000e+00 : bf16
    %2 = vector.broadcast %cst_3 : bf16 to vector<1x1x18x4xbf16>
    %c0_4 = arith.constant 0 : index
    %c17 = arith.constant 17 : index
    %c0_5 = arith.constant 0 : index
    %c0_6 = arith.constant 0 : index
    %3 = vector.load %arg9[%c0_4, %c17, %c0_5, %c0_6] : memref<1x18x18x4xbf16, #tpu.memory_space<vmem>>, vector<1x1x18x4xbf16>
    tpu.vector_store %arg9[%c0_4, %c17, %c0_5, %c0_6], %2 {strides = array<i32>} : memref<1x18x18x4xbf16, #tpu.memory_space<vmem>>, vector<1x1x18x4xbf16>,
    %cst_7 = arith.constant 0.000000e+00 : bf16
    %4 = vector.broadcast %cst_7 : bf16 to vector<1x18x1x4xbf16>
    %c0_8 = arith.constant 0 : index
    %c0_9 = arith.constant 0 : index
    %c0_10 = arith.constant 0 : index
    %c0_11 = arith.constant 0 : index
    %5 = vector.load %arg9[%c0_8, %c0_9, %c0_10, %c0_11] : memref<1x18x18x4xbf16, #tpu.memory_space<vmem>>, vector<1x18x1x4xbf16>
    tpu.vector_store %arg9[%c0_8, %c0_9, %c0_10, %c0_11], %4 {strides = array<i32>} : memref<1x18x18x4xbf16, #tpu.memory_space<vmem>>, vector<1x18x1x4xbf16>,
    %cst_12 = arith.constant 0.000000e+00 : bf16
    %6 = vector.broadcast %cst_12 : bf16 to vector<1x18x1x4xbf16>
    %c0_13 = arith.constant 0 : index
    %c0_14 = arith.constant 0 : index
    %c17_15 = arith.constant 17 : index
    %c0_16 = arith.constant 0 : index
    %7 = vector.load %arg9[%c0_13, %c0_14, %c17_15, %c0_16] : memref<1x18x18x4xbf16, #tpu.memory_space<vmem>>, vector<1x18x1x4xbf16>
    tpu.vector_store %arg9[%c0_13, %c0_14, %c17_15, %c0_16], %6 {strides = array<i32>} : memref<1x18x18x4xbf16, #tpu.memory_space<vmem>>, vector<1x18x1x4xbf16>,
    %c0_17 = arith.constant 0 : index
    %c0_18 = arith.constant 0 : index
    %c0_19 = arith.constant 0 : index
    %c0_20 = arith.constant 0 : index
    %8 = vector.load %arg1[%c0_17, %c0_18, %c0_19, %c0_20] : memref<1x16x16x4xf32, #tpu.memory_space<vmem>>, vector<1x16x16x4xf32>
    %9 = arith.truncf %8 : vector<1x16x16x4xf32> to vector<1x16x16x4xbf16>
    %c0_21 = arith.constant 0 : index
    %c1 = arith.constant 1 : index
    %c1_22 = arith.constant 1 : index
    %c0_23 = arith.constant 0 : index
    %10 = vector.load %arg9[%c0_21, %c1, %c1_22, %c0_23] : memref<1x18x18x4xbf16, #tpu.memory_space<vmem>>, vector<1x16x16x4xbf16>
    tpu.vector_store %arg9[%c0_21, %c1, %c1_22, %c0_23], %9 {strides = array<i32>} : memref<1x18x18x4xbf16, #tpu.memory_space<vmem>>, vector<1x16x16x4xbf16>,
    %cst_24 = arith.constant 0.000000e+00 : f32
    %11 = vector.broadcast %cst_24 : f32 to vector<256x32xf32>
    %c0_25 = arith.constant 0 : index
    %c0_26 = arith.constant 0 : index
    %c0_27 = arith.constant 0 : index
    %c0_28 = arith.constant 0 : index
    %12 = vector.load %arg9[%c0_25, %c0_26, %c0_27, %c0_28] : memref<1x18x18x4xbf16, #tpu.memory_space<vmem>>, vector<1x16x16x4xbf16>
    %13 = vector.shape_cast %12 : vector<1x16x16x4xbf16> to vector<256x4xbf16>
    %c0_29 = arith.constant 0 : index
    %c0_30 = arith.constant 0 : index
    %c0_31 = arith.constant 0 : index
    %14 = vector.load %arg2[%c0_29, %c0_30, %c0_31] : memref<9x4x32xbf16, #tpu.memory_space<vmem>>, vector<1x4x32xbf16>
    %15 = vector.shape_cast %14 : vector<1x4x32xbf16> to vector<4x32xbf16>
    %cst_32 = arith.constant dense<0.000000e+00> : vector<256x32xf32>
    %16 = tpu.matmul %13, %15, %cst_32 {dimension_numbers = #tpu.dot_dimension_numbers<[1], [0], [0], [1], [0, 0, 1, 1], [], []>} : vector<256x4xbf16>, vector<4x32xbf16>, vector<256x32xf32> -> vector<256x32xf32>
    %17 = arith.addf %11, %16 : vector<256x32xf32>
    %c0_33 = arith.constant 0 : index
    %c0_34 = arith.constant 0 : index
    %c1_35 = arith.constant 1 : index
    %c0_36 = arith.constant 0 : index
    %18 = vector.load %arg9[%c0_33, %c0_34, %c1_35, %c0_36] : memref<1x18x18x4xbf16, #tpu.memory_space<vmem>>, vector<1x16x16x4xbf16>
    %19 = vector.shape_cast %18 : vector<1x16x16x4xbf16> to vector<256x4xbf16>
    %c1_37 = arith.constant 1 : index
    %c0_38 = arith.constant 0 : index
    %c0_39 = arith.constant 0 : index
    %20 = vector.load %arg2[%c1_37, %c0_38, %c0_39] : memref<9x4x32xbf16, #tpu.memory_space<vmem>>, vector<1x4x32xbf16>
    %21 = vector.shape_cast %20 : vector<1x4x32xbf16> to vector<4x32xbf16>
    %cst_40 = arith.constant dense<0.000000e+00> : vector<256x32xf32>
    %22 = tpu.matmul %19, %21, %cst_40 {dimension_numbers = #tpu.dot_dimension_numbers<[1], [0], [0], [1], [0, 0, 1, 1], [], []>} : vector<256x4xbf16>, vector<4x32xbf16>, vector<256x32xf32> -> vector<256x32xf32>
    %23 = arith.addf %17, %22 : vector<256x32xf32>
    %c0_41 = arith.constant 0 : index
    %c0_42 = arith.constant 0 : index
    %c2 = arith.constant 2 : index
    %c0_43 = arith.constant 0 : index
    %24 = vector.load %arg9[%c0_41, %c0_42, %c2, %c0_43] : memref<1x18x18x4xbf16, #tpu.memory_space<vmem>>, vector<1x16x16x4xbf16>
    %25 = vector.shape_cast %24 : vector<1x16x16x4xbf16> to vector<256x4xbf16>
    %c2_44 = arith.constant 2 : index
    %c0_45 = arith.constant 0 : index
    %c0_46 = arith.constant 0 : index
    %26 = vector.load %arg2[%c2_44, %c0_45, %c0_46] : memref<9x4x32xbf16, #tpu.memory_space<vmem>>, vector<1x4x32xbf16>
    %27 = vector.shape_cast %26 : vector<1x4x32xbf16> to vector<4x32xbf16>
    %cst_47 = arith.constant dense<0.000000e+00> : vector<256x32xf32>
    %28 = tpu.matmul %25, %27, %cst_47 {dimension_numbers = #tpu.dot_dimension_numbers<[1], [0], [0], [1], [0, 0, 1, 1], [], []>} : vector<256x4xbf16>, vector<4x32xbf16>, vector<256x32xf32> -> vector<256x32xf32>
    %29 = arith.addf %23, %28 : vector<256x32xf32>
    %c0_48 = arith.constant 0 : index
    %c1_49 = arith.constant 1 : index
    %c0_50 = arith.constant 0 : index
    %c0_51 = arith.constant 0 : index
    %30 = vector.load %arg9[%c0_48, %c1_49, %c0_50, %c0_51] : memref<1x18x18x4xbf16, #tpu.memory_space<vmem>>, vector<1x16x16x4xbf16>
    %31 = vector.shape_cast %30 : vector<1x16x16x4xbf16> to vector<256x4xbf16>
    %c3 = arith.constant 3 : index
    %c0_52 = arith.constant 0 : index
    %c0_53 = arith.constant 0 : index
    %32 = vector.load %arg2[%c3, %c0_52, %c0_53] : memref<9x4x32xbf16, #tpu.memory_space<vmem>>, vector<1x4x32xbf16>
    %33 = vector.shape_cast %32 : vector<1x4x32xbf16> to vector<4x32xbf16>
    %cst_54 = arith.constant dense<0.000000e+00> : vector<256x32xf32>
    %34 = tpu.matmul %31, %33, %cst_54 {dimension_numbers = #tpu.dot_dimension_numbers<[1], [0], [0], [1], [0, 0, 1, 1], [], []>} : vector<256x4xbf16>, vector<4x32xbf16>, vector<256x32xf32> -> vector<256x32xf32>
    %35 = arith.addf %29, %34 : vector<256x32xf32>
    %c0_55 = arith.constant 0 : index
    %c1_56 = arith.constant 1 : index
    %c1_57 = arith.constant 1 : index
    %c0_58 = arith.constant 0 : index
    %36 = vector.load %arg9[%c0_55, %c1_56, %c1_57, %c0_58] : memref<1x18x18x4xbf16, #tpu.memory_space<vmem>>, vector<1x16x16x4xbf16>
    %37 = vector.shape_cast %36 : vector<1x16x16x4xbf16> to vector<256x4xbf16>
    %c4 = arith.constant 4 : index
    %c0_59 = arith.constant 0 : index
    %c0_60 = arith.constant 0 : index
    %38 = vector.load %arg2[%c4, %c0_59, %c0_60] : memref<9x4x32xbf16, #tpu.memory_space<vmem>>, vector<1x4x32xbf16>
    %39 = vector.shape_cast %38 : vector<1x4x32xbf16> to vector<4x32xbf16>
    %cst_61 = arith.constant dense<0.000000e+00> : vector<256x32xf32>
    %40 = tpu.matmul %37, %39, %cst_61 {dimension_numbers = #tpu.dot_dimension_numbers<[1], [0], [0], [1], [0, 0, 1, 1], [], []>} : vector<256x4xbf16>, vector<4x32xbf16>, vector<256x32xf32> -> vector<256x32xf32>
    %41 = arith.addf %35, %40 : vector<256x32xf32>
    %c0_62 = arith.constant 0 : index
    %c1_63 = arith.constant 1 : index
    %c2_64 = arith.constant 2 : index
    %c0_65 = arith.constant 0 : index
    %42 = vector.load %arg9[%c0_62, %c1_63, %c2_64, %c0_65] : memref<1x18x18x4xbf16, #tpu.memory_space<vmem>>, vector<1x16x16x4xbf16>
    %43 = vector.shape_cast %42 : vector<1x16x16x4xbf16> to vector<256x4xbf16>
    %c5 = arith.constant 5 : index
    %c0_66 = arith.constant 0 : index
    %c0_67 = arith.constant 0 : index
    %44 = vector.load %arg2[%c5, %c0_66, %c0_67] : memref<9x4x32xbf16, #tpu.memory_space<vmem>>, vector<1x4x32xbf16>
    %45 = vector.shape_cast %44 : vector<1x4x32xbf16> to vector<4x32xbf16>
    %cst_68 = arith.constant dense<0.000000e+00> : vector<256x32xf32>
    %46 = tpu.matmul %43, %45, %cst_68 {dimension_numbers = #tpu.dot_dimension_numbers<[1], [0], [0], [1], [0, 0, 1, 1], [], []>} : vector<256x4xbf16>, vector<4x32xbf16>, vector<256x32xf32> -> vector<256x32xf32>
    %47 = arith.addf %41, %46 : vector<256x32xf32>
    %c0_69 = arith.constant 0 : index
    %c2_70 = arith.constant 2 : index
    %c0_71 = arith.constant 0 : index
    %c0_72 = arith.constant 0 : index
    %48 = vector.load %arg9[%c0_69, %c2_70, %c0_71, %c0_72] : memref<1x18x18x4xbf16, #tpu.memory_space<vmem>>, vector<1x16x16x4xbf16>
    %49 = vector.shape_cast %48 : vector<1x16x16x4xbf16> to vector<256x4xbf16>
    %c6 = arith.constant 6 : index
    %c0_73 = arith.constant 0 : index
    %c0_74 = arith.constant 0 : index
    %50 = vector.load %arg2[%c6, %c0_73, %c0_74] : memref<9x4x32xbf16, #tpu.memory_space<vmem>>, vector<1x4x32xbf16>
    %51 = vector.shape_cast %50 : vector<1x4x32xbf16> to vector<4x32xbf16>
    %cst_75 = arith.constant dense<0.000000e+00> : vector<256x32xf32>
    %52 = tpu.matmul %49, %51, %cst_75 {dimension_numbers = #tpu.dot_dimension_numbers<[1], [0], [0], [1], [0, 0, 1, 1], [], []>} : vector<256x4xbf16>, vector<4x32xbf16>, vector<256x32xf32> -> vector<256x32xf32>
    %53 = arith.addf %47, %52 : vector<256x32xf32>
    %c0_76 = arith.constant 0 : index
    %c2_77 = arith.constant 2 : index
    %c1_78 = arith.constant 1 : index
    %c0_79 = arith.constant 0 : index
    %54 = vector.load %arg9[%c0_76, %c2_77, %c1_78, %c0_79] : memref<1x18x18x4xbf16, #tpu.memory_space<vmem>>, vector<1x16x16x4xbf16>
    %55 = vector.shape_cast %54 : vector<1x16x16x4xbf16> to vector<256x4xbf16>
    %c7 = arith.constant 7 : index
    %c0_80 = arith.constant 0 : index
    %c0_81 = arith.constant 0 : index
    %56 = vector.load %arg2[%c7, %c0_80, %c0_81] : memref<9x4x32xbf16, #tpu.memory_space<vmem>>, vector<1x4x32xbf16>
    %57 = vector.shape_cast %56 : vector<1x4x32xbf16> to vector<4x32xbf16>
    %cst_82 = arith.constant dense<0.000000e+00> : vector<256x32xf32>
    %58 = tpu.matmul %55, %57, %cst_82 {dimension_numbers = #tpu.dot_dimension_numbers<[1], [0], [0], [1], [0, 0, 1, 1], [], []>} : vector<256x4xbf16>, vector<4x32xbf16>, vector<256x32xf32> -> vector<256x32xf32>
    %59 = arith.addf %53, %58 : vector<256x32xf32>
    %c0_83 = arith.constant 0 : index
    %c2_84 = arith.constant 2 : index
    %c2_85 = arith.constant 2 : index
    %c0_86 = arith.constant 0 : index
    %60 = vector.load %arg9[%c0_83, %c2_84, %c2_85, %c0_86] : memref<1x18x18x4xbf16, #tpu.memory_space<vmem>>, vector<1x16x16x4xbf16>
    %61 = vector.shape_cast %60 : vector<1x16x16x4xbf16> to vector<256x4xbf16>
    %c8 = arith.constant 8 : index
    %c0_87 = arith.constant 0 : index
    %c0_88 = arith.constant 0 : index
    %62 = vector.load %arg2[%c8, %c0_87, %c0_88] : memref<9x4x32xbf16, #tpu.memory_space<vmem>>, vector<1x4x32xbf16>
    %63 = vector.shape_cast %62 : vector<1x4x32xbf16> to vector<4x32xbf16>
    %cst_89 = arith.constant dense<0.000000e+00> : vector<256x32xf32>
    %64 = tpu.matmul %61, %63, %cst_89 {dimension_numbers = #tpu.dot_dimension_numbers<[1], [0], [0], [1], [0, 0, 1, 1], [], []>} : vector<256x4xbf16>, vector<4x32xbf16>, vector<256x32xf32> -> vector<256x32xf32>
    %65 = arith.addf %59, %64 : vector<256x32xf32>
    %c0_90 = arith.constant 0 : index
    %c0_91 = arith.constant 0 : index
    %66 = vector.load %arg3[%c0_90, %c0_91] : memref<1x32xf32, #tpu.memory_space<vmem>>, vector<1x32xf32>
    %67 = vector.broadcast %66 : vector<1x32xf32> to vector<256x32xf32>
    %68 = arith.addf %65, %67 : vector<256x32xf32>
    %cst_92 = arith.constant 0.000000e+00 : f32
    %69 = vector.broadcast %cst_92 : f32 to vector<256x32xf32>
    %70 = arith.maximumf %68, %69 : vector<256x32xf32>
    %cst_93 = arith.constant 0.000000e+00 : bf16
    %71 = vector.broadcast %cst_93 : bf16 to vector<1x1x18x32xbf16>
    %c0_94 = arith.constant 0 : index
    %c0_95 = arith.constant 0 : index
    %c0_96 = arith.constant 0 : index
    %c0_97 = arith.constant 0 : index
    %72 = vector.load %arg10[%c0_94, %c0_95, %c0_96, %c0_97] : memref<1x18x18x32xbf16, #tpu.memory_space<vmem>>, vector<1x1x18x32xbf16>
    tpu.vector_store %arg10[%c0_94, %c0_95, %c0_96, %c0_97], %71 {strides = array<i32>} : memref<1x18x18x32xbf16, #tpu.memory_space<vmem>>, vector<1x1x18x32xbf16>,
    %cst_98 = arith.constant 0.000000e+00 : bf16
    %73 = vector.broadcast %cst_98 : bf16 to vector<1x1x18x32xbf16>
    %c0_99 = arith.constant 0 : index
    %c17_100 = arith.constant 17 : index
    %c0_101 = arith.constant 0 : index
    %c0_102 = arith.constant 0 : index
    %74 = vector.load %arg10[%c0_99, %c17_100, %c0_101, %c0_102] : memref<1x18x18x32xbf16, #tpu.memory_space<vmem>>, vector<1x1x18x32xbf16>
    tpu.vector_store %arg10[%c0_99, %c17_100, %c0_101, %c0_102], %73 {strides = array<i32>} : memref<1x18x18x32xbf16, #tpu.memory_space<vmem>>, vector<1x1x18x32xbf16>,
    %cst_103 = arith.constant 0.000000e+00 : bf16
    %75 = vector.broadcast %cst_103 : bf16 to vector<1x18x1x32xbf16>
    %c0_104 = arith.constant 0 : index
    %c0_105 = arith.constant 0 : index
    %c0_106 = arith.constant 0 : index
    %c0_107 = arith.constant 0 : index
    %76 = vector.load %arg10[%c0_104, %c0_105, %c0_106, %c0_107] : memref<1x18x18x32xbf16, #tpu.memory_space<vmem>>, vector<1x18x1x32xbf16>
    tpu.vector_store %arg10[%c0_104, %c0_105, %c0_106, %c0_107], %75 {strides = array<i32>} : memref<1x18x18x32xbf16, #tpu.memory_space<vmem>>, vector<1x18x1x32xbf16>,
    %cst_108 = arith.constant 0.000000e+00 : bf16
    %77 = vector.broadcast %cst_108 : bf16 to vector<1x18x1x32xbf16>
    %c0_109 = arith.constant 0 : index
    %c0_110 = arith.constant 0 : index
    %c17_111 = arith.constant 17 : index
    %c0_112 = arith.constant 0 : index
    %78 = vector.load %arg10[%c0_109, %c0_110, %c17_111, %c0_112] : memref<1x18x18x32xbf16, #tpu.memory_space<vmem>>, vector<1x18x1x32xbf16>
    tpu.vector_store %arg10[%c0_109, %c0_110, %c17_111, %c0_112], %77 {strides = array<i32>} : memref<1x18x18x32xbf16, #tpu.memory_space<vmem>>, vector<1x18x1x32xbf16>,
    %79 = vector.shape_cast %70 : vector<256x32xf32> to vector<1x16x16x32xf32>
    %80 = arith.truncf %79 : vector<1x16x16x32xf32> to vector<1x16x16x32xbf16>
    %c0_113 = arith.constant 0 : index
    %c1_114 = arith.constant 1 : index
    %c1_115 = arith.constant 1 : index
    %c0_116 = arith.constant 0 : index
    %81 = vector.load %arg10[%c0_113, %c1_114, %c1_115, %c0_116] : memref<1x18x18x32xbf16, #tpu.memory_space<vmem>>, vector<1x16x16x32xbf16>
    tpu.vector_store %arg10[%c0_113, %c1_114, %c1_115, %c0_116], %80 {strides = array<i32>} : memref<1x18x18x32xbf16, #tpu.memory_space<vmem>>, vector<1x16x16x32xbf16>,
    %cst_117 = arith.constant 0.000000e+00 : f32
    %82 = vector.broadcast %cst_117 : f32 to vector<256x32xf32>
    %c0_118 = arith.constant 0 : index
    %c0_119 = arith.constant 0 : index
    %c0_120 = arith.constant 0 : index
    %c0_121 = arith.constant 0 : index
    %83 = vector.load %arg10[%c0_118, %c0_119, %c0_120, %c0_121] : memref<1x18x18x32xbf16, #tpu.memory_space<vmem>>, vector<1x16x16x32xbf16>
    %84 = vector.shape_cast %83 : vector<1x16x16x32xbf16> to vector<256x32xbf16>
    %c0_122 = arith.constant 0 : index
    %c0_123 = arith.constant 0 : index
    %c0_124 = arith.constant 0 : index
    %85 = vector.load %arg4[%c0_122, %c0_123, %c0_124] : memref<9x32x32xbf16, #tpu.memory_space<vmem>>, vector<1x32x32xbf16>
    %86 = vector.shape_cast %85 : vector<1x32x32xbf16> to vector<32x32xbf16>
    %cst_125 = arith.constant dense<0.000000e+00> : vector<256x32xf32>
    %87 = tpu.matmul %84, %86, %cst_125 {dimension_numbers = #tpu.dot_dimension_numbers<[1], [0], [0], [1], [0, 0, 1, 1], [], []>} : vector<256x32xbf16>, vector<32x32xbf16>, vector<256x32xf32> -> vector<256x32xf32>
    %88 = arith.addf %82, %87 : vector<256x32xf32>
    %c0_126 = arith.constant 0 : index
    %c0_127 = arith.constant 0 : index
    %c1_128 = arith.constant 1 : index
    %c0_129 = arith.constant 0 : index
    %89 = vector.load %arg10[%c0_126, %c0_127, %c1_128, %c0_129] : memref<1x18x18x32xbf16, #tpu.memory_space<vmem>>, vector<1x16x16x32xbf16>
    %90 = vector.shape_cast %89 : vector<1x16x16x32xbf16> to vector<256x32xbf16>
    %c1_130 = arith.constant 1 : index
    %c0_131 = arith.constant 0 : index
    %c0_132 = arith.constant 0 : index
    %91 = vector.load %arg4[%c1_130, %c0_131, %c0_132] : memref<9x32x32xbf16, #tpu.memory_space<vmem>>, vector<1x32x32xbf16>
    %92 = vector.shape_cast %91 : vector<1x32x32xbf16> to vector<32x32xbf16>
    %cst_133 = arith.constant dense<0.000000e+00> : vector<256x32xf32>
    %93 = tpu.matmul %90, %92, %cst_133 {dimension_numbers = #tpu.dot_dimension_numbers<[1], [0], [0], [1], [0, 0, 1, 1], [], []>} : vector<256x32xbf16>, vector<32x32xbf16>, vector<256x32xf32> -> vector<256x32xf32>
    %94 = arith.addf %88, %93 : vector<256x32xf32>
    %c0_134 = arith.constant 0 : index
    %c0_135 = arith.constant 0 : index
    %c2_136 = arith.constant 2 : index
    %c0_137 = arith.constant 0 : index
    %95 = vector.load %arg10[%c0_134, %c0_135, %c2_136, %c0_137] : memref<1x18x18x32xbf16, #tpu.memory_space<vmem>>, vector<1x16x16x32xbf16>
    %96 = vector.shape_cast %95 : vector<1x16x16x32xbf16> to vector<256x32xbf16>
    %c2_138 = arith.constant 2 : index
    %c0_139 = arith.constant 0 : index
    %c0_140 = arith.constant 0 : index
    %97 = vector.load %arg4[%c2_138, %c0_139, %c0_140] : memref<9x32x32xbf16, #tpu.memory_space<vmem>>, vector<1x32x32xbf16>
    %98 = vector.shape_cast %97 : vector<1x32x32xbf16> to vector<32x32xbf16>
    %cst_141 = arith.constant dense<0.000000e+00> : vector<256x32xf32>
    %99 = tpu.matmul %96, %98, %cst_141 {dimension_numbers = #tpu.dot_dimension_numbers<[1], [0], [0], [1], [0, 0, 1, 1], [], []>} : vector<256x32xbf16>, vector<32x32xbf16>, vector<256x32xf32> -> vector<256x32xf32>
    %100 = arith.addf %94, %99 : vector<256x32xf32>
    %c0_142 = arith.constant 0 : index
    %c1_143 = arith.constant 1 : index
    %c0_144 = arith.constant 0 : index
    %c0_145 = arith.constant 0 : index
    %101 = vector.load %arg10[%c0_142, %c1_143, %c0_144, %c0_145] : memref<1x18x18x32xbf16, #tpu.memory_space<vmem>>, vector<1x16x16x32xbf16>
    %102 = vector.shape_cast %101 : vector<1x16x16x32xbf16> to vector<256x32xbf16>
    %c3_146 = arith.constant 3 : index
    %c0_147 = arith.constant 0 : index
    %c0_148 = arith.constant 0 : index
    %103 = vector.load %arg4[%c3_146, %c0_147, %c0_148] : memref<9x32x32xbf16, #tpu.memory_space<vmem>>, vector<1x32x32xbf16>
    %104 = vector.shape_cast %103 : vector<1x32x32xbf16> to vector<32x32xbf16>
    %cst_149 = arith.constant dense<0.000000e+00> : vector<256x32xf32>
    %105 = tpu.matmul %102, %104, %cst_149 {dimension_numbers = #tpu.dot_dimension_numbers<[1], [0], [0], [1], [0, 0, 1, 1], [], []>} : vector<256x32xbf16>, vector<32x32xbf16>, vector<256x32xf32> -> vector<256x32xf32>
    %106 = arith.addf %100, %105 : vector<256x32xf32>
    %c0_150 = arith.constant 0 : index
    %c1_151 = arith.constant 1 : index
    %c1_152 = arith.constant 1 : index
    %c0_153 = arith.constant 0 : index
    %107 = vector.load %arg10[%c0_150, %c1_151, %c1_152, %c0_153] : memref<1x18x18x32xbf16, #tpu.memory_space<vmem>>, vector<1x16x16x32xbf16>
    %108 = vector.shape_cast %107 : vector<1x16x16x32xbf16> to vector<256x32xbf16>
    %c4_154 = arith.constant 4 : index
    %c0_155 = arith.constant 0 : index
    %c0_156 = arith.constant 0 : index
    %109 = vector.load %arg4[%c4_154, %c0_155, %c0_156] : memref<9x32x32xbf16, #tpu.memory_space<vmem>>, vector<1x32x32xbf16>
    %110 = vector.shape_cast %109 : vector<1x32x32xbf16> to vector<32x32xbf16>
    %cst_157 = arith.constant dense<0.000000e+00> : vector<256x32xf32>
    %111 = tpu.matmul %108, %110, %cst_157 {dimension_numbers = #tpu.dot_dimension_numbers<[1], [0], [0], [1], [0, 0, 1, 1], [], []>} : vector<256x32xbf16>, vector<32x32xbf16>, vector<256x32xf32> -> vector<256x32xf32>
    %112 = arith.addf %106, %111 : vector<256x32xf32>
    %c0_158 = arith.constant 0 : index
    %c1_159 = arith.constant 1 : index
    %c2_160 = arith.constant 2 : index
    %c0_161 = arith.constant 0 : index
    %113 = vector.load %arg10[%c0_158, %c1_159, %c2_160, %c0_161] : memref<1x18x18x32xbf16, #tpu.memory_space<vmem>>, vector<1x16x16x32xbf16>
    %114 = vector.shape_cast %113 : vector<1x16x16x32xbf16> to vector<256x32xbf16>
    %c5_162 = arith.constant 5 : index
    %c0_163 = arith.constant 0 : index
    %c0_164 = arith.constant 0 : index
    %115 = vector.load %arg4[%c5_162, %c0_163, %c0_164] : memref<9x32x32xbf16, #tpu.memory_space<vmem>>, vector<1x32x32xbf16>
    %116 = vector.shape_cast %115 : vector<1x32x32xbf16> to vector<32x32xbf16>
    %cst_165 = arith.constant dense<0.000000e+00> : vector<256x32xf32>
    %117 = tpu.matmul %114, %116, %cst_165 {dimension_numbers = #tpu.dot_dimension_numbers<[1], [0], [0], [1], [0, 0, 1, 1], [], []>} : vector<256x32xbf16>, vector<32x32xbf16>, vector<256x32xf32> -> vector<256x32xf32>
    %118 = arith.addf %112, %117 : vector<256x32xf32>
    %c0_166 = arith.constant 0 : index
    %c2_167 = arith.constant 2 : index
    %c0_168 = arith.constant 0 : index
    %c0_169 = arith.constant 0 : index
    %119 = vector.load %arg10[%c0_166, %c2_167, %c0_168, %c0_169] : memref<1x18x18x32xbf16, #tpu.memory_space<vmem>>, vector<1x16x16x32xbf16>
    %120 = vector.shape_cast %119 : vector<1x16x16x32xbf16> to vector<256x32xbf16>
    %c6_170 = arith.constant 6 : index
    %c0_171 = arith.constant 0 : index
    %c0_172 = arith.constant 0 : index
    %121 = vector.load %arg4[%c6_170, %c0_171, %c0_172] : memref<9x32x32xbf16, #tpu.memory_space<vmem>>, vector<1x32x32xbf16>
    %122 = vector.shape_cast %121 : vector<1x32x32xbf16> to vector<32x32xbf16>
    %cst_173 = arith.constant dense<0.000000e+00> : vector<256x32xf32>
    %123 = tpu.matmul %120, %122, %cst_173 {dimension_numbers = #tpu.dot_dimension_numbers<[1], [0], [0], [1], [0, 0, 1, 1], [], []>} : vector<256x32xbf16>, vector<32x32xbf16>, vector<256x32xf32> -> vector<256x32xf32>
    %124 = arith.addf %118, %123 : vector<256x32xf32>
    %c0_174 = arith.constant 0 : index
    %c2_175 = arith.constant 2 : index
    %c1_176 = arith.constant 1 : index
    %c0_177 = arith.constant 0 : index
    %125 = vector.load %arg10[%c0_174, %c2_175, %c1_176, %c0_177] : memref<1x18x18x32xbf16, #tpu.memory_space<vmem>>, vector<1x16x16x32xbf16>
    %126 = vector.shape_cast %125 : vector<1x16x16x32xbf16> to vector<256x32xbf16>
    %c7_178 = arith.constant 7 : index
    %c0_179 = arith.constant 0 : index
    %c0_180 = arith.constant 0 : index
    %127 = vector.load %arg4[%c7_178, %c0_179, %c0_180] : memref<9x32x32xbf16, #tpu.memory_space<vmem>>, vector<1x32x32xbf16>
    %128 = vector.shape_cast %127 : vector<1x32x32xbf16> to vector<32x32xbf16>
    %cst_181 = arith.constant dense<0.000000e+00> : vector<256x32xf32>
    %129 = tpu.matmul %126, %128, %cst_181 {dimension_numbers = #tpu.dot_dimension_numbers<[1], [0], [0], [1], [0, 0, 1, 1], [], []>} : vector<256x32xbf16>, vector<32x32xbf16>, vector<256x32xf32> -> vector<256x32xf32>
    %130 = arith.addf %124, %129 : vector<256x32xf32>
    %c0_182 = arith.constant 0 : index
    %c2_183 = arith.constant 2 : index
    %c2_184 = arith.constant 2 : index
    %c0_185 = arith.constant 0 : index
    %131 = vector.load %arg10[%c0_182, %c2_183, %c2_184, %c0_185] : memref<1x18x18x32xbf16, #tpu.memory_space<vmem>>, vector<1x16x16x32xbf16>
    %132 = vector.shape_cast %131 : vector<1x16x16x32xbf16> to vector<256x32xbf16>
    %c8_186 = arith.constant 8 : index
    %c0_187 = arith.constant 0 : index
    %c0_188 = arith.constant 0 : index
    %133 = vector.load %arg4[%c8_186, %c0_187, %c0_188] : memref<9x32x32xbf16, #tpu.memory_space<vmem>>, vector<1x32x32xbf16>
    %134 = vector.shape_cast %133 : vector<1x32x32xbf16> to vector<32x32xbf16>
    %cst_189 = arith.constant dense<0.000000e+00> : vector<256x32xf32>
    %135 = tpu.matmul %132, %134, %cst_189 {dimension_numbers = #tpu.dot_dimension_numbers<[1], [0], [0], [1], [0, 0, 1, 1], [], []>} : vector<256x32xbf16>, vector<32x32xbf16>, vector<256x32xf32> -> vector<256x32xf32>
    %136 = arith.addf %130, %135 : vector<256x32xf32>
    %c0_190 = arith.constant 0 : index
    %c0_191 = arith.constant 0 : index
    %137 = vector.load %arg5[%c0_190, %c0_191] : memref<1x32xf32, #tpu.memory_space<vmem>>, vector<1x32xf32>
    %138 = vector.broadcast %137 : vector<1x32xf32> to vector<256x32xf32>
    %139 = arith.addf %136, %138 : vector<256x32xf32>
    %cst_192 = arith.constant 0.000000e+00 : f32
    %140 = vector.broadcast %cst_192 : f32 to vector<256x32xf32>
    %141 = arith.maximumf %139, %140 : vector<256x32xf32>
    %142 = vector.shape_cast %141 : vector<256x32xf32> to vector<1x256x32xf32>
    %cst_193 = arith.constant dense<0.000000e+00> : vector<1x32xf32>
    %143 = vector.multi_reduction <add>, %142, %cst_193 [1] : vector<1x256x32xf32> to vector<1x32xf32>
    %cst_194 = arith.constant 2.560000e+02 : f32
    %144 = vector.broadcast %cst_194 : f32 to vector<1x32xf32>
    %145 = arith.divf %143, %144 : vector<1x32xf32>
    %c0_195 = arith.constant 0 : index
    %c0_196 = arith.constant 0 : index
    %146 = vector.load %arg6[%c0_195, %c0_196] : memref<32x2xf32, #tpu.memory_space<vmem>>, vector<32x2xf32>
    %cst_197 = arith.constant dense<0.000000e+00> : vector<1x2xf32>
    %147 = tpu.matmul %145, %146, %cst_197 {dimension_numbers = #tpu.dot_dimension_numbers<[1], [0], [0], [1], [0, 0, 1, 1], [], []>} : vector<1x32xf32>, vector<32x2xf32>, vector<1x2xf32> -> vector<1x2xf32>
    %cst_198 = arith.constant 0.000000e+00 : f32
    %148 = vector.broadcast %cst_198 : f32 to vector<1x2xf32>
    %149 = arith.maximumf %147, %148 : vector<1x2xf32>
    %c0_199 = arith.constant 0 : index
    %c0_200 = arith.constant 0 : index
    %150 = vector.load %arg7[%c0_199, %c0_200] : memref<2x32xf32, #tpu.memory_space<vmem>>, vector<2x32xf32>
    %cst_201 = arith.constant dense<0.000000e+00> : vector<1x32xf32>
    %151 = tpu.matmul %149, %150, %cst_201 {dimension_numbers = #tpu.dot_dimension_numbers<[1], [0], [0], [1], [0, 0, 1, 1], [], []>} : vector<1x2xf32>, vector<2x32xf32>, vector<1x32xf32> -> vector<1x32xf32>
    %152 = arith.negf %151 : vector<1x32xf32>
    %153 = math.exp %152 : vector<1x32xf32>
    %cst_202 = arith.constant 1.000000e+00 : f32
    %154 = vector.broadcast %cst_202 : f32 to vector<1x32xf32>
    %155 = arith.addf %154, %153 : vector<1x32xf32>
    %156 = arith.divf %154, %155 : vector<1x32xf32>
    %157 = vector.shape_cast %142 : vector<1x256x32xf32> to vector<256x32xf32>
    %158 = vector.broadcast %156 : vector<1x32xf32> to vector<256x32xf32>
    %159 = arith.mulf %157, %158 : vector<256x32xf32>
    %160 = tpu.transpose %159, [1, 0] : vector<256x32xf32> -> vector<32x256xf32>
    %c0_203 = arith.constant 0 : index
    %c0_204 = arith.constant 0 : index
    %161 = vector.load %arg8[%c0_203, %c0_204] : memref<32x256xf32, #tpu.memory_space<vmem>>, vector<32x256xf32>
    tpu.vector_store %arg8[%c0_203, %c0_204], %160 {strides = array<i32>} : memref<32x256xf32, #tpu.memory_space<vmem>>, vector<32x256xf32>,
    return
  }
  func.func @transform_0(%arg0: i32) -> (i32, i32, i32, i32) {
    %c0_i32 = arith.constant 0 : i32
    %c0_i32_0 = arith.constant 0 : i32
    %c0_i32_1 = arith.constant 0 : i32
    %c0_i32_2 = arith.constant 0 : i32
    return %arg0, %c0_i32, %c0_i32_0, %c0_i32_1 : i32, i32, i32, i32
  }
  func.func @transform_1(%arg0: i32) -> (i32, i32, i32) {
    %c0_i32 = arith.constant 0 : i32
    %c0_i32_0 = arith.constant 0 : i32
    %c0_i32_1 = arith.constant 0 : i32
    %c0_i32_2 = arith.constant 0 : i32
    return %c0_i32, %c0_i32_0, %c0_i32_1 : i32, i32, i32
  }
  func.func @transform_2(%arg0: i32) -> (i32, i32) {
    %c0_i32 = arith.constant 0 : i32
    %c0_i32_0 = arith.constant 0 : i32
    %c0_i32_1 = arith.constant 0 : i32
    return %c0_i32, %c0_i32_0 : i32, i32
  }
  func.func @transform_3(%arg0: i32) -> (i32, i32, i32) {
    %c0_i32 = arith.constant 0 : i32
    %c0_i32_0 = arith.constant 0 : i32
    %c0_i32_1 = arith.constant 0 : i32
    %c0_i32_2 = arith.constant 0 : i32
    return %c0_i32, %c0_i32_0, %c0_i32_1 : i32, i32, i32
  }
  func.func @transform_4(%arg0: i32) -> (i32, i32) {
    %c0_i32 = arith.constant 0 : i32
    %c0_i32_0 = arith.constant 0 : i32
    %c0_i32_1 = arith.constant 0 : i32
    return %c0_i32, %c0_i32_0 : i32, i32
  }
  func.func @transform_5(%arg0: i32) -> (i32, i32) {
    %c0_i32 = arith.constant 0 : i32
    %c0_i32_0 = arith.constant 0 : i32
    %c0_i32_1 = arith.constant 0 : i32
    return %c0_i32, %c0_i32_0 : i32, i32
  }
  func.func @transform_6(%arg0: i32) -> (i32, i32) {
    %c0_i32 = arith.constant 0 : i32
    %c0_i32_0 = arith.constant 0 : i32
    %c0_i32_1 = arith.constant 0 : i32
    return %c0_i32, %c0_i32_0 : i32, i32
  }
  func.func @transform_7(%arg0: i32) -> (i32, i32) {
    %c0_i32 = arith.constant 0 : i32
    %c0_i32_0 = arith.constant 0 : i32
    return %arg0, %c0_i32 : i32, i32
  }
}

</mosaic_0001>

<llo_original>
// kernel: tpu_custom_call.1
$region0: #{tpu_custom_call.1}
  #allocation0 [shape = 'u32[]', space=smem, size = 0x4, offset = 0x4, fixed_abs, tag = 'smem constant byte address 0x4 - core index']
  #allocation1 [shape = 'u32[144,128]{1,0:T(1,128)}', space=vmem, size = 0x12000, scoped, tag = 'internal scratch']
  #allocation2 [shape = 'bf16[1,18,18,4]{3,2,1,0:T(8,128)(2,1)}', space=vmem, size = 0x1b000, scoped, tag = 'scratch operand']
  #allocation3 [shape = 'bf16[1,18,18,32]{3,2,1,0:T(8,128)(2,1)}', space=vmem, size = 0x1b000, scoped, tag = 'scratch operand']
  %s0 = inlined_call_operand.vmem [shape: f32[2,16,16,4], index: 0, kind: input, shape index: {}]
  %s1 = inlined_call_operand.vmem [shape: bf16[9,4,32], index: 1, kind: input, shape index: {}]
  %s2 = inlined_call_operand.vmem [shape: f32[1,32], index: 2, kind: input, shape index: {}]
  %s3 = inlined_call_operand.vmem [shape: bf16[9,32,32], index: 3, kind: input, shape index: {}]
  %s4 = inlined_call_operand.vmem [shape: f32[1,32], index: 4, kind: input, shape index: {}]
  %s5 = inlined_call_operand.vmem [shape: f32[32,2], index: 5, kind: input, shape index: {}]
  %s6 = inlined_call_operand.vmem [shape: f32[2,32], index: 6, kind: input, shape index: {}]
  %s7 = inlined_call_operand.hbm [shape: f32[64,256], index: 7, kind: output, shape index: {}]
  %s8 = sld [smem:[#allocation0]]
  $region61: #{tpu_custom_call.1} parent=0
    _
  %s10 = ssub.s32 1, %s8
  %s11 = scalar_select 0, %s10, %s8
  $region1: #{tpu_custom_call.1} parent=0
    #allocation4 [shape = 'u8[65536]{0}', space=vmem, size = 0x10000, scoped, tag = 'output window, operand 0']
    #allocation5 [shape = 's32[2]{0}', space=sflag, size = 0x8, scoped, tag = 'scoped memory for tpu_custom_call.1']
    %12 = vsyncpa [#allocation5], 0
    %s13 = scalar_lea.sflag [#allocation5], 1
    %14 = vsyncpa %s13, 0
    loop: start=0, step=1, limit=4
    $region2: #{tpu_custom_call.1} parent=1 // loop_pre_header
      _
    $region3: #{tpu_custom_call.1} parent=1 // loop_header
      %s16 = sphi 0, %s20
      %p17 = scmp.ge.s32.totalorder %s16, 4
      %s26 = sphi 0, %s28
      %s29 = sphi 0, %s26
      %s30 = sphi 0, %s29
      %s46 = sphi 0, %s30
      %s50 = sphi 0, %s50
      %s52 = sphi 0, %s50
      %s53 = sphi 0, %s52
      %s67 = sphi 0, %s53
      %s71 = sphi 0, %s71
      %s73 = sphi 0, %s71
      %s74 = sphi 0, %s73
      %s88 = sphi 0, %s74
      %s92 = sphi 0, %s92
      %s94 = sphi 0, %s92
      %s95 = sphi 0, %s94
      %s109 = sphi 0, %s95
      %s113 = sphi 0, %s113
      %s115 = sphi 0, %s113
      %s116 = sphi 0, %s115
      %s130 = sphi 0, %s116
      %s134 = sphi 0, %s134
      %s136 = sphi 0, %s134
      %s137 = sphi 0, %s136
      %s151 = sphi 0, %s137
      %s155 = sphi 0, %s155
      %s157 = sphi 0, %s155
      %s158 = sphi 0, %s157
      %s172 = sphi 0, %s158
      %s178 = sphi 0, %s180
      %s181 = sphi 0, %s178
      %s182 = sphi 0, %s181
      %s198 = sphi 0, %s182
    $region4: #{tpu_custom_call.1} parent=1 // loop_header_branch
      %19 = sbr.rel (%p17) target = $region8
    $region5: #{tpu_custom_call.1} parent=1 // loop_body
      %s21 = ssub.s32 %s16, 1
      %s22 = ssub.s32 %s16, 2
      %s23 = sadd.s32 %s16, 1
      %s24 = ssub.s32 %s16, %s23
      %p25 = scmp.eq.s32.totalorder %s24, 0
      %s27 = sadd.s32 %s26, 1
      %s28 = scalar_select %p25, %s26, %s27
      %p31 = pneg %p25
      %p32 = scmp.eq.s32.totalorder %s16, 1
      %p33 = por %p31, %p32
      %p34 = scmp.ne.s32.totalorder %s26, %s29
      %p35 = scmp.eq.s32.totalorder %s16, 0
      %p36 = por %p34, %p35
      %p37 = scmp.ne.s32.totalorder %s26, %s29
      %p38 = scmp.eq.s32.totalorder %s21, 1
      %p39 = por %p37, %p38
      %p40 = scmp.ne.s32.totalorder %s29, %s30
      %p41 = scmp.eq.s32.totalorder %s21, 0
      %p42 = por %p40, %p41
      %p43 = scmp.ne.s32.totalorder %s29, %s30
      %p44 = scmp.eq.s32.totalorder %s22, 1
      %p45 = por %p43, %p44
      %p47 = scmp.ne.s32.totalorder %s30, %s46
      %p48 = scmp.eq.s32.totalorder %s22, 0
      %p49 = por %p47, %p48
      %s51 = sadd.s32 %s50, 1
      %p54 = scmp.eq.s32.totalorder %s16, 1
      %p55 = scmp.ne.s32.totalorder %s50, %s52
      %p56 = scmp.eq.s32.totalorder %s16, 0
      %p57 = por %p55, %p56
      %p58 = scmp.ne.s32.totalorder %s50, %s52
      %p59 = scmp.eq.s32.totalorder %s21, 1
      %p60 = por %p58, %p59
      %p61 = scmp.ne.s32.totalorder %s52, %s53
      %p62 = scmp.eq.s32.totalorder %s21, 0
      %p63 = por %p61, %p62
      %p64 = scmp.ne.s32.totalorder %s52, %s53
      %p65 = scmp.eq.s32.totalorder %s22, 1
      %p66 = por %p64, %p65
      %p68 = scmp.ne.s32.totalorder %s53, %s67
      %p69 = scmp.eq.s32.totalorder %s22, 0
      %p70 = por %p68, %p69
      %s72 = sadd.s32 %s71, 1
      %p75 = scmp.eq.s32.totalorder %s16, 1
      %p76 = scmp.ne.s32.totalorder %s71, %s73
      %p77 = scmp.eq.s32.totalorder %s16, 0
      %p78 = por %p76, %p77
      %p79 = scmp.ne.s32.totalorder %s71, %s73
      %p80 = scmp.eq.s32.totalorder %s21, 1
      %p81 = por %p79, %p80
      %p82 = scmp.ne.s32.totalorder %s73, %s74
      %p83 = scmp.eq.s32.totalorder %s21, 0
      %p84 = por %p82, %p83
      %p85 = scmp.ne.s32.totalorder %s73, %s74
      %p86 = scmp.eq.s32.totalorder %s22, 1
      %p87 = por %p85, %p86
      %p89 = scmp.ne.s32.totalorder %s74, %s88
      %p90 = scmp.eq.s32.totalorder %s22, 0
      %p91 = por %p89, %p90
      %s93 = sadd.s32 %s92, 1
      %p96 = scmp.eq.s32.totalorder %s16, 1
      %p97 = scmp.ne.s32.totalorder %s92, %s94
      %p98 = scmp.eq.s32.totalorder %s16, 0
      %p99 = por %p97, %p98
      %p100 = scmp.ne.s32.totalorder %s92, %s94
      %p101 = scmp.eq.s32.totalorder %s21, 1
      %p102 = por %p100, %p101
      %p103 = scmp.ne.s32.totalorder %s94, %s95
      %p104 = scmp.eq.s32.totalorder %s21, 0
      %p105 = por %p103, %p104
      %p106 = scmp.ne.s32.totalorder %s94, %s95
      %p107 = scmp.eq.s32.totalorder %s22, 1
      %p108 = por %p106, %p107
      %p110 = scmp.ne.s32.totalorder %s95, %s109
      %p111 = scmp.eq.s32.totalorder %s22, 0
      %p112 = por %p110, %p111
      %s114 = sadd.s32 %s113, 1
      %p117 = scmp.eq.s32.totalorder %s16, 1
      %p118 = scmp.ne.s32.totalorder %s113, %s115
      %p119 = scmp.eq.s32.totalorder %s16, 0
      %p120 = por %p118, %p119
      %p121 = scmp.ne.s32.totalorder %s113, %s115
      %p122 = scmp.eq.s32.totalorder %s21, 1
      %p123 = por %p121, %p122
      %p124 = scmp.ne.s32.totalorder %s115, %s116
      %p125 = scmp.eq.s32.totalorder %s21, 0
      %p126 = por %p124, %p125
      %p127 = scmp.ne.s32.totalorder %s115, %s116
      %p128 = scmp.eq.s32.totalorder %s22, 1
      %p129 = por %p127, %p128
      %p131 = scmp.ne.s32.totalorder %s116, %s130
      %p132 = scmp.eq.s32.totalorder %s22, 0
      %p133 = por %p131, %p132
      %s135 = sadd.s32 %s134, 1
      %p138 = scmp.eq.s32.totalorder %s16, 1
      %p139 = scmp.ne.s32.totalorder %s134, %s136
      %p140 = scmp.eq.s32.totalorder %s16, 0
      %p141 = por %p139, %p140
      %p142 = scmp.ne.s32.totalorder %s134, %s136
      %p143 = scmp.eq.s32.totalorder %s21, 1
      %p144 = por %p142, %p143
      %p145 = scmp.ne.s32.totalorder %s136, %s137
      %p146 = scmp.eq.s32.totalorder %s21, 0
      %p147 = por %p145, %p146
      %p148 = scmp.ne.s32.totalorder %s136, %s137
      %p149 = scmp.eq.s32.totalorder %s22, 1
      %p150 = por %p148, %p149
      %p152 = scmp.ne.s32.totalorder %s137, %s151
      %p153 = scmp.eq.s32.totalorder %s22, 0
      %p154 = por %p152, %p153
      %s156 = sadd.s32 %s155, 1
      %p159 = scmp.eq.s32.totalorder %s16, 1
      %p160 = scmp.ne.s32.totalorder %s155, %s157
      %p161 = scmp.eq.s32.totalorder %s16, 0
      %p162 = por %p160, %p161
      %p163 = scmp.ne.s32.totalorder %s155, %s157
      %p164 = scmp.eq.s32.totalorder %s21, 1
      %p165 = por %p163, %p164
      %p166 = scmp.ne.s32.totalorder %s157, %s158
      %p167 = scmp.eq.s32.totalorder %s21, 0
      %p168 = por %p166, %p167
      %p169 = scmp.ne.s32.totalorder %s157, %s158
      %p170 = scmp.eq.s32.totalorder %s22, 1
      %p171 = por %p169, %p170
      %p173 = scmp.ne.s32.totalorder %s158, %s172
      %p174 = scmp.eq.s32.totalorder %s22, 0
      %p175 = por %p173, %p174
      %s176 = ssub.s32 %s16, %s23
      %p177 = scmp.eq.s32.totalorder %s176, 0
      %s179 = sadd.s32 %s178, 1
      %s180 = scalar_select %p177, %s178, %s179
      %p183 = pneg %p177
      %p184 = scmp.eq.s32.totalorder %s16, 1
      %p185 = por %p183, %p184
      %p186 = scmp.ne.s32.totalorder %s178, %s181
      %p187 = scmp.eq.s32.totalorder %s16, 0
      %p188 = por %p186, %p187
      %p189 = scmp.ne.s32.totalorder %s178, %s181
      %p190 = scmp.eq.s32.totalorder %s21, 1
      %p191 = por %p189, %p190
      %p192 = scmp.ne.s32.totalorder %s181, %s182
      %p193 = scmp.eq.s32.totalorder %s21, 0
      %p194 = por %p192, %p193
      %p195 = scmp.ne.s32.totalorder %s181, %s182
      %p196 = scmp.eq.s32.totalorder %s22, 1
      %p197 = por %p195, %p196
      %p199 = scmp.ne.s32.totalorder %s182, %s198
      %p200 = scmp.eq.s32.totalorder %s22, 0
      %p201 = por %p199, %p200
      %p202 = scmp.le.s32.totalorder 1, %s16
      %p203 = scmp.lt.s32.totalorder %s16, 3
      %p204 = pnand %p202, %p203
      %p205 = pneg %p204
      // Predicated region
      $region9: #{tpu_custom_call.1} parent=5 // pred_check
        _
      $region10: #{tpu_custom_call.1} parent=5 // pred_check_branch
        %207 = sbr.rel (%p204) target = $region12
      $region11: #{tpu_custom_call.1} parent=5 // pred_region
        %s208 = ssub.s32 %s16, 1
        // Predicated region
        $region13: #{tpu_custom_call.1} parent=11 // pred_check
          %p209 = pneg %p63
        $region14: #{tpu_custom_call.1} parent=11 // pred_check_branch
          %211 = sbr.rel (%p209) target = $region16
        $region15: #{tpu_custom_call.1} parent=11 // pred_region
          _
        $region16: #{tpu_custom_call.1} parent=11 // pred_fallthru
          _
        // Predicated region
        $region17: #{tpu_custom_call.1} parent=11 // pred_check
          %p212 = pneg %p84
        $region18: #{tpu_custom_call.1} parent=11 // pred_check_branch
          %214 = sbr.rel (%p212) target = $region20
        $region19: #{tpu_custom_call.1} parent=11 // pred_region
          _
        $region20: #{tpu_custom_call.1} parent=11 // pred_fallthru
          _
        // Predicated region
        $region21: #{tpu_custom_call.1} parent=11 // pred_check
          %p215 = pneg %p105
        $region22: #{tpu_custom_call.1} parent=11 // pred_check_branch
          %217 = sbr.rel (%p215) target = $region24
        $region23: #{tpu_custom_call.1} parent=11 // pred_region
          _
        $region24: #{tpu_custom_call.1} parent=11 // pred_fallthru
          _
        // Predicated region
        $region25: #{tpu_custom_call.1} parent=11 // pred_check
          %p218 = pneg %p126
        $region26: #{tpu_custom_call.1} parent=11 // pred_check_branch
          %220 = sbr.rel (%p218) target = $region28
        $region27: #{tpu_custom_call.1} parent=11 // pred_region
          _
        $region28: #{tpu_custom_call.1} parent=11 // pred_fallthru
          _
        // Predicated region
        $region29: #{tpu_custom_call.1} parent=11 // pred_check
          %p221 = pneg %p147
        $region30: #{tpu_custom_call.1} parent=11 // pred_check_branch
          %223 = sbr.rel (%p221) target = $region32
        $region31: #{tpu_custom_call.1} parent=11 // pred_region
          _
        $region32: #{tpu_custom_call.1} parent=11 // pred_fallthru
          _
        // Predicated region
        $region33: #{tpu_custom_call.1} parent=11 // pred_check
          %p224 = pneg %p168
        $region34: #{tpu_custom_call.1} parent=11 // pred_check_branch
          %226 = sbr.rel (%p224) target = $region36
        $region35: #{tpu_custom_call.1} parent=11 // pred_region
          _
        $region36: #{tpu_custom_call.1} parent=11 // pred_fallthru
          _
      $region12: #{tpu_custom_call.1} parent=5 // pred_fallthru
        _
      %p227 = scmp.lt.s32.totalorder %s16, 2
      // Predicated region
      $region37: #{tpu_custom_call.1} parent=5 // pred_check
        %p228 = pneg %p227
      $region38: #{tpu_custom_call.1} parent=5 // pred_check_branch
        %230 = sbr.rel (%p228) target = $region40
      $region39: #{tpu_custom_call.1} parent=5 // pred_region
        // Predicated region
        $region41: #{tpu_custom_call.1} parent=39 // pred_check
          %p231 = pneg %p36
        $region42: #{tpu_custom_call.1} parent=39 // pred_check_branch
          %233 = sbr.rel (%p231) target = $region44
        $region43: #{tpu_custom_call.1} parent=39 // pred_region
          %p234 = scmp.lt.s32.totalorder %s16, 1
          %s235 = scalar_select %p234, %s16, 1
          %s236 = smul.addr %s235, 32
          %s237 = smul.addr %s236, 8
          %s238 = scalar_lea.vmem %s0, %s237
        $region44: #{tpu_custom_call.1} parent=39 // pred_fallthru
          _
      $region40: #{tpu_custom_call.1} parent=5 // pred_fallthru
        _
      %p239 = scmp.le.s32.totalorder 1, %s16
      %p240 = scmp.lt.s32.totalorder %s16, 3
      %p241 = pnand %p239, %p240
      %p242 = pneg %p241
      // Predicated region
      $region45: #{tpu_custom_call.1} parent=5 // pred_check
        _
      $region46: #{tpu_custom_call.1} parent=5 // pred_check_branch
        %244 = sbr.rel (%p241) target = $region48
      $region47: #{tpu_custom_call.1} parent=5 // pred_region
        %s245 = ssub.s32 %s16, 1
        %p246 = scmp.lt.s32.totalorder %s21, 1
        %s247 = scalar_select %p246, %s21, 1
        %s248 = smul.addr %s247, 32
        %s249 = smul.addr %s248, 8
        %s250 = scalar_lea.vmem %s0, %s249
        %p251 = pneg %p42
        %p252 = pneg %p39
        %p253 = pneg %p63
        %p254 = pneg %p60
        %p255 = pneg %p84
        %p256 = pneg %p81
        %p257 = pneg %p105
        %p258 = pneg %p102
        %p259 = pneg %p126
        %p260 = pneg %p123
        %p261 = pneg %p147
        %p262 = pneg %p144
        %p263 = pneg %p168
        %p264 = pneg %p165
        %p265 = pneg %p194
        %p266 = pneg %p191
        %s267 = sand.u32 %s181, 1
        %s268 = scalar_lea.sflag [#allocation5], %s267
        %s269 = sand.u32 %s181, 1
        %s270 = smul.addr %s269, 64
        %s271 = scalar_lea.vmem [#allocation4], %s270
        %p272 = scmp.lt.s32.totalorder %s21, 1
        %s273 = scalar_select %p272, %s21, 1
        %s274 = smul.addr %s273, 32
        %s275 = smul.addr %s274, 8
        %s276 = scalar_lea.vmem %s0, %s275
        %s277 = smul.u32 4, %s21
        %vm279 = vcmask 27648
        %280 = vst.msk [vmem:[#allocation2] sm:$0xf] %vm279, 0
        %281 = vst.msk [vmem:[#allocation2 + $0x4] sm:$0xf] %vm279, 0
        %vm282 = vcmask 24576
        %283 = vst.msk [vmem:[#allocation2 + $0x8] sm:$0x1] %vm282, 0
        %s284 = scalar_lea.vmem [#allocation2], 204
        %285 = vst.msk [vmem:[%s284] sm:$0xf] %vm279, 0
        %286 = vst.msk [vmem:[%s284 + $0x4] sm:$0xf] %vm279, 0
        %287 = vst.msk [vmem:[%s284 + $0x8] sm:$0x1] %vm282, 0
        %vm288 = vcmask 24576
        %vm289 = vsmask.f32 256
        %vm290 = vmand %vm288, %vm289
        %v291 = vld [vmem:[#allocation2] sm:$0x1]
        %v292 = vsel %vm290, 0, %v291
        %293 = vst [vmem:[#allocation2] sm:$0x1] %v292
        %v294 = vld [vmem:[#allocation2 + $0xc] sm:$0x1]
        %v295 = vsel %vm290, 0, %v294
        %296 = vst [vmem:[#allocation2 + $0xc] sm:$0x1] %v295
        %v297 = vld [vmem:[#allocation2 + $0x18] sm:$0x1]
        %v298 = vsel %vm290, 0, %v297
        %299 = vst [vmem:[#allocation2 + $0x18] sm:$0x1] %v298
        %v300 = vld [vmem:[#allocation2 + $0x24] sm:$0x1]
        %v301 = vsel %vm290, 0, %v300
        %302 = vst [vmem:[#allocation2 + $0x24] sm:$0x1] %v301
        %v303 = vld [vmem:[#allocation2 + $0x30] sm:$0x1]
        %v304 = vsel %vm290, 0, %v303
        %305 = vst [vmem:[#allocation2 + $0x30] sm:$0x1] %v304
        %v306 = vld [vmem:[#allocation2 + $0x3c] sm:$0x1]
        %v307 = vsel %vm290, 0, %v306
        %308 = vst [vmem:[#allocation2 + $0x3c] sm:$0x1] %v307
        %v309 = vld [vmem:[#allocation2 + $0x48] sm:$0x1]
        %v310 = vsel %vm290, 0, %v309
        %311 = vst [vmem:[#allocation2 + $0x48] sm:$0x1] %v310
        %v312 = vld [vmem:[#allocation2 + $0x54] sm:$0x1]
        %v313 = vsel %vm290, 0, %v312
        %314 = vst [vmem:[#allocation2 + $0x54] sm:$0x1] %v313
        %v315 = vld [vmem:[#allocation2 + $0x60] sm:$0x1]
        %v316 = vsel %vm290, 0, %v315
        %317 = vst [vmem:[#allocation2 + $0x60] sm:$0x1] %v316
        %v318 = vld [vmem:[#allocation2 + $0x6c] sm:$0x1]
        %v319 = vsel %vm290, 0, %v318
        %320 = vst [vmem:[#allocation2 + $0x6c] sm:$0x1] %v319
        %v321 = vld [vmem:[#allocation2 + $0x78] sm:$0x1]
        %v322 = vsel %vm290, 0, %v321
        %323 = vst [vmem:[#allocation2 + $0x78] sm:$0x1] %v322
        %v324 = vld [vmem:[#allocation2 + $0x84] sm:$0x1]
        %v325 = vsel %vm290, 0, %v324
        %326 = vst [vmem:[#allocation2 + $0x84] sm:$0x1] %v325
        %v327 = vld [vmem:[#allocation2 + $0x90] sm:$0x1]
        %v328 = vsel %vm290, 0, %v327
        %329 = vst [vmem:[#allocation2 + $0x90] sm:$0x1] %v328
        %v330 = vld [vmem:[#allocation2 + $0x9c] sm:$0x1]
        %v331 = vsel %vm290, 0, %v330
        %332 = vst [vmem:[#allocation2 + $0x9c] sm:$0x1] %v331
        %v333 = vld [vmem:[#allocation2 + $0xa8] sm:$0x1]
        %v334 = vsel %vm290, 0, %v333
        %335 = vst [vmem:[#allocation2 + $0xa8] sm:$0x1] %v334
        %v336 = vld [vmem:[#allocation2 + $0xb4] sm:$0x1]
        %v337 = vsel %vm290, 0, %v336
        %338 = vst [vmem:[#allocation2 + $0xb4] sm:$0x1] %v337
        %v339 = vld [vmem:[#allocation2 + $0xc0] sm:$0x1]
        %v340 = vsel %vm290, 0, %v339
        %341 = vst [vmem:[#allocation2 + $0xc0] sm:$0x1] %v340
        %v342 = vld [vmem:[#allocation2 + $0xcc] sm:$0x1]
        %v343 = vsel %vm290, 0, %v342
        %344 = vst [vmem:[#allocation2 + $0xcc] sm:$0x1] %v343
        %vm345 = vsmask.f32 7938
        %vm346 = vmand %vm288, %vm345
        %v347 = vld [vmem:[#allocation2 + $0x8] sm:$0x1]
        %v348 = vsel %vm346, 0, %v347
        %349 = vst [vmem:[#allocation2 + $0x8] sm:$0x1] %v348
        %v350 = vld [vmem:[#allocation2 + $0x14] sm:$0x1]
        %v351 = vsel %vm346, 0, %v350
        %352 = vst [vmem:[#allocation2 + $0x14] sm:$0x1] %v351
        %v353 = vld [vmem:[#allocation2 + $0x20] sm:$0x1]
        %v354 = vsel %vm346, 0, %v353
        %355 = vst [vmem:[#allocation2 + $0x20] sm:$0x1] %v354
        %v356 = vld [vmem:[#allocation2 + $0x2c] sm:$0x1]
        %v357 = vsel %vm346, 0, %v356
        %358 = vst [vmem:[#allocation2 + $0x2c] sm:$0x1] %v357
        %v359 = vld [vmem:[#allocation2 + $0x38] sm:$0x1]
        %v360 = vsel %vm346, 0, %v359
        %361 = vst [vmem:[#allocation2 + $0x38] sm:$0x1] %v360
        %v362 = vld [vmem:[#allocation2 + $0x44] sm:$0x1]
        %v363 = vsel %vm346, 0, %v362
        %364 = vst [vmem:[#allocation2 + $0x44] sm:$0x1] %v363
        %v365 = vld [vmem:[#allocation2 + $0x50] sm:$0x1]
        %v366 = vsel %vm346, 0, %v365
        %367 = vst [vmem:[#allocation2 + $0x50] sm:$0x1] %v366
        %v368 = vld [vmem:[#allocation2 + $0x5c] sm:$0x1]
        %v369 = vsel %vm346, 0, %v368
        %370 = vst [vmem:[#allocation2 + $0x5c] sm:$0x1] %v369
        %v371 = vld [vmem:[#allocation2 + $0x68] sm:$0x1]
        %v372 = vsel %vm346, 0, %v371
        %373 = vst [vmem:[#allocation2 + $0x68] sm:$0x1] %v372
        %v374 = vld [vmem:[#allocation2 + $0x74] sm:$0x1]
        %v375 = vsel %vm346, 0, %v374
        %376 = vst [vmem:[#allocation2 + $0x74] sm:$0x1] %v375
        %v377 = vld [vmem:[#allocation2 + $0x80] sm:$0x1]
        %v378 = vsel %vm346, 0, %v377
        %379 = vst [vmem:[#allocation2 + $0x80] sm:$0x1] %v378
        %v380 = vld [vmem:[#allocation2 + $0x8c] sm:$0x1]
        %v381 = vsel %vm346, 0, %v380
        %382 = vst [vmem:[#allocation2 + $0x8c] sm:$0x1] %v381
        %v383 = vld [vmem:[#allocation2 + $0x98] sm:$0x1]
        %v384 = vsel %vm346, 0, %v383
        %385 = vst [vmem:[#allocation2 + $0x98] sm:$0x1] %v384
        %v386 = vld [vmem:[#allocation2 + $0xa4] sm:$0x1]
        %v387 = vsel %vm346, 0, %v386
        %388 = vst [vmem:[#allocation2 + $0xa4] sm:$0x1] %v387
        %v389 = vld [vmem:[#allocation2 + $0xb0] sm:$0x1]
        %v390 = vsel %vm346, 0, %v389
        %391 = vst [vmem:[#allocation2 + $0xb0] sm:$0x1] %v390
        %v392 = vld [vmem:[#allocation2 + $0xbc] sm:$0x1]
        %v393 = vsel %vm346, 0, %v392
        %394 = vst [vmem:[#allocation2 + $0xbc] sm:$0x1] %v393
        %v395 = vld [vmem:[#allocation2 + $0xc8] sm:$0x1]
        %v396 = vsel %vm346, 0, %v395
        %397 = vst [vmem:[#allocation2 + $0xc8] sm:$0x1] %v396
        %v398 = vld [vmem:[#allocation2 + $0xd4] sm:$0x1]
        %v399 = vsel %vm346, 0, %v398
        %400 = vst [vmem:[#allocation2 + $0xd4] sm:$0x1] %v399
        %v401 = vld [vmem:[%s276] sm:$0xff]
        %v402 = vld [vmem:[%s276 + $0x8] sm:$0xff]
        %v403 = vld [vmem:[%s276 + $0x10] sm:$0xff]
        %v404 = vld [vmem:[%s276 + $0x18] sm:$0xff]
        %v405 = vld [vmem:[%s276 + $0x20] sm:$0xff]
        %v406 = vld [vmem:[%s276 + $0x28] sm:$0xff]
        %v407 = vld [vmem:[%s276 + $0x30] sm:$0xff]
        %v408 = vld [vmem:[%s276 + $0x38] sm:$0xff]
        %v409 = vld [vmem:[%s276 + $0x40] sm:$0xff]
        %v410 = vld [vmem:[%s276 + $0x48] sm:$0xff]
        %v411 = vld [vmem:[%s276 + $0x50] sm:$0xff]
        %v412 = vld [vmem:[%s276 + $0x58] sm:$0xff]
        %v413 = vld [vmem:[%s276 + $0x60] sm:$0xff]
        %v414 = vld [vmem:[%s276 + $0x68] sm:$0xff]
        %v415 = vld [vmem:[%s276 + $0x70] sm:$0xff]
        %v416 = vld [vmem:[%s276 + $0x78] sm:$0xff]
        %v417 = vld [vmem:[%s276 + $0x80] sm:$0xff]
        %v418 = vld [vmem:[%s276 + $0x88] sm:$0xff]
        %v419 = vld [vmem:[%s276 + $0x90] sm:$0xff]
        %v420 = vld [vmem:[%s276 + $0x98] sm:$0xff]
        %v421 = vld [vmem:[%s276 + $0xa0] sm:$0xff]
        %v422 = vld [vmem:[%s276 + $0xa8] sm:$0xff]
        %v423 = vld [vmem:[%s276 + $0xb0] sm:$0xff]
        %v424 = vld [vmem:[%s276 + $0xb8] sm:$0xff]
        %v425 = vld [vmem:[%s276 + $0xc0] sm:$0xff]
        %v426 = vld [vmem:[%s276 + $0xc8] sm:$0xff]
        %v427 = vld [vmem:[%s276 + $0xd0] sm:$0xff]
        %v428 = vld [vmem:[%s276 + $0xd8] sm:$0xff]
        %v429 = vld [vmem:[%s276 + $0xe0] sm:$0xff]
        %v430 = vld [vmem:[%s276 + $0xe8] sm:$0xff]
        %v431 = vld [vmem:[%s276 + $0xf0] sm:$0xff]
        %v432 = vld [vmem:[%s276 + $0xf8] sm:$0xff]
        %v433 = vpack.c.bf16 %v402, %v401
        %v434 = vpack.c.bf16 %v404, %v403
        %v435 = vpack.c.bf16 %v406, %v405
        %v436 = vpack.c.bf16 %v408, %v407
        %v437 = vpack.c.bf16 %v410, %v409
        %v438 = vpack.c.bf16 %v412, %v411
        %v439 = vpack.c.bf16 %v414, %v413
        %v440 = vpack.c.bf16 %v416, %v415
        %v441 = vpack.c.bf16 %v418, %v417
        %v442 = vpack.c.bf16 %v420, %v419
        %v443 = vpack.c.bf16 %v422, %v421
        %v444 = vpack.c.bf16 %v424, %v423
        %v445 = vpack.c.bf16 %v426, %v425
        %v446 = vpack.c.bf16 %v428, %v427
        %v447 = vpack.c.bf16 %v430, %v429
        %v448 = vpack.c.bf16 %v432, %v431
        %v465 = vunpack.c.l.b16 %v433
        %v466 = vunpack.c.h.b16 %v433
        %v467 = vunpack.c.l.b16 %v434
        %v468 = vunpack.c.h.b16 %v434
        %v469 = vunpack.c.l.b16 %v435
        %v470 = vunpack.c.h.b16 %v435
        %v471 = vunpack.c.l.b16 %v436
        %v472 = vunpack.c.h.b16 %v436
        %v473 = vunpack.c.l.b16 %v437
        %v474 = vunpack.c.h.b16 %v437
        %v475 = vunpack.c.l.b16 %v438
        %v476 = vunpack.c.h.b16 %v438
        %v477 = vunpack.c.l.b16 %v439
        %v478 = vunpack.c.h.b16 %v439
        %v479 = vunpack.c.l.b16 %v440
        %v480 = vunpack.c.h.b16 %v440
        %v481 = vunpack.c.l.b16 %v441
        %v482 = vunpack.c.h.b16 %v441
        %v483 = vunpack.c.l.b16 %v442
        %v484 = vunpack.c.h.b16 %v442
        %v485 = vunpack.c.l.b16 %v443
        %v486 = vunpack.c.h.b16 %v443
        %v487 = vunpack.c.l.b16 %v444
        %v488 = vunpack.c.h.b16 %v444
        %v489 = vunpack.c.l.b16 %v445
        %v490 = vunpack.c.h.b16 %v445
        %v491 = vunpack.c.l.b16 %v446
        %v492 = vunpack.c.h.b16 %v446
        %v493 = vunpack.c.l.b16 %v447
        %v494 = vunpack.c.h.b16 %v447
        %v495 = vunpack.c.l.b16 %v448
        %v496 = vunpack.c.h.b16 %v448
        %v497 = vpack.c.b16 %v465, %v465
        %v498 = vpack.c.b16 %v466, %v466
        %v499 = vpack.c.b16 %v467, %v467
        %v500 = vpack.c.b16 %v468, %v468
        %v501 = vpack.c.b16 %v469, %v469
        %v502 = vpack.c.b16 %v470, %v470
        %v503 = vpack.c.b16 %v471, %v471
        %v504 = vpack.c.b16 %v472, %v472
        %v505 = vpack.c.b16 %v473, %v473
        %v506 = vpack.c.b16 %v474, %v474
        %v507 = vpack.c.b16 %v475, %v475
        %v508 = vpack.c.b16 %v476, %v476
        %v509 = vpack.c.b16 %v477, %v477
        %v510 = vpack.c.b16 %v478, %v478
        %v511 = vpack.c.b16 %v479, %v479
        %v512 = vpack.c.b16 %v480, %v480
        %v513 = vpack.c.b16 %v481, %v481
        %v514 = vpack.c.b16 %v482, %v482
        %v515 = vpack.c.b16 %v483, %v483
        %v516 = vpack.c.b16 %v484, %v484
        %v517 = vpack.c.b16 %v485, %v485
        %v518 = vpack.c.b16 %v486, %v486
        %v519 = vpack.c.b16 %v487, %v487
        %v520 = vpack.c.b16 %v488, %v488
        %v521 = vpack.c.b16 %v489, %v489
        %v522 = vpack.c.b16 %v490, %v490
        %v523 = vpack.c.b16 %v491, %v491
        %v524 = vpack.c.b16 %v492, %v492
        %v525 = vpack.c.b16 %v493, %v493
        %v526 = vpack.c.b16 %v494, %v494
        %v527 = vpack.c.b16 %v495, %v495
        %v528 = vpack.c.b16 %v496, %v496
        %vm529 = vsmask.f32 4368
        %vm530 = vmor %vm289, %vm529
        %v532 = vshrl.u32 %v497, 16
        %v534 = vrot.slane %v532, 7
        %v535 = vshll.u32 %v497, 16
        %v537 = vor.u32 %v534, %v535
        %v538 = vrot.slane %v534, 4
        %v540 = vshrl.u32 %v498, 16
        %v542 = vrot.slane %v540, 7
        %v543 = vshll.u32 %v498, 16
        %v545 = vor.u32 %v542, %v543
        %v546 = vsel %vm530, %v538, %v545
        %v547 = vrot.slane %v542, 4
        %v549 = vshrl.u32 %v499, 16
        %v551 = vrot.slane %v549, 7
        %v552 = vshll.u32 %v499, 16
        %v554 = vor.u32 %v551, %v552
        %v555 = vrot.slane %v551, 4
        %v557 = vshrl.u32 %v500, 16
        %v559 = vrot.slane %v557, 7
        %v560 = vshll.u32 %v500, 16
        %v562 = vor.u32 %v559, %v560
        %v563 = vsel %vm530, %v555, %v562
        %v564 = vrot.slane %v559, 4
        %v566 = vshrl.u32 %v501, 16
        %v568 = vrot.slane %v566, 7
        %v569 = vshll.u32 %v501, 16
        %v571 = vor.u32 %v568, %v569
        %v572 = vrot.slane %v568, 4
        %v574 = vshrl.u32 %v502, 16
        %v576 = vrot.slane %v574, 7
        %v577 = vshll.u32 %v502, 16
        %v579 = vor.u32 %v576, %v577
        %v580 = vsel %vm530, %v572, %v579
        %v581 = vrot.slane %v576, 4
        %v583 = vshrl.u32 %v503, 16
        %v585 = vrot.slane %v583, 7
        %v586 = vshll.u32 %v503, 16
        %v588 = vor.u32 %v585, %v586
        %v589 = vrot.slane %v585, 4
        %v591 = vshrl.u32 %v504, 16
        %v593 = vrot.slane %v591, 7
        %v594 = vshll.u32 %v504, 16
        %v596 = vor.u32 %v593, %v594
        %v597 = vsel %vm530, %v589, %v596
        %v598 = vrot.slane %v593, 4
        %v600 = vshrl.u32 %v505, 16
        %v602 = vrot.slane %v600, 7
        %v603 = vshll.u32 %v505, 16
        %v605 = vor.u32 %v602, %v603
        %v606 = vrot.slane %v602, 4
        %v608 = vshrl.u32 %v506, 16
        %v610 = vrot.slane %v608, 7
        %v611 = vshll.u32 %v506, 16
        %v613 = vor.u32 %v610, %v611
        %v614 = vsel %vm530, %v606, %v613
        %v615 = vrot.slane %v610, 4
        %v617 = vshrl.u32 %v507, 16
        %v619 = vrot.slane %v617, 7
        %v620 = vshll.u32 %v507, 16
        %v622 = vor.u32 %v619, %v620
        %v623 = vrot.slane %v619, 4
        %v625 = vshrl.u32 %v508, 16
        %v627 = vrot.slane %v625, 7
        %v628 = vshll.u32 %v508, 16
        %v630 = vor.u32 %v627, %v628
        %v631 = vsel %vm530, %v623, %v630
        %v632 = vrot.slane %v627, 4
        %v634 = vshrl.u32 %v509, 16
        %v636 = vrot.slane %v634, 7
        %v637 = vshll.u32 %v509, 16
        %v639 = vor.u32 %v636, %v637
        %v640 = vrot.slane %v636, 4
        %v642 = vshrl.u32 %v510, 16
        %v644 = vrot.slane %v642, 7
        %v645 = vshll.u32 %v510, 16
        %v647 = vor.u32 %v644, %v645
        %v648 = vsel %vm530, %v640, %v647
        %v649 = vrot.slane %v644, 4
        %v651 = vshrl.u32 %v511, 16
        %v653 = vrot.slane %v651, 7
        %v654 = vshll.u32 %v511, 16
        %v656 = vor.u32 %v653, %v654
        %v657 = vrot.slane %v653, 4
        %v659 = vshrl.u32 %v512, 16
        %v661 = vrot.slane %v659, 7
        %v662 = vshll.u32 %v512, 16
        %v664 = vor.u32 %v661, %v662
        %v665 = vsel %vm530, %v657, %v664
        %v666 = vrot.slane %v661, 4
        %v668 = vshrl.u32 %v513, 16
        %v670 = vrot.slane %v668, 7
        %v671 = vshll.u32 %v513, 16
        %v673 = vor.u32 %v670, %v671
        %v674 = vrot.slane %v670, 4
        %v676 = vshrl.u32 %v514, 16
        %v678 = vrot.slane %v676, 7
        %v679 = vshll.u32 %v514, 16
        %v681 = vor.u32 %v678, %v679
        %v682 = vsel %vm530, %v674, %v681
        %v683 = vrot.slane %v678, 4
        %v685 = vshrl.u32 %v515, 16
        %v687 = vrot.slane %v685, 7
        %v688 = vshll.u32 %v515, 16
        %v690 = vor.u32 %v687, %v688
        %v691 = vrot.slane %v687, 4
        %v693 = vshrl.u32 %v516, 16
        %v695 = vrot.slane %v693, 7
        %v696 = vshll.u32 %v516, 16
        %v698 = vor.u32 %v695, %v696
        %v699 = vsel %vm530, %v691, %v698
        %v700 = vrot.slane %v695, 4
        %v702 = vshrl.u32 %v517, 16
        %v704 = vrot.slane %v702, 7
        %v705 = vshll.u32 %v517, 16
        %v707 = vor.u32 %v704, %v705
        %v708 = vrot.slane %v704, 4
        %v710 = vshrl.u32 %v518, 16
        %v712 = vrot.slane %v710, 7
        %v713 = vshll.u32 %v518, 16
        %v715 = vor.u32 %v712, %v713
        %v716 = vsel %vm530, %v708, %v715
        %v717 = vrot.slane %v712, 4
        %v719 = vshrl.u32 %v519, 16
        %v721 = vrot.slane %v719, 7
        %v722 = vshll.u32 %v519, 16
        %v724 = vor.u32 %v721, %v722
        %v725 = vrot.slane %v721, 4
        %v727 = vshrl.u32 %v520, 16
        %v729 = vrot.slane %v727, 7
        %v730 = vshll.u32 %v520, 16
        %v732 = vor.u32 %v729, %v730
        %v733 = vsel %vm530, %v725, %v732
        %v734 = vrot.slane %v729, 4
        %v736 = vshrl.u32 %v521, 16
        %v738 = vrot.slane %v736, 7
        %v739 = vshll.u32 %v521, 16
        %v741 = vor.u32 %v738, %v739
        %v742 = vrot.slane %v738, 4
        %v744 = vshrl.u32 %v522, 16
        %v746 = vrot.slane %v744, 7
        %v747 = vshll.u32 %v522, 16
        %v749 = vor.u32 %v746, %v747
        %v750 = vsel %vm530, %v742, %v749
        %v751 = vrot.slane %v746, 4
        %v753 = vshrl.u32 %v523, 16
        %v755 = vrot.slane %v753, 7
        %v756 = vshll.u32 %v523, 16
        %v758 = vor.u32 %v755, %v756
        %v759 = vrot.slane %v755, 4
        %v761 = vshrl.u32 %v524, 16
        %v763 = vrot.slane %v761, 7
        %v764 = vshll.u32 %v524, 16
        %v766 = vor.u32 %v763, %v764
        %v767 = vsel %vm530, %v759, %v766
        %v768 = vrot.slane %v763, 4
        %v770 = vshrl.u32 %v525, 16
        %v772 = vrot.slane %v770, 7
        %v773 = vshll.u32 %v525, 16
        %v775 = vor.u32 %v772, %v773
        %v776 = vrot.slane %v772, 4
        %v778 = vshrl.u32 %v526, 16
        %v780 = vrot.slane %v778, 7
        %v781 = vshll.u32 %v526, 16
        %v783 = vor.u32 %v780, %v781
        %v784 = vsel %vm530, %v776, %v783
        %v785 = vrot.slane %v780, 4
        %v787 = vshrl.u32 %v527, 16
        %v789 = vrot.slane %v787, 7
        %v790 = vshll.u32 %v527, 16
        %v792 = vor.u32 %v789, %v790
        %v793 = vrot.slane %v789, 4
        %v795 = vshrl.u32 %v528, 16
        %v797 = vrot.slane %v795, 7
        %v798 = vshll.u32 %v528, 16
        %v800 = vor.u32 %v797, %v798
        %v801 = vsel %vm530, %v793, %v800
        %v802 = vrot.slane %v797, 4
        %s851 = scalar_lea.vmem [#allocation2], 12
        %vm852 = vcmask 27648
        %vm853 = vmand %vm852, %vm345
        %v854 = vld [vmem:[%s851] sm:$0xf]
        %v855 = vsel %vm853, %v537, %v854
        %856 = vst [vmem:[%s851] sm:$0xf] %v855
        %857 = vst.msk [vmem:[%s851 + $0x4] sm:$0xf] %vm279, %v546
        %v858 = vld [vmem:[%s851 + $0x8] sm:$0x1]
        %v859 = vsel %vm290, %v547, %v858
        %860 = vst [vmem:[%s851 + $0x8] sm:$0x1] %v859
        %v861 = vld [vmem:[%s851 + $0xc] sm:$0xf]
        %v862 = vsel %vm853, %v554, %v861
        %863 = vst [vmem:[%s851 + $0xc] sm:$0xf] %v862
        %864 = vst.msk [vmem:[%s851 + $0x10] sm:$0xf] %vm279, %v563
        %v865 = vld [vmem:[%s851 + $0x14] sm:$0x1]
        %v866 = vsel %vm290, %v564, %v865
        %867 = vst [vmem:[%s851 + $0x14] sm:$0x1] %v866
        %v868 = vld [vmem:[%s851 + $0x18] sm:$0xf]
        %v869 = vsel %vm853, %v571, %v868
        %870 = vst [vmem:[%s851 + $0x18] sm:$0xf] %v869
        %871 = vst.msk [vmem:[%s851 + $0x1c] sm:$0xf] %vm279, %v580
        %v872 = vld [vmem:[%s851 + $0x20] sm:$0x1]
        %v873 = vsel %vm290, %v581, %v872
        %874 = vst [vmem:[%s851 + $0x20] sm:$0x1] %v873
        %v875 = vld [vmem:[%s851 + $0x24] sm:$0xf]
        %v876 = vsel %vm853, %v588, %v875
        %877 = vst [vmem:[%s851 + $0x24] sm:$0xf] %v876
        %878 = vst.msk [vmem:[%s851 + $0x28] sm:$0xf] %vm279, %v597
        %v879 = vld [vmem:[%s851 + $0x2c] sm:$0x1]
        %v880 = vsel %vm290, %v598, %v879
        %881 = vst [vmem:[%s851 + $0x2c] sm:$0x1] %v880
        %v882 = vld [vmem:[%s851 + $0x30] sm:$0xf]
        %v883 = vsel %vm853, %v605, %v882
        %884 = vst [vmem:[%s851 + $0x30] sm:$0xf] %v883
        %885 = vst.msk [vmem:[%s851 + $0x34] sm:$0xf] %vm279, %v614
        %v886 = vld [vmem:[%s851 + $0x38] sm:$0x1]
        %v887 = vsel %vm290, %v615, %v886
        %888 = vst [vmem:[%s851 + $0x38] sm:$0x1] %v887
        %v889 = vld [vmem:[%s851 + $0x3c] sm:$0xf]
        %v890 = vsel %vm853, %v622, %v889
        %891 = vst [vmem:[%s851 + $0x3c] sm:$0xf] %v890
        %892 = vst.msk [vmem:[%s851 + $0x40] sm:$0xf] %vm279, %v631
        %v893 = vld [vmem:[%s851 + $0x44] sm:$0x1]
        %v894 = vsel %vm290, %v632, %v893
        %895 = vst [vmem:[%s851 + $0x44] sm:$0x1] %v894
        %v896 = vld [vmem:[%s851 + $0x48] sm:$0xf]
        %v897 = vsel %vm853, %v639, %v896
        %898 = vst [vmem:[%s851 + $0x48] sm:$0xf] %v897
        %899 = vst.msk [vmem:[%s851 + $0x4c] sm:$0xf] %vm279, %v648
        %v900 = vld [vmem:[%s851 + $0x50] sm:$0x1]
        %v901 = vsel %vm290, %v649, %v900
        %902 = vst [vmem:[%s851 + $0x50] sm:$0x1] %v901
        %v903 = vld [vmem:[%s851 + $0x54] sm:$0xf]
        %v904 = vsel %vm853, %v656, %v903
        %905 = vst [vmem:[%s851 + $0x54] sm:$0xf] %v904
        %906 = vst.msk [vmem:[%s851 + $0x58] sm:$0xf] %vm279, %v665
        %v907 = vld [vmem:[%s851 + $0x5c] sm:$0x1]
        %v908 = vsel %vm290, %v666, %v907
        %909 = vst [vmem:[%s851 + $0x5c] sm:$0x1] %v908
        %v910 = vld [vmem:[%s851 + $0x60] sm:$0xf]
        %v911 = vsel %vm853, %v673, %v910
        %912 = vst [vmem:[%s851 + $0x60] sm:$0xf] %v911
        %913 = vst.msk [vmem:[%s851 + $0x64] sm:$0xf] %vm279, %v682
        %v914 = vld [vmem:[%s851 + $0x68] sm:$0x1]
        %v915 = vsel %vm290, %v683, %v914
        %916 = vst [vmem:[%s851 + $0x68] sm:$0x1] %v915
        %v917 = vld [vmem:[%s851 + $0x6c] sm:$0xf]
        %v918 = vsel %vm853, %v690, %v917
        %919 = vst [vmem:[%s851 + $0x6c] sm:$0xf] %v918
        %920 = vst.msk [vmem:[%s851 + $0x70] sm:$0xf] %vm279, %v699
        %v921 = vld [vmem:[%s851 + $0x74] sm:$0x1]
        %v922 = vsel %vm290, %v700, %v921
        %923 = vst [vmem:[%s851 + $0x74] sm:$0x1] %v922
        %v924 = vld [vmem:[%s851 + $0x78] sm:$0xf]
        %v925 = vsel %vm853, %v707, %v924
        %926 = vst [vmem:[%s851 + $0x78] sm:$0xf] %v925
        %927 = vst.msk [vmem:[%s851 + $0x7c] sm:$0xf] %vm279, %v716
        %v928 = vld [vmem:[%s851 + $0x80] sm:$0x1]
        %v929 = vsel %vm290, %v717, %v928
        %930 = vst [vmem:[%s851 + $0x80] sm:$0x1] %v929
        %v931 = vld [vmem:[%s851 + $0x84] sm:$0xf]
        %v932 = vsel %vm853, %v724, %v931
        %933 = vst [vmem:[%s851 + $0x84] sm:$0xf] %v932
        %934 = vst.msk [vmem:[%s851 + $0x88] sm:$0xf] %vm279, %v733
        %v935 = vld [vmem:[%s851 + $0x8c] sm:$0x1]
        %v936 = vsel %vm290, %v734, %v935
        %937 = vst [vmem:[%s851 + $0x8c] sm:$0x1] %v936
        %v938 = vld [vmem:[%s851 + $0x90] sm:$0xf]
        %v939 = vsel %vm853, %v741, %v938
        %940 = vst [vmem:[%s851 + $0x90] sm:$0xf] %v939
        %941 = vst.msk [vmem:[%s851 + $0x94] sm:$0xf] %vm279, %v750
        %v942 = vld [vmem:[%s851 + $0x98] sm:$0x1]
        %v943 = vsel %vm290, %v751, %v942
        %944 = vst [vmem:[%s851 + $0x98] sm:$0x1] %v943
        %v945 = vld [vmem:[%s851 + $0x9c] sm:$0xf]
        %v946 = vsel %vm853, %v758, %v945
        %947 = vst [vmem:[%s851 + $0x9c] sm:$0xf] %v946
        %948 = vst.msk [vmem:[%s851 + $0xa0] sm:$0xf] %vm279, %v767
        %v949 = vld [vmem:[%s851 + $0xa4] sm:$0x1]
        %v950 = vsel %vm290, %v768, %v949
        %951 = vst [vmem:[%s851 + $0xa4] sm:$0x1] %v950
        %v952 = vld [vmem:[%s851 + $0xa8] sm:$0xf]
        %v953 = vsel %vm853, %v775, %v952
        %954 = vst [vmem:[%s851 + $0xa8] sm:$0xf] %v953
        %955 = vst.msk [vmem:[%s851 + $0xac] sm:$0xf] %vm279, %v784
        %v956 = vld [vmem:[%s851 + $0xb0] sm:$0x1]
        %v957 = vsel %vm290, %v785, %v956
        %958 = vst [vmem:[%s851 + $0xb0] sm:$0x1] %v957
        %v959 = vld [vmem:[%s851 + $0xb4] sm:$0xf]
        %v960 = vsel %vm853, %v792, %v959
        %961 = vst [vmem:[%s851 + $0xb4] sm:$0xf] %v960
        %962 = vst.msk [vmem:[%s851 + $0xb8] sm:$0xf] %vm279, %v801
        %v963 = vld [vmem:[%s851 + $0xbc] sm:$0x1]
        %v964 = vsel %vm290, %v802, %v963
        %965 = vst [vmem:[%s851 + $0xbc] sm:$0x1] %v964
        %v966 = vld [vmem:[#allocation2] sm:$0xf]
        %v967 = vld [vmem:[#allocation2 + $0x4] sm:$0xf]
        %v968 = vld [vmem:[#allocation2 + $0xc] sm:$0xf]
        %v969 = vld [vmem:[#allocation2 + $0x10] sm:$0xf]
        %v970 = vld [vmem:[#allocation2 + $0x18] sm:$0xf]
        %v971 = vld [vmem:[#allocation2 + $0x1c] sm:$0xf]
        %v972 = vld [vmem:[#allocation2 + $0x24] sm:$0xf]
        %v973 = vld [vmem:[#allocation2 + $0x28] sm:$0xf]
        %v974 = vld [vmem:[#allocation2 + $0x30] sm:$0xf]
        %v975 = vld [vmem:[#allocation2 + $0x34] sm:$0xf]
        %v976 = vld [vmem:[#allocation2 + $0x3c] sm:$0xf]
        %v977 = vld [vmem:[#allocation2 + $0x40] sm:$0xf]
        %v978 = vld [vmem:[#allocation2 + $0x48] sm:$0xf]
        %v979 = vld [vmem:[#allocation2 + $0x4c] sm:$0xf]
        %v980 = vld [vmem:[#allocation2 + $0x54] sm:$0xf]
        %v981 = vld [vmem:[#allocation2 + $0x58] sm:$0xf]
        %v982 = vld [vmem:[#allocation2 + $0x60] sm:$0xf]
        %v983 = vld [vmem:[#allocation2 + $0x64] sm:$0xf]
        %v984 = vld [vmem:[#allocation2 + $0x6c] sm:$0xf]
        %v985 = vld [vmem:[#allocation2 + $0x70] sm:$0xf]
        %v986 = vld [vmem:[#allocation2 + $0x78] sm:$0xf]
        %v987 = vld [vmem:[#allocation2 + $0x7c] sm:$0xf]
        %v988 = vld [vmem:[#allocation2 + $0x84] sm:$0xf]
        %v989 = vld [vmem:[#allocation2 + $0x88] sm:$0xf]
        %v990 = vld [vmem:[#allocation2 + $0x90] sm:$0xf]
        %v991 = vld [vmem:[#allocation2 + $0x94] sm:$0xf]
        %v992 = vld [vmem:[#allocation2 + $0x9c] sm:$0xf]
        %v993 = vld [vmem:[#allocation2 + $0xa0] sm:$0xf]
        %v994 = vld [vmem:[#allocation2 + $0xa8] sm:$0xf]
        %v995 = vld [vmem:[#allocation2 + $0xac] sm:$0xf]
        %v996 = vld [vmem:[#allocation2 + $0xb4] sm:$0xf]
        %v997 = vld [vmem:[#allocation2 + $0xb8] sm:$0xf]
        %v998 = vld [vmem:[%s1] sm:$0x3]
        %v999 = vld [vmem:[#allocation2 + $0x8] sm:$0x1]
        %v1000 = vld [vmem:[#allocation2 + $0x14] sm:$0x1]
        %v1001 = vld [vmem:[#allocation2 + $0x20] sm:$0x1]
        %v1002 = vld [vmem:[#allocation2 + $0x2c] sm:$0x1]
        %v1003 = vld [vmem:[#allocation2 + $0x38] sm:$0x1]
        %v1004 = vld [vmem:[#allocation2 + $0x44] sm:$0x1]
        %v1005 = vld [vmem:[#allocation2 + $0x50] sm:$0x1]
        %v1006 = vld [vmem:[#allocation2 + $0x5c] sm:$0x1]
        %v1007 = vld [vmem:[#allocation2 + $0x68] sm:$0x1]
        %v1008 = vld [vmem:[#allocation2 + $0x74] sm:$0x1]
        %v1009 = vld [vmem:[#allocation2 + $0x80] sm:$0x1]
        %v1010 = vld [vmem:[#allocation2 + $0x8c] sm:$0x1]
        %v1011 = vld [vmem:[#allocation2 + $0x98] sm:$0x1]
        %v1012 = vld [vmem:[#allocation2 + $0xa4] sm:$0x1]
        %v1013 = vld [vmem:[#allocation2 + $0xb0] sm:$0x1]
        %v1014 = vld [vmem:[#allocation2 + $0xbc] sm:$0x1]
        %vm1015 = vsmask.f32 3328
        %vm1016 = vsmask.f32 7440
        %vm1017 = vmor %vm1015, %vm1016
        %v1019 = vshrl.u32 %v966, 16
        %v1021 = vrot.slane %v1019, 4
        %v1022 = vshll.u32 %v966, 16
        %v1024 = vrot.slane %v1022, 5
        %v1025 = vor.u32 %v1021, %v1024
        %v1026 = vrot.slane %v1025, 4
        %v1028 = vshll.u32 %v967, 16
        %v1030 = vrot.slane %v1028, 5
        %v1031 = vsel %vm1017, %v1026, %v1030
        %v1032 = vshrl.u32 %v967, 16
        %v1034 = vrot.slane %v1032, 4
        %v1035 = vor.u32 %v1034, %v1030
        %v1036 = vrot.slane %v1035, 4
        %v1038 = vshll.u32 %v999, 16
        %v1040 = vrot.slane %v1038, 5
        %v1041 = vsel %vm1017, %v1036, %v1040
        %v1043 = vshrl.u32 %v968, 16
        %v1045 = vrot.slane %v1043, 4
        %v1046 = vshll.u32 %v968, 16
        %v1048 = vrot.slane %v1046, 5
        %v1049 = vor.u32 %v1045, %v1048
        %v1050 = vrot.slane %v1049, 4
        %v1052 = vshll.u32 %v969, 16
        %v1054 = vrot.slane %v1052, 5
        %v1055 = vsel %vm1017, %v1050, %v1054
        %v1056 = vshrl.u32 %v969, 16
        %v1058 = vrot.slane %v1056, 4
        %v1059 = vor.u32 %v1058, %v1054
        %v1060 = vrot.slane %v1059, 4
        %v1062 = vshll.u32 %v1000, 16
        %v1064 = vrot.slane %v1062, 5
        %v1065 = vsel %vm1017, %v1060, %v1064
        %v1067 = vshrl.u32 %v970, 16
        %v1069 = vrot.slane %v1067, 4
        %v1070 = vshll.u32 %v970, 16
        %v1072 = vrot.slane %v1070, 5
        %v1073 = vor.u32 %v1069, %v1072
        %v1074 = vrot.slane %v1073, 4
        %v1076 = vshll.u32 %v971, 16
        %v1078 = vrot.slane %v1076, 5
        %v1079 = vsel %vm1017, %v1074, %v1078
        %v1080 = vshrl.u32 %v971, 16
        %v1082 = vrot.slane %v1080, 4
        %v1083 = vor.u32 %v1082, %v1078
        %v1084 = vrot.slane %v1083, 4
        %v1086 = vshll.u32 %v1001, 16
        %v1088 = vrot.slane %v1086, 5
        %v1089 = vsel %vm1017, %v1084, %v1088
        %v1091 = vshrl.u32 %v972, 16
        %v1093 = vrot.slane %v1091, 4
        %v1094 = vshll.u32 %v972, 16
        %v1096 = vrot.slane %v1094, 5
        %v1097 = vor.u32 %v1093, %v1096
        %v1098 = vrot.slane %v1097, 4
        %v1100 = vshll.u32 %v973, 16
        %v1102 = vrot.slane %v1100, 5
        %v1103 = vsel %vm1017, %v1098, %v1102
        %v1104 = vshrl.u32 %v973, 16
        %v1106 = vrot.slane %v1104, 4
        %v1107 = vor.u32 %v1106, %v1102
        %v1108 = vrot.slane %v1107, 4
        %v1110 = vshll.u32 %v1002, 16
        %v1112 = vrot.slane %v1110, 5
        %v1113 = vsel %vm1017, %v1108, %v1112
        %v1115 = vshrl.u32 %v974, 16
        %v1117 = vrot.slane %v1115, 4
        %v1118 = vshll.u32 %v974, 16
        %v1120 = vrot.slane %v1118, 5
        %v1121 = vor.u32 %v1117, %v1120
        %v1122 = vrot.slane %v1121, 4
        %v1124 = vshll.u32 %v975, 16
        %v1126 = vrot.slane %v1124, 5
        %v1127 = vsel %vm1017, %v1122, %v1126
        %v1128 = vshrl.u32 %v975, 16
        %v1130 = vrot.slane %v1128, 4
        %v1131 = vor.u32 %v1130, %v1126
        %v1132 = vrot.slane %v1131, 4
        %v1134 = vshll.u32 %v1003, 16
        %v1136 = vrot.slane %v1134, 5
        %v1137 = vsel %vm1017, %v1132, %v1136
        %v1139 = vshrl.u32 %v976, 16
        %v1141 = vrot.slane %v1139, 4
        %v1142 = vshll.u32 %v976, 16
        %v1144 = vrot.slane %v1142, 5
        %v1145 = vor.u32 %v1141, %v1144
        %v1146 = vrot.slane %v1145, 4
        %v1148 = vshll.u32 %v977, 16
        %v1150 = vrot.slane %v1148, 5
        %v1151 = vsel %vm1017, %v1146, %v1150
        %v1152 = vshrl.u32 %v977, 16
        %v1154 = vrot.slane %v1152, 4
        %v1155 = vor.u32 %v1154, %v1150
        %v1156 = vrot.slane %v1155, 4
        %v1158 = vshll.u32 %v1004, 16
        %v1160 = vrot.slane %v1158, 5
        %v1161 = vsel %vm1017, %v1156, %v1160
        %v1163 = vshrl.u32 %v978, 16
        %v1165 = vrot.slane %v1163, 4
        %v1166 = vshll.u32 %v978, 16
        %v1168 = vrot.slane %v1166, 5
        %v1169 = vor.u32 %v1165, %v1168
        %v1170 = vrot.slane %v1169, 4
        %v1172 = vshll.u32 %v979, 16
        %v1174 = vrot.slane %v1172, 5
        %v1175 = vsel %vm1017, %v1170, %v1174
        %v1176 = vshrl.u32 %v979, 16
        %v1178 = vrot.slane %v1176, 4
        %v1179 = vor.u32 %v1178, %v1174
        %v1180 = vrot.slane %v1179, 4
        %v1182 = vshll.u32 %v1005, 16
        %v1184 = vrot.slane %v1182, 5
        %v1185 = vsel %vm1017, %v1180, %v1184
        %v1187 = vshrl.u32 %v980, 16
        %v1189 = vrot.slane %v1187, 4
        %v1190 = vshll.u32 %v980, 16
        %v1192 = vrot.slane %v1190, 5
        %v1193 = vor.u32 %v1189, %v1192
        %v1194 = vrot.slane %v1193, 4
        %v1196 = vshll.u32 %v981, 16
        %v1198 = vrot.slane %v1196, 5
        %v1199 = vsel %vm1017, %v1194, %v1198
        %v1200 = vshrl.u32 %v981, 16
        %v1202 = vrot.slane %v1200, 4
        %v1203 = vor.u32 %v1202, %v1198
        %v1204 = vrot.slane %v1203, 4
        %v1206 = vshll.u32 %v1006, 16
        %v1208 = vrot.slane %v1206, 5
        %v1209 = vsel %vm1017, %v1204, %v1208
        %v1211 = vshrl.u32 %v982, 16
        %v1213 = vrot.slane %v1211, 4
        %v1214 = vshll.u32 %v982, 16
        %v1216 = vrot.slane %v1214, 5
        %v1217 = vor.u32 %v1213, %v1216
        %v1218 = vrot.slane %v1217, 4
        %v1220 = vshll.u32 %v983, 16
        %v1222 = vrot.slane %v1220, 5
        %v1223 = vsel %vm1017, %v1218, %v1222
        %v1224 = vshrl.u32 %v983, 16
        %v1226 = vrot.slane %v1224, 4
        %v1227 = vor.u32 %v1226, %v1222
        %v1228 = vrot.slane %v1227, 4
        %v1230 = vshll.u32 %v1007, 16
        %v1232 = vrot.slane %v1230, 5
        %v1233 = vsel %vm1017, %v1228, %v1232
        %v1235 = vshrl.u32 %v984, 16
        %v1237 = vrot.slane %v1235, 4
        %v1238 = vshll.u32 %v984, 16
        %v1240 = vrot.slane %v1238, 5
        %v1241 = vor.u32 %v1237, %v1240
        %v1242 = vrot.slane %v1241, 4
        %v1244 = vshll.u32 %v985, 16
        %v1246 = vrot.slane %v1244, 5
        %v1247 = vsel %vm1017, %v1242, %v1246
        %v1248 = vshrl.u32 %v985, 16
        %v1250 = vrot.slane %v1248, 4
        %v1251 = vor.u32 %v1250, %v1246
        %v1252 = vrot.slane %v1251, 4
        %v1254 = vshll.u32 %v1008, 16
        %v1256 = vrot.slane %v1254, 5
        %v1257 = vsel %vm1017, %v1252, %v1256
        %v1259 = vshrl.u32 %v986, 16
        %v1261 = vrot.slane %v1259, 4
        %v1262 = vshll.u32 %v986, 16
        %v1264 = vrot.slane %v1262, 5
        %v1265 = vor.u32 %v1261, %v1264
        %v1266 = vrot.slane %v1265, 4
        %v1268 = vshll.u32 %v987, 16
        %v1270 = vrot.slane %v1268, 5
        %v1271 = vsel %vm1017, %v1266, %v1270
        %v1272 = vshrl.u32 %v987, 16
        %v1274 = vrot.slane %v1272, 4
        %v1275 = vor.u32 %v1274, %v1270
        %v1276 = vrot.slane %v1275, 4
        %v1278 = vshll.u32 %v1009, 16
        %v1280 = vrot.slane %v1278, 5
        %v1281 = vsel %vm1017, %v1276, %v1280
        %v1283 = vshrl.u32 %v988, 16
        %v1285 = vrot.slane %v1283, 4
        %v1286 = vshll.u32 %v988, 16
        %v1288 = vrot.slane %v1286, 5
        %v1289 = vor.u32 %v1285, %v1288
        %v1290 = vrot.slane %v1289, 4
        %v1292 = vshll.u32 %v989, 16
        %v1294 = vrot.slane %v1292, 5
        %v1295 = vsel %vm1017, %v1290, %v1294
        %v1296 = vshrl.u32 %v989, 16
        %v1298 = vrot.slane %v1296, 4
        %v1299 = vor.u32 %v1298, %v1294
        %v1300 = vrot.slane %v1299, 4
        %v1302 = vshll.u32 %v1010, 16
        %v1304 = vrot.slane %v1302, 5
        %v1305 = vsel %vm1017, %v1300, %v1304
        %v1307 = vshrl.u32 %v990, 16
        %v1309 = vrot.slane %v1307, 4
        %v1310 = vshll.u32 %v990, 16
        %v1312 = vrot.slane %v1310, 5
        %v1313 = vor.u32 %v1309, %v1312
        %v1314 = vrot.slane %v1313, 4
        %v1316 = vshll.u32 %v991, 16
        %v1318 = vrot.slane %v1316, 5
        %v1319 = vsel %vm1017, %v1314, %v1318
        %v1320 = vshrl.u32 %v991, 16
        %v1322 = vrot.slane %v1320, 4
        %v1323 = vor.u32 %v1322, %v1318
        %v1324 = vrot.slane %v1323, 4
        %v1326 = vshll.u32 %v1011, 16
        %v1328 = vrot.slane %v1326, 5
        %v1329 = vsel %vm1017, %v1324, %v1328
        %v1331 = vshrl.u32 %v992, 16
        %v1333 = vrot.slane %v1331, 4
        %v1334 = vshll.u32 %v992, 16
        %v1336 = vrot.slane %v1334, 5
        %v1337 = vor.u32 %v1333, %v1336
        %v1338 = vrot.slane %v1337, 4
        %v1340 = vshll.u32 %v993, 16
        %v1342 = vrot.slane %v1340, 5
        %v1343 = vsel %vm1017, %v1338, %v1342
        %v1344 = vshrl.u32 %v993, 16
        %v1346 = vrot.slane %v1344, 4
        %v1347 = vor.u32 %v1346, %v1342
        %v1348 = vrot.slane %v1347, 4
        %v1350 = vshll.u32 %v1012, 16
        %v1352 = vrot.slane %v1350, 5
        %v1353 = vsel %vm1017, %v1348, %v1352
        %v1355 = vshrl.u32 %v994, 16
        %v1357 = vrot.slane %v1355, 4
        %v1358 = vshll.u32 %v994, 16
        %v1360 = vrot.slane %v1358, 5
        %v1361 = vor.u32 %v1357, %v1360
        %v1362 = vrot.slane %v1361, 4
        %v1364 = vshll.u32 %v995, 16
        %v1366 = vrot.slane %v1364, 5
        %v1367 = vsel %vm1017, %v1362, %v1366
        %v1368 = vshrl.u32 %v995, 16
        %v1370 = vrot.slane %v1368, 4
        %v1371 = vor.u32 %v1370, %v1366
        %v1372 = vrot.slane %v1371, 4
        %v1374 = vshll.u32 %v1013, 16
        %v1376 = vrot.slane %v1374, 5
        %v1377 = vsel %vm1017, %v1372, %v1376
        %v1379 = vshrl.u32 %v996, 16
        %v1381 = vrot.slane %v1379, 4
        %v1382 = vshll.u32 %v996, 16
        %v1384 = vrot.slane %v1382, 5
        %v1385 = vor.u32 %v1381, %v1384
        %v1386 = vrot.slane %v1385, 4
        %v1388 = vshll.u32 %v997, 16
        %v1390 = vrot.slane %v1388, 5
        %v1391 = vsel %vm1017, %v1386, %v1390
        %v1392 = vshrl.u32 %v997, 16
        %v1394 = vrot.slane %v1392, 4
        %v1395 = vor.u32 %v1394, %v1390
        %v1396 = vrot.slane %v1395, 4
        %v1398 = vshll.u32 %v1014, 16
        %v1400 = vrot.slane %v1398, 5
        %v1401 = vsel %vm1017, %v1396, %v1400
        %s1402 = scalar_lea.vmem %s1, 2
        %v1403 = vld [vmem:[%s1402] sm:$0x3]
        %v1404 = vunpack.c.l.b16 %v1031
        %v1405 = vunpack.c.l.b16 %v1041
        %v1406 = vunpack.c.l.b16 %v1055
        %v1407 = vunpack.c.l.b16 %v1065
        %v1408 = vunpack.c.l.b16 %v1079
        %v1409 = vunpack.c.l.b16 %v1089
        %v1410 = vunpack.c.l.b16 %v1103
        %v1411 = vunpack.c.l.b16 %v1113
        %v1412 = vunpack.c.l.b16 %v1127
        %v1413 = vunpack.c.l.b16 %v1137
        %v1414 = vunpack.c.l.b16 %v1151
        %v1415 = vunpack.c.l.b16 %v1161
        %v1416 = vunpack.c.l.b16 %v1175
        %v1417 = vunpack.c.l.b16 %v1185
        %v1418 = vunpack.c.l.b16 %v1199
        %v1419 = vunpack.c.l.b16 %v1209
        %v1420 = vunpack.c.l.b16 %v1223
        %v1421 = vunpack.c.l.b16 %v1233
        %v1422 = vunpack.c.l.b16 %v1247
        %v1423 = vunpack.c.l.b16 %v1257
        %v1424 = vunpack.c.l.b16 %v1271
        %v1425 = vunpack.c.l.b16 %v1281
        %v1426 = vunpack.c.l.b16 %v1295
        %v1427 = vunpack.c.l.b16 %v1305
        %v1428 = vunpack.c.l.b16 %v1319
        %v1429 = vunpack.c.l.b16 %v1329
        %v1430 = vunpack.c.l.b16 %v1343
        %v1431 = vunpack.c.l.b16 %v1353
        %v1432 = vunpack.c.l.b16 %v1367
        %v1433 = vunpack.c.l.b16 %v1377
        %v1434 = vunpack.c.l.b16 %v1391
        %v1435 = vunpack.c.l.b16 %v1401
        %v1436 = vpack.c.b16 %v1405, %v1404
        %v1437 = vpack.c.b16 %v1407, %v1406
        %v1438 = vpack.c.b16 %v1409, %v1408
        %v1439 = vpack.c.b16 %v1411, %v1410
        %v1440 = vpack.c.b16 %v1413, %v1412
        %v1441 = vpack.c.b16 %v1415, %v1414
        %v1442 = vpack.c.b16 %v1417, %v1416
        %v1443 = vpack.c.b16 %v1419, %v1418
        %v1444 = vpack.c.b16 %v1421, %v1420
        %v1445 = vpack.c.b16 %v1423, %v1422
        %v1446 = vpack.c.b16 %v1425, %v1424
        %v1447 = vpack.c.b16 %v1427, %v1426
        %v1448 = vpack.c.b16 %v1429, %v1428
        %v1449 = vpack.c.b16 %v1431, %v1430
        %v1450 = vpack.c.b16 %v1433, %v1432
        %v1451 = vpack.c.b16 %v1435, %v1434
        %vm1452 = vcmask 31744
        %v1454 = vsel %vm1452, %v1436, 0
        %v1457 = vsel %vm1452, %v1437, 0
        %v1460 = vsel %vm1452, %v1438, 0
        %v1463 = vsel %vm1452, %v1439, 0
        %v1466 = vsel %vm1452, %v1440, 0
        %v1469 = vsel %vm1452, %v1441, 0
        %v1472 = vsel %vm1452, %v1442, 0
        %v1475 = vsel %vm1452, %v1443, 0
        %v1478 = vsel %vm1452, %v1444, 0
        %v1481 = vsel %vm1452, %v1445, 0
        %v1484 = vsel %vm1452, %v1446, 0
        %v1487 = vsel %vm1452, %v1447, 0
        %v1490 = vsel %vm1452, %v1448, 0
        %v1493 = vsel %vm1452, %v1449, 0
        %v1496 = vsel %vm1452, %v1450, 0
        %v1499 = vsel %vm1452, %v1451, 0
        %vm1501 = vcmask 1041408
        %v1503 = vsel %vm1501, %v1403, 0
        %1505 = vmatprep.subr.bf16.mxu0 0
        %1506 = vmatpush1.bf16.msra.mxu0 %v1503
        %1507 = vmatprep.subr.bf16.mxu0 0
        %1508 = vmatpush1.bf16.msra.mxu0 0
        %1509 = vmatprep.subr.bf16.mxu0 0
        %1510 = vmatpush1.bf16.msra.mxu0 0
        %1511 = vmatprep.subr.bf16.mxu0 0
        %1512 = vmatpush1.bf16.msra.mxu0 0
        %1513 = vmatprep.subr.bf16.mxu0 0
        %1514 = vmatpush1.bf16.msra.mxu0 0
        %1515 = vmatprep.subr.bf16.mxu0 0
        %1516 = vmatpush1.bf16.msra.mxu0 0
        %1517 = vmatprep.subr.bf16.mxu0 0
        %1518 = vmatpush1.bf16.msra.mxu0 0
        %1519 = vmatprep.subr.bf16.mxu0 0
        %1520 = vmatpush1.bf16.msra.mxu0 0
        %1521 = vmatprep.subr.bf16.mxu0 0
        %1522 = vmatpush1.bf16.msra.mxu0 0
        %1523 = vmatprep.subr.bf16.mxu0 0
        %1524 = vmatpush1.bf16.msra.mxu0 0
        %1525 = vmatprep.subr.bf16.mxu0 0
        %1526 = vmatpush1.bf16.msra.mxu0 0
        %1527 = vmatprep.subr.bf16.mxu0 0
        %1528 = vmatpush1.bf16.msra.mxu0 0
        %1529 = vmatprep.subr.bf16.mxu0 0
        %1530 = vmatpush1.bf16.msra.mxu0 0
        %1531 = vmatprep.subr.bf16.mxu0 0
        %1532 = vmatpush1.bf16.msra.mxu0 0
        %1533 = vmatprep.subr.bf16.mxu0 0
        %1534 = vmatpush1.bf16.msra.mxu0 0
        %1535 = vmatprep.subr.bf16.mxu0 0
        %1536 = vmatpush1.bf16.msra.mxu0 0
        %1537 = vmatprep.mubr.bf16.mxu0 0
        %1538 = vmatmul.mubr.bf16.gmra.mrb[0].mxu0 %v1454
        %v1539 = vpop.f32.mrb[0].mxu0
        %v1540 = vadd.f32 0.0, %v1539
        %v1541 = vpop.f32.mrb[0].mxu0
        %v1542 = vpop.f32.mrb[0].mxu0
        %v1543 = vadd.f32 0.0, %v1542
        %v1544 = vpop.f32.mrb[0].mxu0
        %1545 = vmatprep.mubr.bf16.mxu0 0
        %1546 = vmatmul.mubr.bf16.gmra.mrb[0].mxu0 %v1457
        %v1547 = vpop.f32.mrb[0].mxu0
        %v1548 = vadd.f32 0.0, %v1547
        %v1549 = vpop.f32.mrb[0].mxu0
        %v1550 = vpop.f32.mrb[0].mxu0
        %v1551 = vadd.f32 0.0, %v1550
        %v1552 = vpop.f32.mrb[0].mxu0
        %1553 = vmatprep.mubr.bf16.mxu0 0
        %1554 = vmatmul.mubr.bf16.gmra.mrb[0].mxu0 %v1460
        %v1555 = vpop.f32.mrb[0].mxu0
        %v1556 = vadd.f32 0.0, %v1555
        %v1557 = vpop.f32.mrb[0].mxu0
        %v1558 = vpop.f32.mrb[0].mxu0
        %v1559 = vadd.f32 0.0, %v1558
        %v1560 = vpop.f32.mrb[0].mxu0
        %1561 = vmatprep.mubr.bf16.mxu0 0
        %1562 = vmatmul.mubr.bf16.gmra.mrb[0].mxu0 %v1463
        %v1563 = vpop.f32.mrb[0].mxu0
        %v1564 = vadd.f32 0.0, %v1563
        %v1565 = vpop.f32.mrb[0].mxu0
        %v1566 = vpop.f32.mrb[0].mxu0
        %v1567 = vadd.f32 0.0, %v1566
        %v1568 = vpop.f32.mrb[0].mxu0
        %1569 = vmatprep.mubr.bf16.mxu0 0
        %1570 = vmatmul.mubr.bf16.gmra.mrb[0].mxu0 %v1466
        %v1571 = vpop.f32.mrb[0].mxu0
        %v1572 = vadd.f32 0.0, %v1571
        %v1573 = vpop.f32.mrb[0].mxu0
        %v1574 = vpop.f32.mrb[0].mxu0
        %v1575 = vadd.f32 0.0, %v1574
        %v1576 = vpop.f32.mrb[0].mxu0
        %1577 = vmatprep.mubr.bf16.mxu0 0
        %1578 = vmatmul.mubr.bf16.gmra.mrb[0].mxu0 %v1469
        %v1579 = vpop.f32.mrb[0].mxu0
        %v1580 = vadd.f32 0.0, %v1579
        %v1581 = vpop.f32.mrb[0].mxu0
        %v1582 = vpop.f32.mrb[0].mxu0
        %v1583 = vadd.f32 0.0, %v1582
        %v1584 = vpop.f32.mrb[0].mxu0
        %1585 = vmatprep.mubr.bf16.mxu0 0
        %1586 = vmatmul.mubr.bf16.gmra.mrb[0].mxu0 %v1472
        %v1587 = vpop.f32.mrb[0].mxu0
        %v1588 = vadd.f32 0.0, %v1587
        %v1589 = vpop.f32.mrb[0].mxu0
        %v1590 = vpop.f32.mrb[0].mxu0
        %v1591 = vadd.f32 0.0, %v1590
        %v1592 = vpop.f32.mrb[0].mxu0
        %1593 = vmatprep.mubr.bf16.mxu0 0
        %1594 = vmatmul.mubr.bf16.gmra.mrb[0].mxu0 %v1475
        %v1595 = vpop.f32.mrb[0].mxu0
        %v1596 = vadd.f32 0.0, %v1595
        %v1597 = vpop.f32.mrb[0].mxu0
        %v1598 = vpop.f32.mrb[0].mxu0
        %v1599 = vadd.f32 0.0, %v1598
        %v1600 = vpop.f32.mrb[0].mxu0
        %1601 = vmatprep.mubr.bf16.mxu0 0
        %1602 = vmatmul.mubr.bf16.gmra.mrb[0].mxu0 %v1478
        %v1603 = vpop.f32.mrb[0].mxu0
        %v1604 = vadd.f32 0.0, %v1603
        %v1605 = vpop.f32.mrb[0].mxu0
        %v1606 = vpop.f32.mrb[0].mxu0
        %v1607 = vadd.f32 0.0, %v1606
        %v1608 = vpop.f32.mrb[0].mxu0
        %1609 = vmatprep.mubr.bf16.mxu0 0
        %1610 = vmatmul.mubr.bf16.gmra.mrb[0].mxu0 %v1481
        %v1611 = vpop.f32.mrb[0].mxu0
        %v1612 = vadd.f32 0.0, %v1611
        %v1613 = vpop.f32.mrb[0].mxu0
        %v1614 = vpop.f32.mrb[0].mxu0
        %v1615 = vadd.f32 0.0, %v1614
        %v1616 = vpop.f32.mrb[0].mxu0
        %1617 = vmatprep.mubr.bf16.mxu0 0
        %1618 = vmatmul.mubr.bf16.gmra.mrb[0].mxu0 %v1484
        %v1619 = vpop.f32.mrb[0].mxu0
        %v1620 = vadd.f32 0.0, %v1619
        %v1621 = vpop.f32.mrb[0].mxu0
        %v1622 = vpop.f32.mrb[0].mxu0
        %v1623 = vadd.f32 0.0, %v1622
        %v1624 = vpop.f32.mrb[0].mxu0
        %1625 = vmatprep.mubr.bf16.mxu0 0
        %1626 = vmatmul.mubr.bf16.gmra.mrb[0].mxu0 %v1487
        %v1627 = vpop.f32.mrb[0].mxu0
        %v1628 = vadd.f32 0.0, %v1627
        %v1629 = vpop.f32.mrb[0].mxu0
        %v1630 = vpop.f32.mrb[0].mxu0
        %v1631 = vadd.f32 0.0, %v1630
        %v1632 = vpop.f32.mrb[0].mxu0
        %1633 = vmatprep.mubr.bf16.mxu0 0
        %1634 = vmatmul.mubr.bf16.gmra.mrb[0].mxu0 %v1490
        %v1635 = vpop.f32.mrb[0].mxu0
        %v1636 = vadd.f32 0.0, %v1635
        %v1637 = vpop.f32.mrb[0].mxu0
        %v1638 = vpop.f32.mrb[0].mxu0
        %v1639 = vadd.f32 0.0, %v1638
        %v1640 = vpop.f32.mrb[0].mxu0
        %1641 = vmatprep.mubr.bf16.mxu0 0
        %1642 = vmatmul.mubr.bf16.gmra.mrb[0].mxu0 %v1493
        %v1643 = vpop.f32.mrb[0].mxu0
        %v1644 = vadd.f32 0.0, %v1643
        %v1645 = vpop.f32.mrb[0].mxu0
        %v1646 = vpop.f32.mrb[0].mxu0
        %v1647 = vadd.f32 0.0, %v1646
        %v1648 = vpop.f32.mrb[0].mxu0
        %1649 = vmatprep.mubr.bf16.mxu0 0
        %1650 = vmatmul.mubr.bf16.gmra.mrb[0].mxu0 %v1496
        %v1651 = vpop.f32.mrb[0].mxu0
        %v1652 = vadd.f32 0.0, %v1651
        %v1653 = vpop.f32.mrb[0].mxu0
        %v1654 = vpop.f32.mrb[0].mxu0
        %v1655 = vadd.f32 0.0, %v1654
        %v1656 = vpop.f32.mrb[0].mxu0
        %1657 = vmatprep.mubr.bf16.mxu0 0
        %1658 = vmatmul.mubr.bf16.gmra.mrb[0].mxu0 %v1499
        %v1659 = vpop.f32.mrb[0].mxu0
        %v1660 = vadd.f32 0.0, %v1659
        %v1661 = vpop.f32.mrb[0].mxu0
        %v1662 = vpop.f32.mrb[0].mxu0
        %v1663 = vadd.f32 0.0, %v1662
        %v1664 = vpop.f32.mrb[0].mxu0
        %1665 = vdwg.mxu0
        %v1698 = vunpack.c.l.b16 %v966
        %v1699 = vunpack.c.l.b16 %v967
        %v1700 = vunpack.c.l.b16 %v968
        %v1701 = vunpack.c.l.b16 %v969
        %v1702 = vunpack.c.l.b16 %v970
        %v1703 = vunpack.c.l.b16 %v971
        %v1704 = vunpack.c.l.b16 %v972
        %v1705 = vunpack.c.l.b16 %v973
        %v1706 = vunpack.c.l.b16 %v974
        %v1707 = vunpack.c.l.b16 %v975
        %v1708 = vunpack.c.l.b16 %v976
        %v1709 = vunpack.c.l.b16 %v977
        %v1710 = vunpack.c.l.b16 %v978
        %v1711 = vunpack.c.l.b16 %v979
        %v1712 = vunpack.c.l.b16 %v980
        %v1713 = vunpack.c.l.b16 %v981
        %v1714 = vunpack.c.l.b16 %v982
        %v1715 = vunpack.c.l.b16 %v983
        %v1716 = vunpack.c.l.b16 %v984
        %v1717 = vunpack.c.l.b16 %v985
        %v1718 = vunpack.c.l.b16 %v986
        %v1719 = vunpack.c.l.b16 %v987
        %v1720 = vunpack.c.l.b16 %v988
        %v1721 = vunpack.c.l.b16 %v989
        %v1722 = vunpack.c.l.b16 %v990
        %v1723 = vunpack.c.l.b16 %v991
        %v1724 = vunpack.c.l.b16 %v992
        %v1725 = vunpack.c.l.b16 %v993
        %v1726 = vunpack.c.l.b16 %v994
        %v1727 = vunpack.c.l.b16 %v995
        %v1728 = vunpack.c.l.b16 %v996
        %v1729 = vunpack.c.l.b16 %v997
        %v1730 = vpack.c.b16 %v1699, %v1698
        %v1731 = vpack.c.b16 %v1701, %v1700
        %v1732 = vpack.c.b16 %v1703, %v1702
        %v1733 = vpack.c.b16 %v1705, %v1704
        %v1734 = vpack.c.b16 %v1707, %v1706
        %v1735 = vpack.c.b16 %v1709, %v1708
        %v1736 = vpack.c.b16 %v1711, %v1710
        %v1737 = vpack.c.b16 %v1713, %v1712
        %v1738 = vpack.c.b16 %v1715, %v1714
        %v1739 = vpack.c.b16 %v1717, %v1716
        %v1740 = vpack.c.b16 %v1719, %v1718
        %v1741 = vpack.c.b16 %v1721, %v1720
        %v1742 = vpack.c.b16 %v1723, %v1722
        %v1743 = vpack.c.b16 %v1725, %v1724
        %v1744 = vpack.c.b16 %v1727, %v1726
        %v1745 = vpack.c.b16 %v1729, %v1728
        %v1747 = vsel %vm1452, %v1730, 0
        %v1750 = vsel %vm1452, %v1731, 0
        %v1753 = vsel %vm1452, %v1732, 0
        %v1756 = vsel %vm1452, %v1733, 0
        %v1759 = vsel %vm1452, %v1734, 0
        %v1762 = vsel %vm1452, %v1735, 0
        %v1765 = vsel %vm1452, %v1736, 0
        %v1768 = vsel %vm1452, %v1737, 0
        %v1771 = vsel %vm1452, %v1738, 0
        %v1774 = vsel %vm1452, %v1739, 0
        %v1777 = vsel %vm1452, %v1740, 0
        %v1780 = vsel %vm1452, %v1741, 0
        %v1783 = vsel %vm1452, %v1742, 0
        %v1786 = vsel %vm1452, %v1743, 0
        %v1789 = vsel %vm1452, %v1744, 0
        %v1792 = vsel %vm1452, %v1745, 0
        %v1795 = vsel %vm1501, %v998, 0
        %1797 = vmatprep.subr.bf16.mxu0 0
        %1798 = vmatpush1.bf16.msra.mxu0 %v1795
        %1799 = vmatprep.subr.bf16.mxu0 0
        %1800 = vmatpush1.bf16.msra.mxu0 0
        %1801 = vmatprep.subr.bf16.mxu0 0
        %1802 = vmatpush1.bf16.msra.mxu0 0
        %1803 = vmatprep.subr.bf16.mxu0 0
        %1804 = vmatpush1.bf16.msra.mxu0 0
        %1805 = vmatprep.subr.bf16.mxu0 0
        %1806 = vmatpush1.bf16.msra.mxu0 0
        %1807 = vmatprep.subr.bf16.mxu0 0
        %1808 = vmatpush1.bf16.msra.mxu0 0
        %1809 = vmatprep.subr.bf16.mxu0 0
        %1810 = vmatpush1.bf16.msra.mxu0 0
        %1811 = vmatprep.subr.bf16.mxu0 0
        %1812 = vmatpush1.bf16.msra.mxu0 0
        %1813 = vmatprep.subr.bf16.mxu0 0
        %1814 = vmatpush1.bf16.msra.mxu0 0
        %1815 = vmatprep.subr.bf16.mxu0 0
        %1816 = vmatpush1.bf16.msra.mxu0 0
        %1817 = vmatprep.subr.bf16.mxu0 0
        %1818 = vmatpush1.bf16.msra.mxu0 0
        %1819 = vmatprep.subr.bf16.mxu0 0
        %1820 = vmatpush1.bf16.msra.mxu0 0
        %1821 = vmatprep.subr.bf16.mxu0 0
        %1822 = vmatpush1.bf16.msra.mxu0 0
        %1823 = vmatprep.subr.bf16.mxu0 0
        %1824 = vmatpush1.bf16.msra.mxu0 0
        %1825 = vmatprep.subr.bf16.mxu0 0
        %1826 = vmatpush1.bf16.msra.mxu0 0
        %1827 = vmatprep.subr.bf16.mxu0 0
        %1828 = vmatpush1.bf16.msra.mxu0 0
        %1829 = vmatprep.mubr.bf16.mxu0 0
        %1830 = vmatmul.mubr.bf16.gmra.mrb[0].mxu0 %v1747
        %v1831 = vpop.f32.mrb[0].mxu0
        %v1832 = vadd.f32 %v1540, %v1831
        %v1833 = vpop.f32.mrb[0].mxu0
        %v1834 = vpop.f32.mrb[0].mxu0
        %v1835 = vadd.f32 %v1543, %v1834
        %v1836 = vpop.f32.mrb[0].mxu0
        %1837 = vmatprep.mubr.bf16.mxu0 0
        %1838 = vmatmul.mubr.bf16.gmra.mrb[0].mxu0 %v1750
        %v1839 = vpop.f32.mrb[0].mxu0
        %v1840 = vadd.f32 %v1548, %v1839
        %v1841 = vpop.f32.mrb[0].mxu0
        %v1842 = vpop.f32.mrb[0].mxu0
        %v1843 = vadd.f32 %v1551, %v1842
        %v1844 = vpop.f32.mrb[0].mxu0
        %1845 = vmatprep.mubr.bf16.mxu0 0
        %1846 = vmatmul.mubr.bf16.gmra.mrb[0].mxu0 %v1753
        %v1847 = vpop.f32.mrb[0].mxu0
        %v1848 = vadd.f32 %v1556, %v1847
        %v1849 = vpop.f32.mrb[0].mxu0
        %v1850 = vpop.f32.mrb[0].mxu0
        %v1851 = vadd.f32 %v1559, %v1850
        %v1852 = vpop.f32.mrb[0].mxu0
        %1853 = vmatprep.mubr.bf16.mxu0 0
        %1854 = vmatmul.mubr.bf16.gmra.mrb[0].mxu0 %v1756
        %v1855 = vpop.f32.mrb[0].mxu0
        %v1856 = vadd.f32 %v1564, %v1855
        %v1857 = vpop.f32.mrb[0].mxu0
        %v1858 = vpop.f32.mrb[0].mxu0
        %v1859 = vadd.f32 %v1567, %v1858
        %v1860 = vpop.f32.mrb[0].mxu0
        %1861 = vmatprep.mubr.bf16.mxu0 0
        %1862 = vmatmul.mubr.bf16.gmra.mrb[0].mxu0 %v1759
        %v1863 = vpop.f32.mrb[0].mxu0
        %v1864 = vadd.f32 %v1572, %v1863
        %v1865 = vpop.f32.mrb[0].mxu0
        %v1866 = vpop.f32.mrb[0].mxu0
        %v1867 = vadd.f32 %v1575, %v1866
        %v1868 = vpop.f32.mrb[0].mxu0
        %1869 = vmatprep.mubr.bf16.mxu0 0
        %1870 = vmatmul.mubr.bf16.gmra.mrb[0].mxu0 %v1762
        %v1871 = vpop.f32.mrb[0].mxu0
        %v1872 = vadd.f32 %v1580, %v1871
        %v1873 = vpop.f32.mrb[0].mxu0
        %v1874 = vpop.f32.mrb[0].mxu0
        %v1875 = vadd.f32 %v1583, %v1874
        %v1876 = vpop.f32.mrb[0].mxu0
        %1877 = vmatprep.mubr.bf16.mxu0 0
        %1878 = vmatmul.mubr.bf16.gmra.mrb[0].mxu0 %v1765
        %v1879 = vpop.f32.mrb[0].mxu0
        %v1880 = vadd.f32 %v1588, %v1879
        %v1881 = vpop.f32.mrb[0].mxu0
        %v1882 = vpop.f32.mrb[0].mxu0
        %v1883 = vadd.f32 %v1591, %v1882
        %v1884 = vpop.f32.mrb[0].mxu0
        %1885 = vmatprep.mubr.bf16.mxu0 0
        %1886 = vmatmul.mubr.bf16.gmra.mrb[0].mxu0 %v1768
        %v1887 = vpop.f32.mrb[0].mxu0
        %v1888 = vadd.f32 %v1596, %v1887
        %v1889 = vpop.f32.mrb[0].mxu0
        %v1890 = vpop.f32.mrb[0].mxu0
        %v1891 = vadd.f32 %v1599, %v1890
        %v1892 = vpop.f32.mrb[0].mxu0
        %1893 = vmatprep.mubr.bf16.mxu0 0
        %1894 = vmatmul.mubr.bf16.gmra.mrb[0].mxu0 %v1771
        %v1895 = vpop.f32.mrb[0].mxu0
        %v1896 = vadd.f32 %v1604, %v1895
        %v1897 = vpop.f32.mrb[0].mxu0
        %v1898 = vpop.f32.mrb[0].mxu0
        %v1899 = vadd.f32 %v1607, %v1898
        %v1900 = vpop.f32.mrb[0].mxu0
        %1901 = vmatprep.mubr.bf16.mxu0 0
        %1902 = vmatmul.mubr.bf16.gmra.mrb[0].mxu0 %v1774
        %v1903 = vpop.f32.mrb[0].mxu0
        %v1904 = vadd.f32 %v1612, %v1903
        %v1905 = vpop.f32.mrb[0].mxu0
        %v1906 = vpop.f32.mrb[0].mxu0
        %v1907 = vadd.f32 %v1615, %v1906
        %v1908 = vpop.f32.mrb[0].mxu0
        %1909 = vmatprep.mubr.bf16.mxu0 0
        %1910 = vmatmul.mubr.bf16.gmra.mrb[0].mxu0 %v1777
        %v1911 = vpop.f32.mrb[0].mxu0
        %v1912 = vadd.f32 %v1620, %v1911
        %v1913 = vpop.f32.mrb[0].mxu0
        %v1914 = vpop.f32.mrb[0].mxu0
        %v1915 = vadd.f32 %v1623, %v1914
        %v1916 = vpop.f32.mrb[0].mxu0
        %1917 = vmatprep.mubr.bf16.mxu0 0
        %1918 = vmatmul.mubr.bf16.gmra.mrb[0].mxu0 %v1780
        %v1919 = vpop.f32.mrb[0].mxu0
        %v1920 = vadd.f32 %v1628, %v1919
        %v1921 = vpop.f32.mrb[0].mxu0
        %v1922 = vpop.f32.mrb[0].mxu0
        %v1923 = vadd.f32 %v1631, %v1922
        %v1924 = vpop.f32.mrb[0].mxu0
        %1925 = vmatprep.mubr.bf16.mxu0 0
        %1926 = vmatmul.mubr.bf16.gmra.mrb[0].mxu0 %v1783
        %v1927 = vpop.f32.mrb[0].mxu0
        %v1928 = vadd.f32 %v1636, %v1927
        %v1929 = vpop.f32.mrb[0].mxu0
        %v1930 = vpop.f32.mrb[0].mxu0
        %v1931 = vadd.f32 %v1639, %v1930
        %v1932 = vpop.f32.mrb[0].mxu0
        %1933 = vmatprep.mubr.bf16.mxu0 0
        %1934 = vmatmul.mubr.bf16.gmra.mrb[0].mxu0 %v1786
        %v1935 = vpop.f32.mrb[0].mxu0
        %v1936 = vadd.f32 %v1644, %v1935
        %v1937 = vpop.f32.mrb[0].mxu0
        %v1938 = vpop.f32.mrb[0].mxu0
        %v1939 = vadd.f32 %v1647, %v1938
        %v1940 = vpop.f32.mrb[0].mxu0
        %1941 = vmatprep.mubr.bf16.mxu0 0
        %1942 = vmatmul.mubr.bf16.gmra.mrb[0].mxu0 %v1789
        %v1943 = vpop.f32.mrb[0].mxu0
        %v1944 = vadd.f32 %v1652, %v1943
        %v1945 = vpop.f32.mrb[0].mxu0
        %v1946 = vpop.f32.mrb[0].mxu0
        %v1947 = vadd.f32 %v1655, %v1946
        %v1948 = vpop.f32.mrb[0].mxu0
        %1949 = vmatprep.mubr.bf16.mxu0 0
        %1950 = vmatmul.mubr.bf16.gmra.mrb[0].mxu0 %v1792
        %v1951 = vpop.f32.mrb[0].mxu0
        %v1952 = vadd.f32 %v1660, %v1951
        %v1953 = vpop.f32.mrb[0].mxu0
        %v1954 = vpop.f32.mrb[0].mxu0
        %v1955 = vadd.f32 %v1663, %v1954
        %v1956 = vpop.f32.mrb[0].mxu0
        %1957 = vdwg.mxu0
        %v1958 = vld [vmem:[#allocation2] sm:$0xe]
        %v1959 = vld [vmem:[#allocation2 + $0xc] sm:$0xe]
        %v1960 = vld [vmem:[#allocation2 + $0x18] sm:$0xe]
        %v1961 = vld [vmem:[#allocation2 + $0x24] sm:$0xe]
        %v1962 = vld [vmem:[#allocation2 + $0x30] sm:$0xe]
        %v1963 = vld [vmem:[#allocation2 + $0x3c] sm:$0xe]
        %v1964 = vld [vmem:[#allocation2 + $0x48] sm:$0xe]
        %v1965 = vld [vmem:[#allocation2 + $0x54] sm:$0xe]
        %v1966 = vld [vmem:[#allocation2 + $0x60] sm:$0xe]
        %v1967 = vld [vmem:[#allocation2 + $0x6c] sm:$0xe]
        %v1968 = vld [vmem:[#allocation2 + $0x78] sm:$0xe]
        %v1969 = vld [vmem:[#allocation2 + $0x84] sm:$0xe]
        %v1970 = vld [vmem:[#allocation2 + $0x90] sm:$0xe]
        %v1971 = vld [vmem:[#allocation2 + $0x9c] sm:$0xe]
        %v1972 = vld [vmem:[#allocation2 + $0xa8] sm:$0xe]
        %v1973 = vld [vmem:[#allocation2 + $0xb4] sm:$0xe]
        %vm2006 = vcmask 1042432
        %vm2007 = vcmask 1046532
        %vm2008 = vmor %vm2006, %vm2007
        %v2009 = vrot.slane %v1958, 5
        %v2010 = vrot.slane %v2009, 4
        %v2011 = vrot.slane %v967, 5
        %v2012 = vsel %vm2008, %v2010, %v2011
        %v2013 = vrot.slane %v2011, 4
        %v2014 = vrot.slane %v999, 5
        %v2015 = vsel %vm2008, %v2013, %v2014
        %v2016 = vrot.slane %v1959, 5
        %v2017 = vrot.slane %v2016, 4
        %v2018 = vrot.slane %v969, 5
        %v2019 = vsel %vm2008, %v2017, %v2018
        %v2020 = vrot.slane %v2018, 4
        %v2021 = vrot.slane %v1000, 5
        %v2022 = vsel %vm2008, %v2020, %v2021
        %v2023 = vrot.slane %v1960, 5
        %v2024 = vrot.slane %v2023, 4
        %v2025 = vrot.slane %v971, 5
        %v2026 = vsel %vm2008, %v2024, %v2025
        %v2027 = vrot.slane %v2025, 4
        %v2028 = vrot.slane %v1001, 5
        %v2029 = vsel %vm2008, %v2027, %v2028
        %v2030 = vrot.slane %v1961, 5
        %v2031 = vrot.slane %v2030, 4
        %v2032 = vrot.slane %v973, 5
        %v2033 = vsel %vm2008, %v2031, %v2032
        %v2034 = vrot.slane %v2032, 4
        %v2035 = vrot.slane %v1002, 5
        %v2036 = vsel %vm2008, %v2034, %v2035
        %v2037 = vrot.slane %v1962, 5
        %v2038 = vrot.slane %v2037, 4
        %v2039 = vrot.slane %v975, 5
        %v2040 = vsel %vm2008, %v2038, %v2039
        %v2041 = vrot.slane %v2039, 4
        %v2042 = vrot.slane %v1003, 5
        %v2043 = vsel %vm2008, %v2041, %v2042
        %v2044 = vrot.slane %v1963, 5
        %v2045 = vrot.slane %v2044, 4
        %v2046 = vrot.slane %v977, 5
        %v2047 = vsel %vm2008, %v2045, %v2046
        %v2048 = vrot.slane %v2046, 4
        %v2049 = vrot.slane %v1004, 5
        %v2050 = vsel %vm2008, %v2048, %v2049
        %v2051 = vrot.slane %v1964, 5
        %v2052 = vrot.slane %v2051, 4
        %v2053 = vrot.slane %v979, 5
        %v2054 = vsel %vm2008, %v2052, %v2053
        %v2055 = vrot.slane %v2053, 4
        %v2056 = vrot.slane %v1005, 5
        %v2057 = vsel %vm2008, %v2055, %v2056
        %v2058 = vrot.slane %v1965, 5
        %v2059 = vrot.slane %v2058, 4
        %v2060 = vrot.slane %v981, 5
        %v2061 = vsel %vm2008, %v2059, %v2060
        %v2062 = vrot.slane %v2060, 4
        %v2063 = vrot.slane %v1006, 5
        %v2064 = vsel %vm2008, %v2062, %v2063
        %v2065 = vrot.slane %v1966, 5
        %v2066 = vrot.slane %v2065, 4
        %v2067 = vrot.slane %v983, 5
        %v2068 = vsel %vm2008, %v2066, %v2067
        %v2069 = vrot.slane %v2067, 4
        %v2070 = vrot.slane %v1007, 5
        %v2071 = vsel %vm2008, %v2069, %v2070
        %v2072 = vrot.slane %v1967, 5
        %v2073 = vrot.slane %v2072, 4
        %v2074 = vrot.slane %v985, 5
        %v2075 = vsel %vm2008, %v2073, %v2074
        %v2076 = vrot.slane %v2074, 4
        %v2077 = vrot.slane %v1008, 5
        %v2078 = vsel %vm2008, %v2076, %v2077
        %v2079 = vrot.slane %v1968, 5
        %v2080 = vrot.slane %v2079, 4
        %v2081 = vrot.slane %v987, 5
        %v2082 = vsel %vm2008, %v2080, %v2081
        %v2083 = vrot.slane %v2081, 4
        %v2084 = vrot.slane %v1009, 5
        %v2085 = vsel %vm2008, %v2083, %v2084
        %v2086 = vrot.slane %v1969, 5
        %v2087 = vrot.slane %v2086, 4
        %v2088 = vrot.slane %v989, 5
        %v2089 = vsel %vm2008, %v2087, %v2088
        %v2090 = vrot.slane %v2088, 4
        %v2091 = vrot.slane %v1010, 5
        %v2092 = vsel %vm2008, %v2090, %v2091
        %v2093 = vrot.slane %v1970, 5
        %v2094 = vrot.slane %v2093, 4
        %v2095 = vrot.slane %v991, 5
        %v2096 = vsel %vm2008, %v2094, %v2095
        %v2097 = vrot.slane %v2095, 4
        %v2098 = vrot.slane %v1011, 5
        %v2099 = vsel %vm2008, %v2097, %v2098
        %v2100 = vrot.slane %v1971, 5
        %v2101 = vrot.slane %v2100, 4
        %v2102 = vrot.slane %v993, 5
        %v2103 = vsel %vm2008, %v2101, %v2102
        %v2104 = vrot.slane %v2102, 4
        %v2105 = vrot.slane %v1012, 5
        %v2106 = vsel %vm2008, %v2104, %v2105
        %v2107 = vrot.slane %v1972, 5
        %v2108 = vrot.slane %v2107, 4
        %v2109 = vrot.slane %v995, 5
        %v2110 = vsel %vm2008, %v2108, %v2109
        %v2111 = vrot.slane %v2109, 4
        %v2112 = vrot.slane %v1013, 5
        %v2113 = vsel %vm2008, %v2111, %v2112
        %v2114 = vrot.slane %v1973, 5
        %v2115 = vrot.slane %v2114, 4
        %v2116 = vrot.slane %v997, 5
        %v2117 = vsel %vm2008, %v2115, %v2116
        %v2118 = vrot.slane %v2116, 4
        %v2119 = vrot.slane %v1014, 5
        %v2120 = vsel %vm2008, %v2118, %v2119
        %s2121 = scalar_lea.vmem %s1, 4
        %v2122 = vld [vmem:[%s2121] sm:$0x3]
        %v2123 = vunpack.c.l.b16 %v2012
        %v2124 = vunpack.c.l.b16 %v2015
        %v2125 = vunpack.c.l.b16 %v2019
        %v2126 = vunpack.c.l.b16 %v2022
        %v2127 = vunpack.c.l.b16 %v2026
        %v2128 = vunpack.c.l.b16 %v2029
        %v2129 = vunpack.c.l.b16 %v2033
        %v2130 = vunpack.c.l.b16 %v2036
        %v2131 = vunpack.c.l.b16 %v2040
        %v2132 = vunpack.c.l.b16 %v2043
        %v2133 = vunpack.c.l.b16 %v2047
        %v2134 = vunpack.c.l.b16 %v2050
        %v2135 = vunpack.c.l.b16 %v2054
        %v2136 = vunpack.c.l.b16 %v2057
        %v2137 = vunpack.c.l.b16 %v2061
        %v2138 = vunpack.c.l.b16 %v2064
        %v2139 = vunpack.c.l.b16 %v2068
        %v2140 = vunpack.c.l.b16 %v2071
        %v2141 = vunpack.c.l.b16 %v2075
        %v2142 = vunpack.c.l.b16 %v2078
        %v2143 = vunpack.c.l.b16 %v2082
        %v2144 = vunpack.c.l.b16 %v2085
        %v2145 = vunpack.c.l.b16 %v2089
        %v2146 = vunpack.c.l.b16 %v2092
        %v2147 = vunpack.c.l.b16 %v2096
        %v2148 = vunpack.c.l.b16 %v2099
        %v2149 = vunpack.c.l.b16 %v2103
        %v2150 = vunpack.c.l.b16 %v2106
        %v2151 = vunpack.c.l.b16 %v2110
        %v2152 = vunpack.c.l.b16 %v2113
        %v2153 = vunpack.c.l.b16 %v2117
        %v2154 = vunpack.c.l.b16 %v2120
        %v2155 = vpack.c.b16 %v2124, %v2123
        %v2156 = vpack.c.b16 %v2126, %v2125
        %v2157 = vpack.c.b16 %v2128, %v2127
        %v2158 = vpack.c.b16 %v2130, %v2129
        %v2159 = vpack.c.b16 %v2132, %v2131
        %v2160 = vpack.c.b16 %v2134, %v2133
        %v2161 = vpack.c.b16 %v2136, %v2135
        %v2162 = vpack.c.b16 %v2138, %v2137
        %v2163 = vpack.c.b16 %v2140, %v2139
        %v2164 = vpack.c.b16 %v2142, %v2141
        %v2165 = vpack.c.b16 %v2144, %v2143
        %v2166 = vpack.c.b16 %v2146, %v2145
        %v2167 = vpack.c.b16 %v2148, %v2147
        %v2168 = vpack.c.b16 %v2150, %v2149
        %v2169 = vpack.c.b16 %v2152, %v2151
        %v2170 = vpack.c.b16 %v2154, %v2153
        %v2172 = vsel %vm1452, %v2155, 0
        %v2175 = vsel %vm1452, %v2156, 0
        %v2178 = vsel %vm1452, %v2157, 0
        %v2181 = vsel %vm1452, %v2158, 0
        %v2184 = vsel %vm1452, %v2159, 0
        %v2187 = vsel %vm1452, %v2160, 0
        %v2190 = vsel %vm1452, %v2161, 0
        %v2193 = vsel %vm1452, %v2162, 0
        %v2196 = vsel %vm1452, %v2163, 0
        %v2199 = vsel %vm1452, %v2164, 0
        %v2202 = vsel %vm1452, %v2165, 0
        %v2205 = vsel %vm1452, %v2166, 0
        %v2208 = vsel %vm1452, %v2167, 0
        %v2211 = vsel %vm1452, %v2168, 0
        %v2214 = vsel %vm1452, %v2169, 0
        %v2217 = vsel %vm1452, %v2170, 0
        %v2220 = vsel %vm1501, %v2122, 0
        %2222 = vmatprep.subr.bf16.mxu0 0
        %2223 = vmatpush1.bf16.msra.mxu0 %v2220
        %2224 = vmatprep.subr.bf16.mxu0 0
        %2225 = vmatpush1.bf16.msra.mxu0 0
        %2226 = vmatprep.subr.bf16.mxu0 0
        %2227 = vmatpush1.bf16.msra.mxu0 0
        %2228 = vmatprep.subr.bf16.mxu0 0
        %2229 = vmatpush1.bf16.msra.mxu0 0
        %2230 = vmatprep.subr.bf16.mxu0 0
        %2231 = vmatpush1.bf16.msra.mxu0 0
        %2232 = vmatprep.subr.bf16.mxu0 0
        %2233 = vmatpush1.bf16.msra.mxu0 0
        %2234 = vmatprep.subr.bf16.mxu0 0
        %2235 = vmatpush1.bf16.msra.mxu0 0
        %2236 = vmatprep.subr.bf16.mxu0 0
        %2237 = vmatpush1.bf16.msra.mxu0 0
        %2238 = vmatprep.subr.bf16.mxu0 0
        %2239 = vmatpush1.bf16.msra.mxu0 0
        %2240 = vmatprep.subr.bf16.mxu0 0
        %2241 = vmatpush1.bf16.msra.mxu0 0
        %2242 = vmatprep.subr.bf16.mxu0 0
        %2243 = vmatpush1.bf16.msra.mxu0 0
        %2244 = vmatprep.subr.bf16.mxu0 0
        %2245 = vmatpush1.bf16.msra.mxu0 0
        %2246 = vmatprep.subr.bf16.mxu0 0
        %2247 = vmatpush1.bf16.msra.mxu0 0
        %2248 = vmatprep.subr.bf16.mxu0 0
        %2249 = vmatpush1.bf16.msra.mxu0 0
        %2250 = vmatprep.subr.bf16.mxu0 0
        %2251 = vmatpush1.bf16.msra.mxu0 0
        %2252 = vmatprep.subr.bf16.mxu0 0
        %2253 = vmatpush1.bf16.msra.mxu0 0
        %2254 = vmatprep.mubr.bf16.mxu0 0
        %2255 = vmatmul.mubr.bf16.gmra.mrb[0].mxu0 %v2172
        %v2256 = vpop.f32.mrb[0].mxu0
        %v2257 = vadd.f32 0.0, %v2256
        %v2258 = vpop.f32.mrb[0].mxu0
        %v2259 = vpop.f32.mrb[0].mxu0
        %v2260 = vadd.f32 0.0, %v2259
        %v2261 = vpop.f32.mrb[0].mxu0
        %2262 = vmatprep.mubr.bf16.mxu0 0
        %2263 = vmatmul.mubr.bf16.gmra.mrb[0].mxu0 %v2175
        %v2264 = vpop.f32.mrb[0].mxu0
        %v2265 = vadd.f32 0.0, %v2264
        %v2266 = vpop.f32.mrb[0].mxu0
        %v2267 = vpop.f32.mrb[0].mxu0
        %v2268 = vadd.f32 0.0, %v2267
        %v2269 = vpop.f32.mrb[0].mxu0
        %2270 = vmatprep.mubr.bf16.mxu0 0
        %2271 = vmatmul.mubr.bf16.gmra.mrb[0].mxu0 %v2178
        %v2272 = vpop.f32.mrb[0].mxu0
        %v2273 = vadd.f32 0.0, %v2272
        %v2274 = vpop.f32.mrb[0].mxu0
        %v2275 = vpop.f32.mrb[0].mxu0
        %v2276 = vadd.f32 0.0, %v2275
        %v2277 = vpop.f32.mrb[0].mxu0
        %2278 = vmatprep.mubr.bf16.mxu0 0
        %2279 = vmatmul.mubr.bf16.gmra.mrb[0].mxu0 %v2181
        %v2280 = vpop.f32.mrb[0].mxu0
        %v2281 = vadd.f32 0.0, %v2280
        %v2282 = vpop.f32.mrb[0].mxu0
        %v2283 = vpop.f32.mrb[0].mxu0
        %v2284 = vadd.f32 0.0, %v2283
        %v2285 = vpop.f32.mrb[0].mxu0
        %2286 = vmatprep.mubr.bf16.mxu0 0
        %2287 = vmatmul.mubr.bf16.gmra.mrb[0].mxu0 %v2184
        %v2288 = vpop.f32.mrb[0].mxu0
        %v2289 = vadd.f32 0.0, %v2288
        %v2290 = vpop.f32.mrb[0].mxu0
        %v2291 = vpop.f32.mrb[0].mxu0
        %v2292 = vadd.f32 0.0, %v2291
        %v2293 = vpop.f32.mrb[0].mxu0
        %2294 = vmatprep.mubr.bf16.mxu0 0
        %2295 = vmatmul.mubr.bf16.gmra.mrb[0].mxu0 %v2187
        %v2296 = vpop.f32.mrb[0].mxu0
        %v2297 = vadd.f32 0.0, %v2296
        %v2298 = vpop.f32.mrb[0].mxu0
        %v2299 = vpop.f32.mrb[0].mxu0
        %v2300 = vadd.f32 0.0, %v2299
        %v2301 = vpop.f32.mrb[0].mxu0
        %2302 = vmatprep.mubr.bf16.mxu0 0
        %2303 = vmatmul.mubr.bf16.gmra.mrb[0].mxu0 %v2190
        %v2304 = vpop.f32.mrb[0].mxu0
        %v2305 = vadd.f32 0.0, %v2304
        %v2306 = vpop.f32.mrb[0].mxu0
        %v2307 = vpop.f32.mrb[0].mxu0
        %v2308 = vadd.f32 0.0, %v2307
        %v2309 = vpop.f32.mrb[0].mxu0
        %2310 = vmatprep.mubr.bf16.mxu0 0
        %2311 = vmatmul.mubr.bf16.gmra.mrb[0].mxu0 %v2193
        %v2312 = vpop.f32.mrb[0].mxu0
        %v2313 = vadd.f32 0.0, %v2312
        %v2314 = vpop.f32.mrb[0].mxu0
        %v2315 = vpop.f32.mrb[0].mxu0
        %v2316 = vadd.f32 0.0, %v2315
        %v2317 = vpop.f32.mrb[0].mxu0
        %2318 = vmatprep.mubr.bf16.mxu0 0
        %2319 = vmatmul.mubr.bf16.gmra.mrb[0].mxu0 %v2196
        %v2320 = vpop.f32.mrb[0].mxu0
        %v2321 = vadd.f32 0.0, %v2320
        %v2322 = vpop.f32.mrb[0].mxu0
        %v2323 = vpop.f32.mrb[0].mxu0
        %v2324 = vadd.f32 0.0, %v2323
        %v2325 = vpop.f32.mrb[0].mxu0
        %2326 = vmatprep.mubr.bf16.mxu0 0
        %2327 = vmatmul.mubr.bf16.gmra.mrb[0].mxu0 %v2199
        %v2328 = vpop.f32.mrb[0].mxu0
        %v2329 = vadd.f32 0.0, %v2328
        %v2330 = vpop.f32.mrb[0].mxu0
        %v2331 = vpop.f32.mrb[0].mxu0
        %v2332 = vadd.f32 0.0, %v2331
        %v2333 = vpop.f32.mrb[0].mxu0
        %2334 = vmatprep.mubr.bf16.mxu0 0
        %2335 = vmatmul.mubr.bf16.gmra.mrb[0].mxu0 %v2202
        %v2336 = vpop.f32.mrb[0].mxu0
        %v2337 = vadd.f32 0.0, %v2336
        %v2338 = vpop.f32.mrb[0].mxu0
        %v2339 = vpop.f32.mrb[0].mxu0
        %v2340 = vadd.f32 0.0, %v2339
        %v2341 = vpop.f32.mrb[0].mxu0
        %2342 = vmatprep.mubr.bf16.mxu0 0
        %2343 = vmatmul.mubr.bf16.gmra.mrb[0].mxu0 %v2205
        %v2344 = vpop.f32.mrb[0].mxu0
        %v2345 = vadd.f32 0.0, %v2344
        %v2346 = vpop.f32.mrb[0].mxu0
        %v2347 = vpop.f32.mrb[0].mxu0
        %v2348 = vadd.f32 0.0, %v2347
        %v2349 = vpop.f32.mrb[0].mxu0
        %2350 = vmatprep.mubr.bf16.mxu0 0
        %2351 = vmatmul.mubr.bf16.gmra.mrb[0].mxu0 %v2208
        %v2352 = vpop.f32.mrb[0].mxu0
        %v2353 = vadd.f32 0.0, %v2352
        %v2354 = vpop.f32.mrb[0].mxu0
        %v2355 = vpop.f32.mrb[0].mxu0
        %v2356 = vadd.f32 0.0, %v2355
        %v2357 = vpop.f32.mrb[0].mxu0
        %2358 = vmatprep.mubr.bf16.mxu0 0
        %2359 = vmatmul.mubr.bf16.gmra.mrb[0].mxu0 %v2211
        %v2360 = vpop.f32.mrb[0].mxu0
        %v2361 = vadd.f32 0.0, %v2360
        %v2362 = vpop.f32.mrb[0].mxu0
        %v2363 = vpop.f32.mrb[0].mxu0
        %v2364 = vadd.f32 0.0, %v2363
        %v2365 = vpop.f32.mrb[0].mxu0
        %2366 = vmatprep.mubr.bf16.mxu0 0
        %2367 = vmatmul.mubr.bf16.gmra.mrb[0].mxu0 %v2214
        %v2368 = vpop.f32.mrb[0].mxu0
        %v2369 = vadd.f32 0.0, %v2368
        %v2370 = vpop.f32.mrb[0].mxu0
        %v2371 = vpop.f32.mrb[0].mxu0
        %v2372 = vadd.f32 0.0, %v2371
        %v2373 = vpop.f32.mrb[0].mxu0
        %2374 = vmatprep.mubr.bf16.mxu0 0
        %2375 = vmatmul.mubr.bf16.gmra.mrb[0].mxu0 %v2217
        %v2376 = vpop.f32.mrb[0].mxu0
        %v2377 = vadd.f32 0.0, %v2376
        %v2378 = vpop.f32.mrb[0].mxu0
        %v2379 = vpop.f32.mrb[0].mxu0
        %v2380 = vadd.f32 0.0, %v2379
        %v2381 = vpop.f32.mrb[0].mxu0
        %2382 = vdwg.mxu0
        %v2383 = vadd.f32 %v1832, %v2257
        %v2384 = vadd.f32 %v1835, %v2260
        %v2385 = vadd.f32 %v1840, %v2265
        %v2386 = vadd.f32 %v1843, %v2268
        %v2387 = vadd.f32 %v1848, %v2273
        %v2388 = vadd.f32 %v1851, %v2276
        %v2389 = vadd.f32 %v1856, %v2281
        %v2390 = vadd.f32 %v1859, %v2284
        %v2391 = vadd.f32 %v1864, %v2289
        %v2392 = vadd.f32 %v1867, %v2292
        %v2393 = vadd.f32 %v1872, %v2297
        %v2394 = vadd.f32 %v1875, %v2300
        %v2395 = vadd.f32 %v1880, %v2305
        %v2396 = vadd.f32 %v1883, %v2308
        %v2397 = vadd.f32 %v1888, %v2313
        %v2398 = vadd.f32 %v1891, %v2316
        %v2399 = vadd.f32 %v1896, %v2321
        %v2400 = vadd.f32 %v1899, %v2324
        %v2401 = vadd.f32 %v1904, %v2329
        %v2402 = vadd.f32 %v1907, %v2332
        %v2403 = vadd.f32 %v1912, %v2337
        %v2404 = vadd.f32 %v1915, %v2340
        %v2405 = vadd.f32 %v1920, %v2345
        %v2406 = vadd.f32 %v1923, %v2348
        %v2407 = vadd.f32 %v1928, %v2353
        %v2408 = vadd.f32 %v1931, %v2356
        %v2409 = vadd.f32 %v1936, %v2361
        %v2410 = vadd.f32 %v1939, %v2364
        %v2411 = vadd.f32 %v1944, %v2369
        %v2412 = vadd.f32 %v1947, %v2372
        %v2413 = vadd.f32 %v1952, %v2377
        %v2414 = vadd.f32 %v1955, %v2380
        %v2415 = vld [vmem:[%s851] sm:$0xf]
        %v2416 = vld [vmem:[%s851 + $0x4] sm:$0xf]
        %v2417 = vld [vmem:[%s851 + $0xc] sm:$0xf]
        %v2418 = vld [vmem:[%s851 + $0x10] sm:$0xf]
        %v2419 = vld [vmem:[%s851 + $0x18] sm:$0xf]
        %v2420 = vld [vmem:[%s851 + $0x1c] sm:$0xf]
        %v2421 = vld [vmem:[%s851 + $0x24] sm:$0xf]
        %v2422 = vld [vmem:[%s851 + $0x28] sm:$0xf]
        %v2423 = vld [vmem:[%s851 + $0x30] sm:$0xf]
        %v2424 = vld [vmem:[%s851 + $0x34] sm:$0xf]
        %v2425 = vld [vmem:[%s851 + $0x3c] sm:$0xf]
        %v2426 = vld [vmem:[%s851 + $0x40] sm:$0xf]
        %v2427 = vld [vmem:[%s851 + $0x48] sm:$0xf]
        %v2428 = vld [vmem:[%s851 + $0x4c] sm:$0xf]
        %v2429 = vld [vmem:[%s851 + $0x54] sm:$0xf]
        %v2430 = vld [vmem:[%s851 + $0x58] sm:$0xf]
        %v2431 = vld [vmem:[%s851 + $0x60] sm:$0xf]
        %v2432 = vld [vmem:[%s851 + $0x64] sm:$0xf]
        %v2433 = vld [vmem:[%s851 + $0x6c] sm:$0xf]
        %v2434 = vld [vmem:[%s851 + $0x70] sm:$0xf]
        %v2435 = vld [vmem:[%s851 + $0x78] sm:$0xf]
        %v2436 = vld [vmem:[%s851 + $0x7c] sm:$0xf]
        %v2437 = vld [vmem:[%s851 + $0x84] sm:$0xf]
        %v2438 = vld [vmem:[%s851 + $0x88] sm:$0xf]
        %v2439 = vld [vmem:[%s851 + $0x90] sm:$0xf]
        %v2440 = vld [vmem:[%s851 + $0x94] sm:$0xf]
        %v2441 = vld [vmem:[%s851 + $0x9c] sm:$0xf]
        %v2442 = vld [vmem:[%s851 + $0xa0] sm:$0xf]
        %v2443 = vld [vmem:[%s851 + $0xa8] sm:$0xf]
        %v2444 = vld [vmem:[%s851 + $0xac] sm:$0xf]
        %v2445 = vld [vmem:[%s851 + $0xb4] sm:$0xf]
        %v2446 = vld [vmem:[%s851 + $0xb8] sm:$0xf]
        %s2447 = scalar_lea.vmem %s1, 6
        %v2448 = vld [vmem:[%s2447] sm:$0x3]
        %v2481 = vunpack.c.l.b16 %v2415
        %v2482 = vunpack.c.l.b16 %v2416
        %v2483 = vunpack.c.l.b16 %v2417
        %v2484 = vunpack.c.l.b16 %v2418
        %v2485 = vunpack.c.l.b16 %v2419
        %v2486 = vunpack.c.l.b16 %v2420
        %v2487 = vunpack.c.l.b16 %v2421
        %v2488 = vunpack.c.l.b16 %v2422
        %v2489 = vunpack.c.l.b16 %v2423
        %v2490 = vunpack.c.l.b16 %v2424
        %v2491 = vunpack.c.l.b16 %v2425
        %v2492 = vunpack.c.l.b16 %v2426
        %v2493 = vunpack.c.l.b16 %v2427
        %v2494 = vunpack.c.l.b16 %v2428
        %v2495 = vunpack.c.l.b16 %v2429
        %v2496 = vunpack.c.l.b16 %v2430
        %v2497 = vunpack.c.l.b16 %v2431
        %v2498 = vunpack.c.l.b16 %v2432
        %v2499 = vunpack.c.l.b16 %v2433
        %v2500 = vunpack.c.l.b16 %v2434
        %v2501 = vunpack.c.l.b16 %v2435
        %v2502 = vunpack.c.l.b16 %v2436
        %v2503 = vunpack.c.l.b16 %v2437
        %v2504 = vunpack.c.l.b16 %v2438
        %v2505 = vunpack.c.l.b16 %v2439
        %v2506 = vunpack.c.l.b16 %v2440
        %v2507 = vunpack.c.l.b16 %v2441
        %v2508 = vunpack.c.l.b16 %v2442
        %v2509 = vunpack.c.l.b16 %v2443
        %v2510 = vunpack.c.l.b16 %v2444
        %v2511 = vunpack.c.l.b16 %v2445
        %v2512 = vunpack.c.l.b16 %v2446
        %v2513 = vpack.c.b16 %v2482, %v2481
        %v2514 = vpack.c.b16 %v2484, %v2483
        %v2515 = vpack.c.b16 %v2486, %v2485
        %v2516 = vpack.c.b16 %v2488, %v2487
        %v2517 = vpack.c.b16 %v2490, %v2489
        %v2518 = vpack.c.b16 %v2492, %v2491
        %v2519 = vpack.c.b16 %v2494, %v2493
        %v2520 = vpack.c.b16 %v2496, %v2495
        %v2521 = vpack.c.b16 %v2498, %v2497
        %v2522 = vpack.c.b16 %v2500, %v2499
        %v2523 = vpack.c.b16 %v2502, %v2501
        %v2524 = vpack.c.b16 %v2504, %v2503
        %v2525 = vpack.c.b16 %v2506, %v2505
        %v2526 = vpack.c.b16 %v2508, %v2507
        %v2527 = vpack.c.b16 %v2510, %v2509
        %v2528 = vpack.c.b16 %v2512, %v2511
        %v2530 = vsel %vm1452, %v2513, 0
        %v2533 = vsel %vm1452, %v2514, 0
        %v2536 = vsel %vm1452, %v2515, 0
        %v2539 = vsel %vm1452, %v2516, 0
        %v2542 = vsel %vm1452, %v2517, 0
        %v2545 = vsel %vm1452, %v2518, 0
        %v2548 = vsel %vm1452, %v2519, 0
        %v2551 = vsel %vm1452, %v2520, 0
        %v2554 = vsel %vm1452, %v2521, 0
        %v2557 = vsel %vm1452, %v2522, 0
        %v2560 = vsel %vm1452, %v2523, 0
        %v2563 = vsel %vm1452, %v2524, 0
        %v2566 = vsel %vm1452, %v2525, 0
        %v2569 = vsel %vm1452, %v2526, 0
        %v2572 = vsel %vm1452, %v2527, 0
        %v2575 = vsel %vm1452, %v2528, 0
        %v2578 = vsel %vm1501, %v2448, 0
        %2580 = vmatprep.subr.bf16.mxu0 0
        %2581 = vmatpush1.bf16.msra.mxu0 %v2578
        %2582 = vmatprep.subr.bf16.mxu0 0
        %2583 = vmatpush1.bf16.msra.mxu0 0
        %2584 = vmatprep.subr.bf16.mxu0 0
        %2585 = vmatpush1.bf16.msra.mxu0 0
        %2586 = vmatprep.subr.bf16.mxu0 0
        %2587 = vmatpush1.bf16.msra.mxu0 0
        %2588 = vmatprep.subr.bf16.mxu0 0
        %2589 = vmatpush1.bf16.msra.mxu0 0
        %2590 = vmatprep.subr.bf16.mxu0 0
        %2591 = vmatpush1.bf16.msra.mxu0 0
        %2592 = vmatprep.subr.bf16.mxu0 0
        %2593 = vmatpush1.bf16.msra.mxu0 0
        %2594 = vmatprep.subr.bf16.mxu0 0
        %2595 = vmatpush1.bf16.msra.mxu0 0
        %2596 = vmatprep.subr.bf16.mxu0 0
        %2597 = vmatpush1.bf16.msra.mxu0 0
        %2598 = vmatprep.subr.bf16.mxu0 0
        %2599 = vmatpush1.bf16.msra.mxu0 0
        %2600 = vmatprep.subr.bf16.mxu0 0
        %2601 = vmatpush1.bf16.msra.mxu0 0
        %2602 = vmatprep.subr.bf16.mxu0 0
        %2603 = vmatpush1.bf16.msra.mxu0 0
        %2604 = vmatprep.subr.bf16.mxu0 0
        %2605 = vmatpush1.bf16.msra.mxu0 0
        %2606 = vmatprep.subr.bf16.mxu0 0
        %2607 = vmatpush1.bf16.msra.mxu0 0
        %2608 = vmatprep.subr.bf16.mxu0 0
        %2609 = vmatpush1.bf16.msra.mxu0 0
        %2610 = vmatprep.subr.bf16.mxu0 0
        %2611 = vmatpush1.bf16.msra.mxu0 0
        %2612 = vmatprep.mubr.bf16.mxu0 0
        %2613 = vmatmul.mubr.bf16.gmra.mrb[0].mxu0 %v2530
        %v2614 = vpop.f32.mrb[0].mxu0
        %v2615 = vadd.f32 0.0, %v2614
        %v2616 = vpop.f32.mrb[0].mxu0
        %v2617 = vpop.f32.mrb[0].mxu0
        %v2618 = vadd.f32 0.0, %v2617
        %v2619 = vpop.f32.mrb[0].mxu0
        %2620 = vmatprep.mubr.bf16.mxu0 0
        %2621 = vmatmul.mubr.bf16.gmra.mrb[0].mxu0 %v2533
        %v2622 = vpop.f32.mrb[0].mxu0
        %v2623 = vadd.f32 0.0, %v2622
        %v2624 = vpop.f32.mrb[0].mxu0
        %v2625 = vpop.f32.mrb[0].mxu0
        %v2626 = vadd.f32 0.0, %v2625
        %v2627 = vpop.f32.mrb[0].mxu0
        %2628 = vmatprep.mubr.bf16.mxu0 0
        %2629 = vmatmul.mubr.bf16.gmra.mrb[0].mxu0 %v2536
        %v2630 = vpop.f32.mrb[0].mxu0
        %v2631 = vadd.f32 0.0, %v2630
        %v2632 = vpop.f32.mrb[0].mxu0
        %v2633 = vpop.f32.mrb[0].mxu0
        %v2634 = vadd.f32 0.0, %v2633
        %v2635 = vpop.f32.mrb[0].mxu0
        %2636 = vmatprep.mubr.bf16.mxu0 0
        %2637 = vmatmul.mubr.bf16.gmra.mrb[0].mxu0 %v2539
        %v2638 = vpop.f32.mrb[0].mxu0
        %v2639 = vadd.f32 0.0, %v2638
        %v2640 = vpop.f32.mrb[0].mxu0
        %v2641 = vpop.f32.mrb[0].mxu0
        %v2642 = vadd.f32 0.0, %v2641
        %v2643 = vpop.f32.mrb[0].mxu0
        %2644 = vmatprep.mubr.bf16.mxu0 0
        %2645 = vmatmul.mubr.bf16.gmra.mrb[0].mxu0 %v2542
        %v2646 = vpop.f32.mrb[0].mxu0
        %v2647 = vadd.f32 0.0, %v2646
        %v2648 = vpop.f32.mrb[0].mxu0
        %v2649 = vpop.f32.mrb[0].mxu0
        %v2650 = vadd.f32 0.0, %v2649
        %v2651 = vpop.f32.mrb[0].mxu0
        %2652 = vmatprep.mubr.bf16.mxu0 0
        %2653 = vmatmul.mubr.bf16.gmra.mrb[0].mxu0 %v2545
        %v2654 = vpop.f32.mrb[0].mxu0
        %v2655 = vadd.f32 0.0, %v2654
        %v2656 = vpop.f32.mrb[0].mxu0
        %v2657 = vpop.f32.mrb[0].mxu0
        %v2658 = vadd.f32 0.0, %v2657
        %v2659 = vpop.f32.mrb[0].mxu0
        %2660 = vmatprep.mubr.bf16.mxu0 0
        %2661 = vmatmul.mubr.bf16.gmra.mrb[0].mxu0 %v2548
        %v2662 = vpop.f32.mrb[0].mxu0
        %v2663 = vadd.f32 0.0, %v2662
        %v2664 = vpop.f32.mrb[0].mxu0
        %v2665 = vpop.f32.mrb[0].mxu0
        %v2666 = vadd.f32 0.0, %v2665
        %v2667 = vpop.f32.mrb[0].mxu0
        %2668 = vmatprep.mubr.bf16.mxu0 0
        %2669 = vmatmul.mubr.bf16.gmra.mrb[0].mxu0 %v2551
        %v2670 = vpop.f32.mrb[0].mxu0
        %v2671 = vadd.f32 0.0, %v2670
        %v2672 = vpop.f32.mrb[0].mxu0
        %v2673 = vpop.f32.mrb[0].mxu0
        %v2674 = vadd.f32 0.0, %v2673
        %v2675 = vpop.f32.mrb[0].mxu0
        %2676 = vmatprep.mubr.bf16.mxu0 0
        %2677 = vmatmul.mubr.bf16.gmra.mrb[0].mxu0 %v2554
        %v2678 = vpop.f32.mrb[0].mxu0
        %v2679 = vadd.f32 0.0, %v2678
        %v2680 = vpop.f32.mrb[0].mxu0
        %v2681 = vpop.f32.mrb[0].mxu0
        %v2682 = vadd.f32 0.0, %v2681
        %v2683 = vpop.f32.mrb[0].mxu0
        %2684 = vmatprep.mubr.bf16.mxu0 0
        %2685 = vmatmul.mubr.bf16.gmra.mrb[0].mxu0 %v2557
        %v2686 = vpop.f32.mrb[0].mxu0
        %v2687 = vadd.f32 0.0, %v2686
        %v2688 = vpop.f32.mrb[0].mxu0
        %v2689 = vpop.f32.mrb[0].mxu0
        %v2690 = vadd.f32 0.0, %v2689
        %v2691 = vpop.f32.mrb[0].mxu0
        %2692 = vmatprep.mubr.bf16.mxu0 0
        %2693 = vmatmul.mubr.bf16.gmra.mrb[0].mxu0 %v2560
        %v2694 = vpop.f32.mrb[0].mxu0
        %v2695 = vadd.f32 0.0, %v2694
        %v2696 = vpop.f32.mrb[0].mxu0
        %v2697 = vpop.f32.mrb[0].mxu0
        %v2698 = vadd.f32 0.0, %v2697
        %v2699 = vpop.f32.mrb[0].mxu0
        %2700 = vmatprep.mubr.bf16.mxu0 0
        %2701 = vmatmul.mubr.bf16.gmra.mrb[0].mxu0 %v2563
        %v2702 = vpop.f32.mrb[0].mxu0
        %v2703 = vadd.f32 0.0, %v2702
        %v2704 = vpop.f32.mrb[0].mxu0
        %v2705 = vpop.f32.mrb[0].mxu0
        %v2706 = vadd.f32 0.0, %v2705
        %v2707 = vpop.f32.mrb[0].mxu0
        %2708 = vmatprep.mubr.bf16.mxu0 0
        %2709 = vmatmul.mubr.bf16.gmra.mrb[0].mxu0 %v2566
        %v2710 = vpop.f32.mrb[0].mxu0
        %v2711 = vadd.f32 0.0, %v2710
        %v2712 = vpop.f32.mrb[0].mxu0
        %v2713 = vpop.f32.mrb[0].mxu0
        %v2714 = vadd.f32 0.0, %v2713
        %v2715 = vpop.f32.mrb[0].mxu0
        %2716 = vmatprep.mubr.bf16.mxu0 0
        %2717 = vmatmul.mubr.bf16.gmra.mrb[0].mxu0 %v2569
        %v2718 = vpop.f32.mrb[0].mxu0
        %v2719 = vadd.f32 0.0, %v2718
        %v2720 = vpop.f32.mrb[0].mxu0
        %v2721 = vpop.f32.mrb[0].mxu0
        %v2722 = vadd.f32 0.0, %v2721
        %v2723 = vpop.f32.mrb[0].mxu0
        %2724 = vmatprep.mubr.bf16.mxu0 0
        %2725 = vmatmul.mubr.bf16.gmra.mrb[0].mxu0 %v2572
        %v2726 = vpop.f32.mrb[0].mxu0
        %v2727 = vadd.f32 0.0, %v2726
        %v2728 = vpop.f32.mrb[0].mxu0
        %v2729 = vpop.f32.mrb[0].mxu0
        %v2730 = vadd.f32 0.0, %v2729
        %v2731 = vpop.f32.mrb[0].mxu0
        %2732 = vmatprep.mubr.bf16.mxu0 0
        %2733 = vmatmul.mubr.bf16.gmra.mrb[0].mxu0 %v2575
        %v2734 = vpop.f32.mrb[0].mxu0
        %v2735 = vadd.f32 0.0, %v2734
        %v2736 = vpop.f32.mrb[0].mxu0
        %v2737 = vpop.f32.mrb[0].mxu0
        %v2738 = vadd.f32 0.0, %v2737
        %v2739 = vpop.f32.mrb[0].mxu0
        %2740 = vdwg.mxu0
        %v2741 = vadd.f32 %v2383, %v2615
        %v2742 = vadd.f32 %v2384, %v2618
        %v2743 = vadd.f32 %v2385, %v2623
        %v2744 = vadd.f32 %v2386, %v2626
        %v2745 = vadd.f32 %v2387, %v2631
        %v2746 = vadd.f32 %v2388, %v2634
        %v2747 = vadd.f32 %v2389, %v2639
        %v2748 = vadd.f32 %v2390, %v2642
        %v2749 = vadd.f32 %v2391, %v2647
        %v2750 = vadd.f32 %v2392, %v2650
        %v2751 = vadd.f32 %v2393, %v2655
        %v2752 = vadd.f32 %v2394, %v2658
        %v2753 = vadd.f32 %v2395, %v2663
        %v2754 = vadd.f32 %v2396, %v2666
        %v2755 = vadd.f32 %v2397, %v2671
        %v2756 = vadd.f32 %v2398, %v2674
        %v2757 = vadd.f32 %v2399, %v2679
        %v2758 = vadd.f32 %v2400, %v2682
        %v2759 = vadd.f32 %v2401, %v2687
        %v2760 = vadd.f32 %v2402, %v2690
        %v2761 = vadd.f32 %v2403, %v2695
        %v2762 = vadd.f32 %v2404, %v2698
        %v2763 = vadd.f32 %v2405, %v2703
        %v2764 = vadd.f32 %v2406, %v2706
        %v2765 = vadd.f32 %v2407, %v2711
        %v2766 = vadd.f32 %v2408, %v2714
        %v2767 = vadd.f32 %v2409, %v2719
        %v2768 = vadd.f32 %v2410, %v2722
        %v2769 = vadd.f32 %v2411, %v2727
        %v2770 = vadd.f32 %v2412, %v2730
        %v2771 = vadd.f32 %v2413, %v2735
        %v2772 = vadd.f32 %v2414, %v2738
        %v2773 = vld [vmem:[%s851] sm:$0xf]
        %v2774 = vld [vmem:[%s851 + $0x4] sm:$0xf]
        %v2775 = vld [vmem:[%s851 + $0x8] sm:$0x1]
        %v2776 = vld [vmem:[%s851 + $0xc] sm:$0xf]
        %v2777 = vld [vmem:[%s851 + $0x10] sm:$0xf]
        %v2778 = vld [vmem:[%s851 + $0x14] sm:$0x1]
        %v2779 = vld [vmem:[%s851 + $0x18] sm:$0xf]
        %v2780 = vld [vmem:[%s851 + $0x1c] sm:$0xf]
        %v2781 = vld [vmem:[%s851 + $0x20] sm:$0x1]
        %v2782 = vld [vmem:[%s851 + $0x24] sm:$0xf]
        %v2783 = vld [vmem:[%s851 + $0x28] sm:$0xf]
        %v2784 = vld [vmem:[%s851 + $0x2c] sm:$0x1]
        %v2785 = vld [vmem:[%s851 + $0x30] sm:$0xf]
        %v2786 = vld [vmem:[%s851 + $0x34] sm:$0xf]
        %v2787 = vld [vmem:[%s851 + $0x38] sm:$0x1]
        %v2788 = vld [vmem:[%s851 + $0x3c] sm:$0xf]
        %v2789 = vld [vmem:[%s851 + $0x40] sm:$0xf]
        %v2790 = vld [vmem:[%s851 + $0x44] sm:$0x1]
        %v2791 = vld [vmem:[%s851 + $0x48] sm:$0xf]
        %v2792 = vld [vmem:[%s851 + $0x4c] sm:$0xf]
        %v2793 = vld [vmem:[%s851 + $0x50] sm:$0x1]
        %v2794 = vld [vmem:[%s851 + $0x54] sm:$0xf]
        %v2795 = vld [vmem:[%s851 + $0x58] sm:$0xf]
        %v2796 = vld [vmem:[%s851 + $0x5c] sm:$0x1]
        %v2797 = vld [vmem:[%s851 + $0x60] sm:$0xf]
        %v2798 = vld [vmem:[%s851 + $0x64] sm:$0xf]
        %v2799 = vld [vmem:[%s851 + $0x68] sm:$0x1]
        %v2800 = vld [vmem:[%s851 + $0x6c] sm:$0xf]
        %v2801 = vld [vmem:[%s851 + $0x70] sm:$0xf]
        %v2802 = vld [vmem:[%s851 + $0x74] sm:$0x1]
        %v2803 = vld [vmem:[%s851 + $0x78] sm:$0xf]
        %v2804 = vld [vmem:[%s851 + $0x7c] sm:$0xf]
        %v2805 = vld [vmem:[%s851 + $0x80] sm:$0x1]
        %v2806 = vld [vmem:[%s851 + $0x84] sm:$0xf]
        %v2807 = vld [vmem:[%s851 + $0x88] sm:$0xf]
        %v2808 = vld [vmem:[%s851 + $0x8c] sm:$0x1]
        %v2809 = vld [vmem:[%s851 + $0x90] sm:$0xf]
        %v2810 = vld [vmem:[%s851 + $0x94] sm:$0xf]
        %v2811 = vld [vmem:[%s851 + $0x98] sm:$0x1]
        %v2812 = vld [vmem:[%s851 + $0x9c] sm:$0xf]
        %v2813 = vld [vmem:[%s851 + $0xa0] sm:$0xf]
        %v2814 = vld [vmem:[%s851 + $0xa4] sm:$0x1]
        %v2815 = vld [vmem:[%s851 + $0xa8] sm:$0xf]
        %v2816 = vld [vmem:[%s851 + $0xac] sm:$0xf]
        %v2817 = vld [vmem:[%s851 + $0xb0] sm:$0x1]
        %v2818 = vld [vmem:[%s851 + $0xb4] sm:$0xf]
        %v2819 = vld [vmem:[%s851 + $0xb8] sm:$0xf]
        %v2820 = vld [vmem:[%s851 + $0xbc] sm:$0x1]
        %v2822 = vshrl.u32 %v2773, 16
        %v2824 = vrot.slane %v2822, 4
        %v2825 = vshll.u32 %v2773, 16
        %v2827 = vrot.slane %v2825, 5
        %v2828 = vor.u32 %v2824, %v2827
        %v2829 = vrot.slane %v2828, 4
        %v2831 = vshll.u32 %v2774, 16
        %v2833 = vrot.slane %v2831, 5
        %v2834 = vsel %vm1017, %v2829, %v2833
        %v2835 = vshrl.u32 %v2774, 16
        %v2837 = vrot.slane %v2835, 4
        %v2838 = vor.u32 %v2837, %v2833
        %v2839 = vrot.slane %v2838, 4
        %v2841 = vshll.u32 %v2775, 16
        %v2843 = vrot.slane %v2841, 5
        %v2844 = vsel %vm1017, %v2839, %v2843
        %v2846 = vshrl.u32 %v2776, 16
        %v2848 = vrot.slane %v2846, 4
        %v2849 = vshll.u32 %v2776, 16
        %v2851 = vrot.slane %v2849, 5
        %v2852 = vor.u32 %v2848, %v2851
        %v2853 = vrot.slane %v2852, 4
        %v2855 = vshll.u32 %v2777, 16
        %v2857 = vrot.slane %v2855, 5
        %v2858 = vsel %vm1017, %v2853, %v2857
        %v2859 = vshrl.u32 %v2777, 16
        %v2861 = vrot.slane %v2859, 4
        %v2862 = vor.u32 %v2861, %v2857
        %v2863 = vrot.slane %v2862, 4
        %v2865 = vshll.u32 %v2778, 16
        %v2867 = vrot.slane %v2865, 5
        %v2868 = vsel %vm1017, %v2863, %v2867
        %v2870 = vshrl.u32 %v2779, 16
        %v2872 = vrot.slane %v2870, 4
        %v2873 = vshll.u32 %v2779, 16
        %v2875 = vrot.slane %v2873, 5
        %v2876 = vor.u32 %v2872, %v2875
        %v2877 = vrot.slane %v2876, 4
        %v2879 = vshll.u32 %v2780, 16
        %v2881 = vrot.slane %v2879, 5
        %v2882 = vsel %vm1017, %v2877, %v2881
        %v2883 = vshrl.u32 %v2780, 16
        %v2885 = vrot.slane %v2883, 4
        %v2886 = vor.u32 %v2885, %v2881
        %v2887 = vrot.slane %v2886, 4
        %v2889 = vshll.u32 %v2781, 16
        %v2891 = vrot.slane %v2889, 5
        %v2892 = vsel %vm1017, %v2887, %v2891
        %v2894 = vshrl.u32 %v2782, 16
        %v2896 = vrot.slane %v2894, 4
        %v2897 = vshll.u32 %v2782, 16
        %v2899 = vrot.slane %v2897, 5
        %v2900 = vor.u32 %v2896, %v2899
        %v2901 = vrot.slane %v2900, 4
        %v2903 = vshll.u32 %v2783, 16
        %v2905 = vrot.slane %v2903, 5
        %v2906 = vsel %vm1017, %v2901, %v2905
        %v2907 = vshrl.u32 %v2783, 16
        %v2909 = vrot.slane %v2907, 4
        %v2910 = vor.u32 %v2909, %v2905
        %v2911 = vrot.slane %v2910, 4
        %v2913 = vshll.u32 %v2784, 16
        %v2915 = vrot.slane %v2913, 5
        %v2916 = vsel %vm1017, %v2911, %v2915
        %v2918 = vshrl.u32 %v2785, 16
        %v2920 = vrot.slane %v2918, 4
        %v2921 = vshll.u32 %v2785, 16
        %v2923 = vrot.slane %v2921, 5
        %v2924 = vor.u32 %v2920, %v2923
        %v2925 = vrot.slane %v2924, 4
        %v2927 = vshll.u32 %v2786, 16
        %v2929 = vrot.slane %v2927, 5
        %v2930 = vsel %vm1017, %v2925, %v2929
        %v2931 = vshrl.u32 %v2786, 16
        %v2933 = vrot.slane %v2931, 4
        %v2934 = vor.u32 %v2933, %v2929
        %v2935 = vrot.slane %v2934, 4
        %v2937 = vshll.u32 %v2787, 16
        %v2939 = vrot.slane %v2937, 5
        %v2940 = vsel %vm1017, %v2935, %v2939
        %v2942 = vshrl.u32 %v2788, 16
        %v2944 = vrot.slane %v2942, 4
        %v2945 = vshll.u32 %v2788, 16
        %v2947 = vrot.slane %v2945, 5
        %v2948 = vor.u32 %v2944, %v2947
        %v2949 = vrot.slane %v2948, 4
        %v2951 = vshll.u32 %v2789, 16
        %v2953 = vrot.slane %v2951, 5
        %v2954 = vsel %vm1017, %v2949, %v2953
        %v2955 = vshrl.u32 %v2789, 16
        %v2957 = vrot.slane %v2955, 4
        %v2958 = vor.u32 %v2957, %v2953
        %v2959 = vrot.slane %v2958, 4
        %v2961 = vshll.u32 %v2790, 16
        %v2963 = vrot.slane %v2961, 5
        %v2964 = vsel %vm1017, %v2959, %v2963
        %v2966 = vshrl.u32 %v2791, 16
        %v2968 = vrot.slane %v2966, 4
        %v2969 = vshll.u32 %v2791, 16
        %v2971 = vrot.slane %v2969, 5
        %v2972 = vor.u32 %v2968, %v2971
        %v2973 = vrot.slane %v2972, 4
        %v2975 = vshll.u32 %v2792, 16
        %v2977 = vrot.slane %v2975, 5
        %v2978 = vsel %vm1017, %v2973, %v2977
        %v2979 = vshrl.u32 %v2792, 16
        %v2981 = vrot.slane %v2979, 4
        %v2982 = vor.u32 %v2981, %v2977
        %v2983 = vrot.slane %v2982, 4
        %v2985 = vshll.u32 %v2793, 16
        %v2987 = vrot.slane %v2985, 5
        %v2988 = vsel %vm1017, %v2983, %v2987
        %v2990 = vshrl.u32 %v2794, 16
        %v2992 = vrot.slane %v2990, 4
        %v2993 = vshll.u32 %v2794, 16
        %v2995 = vrot.slane %v2993, 5
        %v2996 = vor.u32 %v2992, %v2995
        %v2997 = vrot.slane %v2996, 4
        %v2999 = vshll.u32 %v2795, 16
        %v3001 = vrot.slane %v2999, 5
        %v3002 = vsel %vm1017, %v2997, %v3001
        %v3003 = vshrl.u32 %v2795, 16
        %v3005 = vrot.slane %v3003, 4
        %v3006 = vor.u32 %v3005, %v3001
        %v3007 = vrot.slane %v3006, 4
        %v3009 = vshll.u32 %v2796, 16
        %v3011 = vrot.slane %v3009, 5
        %v3012 = vsel %vm1017, %v3007, %v3011
        %v3014 = vshrl.u32 %v2797, 16
        %v3016 = vrot.slane %v3014, 4
        %v3017 = vshll.u32 %v2797, 16
        %v3019 = vrot.slane %v3017, 5
        %v3020 = vor.u32 %v3016, %v3019
        %v3021 = vrot.slane %v3020, 4
        %v3023 = vshll.u32 %v2798, 16
        %v3025 = vrot.slane %v3023, 5
        %v3026 = vsel %vm1017, %v3021, %v3025
        %v3027 = vshrl.u32 %v2798, 16
        %v3029 = vrot.slane %v3027, 4
        %v3030 = vor.u32 %v3029, %v3025
        %v3031 = vrot.slane %v3030, 4
        %v3033 = vshll.u32 %v2799, 16
        %v3035 = vrot.slane %v3033, 5
        %v3036 = vsel %vm1017, %v3031, %v3035
        %v3038 = vshrl.u32 %v2800, 16
        %v3040 = vrot.slane %v3038, 4
        %v3041 = vshll.u32 %v2800, 16
        %v3043 = vrot.slane %v3041, 5
        %v3044 = vor.u32 %v3040, %v3043
        %v3045 = vrot.slane %v3044, 4
        %v3047 = vshll.u32 %v2801, 16
        %v3049 = vrot.slane %v3047, 5
        %v3050 = vsel %vm1017, %v3045, %v3049
        %v3051 = vshrl.u32 %v2801, 16
        %v3053 = vrot.slane %v3051, 4
        %v3054 = vor.u32 %v3053, %v3049
        %v3055 = vrot.slane %v3054, 4
        %v3057 = vshll.u32 %v2802, 16
        %v3059 = vrot.slane %v3057, 5
        %v3060 = vsel %vm1017, %v3055, %v3059
        %v3062 = vshrl.u32 %v2803, 16
        %v3064 = vrot.slane %v3062, 4
        %v3065 = vshll.u32 %v2803, 16
        %v3067 = vrot.slane %v3065, 5
        %v3068 = vor.u32 %v3064, %v3067
        %v3069 = vrot.slane %v3068, 4
        %v3071 = vshll.u32 %v2804, 16
        %v3073 = vrot.slane %v3071, 5
        %v3074 = vsel %vm1017, %v3069, %v3073
        %v3075 = vshrl.u32 %v2804, 16
        %v3077 = vrot.slane %v3075, 4
        %v3078 = vor.u32 %v3077, %v3073
        %v3079 = vrot.slane %v3078, 4
        %v3081 = vshll.u32 %v2805, 16
        %v3083 = vrot.slane %v3081, 5
        %v3084 = vsel %vm1017, %v3079, %v3083
        %v3086 = vshrl.u32 %v2806, 16
        %v3088 = vrot.slane %v3086, 4
        %v3089 = vshll.u32 %v2806, 16
        %v3091 = vrot.slane %v3089, 5
        %v3092 = vor.u32 %v3088, %v3091
        %v3093 = vrot.slane %v3092, 4
        %v3095 = vshll.u32 %v2807, 16
        %v3097 = vrot.slane %v3095, 5
        %v3098 = vsel %vm1017, %v3093, %v3097
        %v3099 = vshrl.u32 %v2807, 16
        %v3101 = vrot.slane %v3099, 4
        %v3102 = vor.u32 %v3101, %v3097
        %v3103 = vrot.slane %v3102, 4
        %v3105 = vshll.u32 %v2808, 16
        %v3107 = vrot.slane %v3105, 5
        %v3108 = vsel %vm1017, %v3103, %v3107
        %v3110 = vshrl.u32 %v2809, 16
        %v3112 = vrot.slane %v3110, 4
        %v3113 = vshll.u32 %v2809, 16
        %v3115 = vrot.slane %v3113, 5
        %v3116 = vor.u32 %v3112, %v3115
        %v3117 = vrot.slane %v3116, 4
        %v3119 = vshll.u32 %v2810, 16
        %v3121 = vrot.slane %v3119, 5
        %v3122 = vsel %vm1017, %v3117, %v3121
        %v3123 = vshrl.u32 %v2810, 16
        %v3125 = vrot.slane %v3123, 4
        %v3126 = vor.u32 %v3125, %v3121
        %v3127 = vrot.slane %v3126, 4
        %v3129 = vshll.u32 %v2811, 16
        %v3131 = vrot.slane %v3129, 5
        %v3132 = vsel %vm1017, %v3127, %v3131
        %v3134 = vshrl.u32 %v2812, 16
        %v3136 = vrot.slane %v3134, 4
        %v3137 = vshll.u32 %v2812, 16
        %v3139 = vrot.slane %v3137, 5
        %v3140 = vor.u32 %v3136, %v3139
        %v3141 = vrot.slane %v3140, 4
        %v3143 = vshll.u32 %v2813, 16
        %v3145 = vrot.slane %v3143, 5
        %v3146 = vsel %vm1017, %v3141, %v3145
        %v3147 = vshrl.u32 %v2813, 16
        %v3149 = vrot.slane %v3147, 4
        %v3150 = vor.u32 %v3149, %v3145
        %v3151 = vrot.slane %v3150, 4
        %v3153 = vshll.u32 %v2814, 16
        %v3155 = vrot.slane %v3153, 5
        %v3156 = vsel %vm1017, %v3151, %v3155
        %v3158 = vshrl.u32 %v2815, 16
        %v3160 = vrot.slane %v3158, 4
        %v3161 = vshll.u32 %v2815, 16
        %v3163 = vrot.slane %v3161, 5
        %v3164 = vor.u32 %v3160, %v3163
        %v3165 = vrot.slane %v3164, 4
        %v3167 = vshll.u32 %v2816, 16
        %v3169 = vrot.slane %v3167, 5
        %v3170 = vsel %vm1017, %v3165, %v3169
        %v3171 = vshrl.u32 %v2816, 16
        %v3173 = vrot.slane %v3171, 4
        %v3174 = vor.u32 %v3173, %v3169
        %v3175 = vrot.slane %v3174, 4
        %v3177 = vshll.u32 %v2817, 16
        %v3179 = vrot.slane %v3177, 5
        %v3180 = vsel %vm1017, %v3175, %v3179
        %v3182 = vshrl.u32 %v2818, 16
        %v3184 = vrot.slane %v3182, 4
        %v3185 = vshll.u32 %v2818, 16
        %v3187 = vrot.slane %v3185, 5
        %v3188 = vor.u32 %v3184, %v3187
        %v3189 = vrot.slane %v3188, 4
        %v3191 = vshll.u32 %v2819, 16
        %v3193 = vrot.slane %v3191, 5
        %v3194 = vsel %vm1017, %v3189, %v3193
        %v3195 = vshrl.u32 %v2819, 16
        %v3197 = vrot.slane %v3195, 4
        %v3198 = vor.u32 %v3197, %v3193
        %v3199 = vrot.slane %v3198, 4
        %v3201 = vshll.u32 %v2820, 16
        %v3203 = vrot.slane %v3201, 5
        %v3204 = vsel %vm1017, %v3199, %v3203
        %s3205 = scalar_lea.vmem %s1, 8
        %v3206 = vld [vmem:[%s3205] sm:$0x3]
        %v3207 = vunpack.c.l.b16 %v2834
        %v3208 = vunpack.c.l.b16 %v2844
        %v3209 = vunpack.c.l.b16 %v2858
        %v3210 = vunpack.c.l.b16 %v2868
        %v3211 = vunpack.c.l.b16 %v2882
        %v3212 = vunpack.c.l.b16 %v2892
        %v3213 = vunpack.c.l.b16 %v2906
        %v3214 = vunpack.c.l.b16 %v2916
        %v3215 = vunpack.c.l.b16 %v2930
        %v3216 = vunpack.c.l.b16 %v2940
        %v3217 = vunpack.c.l.b16 %v2954
        %v3218 = vunpack.c.l.b16 %v2964
        %v3219 = vunpack.c.l.b16 %v2978
        %v3220 = vunpack.c.l.b16 %v2988
        %v3221 = vunpack.c.l.b16 %v3002
        %v3222 = vunpack.c.l.b16 %v3012
        %v3223 = vunpack.c.l.b16 %v3026
        %v3224 = vunpack.c.l.b16 %v3036
        %v3225 = vunpack.c.l.b16 %v3050
        %v3226 = vunpack.c.l.b16 %v3060
        %v3227 = vunpack.c.l.b16 %v3074
        %v3228 = vunpack.c.l.b16 %v3084
        %v3229 = vunpack.c.l.b16 %v3098
        %v3230 = vunpack.c.l.b16 %v3108
        %v3231 = vunpack.c.l.b16 %v3122
        %v3232 = vunpack.c.l.b16 %v3132
        %v3233 = vunpack.c.l.b16 %v3146
        %v3234 = vunpack.c.l.b16 %v3156
        %v3235 = vunpack.c.l.b16 %v3170
        %v3236 = vunpack.c.l.b16 %v3180
        %v3237 = vunpack.c.l.b16 %v3194
        %v3238 = vunpack.c.l.b16 %v3204
        %v3239 = vpack.c.b16 %v3208, %v3207
        %v3240 = vpack.c.b16 %v3210, %v3209
        %v3241 = vpack.c.b16 %v3212, %v3211
        %v3242 = vpack.c.b16 %v3214, %v3213
        %v3243 = vpack.c.b16 %v3216, %v3215
        %v3244 = vpack.c.b16 %v3218, %v3217
        %v3245 = vpack.c.b16 %v3220, %v3219
        %v3246 = vpack.c.b16 %v3222, %v3221
        %v3247 = vpack.c.b16 %v3224, %v3223
        %v3248 = vpack.c.b16 %v3226, %v3225
        %v3249 = vpack.c.b16 %v3228, %v3227
        %v3250 = vpack.c.b16 %v3230, %v3229
        %v3251 = vpack.c.b16 %v3232, %v3231
        %v3252 = vpack.c.b16 %v3234, %v3233
        %v3253 = vpack.c.b16 %v3236, %v3235
        %v3254 = vpack.c.b16 %v3238, %v3237
        %v3256 = vsel %vm1452, %v3239, 0
        %v3259 = vsel %vm1452, %v3240, 0
        %v3262 = vsel %vm1452, %v3241, 0
        %v3265 = vsel %vm1452, %v3242, 0
        %v3268 = vsel %vm1452, %v3243, 0
        %v3271 = vsel %vm1452, %v3244, 0
        %v3274 = vsel %vm1452, %v3245, 0
        %v3277 = vsel %vm1452, %v3246, 0
        %v3280 = vsel %vm1452, %v3247, 0
        %v3283 = vsel %vm1452, %v3248, 0
        %v3286 = vsel %vm1452, %v3249, 0
        %v3289 = vsel %vm1452, %v3250, 0
        %v3292 = vsel %vm1452, %v3251, 0
        %v3295 = vsel %vm1452, %v3252, 0
        %v3298 = vsel %vm1452, %v3253, 0
        %v3301 = vsel %vm1452, %v3254, 0
        %v3304 = vsel %vm1501, %v3206, 0
        %3306 = vmatprep.subr.bf16.mxu0 0
        %3307 = vmatpush1.bf16.msra.mxu0 %v3304
        %3308 = vmatprep.subr.bf16.mxu0 0
        %3309 = vmatpush1.bf16.msra.mxu0 0
        %3310 = vmatprep.subr.bf16.mxu0 0
        %3311 = vmatpush1.bf16.msra.mxu0 0
        %3312 = vmatprep.subr.bf16.mxu0 0
        %3313 = vmatpush1.bf16.msra.mxu0 0
        %3314 = vmatprep.subr.bf16.mxu0 0
        %3315 = vmatpush1.bf16.msra.mxu0 0
        %3316 = vmatprep.subr.bf16.mxu0 0
        %3317 = vmatpush1.bf16.msra.mxu0 0
        %3318 = vmatprep.subr.bf16.mxu0 0
        %3319 = vmatpush1.bf16.msra.mxu0 0
        %3320 = vmatprep.subr.bf16.mxu0 0
        %3321 = vmatpush1.bf16.msra.mxu0 0
        %3322 = vmatprep.subr.bf16.mxu0 0
        %3323 = vmatpush1.bf16.msra.mxu0 0
        %3324 = vmatprep.subr.bf16.mxu0 0
        %3325 = vmatpush1.bf16.msra.mxu0 0
        %3326 = vmatprep.subr.bf16.mxu0 0
        %3327 = vmatpush1.bf16.msra.mxu0 0
        %3328 = vmatprep.subr.bf16.mxu0 0
        %3329 = vmatpush1.bf16.msra.mxu0 0
        %3330 = vmatprep.subr.bf16.mxu0 0
        %3331 = vmatpush1.bf16.msra.mxu0 0
        %3332 = vmatprep.subr.bf16.mxu0 0
        %3333 = vmatpush1.bf16.msra.mxu0 0
        %3334 = vmatprep.subr.bf16.mxu0 0
        %3335 = vmatpush1.bf16.msra.mxu0 0
        %3336 = vmatprep.subr.bf16.mxu0 0
        %3337 = vmatpush1.bf16.msra.mxu0 0
        %3338 = vmatprep.mubr.bf16.mxu0 0
        %3339 = vmatmul.mubr.bf16.gmra.mrb[0].mxu0 %v3256
        %v3340 = vpop.f32.mrb[0].mxu0
        %v3341 = vadd.f32 0.0, %v3340
        %v3342 = vpop.f32.mrb[0].mxu0
        %v3343 = vpop.f32.mrb[0].mxu0
        %v3344 = vadd.f32 0.0, %v3343
        %v3345 = vpop.f32.mrb[0].mxu0
        %3346 = vmatprep.mubr.bf16.mxu0 0
        %3347 = vmatmul.mubr.bf16.gmra.mrb[0].mxu0 %v3259
        %v3348 = vpop.f32.mrb[0].mxu0
        %v3349 = vadd.f32 0.0, %v3348
        %v3350 = vpop.f32.mrb[0].mxu0
        %v3351 = vpop.f32.mrb[0].mxu0
        %v3352 = vadd.f32 0.0, %v3351
        %v3353 = vpop.f32.mrb[0].mxu0
        %3354 = vmatprep.mubr.bf16.mxu0 0
        %3355 = vmatmul.mubr.bf16.gmra.mrb[0].mxu0 %v3262
        %v3356 = vpop.f32.mrb[0].mxu0
        %v3357 = vadd.f32 0.0, %v3356
        %v3358 = vpop.f32.mrb[0].mxu0
        %v3359 = vpop.f32.mrb[0].mxu0
        %v3360 = vadd.f32 0.0, %v3359
        %v3361 = vpop.f32.mrb[0].mxu0
        %3362 = vmatprep.mubr.bf16.mxu0 0
        %3363 = vmatmul.mubr.bf16.gmra.mrb[0].mxu0 %v3265
        %v3364 = vpop.f32.mrb[0].mxu0
        %v3365 = vadd.f32 0.0, %v3364
        %v3366 = vpop.f32.mrb[0].mxu0
        %v3367 = vpop.f32.mrb[0].mxu0
        %v3368 = vadd.f32 0.0, %v3367
        %v3369 = vpop.f32.mrb[0].mxu0
        %3370 = vmatprep.mubr.bf16.mxu0 0
        %3371 = vmatmul.mubr.bf16.gmra.mrb[0].mxu0 %v3268
        %v3372 = vpop.f32.mrb[0].mxu0
        %v3373 = vadd.f32 0.0, %v3372
        %v3374 = vpop.f32.mrb[0].mxu0
        %v3375 = vpop.f32.mrb[0].mxu0
        %v3376 = vadd.f32 0.0, %v3375
        %v3377 = vpop.f32.mrb[0].mxu0
        %3378 = vmatprep.mubr.bf16.mxu0 0
        %3379 = vmatmul.mubr.bf16.gmra.mrb[0].mxu0 %v3271
        %v3380 = vpop.f32.mrb[0].mxu0
        %v3381 = vadd.f32 0.0, %v3380
        %v3382 = vpop.f32.mrb[0].mxu0
        %v3383 = vpop.f32.mrb[0].mxu0
        %v3384 = vadd.f32 0.0, %v3383
        %v3385 = vpop.f32.mrb[0].mxu0
        %3386 = vmatprep.mubr.bf16.mxu0 0
        %3387 = vmatmul.mubr.bf16.gmra.mrb[0].mxu0 %v3274
        %v3388 = vpop.f32.mrb[0].mxu0
        %v3389 = vadd.f32 0.0, %v3388
        %v3390 = vpop.f32.mrb[0].mxu0
        %v3391 = vpop.f32.mrb[0].mxu0
        %v3392 = vadd.f32 0.0, %v3391
        %v3393 = vpop.f32.mrb[0].mxu0
        %3394 = vmatprep.mubr.bf16.mxu0 0
        %3395 = vmatmul.mubr.bf16.gmra.mrb[0].mxu0 %v3277
        %v3396 = vpop.f32.mrb[0].mxu0
        %v3397 = vadd.f32 0.0, %v3396
        %v3398 = vpop.f32.mrb[0].mxu0
        %v3399 = vpop.f32.mrb[0].mxu0
        %v3400 = vadd.f32 0.0, %v3399
        %v3401 = vpop.f32.mrb[0].mxu0
        %3402 = vmatprep.mubr.bf16.mxu0 0
        %3403 = vmatmul.mubr.bf16.gmra.mrb[0].mxu0 %v3280
        %v3404 = vpop.f32.mrb[0].mxu0
        %v3405 = vadd.f32 0.0, %v3404
        %v3406 = vpop.f32.mrb[0].mxu0
        %v3407 = vpop.f32.mrb[0].mxu0
        %v3408 = vadd.f32 0.0, %v3407
        %v3409 = vpop.f32.mrb[0].mxu0
        %3410 = vmatprep.mubr.bf16.mxu0 0
        %3411 = vmatmul.mubr.bf16.gmra.mrb[0].mxu0 %v3283
        %v3412 = vpop.f32.mrb[0].mxu0
        %v3413 = vadd.f32 0.0, %v3412
        %v3414 = vpop.f32.mrb[0].mxu0
        %v3415 = vpop.f32.mrb[0].mxu0
        %v3416 = vadd.f32 0.0, %v3415
        %v3417 = vpop.f32.mrb[0].mxu0
        %3418 = vmatprep.mubr.bf16.mxu0 0
        %3419 = vmatmul.mubr.bf16.gmra.mrb[0].mxu0 %v3286
        %v3420 = vpop.f32.mrb[0].mxu0
        %v3421 = vadd.f32 0.0, %v3420
        %v3422 = vpop.f32.mrb[0].mxu0
        %v3423 = vpop.f32.mrb[0].mxu0
        %v3424 = vadd.f32 0.0, %v3423
        %v3425 = vpop.f32.mrb[0].mxu0
        %3426 = vmatprep.mubr.bf16.mxu0 0
        %3427 = vmatmul.mubr.bf16.gmra.mrb[0].mxu0 %v3289
        %v3428 = vpop.f32.mrb[0].mxu0
        %v3429 = vadd.f32 0.0, %v3428
        %v3430 = vpop.f32.mrb[0].mxu0
        %v3431 = vpop.f32.mrb[0].mxu0
        %v3432 = vadd.f32 0.0, %v3431
        %v3433 = vpop.f32.mrb[0].mxu0
        %3434 = vmatprep.mubr.bf16.mxu0 0
        %3435 = vmatmul.mubr.bf16.gmra.mrb[0].mxu0 %v3292
        %v3436 = vpop.f32.mrb[0].mxu0
        %v3437 = vadd.f32 0.0, %v3436
        %v3438 = vpop.f32.mrb[0].mxu0
        %v3439 = vpop.f32.mrb[0].mxu0
        %v3440 = vadd.f32 0.0, %v3439
        %v3441 = vpop.f32.mrb[0].mxu0
        %3442 = vmatprep.mubr.bf16.mxu0 0
        %3443 = vmatmul.mubr.bf16.gmra.mrb[0].mxu0 %v3295
        %v3444 = vpop.f32.mrb[0].mxu0
        %v3445 = vadd.f32 0.0, %v3444
        %v3446 = vpop.f32.mrb[0].mxu0
        %v3447 = vpop.f32.mrb[0].mxu0
        %v3448 = vadd.f32 0.0, %v3447
        %v3449 = vpop.f32.mrb[0].mxu0
        %3450 = vmatprep.mubr.bf16.mxu0 0
        %3451 = vmatmul.mubr.bf16.gmra.mrb[0].mxu0 %v3298
        %v3452 = vpop.f32.mrb[0].mxu0
        %v3453 = vadd.f32 0.0, %v3452
        %v3454 = vpop.f32.mrb[0].mxu0
        %v3455 = vpop.f32.mrb[0].mxu0
        %v3456 = vadd.f32 0.0, %v3455
        %v3457 = vpop.f32.mrb[0].mxu0
        %3458 = vmatprep.mubr.bf16.mxu0 0
        %3459 = vmatmul.mubr.bf16.gmra.mrb[0].mxu0 %v3301
        %v3460 = vpop.f32.mrb[0].mxu0
        %v3461 = vadd.f32 0.0, %v3460
        %v3462 = vpop.f32.mrb[0].mxu0
        %v3463 = vpop.f32.mrb[0].mxu0
        %v3464 = vadd.f32 0.0, %v3463
        %v3465 = vpop.f32.mrb[0].mxu0
        %3466 = vdwg.mxu0
        %v3467 = vadd.f32 %v2741, %v3341
        %v3468 = vadd.f32 %v2742, %v3344
        %v3469 = vadd.f32 %v2743, %v3349
        %v3470 = vadd.f32 %v2744, %v3352
        %v3471 = vadd.f32 %v2745, %v3357
        %v3472 = vadd.f32 %v2746, %v3360
        %v3473 = vadd.f32 %v2747, %v3365
        %v3474 = vadd.f32 %v2748, %v3368
        %v3475 = vadd.f32 %v2749, %v3373
        %v3476 = vadd.f32 %v2750, %v3376
        %v3477 = vadd.f32 %v2751, %v3381
        %v3478 = vadd.f32 %v2752, %v3384
        %v3479 = vadd.f32 %v2753, %v3389
        %v3480 = vadd.f32 %v2754, %v3392
        %v3481 = vadd.f32 %v2755, %v3397
        %v3482 = vadd.f32 %v2756, %v3400
        %v3483 = vadd.f32 %v2757, %v3405
        %v3484 = vadd.f32 %v2758, %v3408
        %v3485 = vadd.f32 %v2759, %v3413
        %v3486 = vadd.f32 %v2760, %v3416
        %v3487 = vadd.f32 %v2761, %v3421
        %v3488 = vadd.f32 %v2762, %v3424
        %v3489 = vadd.f32 %v2763, %v3429
        %v3490 = vadd.f32 %v2764, %v3432
        %v3491 = vadd.f32 %v2765, %v3437
        %v3492 = vadd.f32 %v2766, %v3440
        %v3493 = vadd.f32 %v2767, %v3445
        %v3494 = vadd.f32 %v2768, %v3448
        %v3495 = vadd.f32 %v2769, %v3453
        %v3496 = vadd.f32 %v2770, %v3456
        %v3497 = vadd.f32 %v2771, %v3461
        %v3498 = vadd.f32 %v2772, %v3464
        %v3499 = vld [vmem:[%s851] sm:$0xe]
        %v3500 = vld [vmem:[%s851 + $0xc] sm:$0xe]
        %v3501 = vld [vmem:[%s851 + $0x18] sm:$0xe]
        %v3502 = vld [vmem:[%s851 + $0x24] sm:$0xe]
        %v3503 = vld [vmem:[%s851 + $0x30] sm:$0xe]
        %v3504 = vld [vmem:[%s851 + $0x3c] sm:$0xe]
        %v3505 = vld [vmem:[%s851 + $0x48] sm:$0xe]
        %v3506 = vld [vmem:[%s851 + $0x54] sm:$0xe]
        %v3507 = vld [vmem:[%s851 + $0x60] sm:$0xe]
        %v3508 = vld [vmem:[%s851 + $0x6c] sm:$0xe]
        %v3509 = vld [vmem:[%s851 + $0x78] sm:$0xe]
        %v3510 = vld [vmem:[%s851 + $0x84] sm:$0xe]
        %v3511 = vld [vmem:[%s851 + $0x90] sm:$0xe]
        %v3512 = vld [vmem:[%s851 + $0x9c] sm:$0xe]
        %v3513 = vld [vmem:[%s851 + $0xa8] sm:$0xe]
        %v3514 = vld [vmem:[%s851 + $0xb4] sm:$0xe]
        %v3563 = vrot.slane %v3499, 5
        %v3564 = vrot.slane %v3563, 4
        %v3565 = vrot.slane %v2774, 5
        %v3566 = vsel %vm2008, %v3564, %v3565
        %v3567 = vrot.slane %v3565, 4
        %v3568 = vrot.slane %v2775, 5
        %v3569 = vsel %vm2008, %v3567, %v3568
        %v3570 = vrot.slane %v3500, 5
        %v3571 = vrot.slane %v3570, 4
        %v3572 = vrot.slane %v2777, 5
        %v3573 = vsel %vm2008, %v3571, %v3572
        %v3574 = vrot.slane %v3572, 4
        %v3575 = vrot.slane %v2778, 5
        %v3576 = vsel %vm2008, %v3574, %v3575
        %v3577 = vrot.slane %v3501, 5
        %v3578 = vrot.slane %v3577, 4
        %v3579 = vrot.slane %v2780, 5
        %v3580 = vsel %vm2008, %v3578, %v3579
        %v3581 = vrot.slane %v3579, 4
        %v3582 = vrot.slane %v2781, 5
        %v3583 = vsel %vm2008, %v3581, %v3582
        %v3584 = vrot.slane %v3502, 5
        %v3585 = vrot.slane %v3584, 4
        %v3586 = vrot.slane %v2783, 5
        %v3587 = vsel %vm2008, %v3585, %v3586
        %v3588 = vrot.slane %v3586, 4
        %v3589 = vrot.slane %v2784, 5
        %v3590 = vsel %vm2008, %v3588, %v3589
        %v3591 = vrot.slane %v3503, 5
        %v3592 = vrot.slane %v3591, 4
        %v3593 = vrot.slane %v2786, 5
        %v3594 = vsel %vm2008, %v3592, %v3593
        %v3595 = vrot.slane %v3593, 4
        %v3596 = vrot.slane %v2787, 5
        %v3597 = vsel %vm2008, %v3595, %v3596
        %v3598 = vrot.slane %v3504, 5
        %v3599 = vrot.slane %v3598, 4
        %v3600 = vrot.slane %v2789, 5
        %v3601 = vsel %vm2008, %v3599, %v3600
        %v3602 = vrot.slane %v3600, 4
        %v3603 = vrot.slane %v2790, 5
        %v3604 = vsel %vm2008, %v3602, %v3603
        %v3605 = vrot.slane %v3505, 5
        %v3606 = vrot.slane %v3605, 4
        %v3607 = vrot.slane %v2792, 5
        %v3608 = vsel %vm2008, %v3606, %v3607
        %v3609 = vrot.slane %v3607, 4
        %v3610 = vrot.slane %v2793, 5
        %v3611 = vsel %vm2008, %v3609, %v3610
        %v3612 = vrot.slane %v3506, 5
        %v3613 = vrot.slane %v3612, 4
        %v3614 = vrot.slane %v2795, 5
        %v3615 = vsel %vm2008, %v3613, %v3614
        %v3616 = vrot.slane %v3614, 4
        %v3617 = vrot.slane %v2796, 5
        %v3618 = vsel %vm2008, %v3616, %v3617
        %v3619 = vrot.slane %v3507, 5
        %v3620 = vrot.slane %v3619, 4
        %v3621 = vrot.slane %v2798, 5
        %v3622 = vsel %vm2008, %v3620, %v3621
        %v3623 = vrot.slane %v3621, 4
        %v3624 = vrot.slane %v2799, 5
        %v3625 = vsel %vm2008, %v3623, %v3624
        %v3626 = vrot.slane %v3508, 5
        %v3627 = vrot.slane %v3626, 4
        %v3628 = vrot.slane %v2801, 5
        %v3629 = vsel %vm2008, %v3627, %v3628
        %v3630 = vrot.slane %v3628, 4
        %v3631 = vrot.slane %v2802, 5
        %v3632 = vsel %vm2008, %v3630, %v3631
        %v3633 = vrot.slane %v3509, 5
        %v3634 = vrot.slane %v3633, 4
        %v3635 = vrot.slane %v2804, 5
        %v3636 = vsel %vm2008, %v3634, %v3635
        %v3637 = vrot.slane %v3635, 4
        %v3638 = vrot.slane %v2805, 5
        %v3639 = vsel %vm2008, %v3637, %v3638
        %v3640 = vrot.slane %v3510, 5
        %v3641 = vrot.slane %v3640, 4
        %v3642 = vrot.slane %v2807, 5
        %v3643 = vsel %vm2008, %v3641, %v3642
        %v3644 = vrot.slane %v3642, 4
        %v3645 = vrot.slane %v2808, 5
        %v3646 = vsel %vm2008, %v3644, %v3645
        %v3647 = vrot.slane %v3511, 5
        %v3648 = vrot.slane %v3647, 4
        %v3649 = vrot.slane %v2810, 5
        %v3650 = vsel %vm2008, %v3648, %v3649
        %v3651 = vrot.slane %v3649, 4
        %v3652 = vrot.slane %v2811, 5
        %v3653 = vsel %vm2008, %v3651, %v3652
        %v3654 = vrot.slane %v3512, 5
        %v3655 = vrot.slane %v3654, 4
        %v3656 = vrot.slane %v2813, 5
        %v3657 = vsel %vm2008, %v3655, %v3656
        %v3658 = vrot.slane %v3656, 4
        %v3659 = vrot.slane %v2814, 5
        %v3660 = vsel %vm2008, %v3658, %v3659
        %v3661 = vrot.slane %v3513, 5
        %v3662 = vrot.slane %v3661, 4
        %v3663 = vrot.slane %v2816, 5
        %v3664 = vsel %vm2008, %v3662, %v3663
        %v3665 = vrot.slane %v3663, 4
        %v3666 = vrot.slane %v2817, 5
        %v3667 = vsel %vm2008, %v3665, %v3666
        %v3668 = vrot.slane %v3514, 5
        %v3669 = vrot.slane %v3668, 4
        %v3670 = vrot.slane %v2819, 5
        %v3671 = vsel %vm2008, %v3669, %v3670
        %v3672 = vrot.slane %v3670, 4
        %v3673 = vrot.slane %v2820, 5
        %v3674 = vsel %vm2008, %v3672, %v3673
        %s3675 = scalar_lea.vmem %s1, 10
        %v3676 = vld [vmem:[%s3675] sm:$0x3]
        %v3677 = vunpack.c.l.b16 %v3566
        %v3678 = vunpack.c.l.b16 %v3569
        %v3679 = vunpack.c.l.b16 %v3573
        %v3680 = vunpack.c.l.b16 %v3576
        %v3681 = vunpack.c.l.b16 %v3580
        %v3682 = vunpack.c.l.b16 %v3583
        %v3683 = vunpack.c.l.b16 %v3587
        %v3684 = vunpack.c.l.b16 %v3590
        %v3685 = vunpack.c.l.b16 %v3594
        %v3686 = vunpack.c.l.b16 %v3597
        %v3687 = vunpack.c.l.b16 %v3601
        %v3688 = vunpack.c.l.b16 %v3604
        %v3689 = vunpack.c.l.b16 %v3608
        %v3690 = vunpack.c.l.b16 %v3611
        %v3691 = vunpack.c.l.b16 %v3615
        %v3692 = vunpack.c.l.b16 %v3618
        %v3693 = vunpack.c.l.b16 %v3622
        %v3694 = vunpack.c.l.b16 %v3625
        %v3695 = vunpack.c.l.b16 %v3629
        %v3696 = vunpack.c.l.b16 %v3632
        %v3697 = vunpack.c.l.b16 %v3636
        %v3698 = vunpack.c.l.b16 %v3639
        %v3699 = vunpack.c.l.b16 %v3643
        %v3700 = vunpack.c.l.b16 %v3646
        %v3701 = vunpack.c.l.b16 %v3650
        %v3702 = vunpack.c.l.b16 %v3653
        %v3703 = vunpack.c.l.b16 %v3657
        %v3704 = vunpack.c.l.b16 %v3660
        %v3705 = vunpack.c.l.b16 %v3664
        %v3706 = vunpack.c.l.b16 %v3667
        %v3707 = vunpack.c.l.b16 %v3671
        %v3708 = vunpack.c.l.b16 %v3674
        %v3709 = vpack.c.b16 %v3678, %v3677
        %v3710 = vpack.c.b16 %v3680, %v3679
        %v3711 = vpack.c.b16 %v3682, %v3681
        %v3712 = vpack.c.b16 %v3684, %v3683
        %v3713 = vpack.c.b16 %v3686, %v3685
        %v3714 = vpack.c.b16 %v3688, %v3687
        %v3715 = vpack.c.b16 %v3690, %v3689
        %v3716 = vpack.c.b16 %v3692, %v3691
        %v3717 = vpack.c.b16 %v3694, %v3693
        %v3718 = vpack.c.b16 %v3696, %v3695
        %v3719 = vpack.c.b16 %v3698, %v3697
        %v3720 = vpack.c.b16 %v3700, %v3699
        %v3721 = vpack.c.b16 %v3702, %v3701
        %v3722 = vpack.c.b16 %v3704, %v3703
        %v3723 = vpack.c.b16 %v3706, %v3705
        %v3724 = vpack.c.b16 %v3708, %v3707
        %v3726 = vsel %vm1452, %v3709, 0
        %v3729 = vsel %vm1452, %v3710, 0
        %v3732 = vsel %vm1452, %v3711, 0
        %v3735 = vsel %vm1452, %v3712, 0
        %v3738 = vsel %vm1452, %v3713, 0
        %v3741 = vsel %vm1452, %v3714, 0
        %v3744 = vsel %vm1452, %v3715, 0
        %v3747 = vsel %vm1452, %v3716, 0
        %v3750 = vsel %vm1452, %v3717, 0
        %v3753 = vsel %vm1452, %v3718, 0
        %v3756 = vsel %vm1452, %v3719, 0
        %v3759 = vsel %vm1452, %v3720, 0
        %v3762 = vsel %vm1452, %v3721, 0
        %v3765 = vsel %vm1452, %v3722, 0
        %v3768 = vsel %vm1452, %v3723, 0
        %v3771 = vsel %vm1452, %v3724, 0
        %v3774 = vsel %vm1501, %v3676, 0
        %3776 = vmatprep.subr.bf16.mxu0 0
        %3777 = vmatpush1.bf16.msra.mxu0 %v3774
        %3778 = vmatprep.subr.bf16.mxu0 0
        %3779 = vmatpush1.bf16.msra.mxu0 0
        %3780 = vmatprep.subr.bf16.mxu0 0
        %3781 = vmatpush1.bf16.msra.mxu0 0
        %3782 = vmatprep.subr.bf16.mxu0 0
        %3783 = vmatpush1.bf16.msra.mxu0 0
        %3784 = vmatprep.subr.bf16.mxu0 0
        %3785 = vmatpush1.bf16.msra.mxu0 0
        %3786 = vmatprep.subr.bf16.mxu0 0
        %3787 = vmatpush1.bf16.msra.mxu0 0
        %3788 = vmatprep.subr.bf16.mxu0 0
        %3789 = vmatpush1.bf16.msra.mxu0 0
        %3790 = vmatprep.subr.bf16.mxu0 0
        %3791 = vmatpush1.bf16.msra.mxu0 0
        %3792 = vmatprep.subr.bf16.mxu0 0
        %3793 = vmatpush1.bf16.msra.mxu0 0
        %3794 = vmatprep.subr.bf16.mxu0 0
        %3795 = vmatpush1.bf16.msra.mxu0 0
        %3796 = vmatprep.subr.bf16.mxu0 0
        %3797 = vmatpush1.bf16.msra.mxu0 0
        %3798 = vmatprep.subr.bf16.mxu0 0
        %3799 = vmatpush1.bf16.msra.mxu0 0
        %3800 = vmatprep.subr.bf16.mxu0 0
        %3801 = vmatpush1.bf16.msra.mxu0 0
        %3802 = vmatprep.subr.bf16.mxu0 0
        %3803 = vmatpush1.bf16.msra.mxu0 0
        %3804 = vmatprep.subr.bf16.mxu0 0
        %3805 = vmatpush1.bf16.msra.mxu0 0
        %3806 = vmatprep.subr.bf16.mxu0 0
        %3807 = vmatpush1.bf16.msra.mxu0 0
        %3808 = vmatprep.mubr.bf16.mxu0 0
        %3809 = vmatmul.mubr.bf16.gmra.mrb[0].mxu0 %v3726
        %v3810 = vpop.f32.mrb[0].mxu0
        %v3811 = vadd.f32 0.0, %v3810
        %v3812 = vpop.f32.mrb[0].mxu0
        %v3813 = vpop.f32.mrb[0].mxu0
        %v3814 = vadd.f32 0.0, %v3813
        %v3815 = vpop.f32.mrb[0].mxu0
        %3816 = vmatprep.mubr.bf16.mxu0 0
        %3817 = vmatmul.mubr.bf16.gmra.mrb[0].mxu0 %v3729
        %v3818 = vpop.f32.mrb[0].mxu0
        %v3819 = vadd.f32 0.0, %v3818
        %v3820 = vpop.f32.mrb[0].mxu0
        %v3821 = vpop.f32.mrb[0].mxu0
        %v3822 = vadd.f32 0.0, %v3821
        %v3823 = vpop.f32.mrb[0].mxu0
        %3824 = vmatprep.mubr.bf16.mxu0 0
        %3825 = vmatmul.mubr.bf16.gmra.mrb[0].mxu0 %v3732
        %v3826 = vpop.f32.mrb[0].mxu0
        %v3827 = vadd.f32 0.0, %v3826
        %v3828 = vpop.f32.mrb[0].mxu0
        %v3829 = vpop.f32.mrb[0].mxu0
        %v3830 = vadd.f32 0.0, %v3829
        %v3831 = vpop.f32.mrb[0].mxu0
        %3832 = vmatprep.mubr.bf16.mxu0 0
        %3833 = vmatmul.mubr.bf16.gmra.mrb[0].mxu0 %v3735
        %v3834 = vpop.f32.mrb[0].mxu0
        %v3835 = vadd.f32 0.0, %v3834
        %v3836 = vpop.f32.mrb[0].mxu0
        %v3837 = vpop.f32.mrb[0].mxu0
        %v3838 = vadd.f32 0.0, %v3837
        %v3839 = vpop.f32.mrb[0].mxu0
        %3840 = vmatprep.mubr.bf16.mxu0 0
        %3841 = vmatmul.mubr.bf16.gmra.mrb[0].mxu0 %v3738
        %v3842 = vpop.f32.mrb[0].mxu0
        %v3843 = vadd.f32 0.0, %v3842
        %v3844 = vpop.f32.mrb[0].mxu0
        %v3845 = vpop.f32.mrb[0].mxu0
        %v3846 = vadd.f32 0.0, %v3845
        %v3847 = vpop.f32.mrb[0].mxu0
        %3848 = vmatprep.mubr.bf16.mxu0 0
        %3849 = vmatmul.mubr.bf16.gmra.mrb[0].mxu0 %v3741
        %v3850 = vpop.f32.mrb[0].mxu0
        %v3851 = vadd.f32 0.0, %v3850
        %v3852 = vpop.f32.mrb[0].mxu0
        %v3853 = vpop.f32.mrb[0].mxu0
        %v3854 = vadd.f32 0.0, %v3853
        %v3855 = vpop.f32.mrb[0].mxu0
        %3856 = vmatprep.mubr.bf16.mxu0 0
        %3857 = vmatmul.mubr.bf16.gmra.mrb[0].mxu0 %v3744
        %v3858 = vpop.f32.mrb[0].mxu0
        %v3859 = vadd.f32 0.0, %v3858
        %v3860 = vpop.f32.mrb[0].mxu0
        %v3861 = vpop.f32.mrb[0].mxu0
        %v3862 = vadd.f32 0.0, %v3861
        %v3863 = vpop.f32.mrb[0].mxu0
        %3864 = vmatprep.mubr.bf16.mxu0 0
        %3865 = vmatmul.mubr.bf16.gmra.mrb[0].mxu0 %v3747
        %v3866 = vpop.f32.mrb[0].mxu0
        %v3867 = vadd.f32 0.0, %v3866
        %v3868 = vpop.f32.mrb[0].mxu0
        %v3869 = vpop.f32.mrb[0].mxu0
        %v3870 = vadd.f32 0.0, %v3869
        %v3871 = vpop.f32.mrb[0].mxu0
        %3872 = vmatprep.mubr.bf16.mxu0 0
        %3873 = vmatmul.mubr.bf16.gmra.mrb[0].mxu0 %v3750
        %v3874 = vpop.f32.mrb[0].mxu0
        %v3875 = vadd.f32 0.0, %v3874
        %v3876 = vpop.f32.mrb[0].mxu0
        %v3877 = vpop.f32.mrb[0].mxu0
        %v3878 = vadd.f32 0.0, %v3877
        %v3879 = vpop.f32.mrb[0].mxu0
        %3880 = vmatprep.mubr.bf16.mxu0 0
        %3881 = vmatmul.mubr.bf16.gmra.mrb[0].mxu0 %v3753
        %v3882 = vpop.f32.mrb[0].mxu0
        %v3883 = vadd.f32 0.0, %v3882
        %v3884 = vpop.f32.mrb[0].mxu0
        %v3885 = vpop.f32.mrb[0].mxu0
        %v3886 = vadd.f32 0.0, %v3885
        %v3887 = vpop.f32.mrb[0].mxu0
        %3888 = vmatprep.mubr.bf16.mxu0 0
        %3889 = vmatmul.mubr.bf16.gmra.mrb[0].mxu0 %v3756
        %v3890 = vpop.f32.mrb[0].mxu0
        %v3891 = vadd.f32 0.0, %v3890
        %v3892 = vpop.f32.mrb[0].mxu0
        %v3893 = vpop.f32.mrb[0].mxu0
        %v3894 = vadd.f32 0.0, %v3893
        %v3895 = vpop.f32.mrb[0].mxu0
        %3896 = vmatprep.mubr.bf16.mxu0 0
        %3897 = vmatmul.mubr.bf16.gmra.mrb[0].mxu0 %v3759
        %v3898 = vpop.f32.mrb[0].mxu0
        %v3899 = vadd.f32 0.0, %v3898
        %v3900 = vpop.f32.mrb[0].mxu0
        %v3901 = vpop.f32.mrb[0].mxu0
        %v3902 = vadd.f32 0.0, %v3901
        %v3903 = vpop.f32.mrb[0].mxu0
        %3904 = vmatprep.mubr.bf16.mxu0 0
        %3905 = vmatmul.mubr.bf16.gmra.mrb[0].mxu0 %v3762
        %v3906 = vpop.f32.mrb[0].mxu0
        %v3907 = vadd.f32 0.0, %v3906
        %v3908 = vpop.f32.mrb[0].mxu0
        %v3909 = vpop.f32.mrb[0].mxu0
        %v3910 = vadd.f32 0.0, %v3909
        %v3911 = vpop.f32.mrb[0].mxu0
        %3912 = vmatprep.mubr.bf16.mxu0 0
        %3913 = vmatmul.mubr.bf16.gmra.mrb[0].mxu0 %v3765
        %v3914 = vpop.f32.mrb[0].mxu0
        %v3915 = vadd.f32 0.0, %v3914
        %v3916 = vpop.f32.mrb[0].mxu0
        %v3917 = vpop.f32.mrb[0].mxu0
        %v3918 = vadd.f32 0.0, %v3917
        %v3919 = vpop.f32.mrb[0].mxu0
        %3920 = vmatprep.mubr.bf16.mxu0 0
        %3921 = vmatmul.mubr.bf16.gmra.mrb[0].mxu0 %v3768
        %v3922 = vpop.f32.mrb[0].mxu0
        %v3923 = vadd.f32 0.0, %v3922
        %v3924 = vpop.f32.mrb[0].mxu0
        %v3925 = vpop.f32.mrb[0].mxu0
        %v3926 = vadd.f32 0.0, %v3925
        %v3927 = vpop.f32.mrb[0].mxu0
        %3928 = vmatprep.mubr.bf16.mxu0 0
        %3929 = vmatmul.mubr.bf16.gmra.mrb[0].mxu0 %v3771
        %v3930 = vpop.f32.mrb[0].mxu0
        %v3931 = vadd.f32 0.0, %v3930
        %v3932 = vpop.f32.mrb[0].mxu0
        %v3933 = vpop.f32.mrb[0].mxu0
        %v3934 = vadd.f32 0.0, %v3933
        %v3935 = vpop.f32.mrb[0].mxu0
        %3936 = vdwg.mxu0
        %v3937 = vadd.f32 %v3467, %v3811
        %v3938 = vadd.f32 %v3468, %v3814
        %v3939 = vadd.f32 %v3469, %v3819
        %v3940 = vadd.f32 %v3470, %v3822
        %v3941 = vadd.f32 %v3471, %v3827
        %v3942 = vadd.f32 %v3472, %v3830
        %v3943 = vadd.f32 %v3473, %v3835
        %v3944 = vadd.f32 %v3474, %v3838
        %v3945 = vadd.f32 %v3475, %v3843
        %v3946 = vadd.f32 %v3476, %v3846
        %v3947 = vadd.f32 %v3477, %v3851
        %v3948 = vadd.f32 %v3478, %v3854
        %v3949 = vadd.f32 %v3479, %v3859
        %v3950 = vadd.f32 %v3480, %v3862
        %v3951 = vadd.f32 %v3481, %v3867
        %v3952 = vadd.f32 %v3482, %v3870
        %v3953 = vadd.f32 %v3483, %v3875
        %v3954 = vadd.f32 %v3484, %v3878
        %v3955 = vadd.f32 %v3485, %v3883
        %v3956 = vadd.f32 %v3486, %v3886
        %v3957 = vadd.f32 %v3487, %v3891
        %v3958 = vadd.f32 %v3488, %v3894
        %v3959 = vadd.f32 %v3489, %v3899
        %v3960 = vadd.f32 %v3490, %v3902
        %v3961 = vadd.f32 %v3491, %v3907
        %v3962 = vadd.f32 %v3492, %v3910
        %v3963 = vadd.f32 %v3493, %v3915
        %v3964 = vadd.f32 %v3494, %v3918
        %v3965 = vadd.f32 %v3495, %v3923
        %v3966 = vadd.f32 %v3496, %v3926
        %v3967 = vadd.f32 %v3497, %v3931
        %v3968 = vadd.f32 %v3498, %v3934
        %s3969 = scalar_lea.vmem [#allocation2], 24
        %v3970 = vld [vmem:[%s3969] sm:$0xf]
        %v3971 = vld [vmem:[%s3969 + $0x4] sm:$0xf]
        %v3972 = vld [vmem:[%s3969 + $0xc] sm:$0xf]
        %v3973 = vld [vmem:[%s3969 + $0x10] sm:$0xf]
        %v3974 = vld [vmem:[%s3969 + $0x18] sm:$0xf]
        %v3975 = vld [vmem:[%s3969 + $0x1c] sm:$0xf]
        %v3976 = vld [vmem:[%s3969 + $0x24] sm:$0xf]
        %v3977 = vld [vmem:[%s3969 + $0x28] sm:$0xf]
        %v3978 = vld [vmem:[%s3969 + $0x30] sm:$0xf]
        %v3979 = vld [vmem:[%s3969 + $0x34] sm:$0xf]
        %v3980 = vld [vmem:[%s3969 + $0x3c] sm:$0xf]
        %v3981 = vld [vmem:[%s3969 + $0x40] sm:$0xf]
        %v3982 = vld [vmem:[%s3969 + $0x48] sm:$0xf]
        %v3983 = vld [vmem:[%s3969 + $0x4c] sm:$0xf]
        %v3984 = vld [vmem:[%s3969 + $0x54] sm:$0xf]
        %v3985 = vld [vmem:[%s3969 + $0x58] sm:$0xf]
        %v3986 = vld [vmem:[%s3969 + $0x60] sm:$0xf]
        %v3987 = vld [vmem:[%s3969 + $0x64] sm:$0xf]
        %v3988 = vld [vmem:[%s3969 + $0x6c] sm:$0xf]
        %v3989 = vld [vmem:[%s3969 + $0x70] sm:$0xf]
        %v3990 = vld [vmem:[%s3969 + $0x78] sm:$0xf]
        %v3991 = vld [vmem:[%s3969 + $0x7c] sm:$0xf]
        %v3992 = vld [vmem:[%s3969 + $0x84] sm:$0xf]
        %v3993 = vld [vmem:[%s3969 + $0x88] sm:$0xf]
        %v3994 = vld [vmem:[%s3969 + $0x90] sm:$0xf]
        %v3995 = vld [vmem:[%s3969 + $0x94] sm:$0xf]
        %v3996 = vld [vmem:[%s3969 + $0x9c] sm:$0xf]
        %v3997 = vld [vmem:[%s3969 + $0xa0] sm:$0xf]
        %v3998 = vld [vmem:[%s3969 + $0xa8] sm:$0xf]
        %v3999 = vld [vmem:[%s3969 + $0xac] sm:$0xf]
        %v4000 = vld [vmem:[%s3969 + $0xb4] sm:$0xf]
        %v4001 = vld [vmem:[%s3969 + $0xb8] sm:$0xf]
        %s4002 = scalar_lea.vmem %s1, 12
        %v4003 = vld [vmem:[%s4002] sm:$0x3]
        %v4036 = vunpack.c.l.b16 %v3970
        %v4037 = vunpack.c.l.b16 %v3971
        %v4038 = vunpack.c.l.b16 %v3972
        %v4039 = vunpack.c.l.b16 %v3973
        %v4040 = vunpack.c.l.b16 %v3974
        %v4041 = vunpack.c.l.b16 %v3975
        %v4042 = vunpack.c.l.b16 %v3976
        %v4043 = vunpack.c.l.b16 %v3977
        %v4044 = vunpack.c.l.b16 %v3978
        %v4045 = vunpack.c.l.b16 %v3979
        %v4046 = vunpack.c.l.b16 %v3980
        %v4047 = vunpack.c.l.b16 %v3981
        %v4048 = vunpack.c.l.b16 %v3982
        %v4049 = vunpack.c.l.b16 %v3983
        %v4050 = vunpack.c.l.b16 %v3984
        %v4051 = vunpack.c.l.b16 %v3985
        %v4052 = vunpack.c.l.b16 %v3986
        %v4053 = vunpack.c.l.b16 %v3987
        %v4054 = vunpack.c.l.b16 %v3988
        %v4055 = vunpack.c.l.b16 %v3989
        %v4056 = vunpack.c.l.b16 %v3990
        %v4057 = vunpack.c.l.b16 %v3991
        %v4058 = vunpack.c.l.b16 %v3992
        %v4059 = vunpack.c.l.b16 %v3993
        %v4060 = vunpack.c.l.b16 %v3994
        %v4061 = vunpack.c.l.b16 %v3995
        %v4062 = vunpack.c.l.b16 %v3996
        %v4063 = vunpack.c.l.b16 %v3997
        %v4064 = vunpack.c.l.b16 %v3998
        %v4065 = vunpack.c.l.b16 %v3999
        %v4066 = vunpack.c.l.b16 %v4000
        %v4067 = vunpack.c.l.b16 %v4001
        %v4068 = vpack.c.b16 %v4037, %v4036
        %v4069 = vpack.c.b16 %v4039, %v4038
        %v4070 = vpack.c.b16 %v4041, %v4040
        %v4071 = vpack.c.b16 %v4043, %v4042
        %v4072 = vpack.c.b16 %v4045, %v4044
        %v4073 = vpack.c.b16 %v4047, %v4046
        %v4074 = vpack.c.b16 %v4049, %v4048
        %v4075 = vpack.c.b16 %v4051, %v4050
        %v4076 = vpack.c.b16 %v4053, %v4052
        %v4077 = vpack.c.b16 %v4055, %v4054
        %v4078 = vpack.c.b16 %v4057, %v4056
        %v4079 = vpack.c.b16 %v4059, %v4058
        %v4080 = vpack.c.b16 %v4061, %v4060
        %v4081 = vpack.c.b16 %v4063, %v4062
        %v4082 = vpack.c.b16 %v4065, %v4064
        %v4083 = vpack.c.b16 %v4067, %v4066
        %v4085 = vsel %vm1452, %v4068, 0
        %v4088 = vsel %vm1452, %v4069, 0
        %v4091 = vsel %vm1452, %v4070, 0
        %v4094 = vsel %vm1452, %v4071, 0
        %v4097 = vsel %vm1452, %v4072, 0
        %v4100 = vsel %vm1452, %v4073, 0
        %v4103 = vsel %vm1452, %v4074, 0
        %v4106 = vsel %vm1452, %v4075, 0
        %v4109 = vsel %vm1452, %v4076, 0
        %v4112 = vsel %vm1452, %v4077, 0
        %v4115 = vsel %vm1452, %v4078, 0
        %v4118 = vsel %vm1452, %v4079, 0
        %v4121 = vsel %vm1452, %v4080, 0
        %v4124 = vsel %vm1452, %v4081, 0
        %v4127 = vsel %vm1452, %v4082, 0
        %v4130 = vsel %vm1452, %v4083, 0
        %v4133 = vsel %vm1501, %v4003, 0
        %4135 = vmatprep.subr.bf16.mxu0 0
        %4136 = vmatpush1.bf16.msra.mxu0 %v4133
        %4137 = vmatprep.subr.bf16.mxu0 0
        %4138 = vmatpush1.bf16.msra.mxu0 0
        %4139 = vmatprep.subr.bf16.mxu0 0
        %4140 = vmatpush1.bf16.msra.mxu0 0
        %4141 = vmatprep.subr.bf16.mxu0 0
        %4142 = vmatpush1.bf16.msra.mxu0 0
        %4143 = vmatprep.subr.bf16.mxu0 0
        %4144 = vmatpush1.bf16.msra.mxu0 0
        %4145 = vmatprep.subr.bf16.mxu0 0
        %4146 = vmatpush1.bf16.msra.mxu0 0
        %4147 = vmatprep.subr.bf16.mxu0 0
        %4148 = vmatpush1.bf16.msra.mxu0 0
        %4149 = vmatprep.subr.bf16.mxu0 0
        %4150 = vmatpush1.bf16.msra.mxu0 0
        %4151 = vmatprep.subr.bf16.mxu0 0
        %4152 = vmatpush1.bf16.msra.mxu0 0
        %4153 = vmatprep.subr.bf16.mxu0 0
        %4154 = vmatpush1.bf16.msra.mxu0 0
        %4155 = vmatprep.subr.bf16.mxu0 0
        %4156 = vmatpush1.bf16.msra.mxu0 0
        %4157 = vmatprep.subr.bf16.mxu0 0
        %4158 = vmatpush1.bf16.msra.mxu0 0
        %4159 = vmatprep.subr.bf16.mxu0 0
        %4160 = vmatpush1.bf16.msra.mxu0 0
        %4161 = vmatprep.subr.bf16.mxu0 0
        %4162 = vmatpush1.bf16.msra.mxu0 0
        %4163 = vmatprep.subr.bf16.mxu0 0
        %4164 = vmatpush1.bf16.msra.mxu0 0
        %4165 = vmatprep.subr.bf16.mxu0 0
        %4166 = vmatpush1.bf16.msra.mxu0 0
        %4167 = vmatprep.mubr.bf16.mxu0 0
        %4168 = vmatmul.mubr.bf16.gmra.mrb[0].mxu0 %v4085
        %v4169 = vpop.f32.mrb[0].mxu0
        %v4170 = vadd.f32 0.0, %v4169
        %v4171 = vpop.f32.mrb[0].mxu0
        %v4172 = vpop.f32.mrb[0].mxu0
        %v4173 = vadd.f32 0.0, %v4172
        %v4174 = vpop.f32.mrb[0].mxu0
        %4175 = vmatprep.mubr.bf16.mxu0 0
        %4176 = vmatmul.mubr.bf16.gmra.mrb[0].mxu0 %v4088
        %v4177 = vpop.f32.mrb[0].mxu0
        %v4178 = vadd.f32 0.0, %v4177
        %v4179 = vpop.f32.mrb[0].mxu0
        %v4180 = vpop.f32.mrb[0].mxu0
        %v4181 = vadd.f32 0.0, %v4180
        %v4182 = vpop.f32.mrb[0].mxu0
        %4183 = vmatprep.mubr.bf16.mxu0 0
        %4184 = vmatmul.mubr.bf16.gmra.mrb[0].mxu0 %v4091
        %v4185 = vpop.f32.mrb[0].mxu0
        %v4186 = vadd.f32 0.0, %v4185
        %v4187 = vpop.f32.mrb[0].mxu0
        %v4188 = vpop.f32.mrb[0].mxu0
        %v4189 = vadd.f32 0.0, %v4188
        %v4190 = vpop.f32.mrb[0].mxu0
        %4191 = vmatprep.mubr.bf16.mxu0 0
        %4192 = vmatmul.mubr.bf16.gmra.mrb[0].mxu0 %v4094
        %v4193 = vpop.f32.mrb[0].mxu0
        %v4194 = vadd.f32 0.0, %v4193
        %v4195 = vpop.f32.mrb[0].mxu0
        %v4196 = vpop.f32.mrb[0].mxu0
        %v4197 = vadd.f32 0.0, %v4196
        %v4198 = vpop.f32.mrb[0].mxu0
        %4199 = vmatprep.mubr.bf16.mxu0 0
        %4200 = vmatmul.mubr.bf16.gmra.mrb[0].mxu0 %v4097
        %v4201 = vpop.f32.mrb[0].mxu0
        %v4202 = vadd.f32 0.0, %v4201
        %v4203 = vpop.f32.mrb[0].mxu0
        %v4204 = vpop.f32.mrb[0].mxu0
        %v4205 = vadd.f32 0.0, %v4204
        %v4206 = vpop.f32.mrb[0].mxu0
        %4207 = vmatprep.mubr.bf16.mxu0 0
        %4208 = vmatmul.mubr.bf16.gmra.mrb[0].mxu0 %v4100
        %v4209 = vpop.f32.mrb[0].mxu0
        %v4210 = vadd.f32 0.0, %v4209
        %v4211 = vpop.f32.mrb[0].mxu0
        %v4212 = vpop.f32.mrb[0].mxu0
        %v4213 = vadd.f32 0.0, %v4212
        %v4214 = vpop.f32.mrb[0].mxu0
        %4215 = vmatprep.mubr.bf16.mxu0 0
        %4216 = vmatmul.mubr.bf16.gmra.mrb[0].mxu0 %v4103
        %v4217 = vpop.f32.mrb[0].mxu0
        %v4218 = vadd.f32 0.0, %v4217
        %v4219 = vpop.f32.mrb[0].mxu0
        %v4220 = vpop.f32.mrb[0].mxu0
        %v4221 = vadd.f32 0.0, %v4220
        %v4222 = vpop.f32.mrb[0].mxu0
        %4223 = vmatprep.mubr.bf16.mxu0 0
        %4224 = vmatmul.mubr.bf16.gmra.mrb[0].mxu0 %v4106
        %v4225 = vpop.f32.mrb[0].mxu0
        %v4226 = vadd.f32 0.0, %v4225
        %v4227 = vpop.f32.mrb[0].mxu0
        %v4228 = vpop.f32.mrb[0].mxu0
        %v4229 = vadd.f32 0.0, %v4228
        %v4230 = vpop.f32.mrb[0].mxu0
        %4231 = vmatprep.mubr.bf16.mxu0 0
        %4232 = vmatmul.mubr.bf16.gmra.mrb[0].mxu0 %v4109
        %v4233 = vpop.f32.mrb[0].mxu0
        %v4234 = vadd.f32 0.0, %v4233
        %v4235 = vpop.f32.mrb[0].mxu0
        %v4236 = vpop.f32.mrb[0].mxu0
        %v4237 = vadd.f32 0.0, %v4236
        %v4238 = vpop.f32.mrb[0].mxu0
        %4239 = vmatprep.mubr.bf16.mxu0 0
        %4240 = vmatmul.mubr.bf16.gmra.mrb[0].mxu0 %v4112
        %v4241 = vpop.f32.mrb[0].mxu0
        %v4242 = vadd.f32 0.0, %v4241
        %v4243 = vpop.f32.mrb[0].mxu0
        %v4244 = vpop.f32.mrb[0].mxu0
        %v4245 = vadd.f32 0.0, %v4244
        %v4246 = vpop.f32.mrb[0].mxu0
        %4247 = vmatprep.mubr.bf16.mxu0 0
        %4248 = vmatmul.mubr.bf16.gmra.mrb[0].mxu0 %v4115
        %v4249 = vpop.f32.mrb[0].mxu0
        %v4250 = vadd.f32 0.0, %v4249
        %v4251 = vpop.f32.mrb[0].mxu0
        %v4252 = vpop.f32.mrb[0].mxu0
        %v4253 = vadd.f32 0.0, %v4252
        %v4254 = vpop.f32.mrb[0].mxu0
        %4255 = vmatprep.mubr.bf16.mxu0 0
        %4256 = vmatmul.mubr.bf16.gmra.mrb[0].mxu0 %v4118
        %v4257 = vpop.f32.mrb[0].mxu0
        %v4258 = vadd.f32 0.0, %v4257
        %v4259 = vpop.f32.mrb[0].mxu0
        %v4260 = vpop.f32.mrb[0].mxu0
        %v4261 = vadd.f32 0.0, %v4260
        %v4262 = vpop.f32.mrb[0].mxu0
        %4263 = vmatprep.mubr.bf16.mxu0 0
        %4264 = vmatmul.mubr.bf16.gmra.mrb[0].mxu0 %v4121
        %v4265 = vpop.f32.mrb[0].mxu0
        %v4266 = vadd.f32 0.0, %v4265
        %v4267 = vpop.f32.mrb[0].mxu0
        %v4268 = vpop.f32.mrb[0].mxu0
        %v4269 = vadd.f32 0.0, %v4268
        %v4270 = vpop.f32.mrb[0].mxu0
        %4271 = vmatprep.mubr.bf16.mxu0 0
        %4272 = vmatmul.mubr.bf16.gmra.mrb[0].mxu0 %v4124
        %v4273 = vpop.f32.mrb[0].mxu0
        %v4274 = vadd.f32 0.0, %v4273
        %v4275 = vpop.f32.mrb[0].mxu0
        %v4276 = vpop.f32.mrb[0].mxu0
        %v4277 = vadd.f32 0.0, %v4276
        %v4278 = vpop.f32.mrb[0].mxu0
        %4279 = vmatprep.mubr.bf16.mxu0 0
        %4280 = vmatmul.mubr.bf16.gmra.mrb[0].mxu0 %v4127
        %v4281 = vpop.f32.mrb[0].mxu0
        %v4282 = vadd.f32 0.0, %v4281
        %v4283 = vpop.f32.mrb[0].mxu0
        %v4284 = vpop.f32.mrb[0].mxu0
        %v4285 = vadd.f32 0.0, %v4284
        %v4286 = vpop.f32.mrb[0].mxu0
        %4287 = vmatprep.mubr.bf16.mxu0 0
        %4288 = vmatmul.mubr.bf16.gmra.mrb[0].mxu0 %v4130
        %v4289 = vpop.f32.mrb[0].mxu0
        %v4290 = vadd.f32 0.0, %v4289
        %v4291 = vpop.f32.mrb[0].mxu0
        %v4292 = vpop.f32.mrb[0].mxu0
        %v4293 = vadd.f32 0.0, %v4292
        %v4294 = vpop.f32.mrb[0].mxu0
        %4295 = vdwg.mxu0
        %v4296 = vadd.f32 %v3937, %v4170
        %v4297 = vadd.f32 %v3938, %v4173
        %v4298 = vadd.f32 %v3939, %v4178
        %v4299 = vadd.f32 %v3940, %v4181
        %v4300 = vadd.f32 %v3941, %v4186
        %v4301 = vadd.f32 %v3942, %v4189
        %v4302 = vadd.f32 %v3943, %v4194
        %v4303 = vadd.f32 %v3944, %v4197
        %v4304 = vadd.f32 %v3945, %v4202
        %v4305 = vadd.f32 %v3946, %v4205
        %v4306 = vadd.f32 %v3947, %v4210
        %v4307 = vadd.f32 %v3948, %v4213
        %v4308 = vadd.f32 %v3949, %v4218
        %v4309 = vadd.f32 %v3950, %v4221
        %v4310 = vadd.f32 %v3951, %v4226
        %v4311 = vadd.f32 %v3952, %v4229
        %v4312 = vadd.f32 %v3953, %v4234
        %v4313 = vadd.f32 %v3954, %v4237
        %v4314 = vadd.f32 %v3955, %v4242
        %v4315 = vadd.f32 %v3956, %v4245
        %v4316 = vadd.f32 %v3957, %v4250
        %v4317 = vadd.f32 %v3958, %v4253
        %v4318 = vadd.f32 %v3959, %v4258
        %v4319 = vadd.f32 %v3960, %v4261
        %v4320 = vadd.f32 %v3961, %v4266
        %v4321 = vadd.f32 %v3962, %v4269
        %v4322 = vadd.f32 %v3963, %v4274
        %v4323 = vadd.f32 %v3964, %v4277
        %v4324 = vadd.f32 %v3965, %v4282
        %v4325 = vadd.f32 %v3966, %v4285
        %v4326 = vadd.f32 %v3967, %v4290
        %v4327 = vadd.f32 %v3968, %v4293
        %v4328 = vld [vmem:[%s3969] sm:$0xf]
        %v4329 = vld [vmem:[%s3969 + $0x4] sm:$0xf]
        %v4330 = vld [vmem:[%s3969 + $0x8] sm:$0x1]
        %v4331 = vld [vmem:[%s3969 + $0xc] sm:$0xf]
        %v4332 = vld [vmem:[%s3969 + $0x10] sm:$0xf]
        %v4333 = vld [vmem:[%s3969 + $0x14] sm:$0x1]
        %v4334 = vld [vmem:[%s3969 + $0x18] sm:$0xf]
        %v4335 = vld [vmem:[%s3969 + $0x1c] sm:$0xf]
        %v4336 = vld [vmem:[%s3969 + $0x20] sm:$0x1]
        %v4337 = vld [vmem:[%s3969 + $0x24] sm:$0xf]
        %v4338 = vld [vmem:[%s3969 + $0x28] sm:$0xf]
        %v4339 = vld [vmem:[%s3969 + $0x2c] sm:$0x1]
        %v4340 = vld [vmem:[%s3969 + $0x30] sm:$0xf]
        %v4341 = vld [vmem:[%s3969 + $0x34] sm:$0xf]
        %v4342 = vld [vmem:[%s3969 + $0x38] sm:$0x1]
        %v4343 = vld [vmem:[%s3969 + $0x3c] sm:$0xf]
        %v4344 = vld [vmem:[%s3969 + $0x40] sm:$0xf]
        %v4345 = vld [vmem:[%s3969 + $0x44] sm:$0x1]
        %v4346 = vld [vmem:[%s3969 + $0x48] sm:$0xf]
        %v4347 = vld [vmem:[%s3969 + $0x4c] sm:$0xf]
        %v4348 = vld [vmem:[%s3969 + $0x50] sm:$0x1]
        %v4349 = vld [vmem:[%s3969 + $0x54] sm:$0xf]
        %v4350 = vld [vmem:[%s3969 + $0x58] sm:$0xf]
        %v4351 = vld [vmem:[%s3969 + $0x5c] sm:$0x1]
        %v4352 = vld [vmem:[%s3969 + $0x60] sm:$0xf]
        %v4353 = vld [vmem:[%s3969 + $0x64] sm:$0xf]
        %v4354 = vld [vmem:[%s3969 + $0x68] sm:$0x1]
        %v4355 = vld [vmem:[%s3969 + $0x6c] sm:$0xf]
        %v4356 = vld [vmem:[%s3969 + $0x70] sm:$0xf]
        %v4357 = vld [vmem:[%s3969 + $0x74] sm:$0x1]
        %v4358 = vld [vmem:[%s3969 + $0x78] sm:$0xf]
        %v4359 = vld [vmem:[%s3969 + $0x7c] sm:$0xf]
        %v4360 = vld [vmem:[%s3969 + $0x80] sm:$0x1]
        %v4361 = vld [vmem:[%s3969 + $0x84] sm:$0xf]
        %v4362 = vld [vmem:[%s3969 + $0x88] sm:$0xf]
        %v4363 = vld [vmem:[%s3969 + $0x8c] sm:$0x1]
        %v4364 = vld [vmem:[%s3969 + $0x90] sm:$0xf]
        %v4365 = vld [vmem:[%s3969 + $0x94] sm:$0xf]
        %v4366 = vld [vmem:[%s3969 + $0x98] sm:$0x1]
        %v4367 = vld [vmem:[%s3969 + $0x9c] sm:$0xf]
        %v4368 = vld [vmem:[%s3969 + $0xa0] sm:$0xf]
        %v4369 = vld [vmem:[%s3969 + $0xa4] sm:$0x1]
        %v4370 = vld [vmem:[%s3969 + $0xa8] sm:$0xf]
        %v4371 = vld [vmem:[%s3969 + $0xac] sm:$0xf]
        %v4372 = vld [vmem:[%s3969 + $0xb0] sm:$0x1]
        %v4373 = vld [vmem:[%s3969 + $0xb4] sm:$0xf]
        %v4374 = vld [vmem:[%s3969 + $0xb8] sm:$0xf]
        %v4375 = vld [vmem:[%s3969 + $0xbc] sm:$0x1]
        %v4377 = vshrl.u32 %v4328, 16
        %v4379 = vrot.slane %v4377, 4
        %v4380 = vshll.u32 %v4328, 16
        %v4382 = vrot.slane %v4380, 5
        %v4383 = vor.u32 %v4379, %v4382
        %v4384 = vrot.slane %v4383, 4
        %v4386 = vshll.u32 %v4329, 16
        %v4388 = vrot.slane %v4386, 5
        %v4389 = vsel %vm1017, %v4384, %v4388
        %v4390 = vshrl.u32 %v4329, 16
        %v4392 = vrot.slane %v4390, 4
        %v4393 = vor.u32 %v4392, %v4388
        %v4394 = vrot.slane %v4393, 4
        %v4396 = vshll.u32 %v4330, 16
        %v4398 = vrot.slane %v4396, 5
        %v4399 = vsel %vm1017, %v4394, %v4398
        %v4401 = vshrl.u32 %v4331, 16
        %v4403 = vrot.slane %v4401, 4
        %v4404 = vshll.u32 %v4331, 16
        %v4406 = vrot.slane %v4404, 5
        %v4407 = vor.u32 %v4403, %v4406
        %v4408 = vrot.slane %v4407, 4
        %v4410 = vshll.u32 %v4332, 16
        %v4412 = vrot.slane %v4410, 5
        %v4413 = vsel %vm1017, %v4408, %v4412
        %v4414 = vshrl.u32 %v4332, 16
        %v4416 = vrot.slane %v4414, 4
        %v4417 = vor.u32 %v4416, %v4412
        %v4418 = vrot.slane %v4417, 4
        %v4420 = vshll.u32 %v4333, 16
        %v4422 = vrot.slane %v4420, 5
        %v4423 = vsel %vm1017, %v4418, %v4422
        %v4425 = vshrl.u32 %v4334, 16
        %v4427 = vrot.slane %v4425, 4
        %v4428 = vshll.u32 %v4334, 16
        %v4430 = vrot.slane %v4428, 5
        %v4431 = vor.u32 %v4427, %v4430
        %v4432 = vrot.slane %v4431, 4
        %v4434 = vshll.u32 %v4335, 16
        %v4436 = vrot.slane %v4434, 5
        %v4437 = vsel %vm1017, %v4432, %v4436
        %v4438 = vshrl.u32 %v4335, 16
        %v4440 = vrot.slane %v4438, 4
        %v4441 = vor.u32 %v4440, %v4436
        %v4442 = vrot.slane %v4441, 4
        %v4444 = vshll.u32 %v4336, 16
        %v4446 = vrot.slane %v4444, 5
        %v4447 = vsel %vm1017, %v4442, %v4446
        %v4449 = vshrl.u32 %v4337, 16
        %v4451 = vrot.slane %v4449, 4
        %v4452 = vshll.u32 %v4337, 16
        %v4454 = vrot.slane %v4452, 5
        %v4455 = vor.u32 %v4451, %v4454
        %v4456 = vrot.slane %v4455, 4
        %v4458 = vshll.u32 %v4338, 16
        %v4460 = vrot.slane %v4458, 5
        %v4461 = vsel %vm1017, %v4456, %v4460
        %v4462 = vshrl.u32 %v4338, 16
        %v4464 = vrot.slane %v4462, 4
        %v4465 = vor.u32 %v4464, %v4460
        %v4466 = vrot.slane %v4465, 4
        %v4468 = vshll.u32 %v4339, 16
        %v4470 = vrot.slane %v4468, 5
        %v4471 = vsel %vm1017, %v4466, %v4470
        %v4473 = vshrl.u32 %v4340, 16
        %v4475 = vrot.slane %v4473, 4
        %v4476 = vshll.u32 %v4340, 16
        %v4478 = vrot.slane %v4476, 5
        %v4479 = vor.u32 %v4475, %v4478
        %v4480 = vrot.slane %v4479, 4
        %v4482 = vshll.u32 %v4341, 16
        %v4484 = vrot.slane %v4482, 5
        %v4485 = vsel %vm1017, %v4480, %v4484
        %v4486 = vshrl.u32 %v4341, 16
        %v4488 = vrot.slane %v4486, 4
        %v4489 = vor.u32 %v4488, %v4484
        %v4490 = vrot.slane %v4489, 4
        %v4492 = vshll.u32 %v4342, 16
        %v4494 = vrot.slane %v4492, 5
        %v4495 = vsel %vm1017, %v4490, %v4494
        %v4497 = vshrl.u32 %v4343, 16
        %v4499 = vrot.slane %v4497, 4
        %v4500 = vshll.u32 %v4343, 16
        %v4502 = vrot.slane %v4500, 5
        %v4503 = vor.u32 %v4499, %v4502
        %v4504 = vrot.slane %v4503, 4
        %v4506 = vshll.u32 %v4344, 16
        %v4508 = vrot.slane %v4506, 5
        %v4509 = vsel %vm1017, %v4504, %v4508
        %v4510 = vshrl.u32 %v4344, 16
        %v4512 = vrot.slane %v4510, 4
        %v4513 = vor.u32 %v4512, %v4508
        %v4514 = vrot.slane %v4513, 4
        %v4516 = vshll.u32 %v4345, 16
        %v4518 = vrot.slane %v4516, 5
        %v4519 = vsel %vm1017, %v4514, %v4518
        %v4521 = vshrl.u32 %v4346, 16
        %v4523 = vrot.slane %v4521, 4
        %v4524 = vshll.u32 %v4346, 16
        %v4526 = vrot.slane %v4524, 5
        %v4527 = vor.u32 %v4523, %v4526
        %v4528 = vrot.slane %v4527, 4
        %v4530 = vshll.u32 %v4347, 16
        %v4532 = vrot.slane %v4530, 5
        %v4533 = vsel %vm1017, %v4528, %v4532
        %v4534 = vshrl.u32 %v4347, 16
        %v4536 = vrot.slane %v4534, 4
        %v4537 = vor.u32 %v4536, %v4532
        %v4538 = vrot.slane %v4537, 4
        %v4540 = vshll.u32 %v4348, 16
        %v4542 = vrot.slane %v4540, 5
        %v4543 = vsel %vm1017, %v4538, %v4542
        %v4545 = vshrl.u32 %v4349, 16
        %v4547 = vrot.slane %v4545, 4
        %v4548 = vshll.u32 %v4349, 16
        %v4550 = vrot.slane %v4548, 5
        %v4551 = vor.u32 %v4547, %v4550
        %v4552 = vrot.slane %v4551, 4
        %v4554 = vshll.u32 %v4350, 16
        %v4556 = vrot.slane %v4554, 5
        %v4557 = vsel %vm1017, %v4552, %v4556
        %v4558 = vshrl.u32 %v4350, 16
        %v4560 = vrot.slane %v4558, 4
        %v4561 = vor.u32 %v4560, %v4556
        %v4562 = vrot.slane %v4561, 4
        %v4564 = vshll.u32 %v4351, 16
        %v4566 = vrot.slane %v4564, 5
        %v4567 = vsel %vm1017, %v4562, %v4566
        %v4569 = vshrl.u32 %v4352, 16
        %v4571 = vrot.slane %v4569, 4
        %v4572 = vshll.u32 %v4352, 16
        %v4574 = vrot.slane %v4572, 5
        %v4575 = vor.u32 %v4571, %v4574
        %v4576 = vrot.slane %v4575, 4
        %v4578 = vshll.u32 %v4353, 16
        %v4580 = vrot.slane %v4578, 5
        %v4581 = vsel %vm1017, %v4576, %v4580
        %v4582 = vshrl.u32 %v4353, 16
        %v4584 = vrot.slane %v4582, 4
        %v4585 = vor.u32 %v4584, %v4580
        %v4586 = vrot.slane %v4585, 4
        %v4588 = vshll.u32 %v4354, 16
        %v4590 = vrot.slane %v4588, 5
        %v4591 = vsel %vm1017, %v4586, %v4590
        %v4593 = vshrl.u32 %v4355, 16
        %v4595 = vrot.slane %v4593, 4
        %v4596 = vshll.u32 %v4355, 16
        %v4598 = vrot.slane %v4596, 5
        %v4599 = vor.u32 %v4595, %v4598
        %v4600 = vrot.slane %v4599, 4
        %v4602 = vshll.u32 %v4356, 16
        %v4604 = vrot.slane %v4602, 5
        %v4605 = vsel %vm1017, %v4600, %v4604
        %v4606 = vshrl.u32 %v4356, 16
        %v4608 = vrot.slane %v4606, 4
        %v4609 = vor.u32 %v4608, %v4604
        %v4610 = vrot.slane %v4609, 4
        %v4612 = vshll.u32 %v4357, 16
        %v4614 = vrot.slane %v4612, 5
        %v4615 = vsel %vm1017, %v4610, %v4614
        %v4617 = vshrl.u32 %v4358, 16
        %v4619 = vrot.slane %v4617, 4
        %v4620 = vshll.u32 %v4358, 16
        %v4622 = vrot.slane %v4620, 5
        %v4623 = vor.u32 %v4619, %v4622
        %v4624 = vrot.slane %v4623, 4
        %v4626 = vshll.u32 %v4359, 16
        %v4628 = vrot.slane %v4626, 5
        %v4629 = vsel %vm1017, %v4624, %v4628
        %v4630 = vshrl.u32 %v4359, 16
        %v4632 = vrot.slane %v4630, 4
        %v4633 = vor.u32 %v4632, %v4628
        %v4634 = vrot.slane %v4633, 4
        %v4636 = vshll.u32 %v4360, 16
        %v4638 = vrot.slane %v4636, 5
        %v4639 = vsel %vm1017, %v4634, %v4638
        %v4641 = vshrl.u32 %v4361, 16
        %v4643 = vrot.slane %v4641, 4
        %v4644 = vshll.u32 %v4361, 16
        %v4646 = vrot.slane %v4644, 5
        %v4647 = vor.u32 %v4643, %v4646
        %v4648 = vrot.slane %v4647, 4
        %v4650 = vshll.u32 %v4362, 16
        %v4652 = vrot.slane %v4650, 5
        %v4653 = vsel %vm1017, %v4648, %v4652
        %v4654 = vshrl.u32 %v4362, 16
        %v4656 = vrot.slane %v4654, 4
        %v4657 = vor.u32 %v4656, %v4652
        %v4658 = vrot.slane %v4657, 4
        %v4660 = vshll.u32 %v4363, 16
        %v4662 = vrot.slane %v4660, 5
        %v4663 = vsel %vm1017, %v4658, %v4662
        %v4665 = vshrl.u32 %v4364, 16
        %v4667 = vrot.slane %v4665, 4
        %v4668 = vshll.u32 %v4364, 16
        %v4670 = vrot.slane %v4668, 5
        %v4671 = vor.u32 %v4667, %v4670
        %v4672 = vrot.slane %v4671, 4
        %v4674 = vshll.u32 %v4365, 16
        %v4676 = vrot.slane %v4674, 5
        %v4677 = vsel %vm1017, %v4672, %v4676
        %v4678 = vshrl.u32 %v4365, 16
        %v4680 = vrot.slane %v4678, 4
        %v4681 = vor.u32 %v4680, %v4676
        %v4682 = vrot.slane %v4681, 4
        %v4684 = vshll.u32 %v4366, 16
        %v4686 = vrot.slane %v4684, 5
        %v4687 = vsel %vm1017, %v4682, %v4686
        %v4689 = vshrl.u32 %v4367, 16
        %v4691 = vrot.slane %v4689, 4
        %v4692 = vshll.u32 %v4367, 16
        %v4694 = vrot.slane %v4692, 5
        %v4695 = vor.u32 %v4691, %v4694
        %v4696 = vrot.slane %v4695, 4
        %v4698 = vshll.u32 %v4368, 16
        %v4700 = vrot.slane %v4698, 5
        %v4701 = vsel %vm1017, %v4696, %v4700
        %v4702 = vshrl.u32 %v4368, 16
        %v4704 = vrot.slane %v4702, 4
        %v4705 = vor.u32 %v4704, %v4700
        %v4706 = vrot.slane %v4705, 4
        %v4708 = vshll.u32 %v4369, 16
        %v4710 = vrot.slane %v4708, 5
        %v4711 = vsel %vm1017, %v4706, %v4710
        %v4713 = vshrl.u32 %v4370, 16
        %v4715 = vrot.slane %v4713, 4
        %v4716 = vshll.u32 %v4370, 16
        %v4718 = vrot.slane %v4716, 5
        %v4719 = vor.u32 %v4715, %v4718
        %v4720 = vrot.slane %v4719, 4
        %v4722 = vshll.u32 %v4371, 16
        %v4724 = vrot.slane %v4722, 5
        %v4725 = vsel %vm1017, %v4720, %v4724
        %v4726 = vshrl.u32 %v4371, 16
        %v4728 = vrot.slane %v4726, 4
        %v4729 = vor.u32 %v4728, %v4724
        %v4730 = vrot.slane %v4729, 4
        %v4732 = vshll.u32 %v4372, 16
        %v4734 = vrot.slane %v4732, 5
        %v4735 = vsel %vm1017, %v4730, %v4734
        %v4737 = vshrl.u32 %v4373, 16
        %v4739 = vrot.slane %v4737, 4
        %v4740 = vshll.u32 %v4373, 16
        %v4742 = vrot.slane %v4740, 5
        %v4743 = vor.u32 %v4739, %v4742
        %v4744 = vrot.slane %v4743, 4
        %v4746 = vshll.u32 %v4374, 16
        %v4748 = vrot.slane %v4746, 5
        %v4749 = vsel %vm1017, %v4744, %v4748
        %v4750 = vshrl.u32 %v4374, 16
        %v4752 = vrot.slane %v4750, 4
        %v4753 = vor.u32 %v4752, %v4748
        %v4754 = vrot.slane %v4753, 4
        %v4756 = vshll.u32 %v4375, 16
        %v4758 = vrot.slane %v4756, 5
        %v4759 = vsel %vm1017, %v4754, %v4758
        %s4760 = scalar_lea.vmem %s1, 14
        %v4761 = vld [vmem:[%s4760] sm:$0x3]
        %v4762 = vunpack.c.l.b16 %v4389
        %v4763 = vunpack.c.l.b16 %v4399
        %v4764 = vunpack.c.l.b16 %v4413
        %v4765 = vunpack.c.l.b16 %v4423
        %v4766 = vunpack.c.l.b16 %v4437
        %v4767 = vunpack.c.l.b16 %v4447
        %v4768 = vunpack.c.l.b16 %v4461
        %v4769 = vunpack.c.l.b16 %v4471
        %v4770 = vunpack.c.l.b16 %v4485
        %v4771 = vunpack.c.l.b16 %v4495
        %v4772 = vunpack.c.l.b16 %v4509
        %v4773 = vunpack.c.l.b16 %v4519
        %v4774 = vunpack.c.l.b16 %v4533
        %v4775 = vunpack.c.l.b16 %v4543
        %v4776 = vunpack.c.l.b16 %v4557
        %v4777 = vunpack.c.l.b16 %v4567
        %v4778 = vunpack.c.l.b16 %v4581
        %v4779 = vunpack.c.l.b16 %v4591
        %v4780 = vunpack.c.l.b16 %v4605
        %v4781 = vunpack.c.l.b16 %v4615
        %v4782 = vunpack.c.l.b16 %v4629
        %v4783 = vunpack.c.l.b16 %v4639
        %v4784 = vunpack.c.l.b16 %v4653
        %v4785 = vunpack.c.l.b16 %v4663
        %v4786 = vunpack.c.l.b16 %v4677
        %v4787 = vunpack.c.l.b16 %v4687
        %v4788 = vunpack.c.l.b16 %v4701
        %v4789 = vunpack.c.l.b16 %v4711
        %v4790 = vunpack.c.l.b16 %v4725
        %v4791 = vunpack.c.l.b16 %v4735
        %v4792 = vunpack.c.l.b16 %v4749
        %v4793 = vunpack.c.l.b16 %v4759
        %v4794 = vpack.c.b16 %v4763, %v4762
        %v4795 = vpack.c.b16 %v4765, %v4764
        %v4796 = vpack.c.b16 %v4767, %v4766
        %v4797 = vpack.c.b16 %v4769, %v4768
        %v4798 = vpack.c.b16 %v4771, %v4770
        %v4799 = vpack.c.b16 %v4773, %v4772
        %v4800 = vpack.c.b16 %v4775, %v4774
        %v4801 = vpack.c.b16 %v4777, %v4776
        %v4802 = vpack.c.b16 %v4779, %v4778
        %v4803 = vpack.c.b16 %v4781, %v4780
        %v4804 = vpack.c.b16 %v4783, %v4782
        %v4805 = vpack.c.b16 %v4785, %v4784
        %v4806 = vpack.c.b16 %v4787, %v4786
        %v4807 = vpack.c.b16 %v4789, %v4788
        %v4808 = vpack.c.b16 %v4791, %v4790
        %v4809 = vpack.c.b16 %v4793, %v4792
        %v4811 = vsel %vm1452, %v4794, 0
        %v4814 = vsel %vm1452, %v4795, 0
        %v4817 = vsel %vm1452, %v4796, 0
        %v4820 = vsel %vm1452, %v4797, 0
        %v4823 = vsel %vm1452, %v4798, 0
        %v4826 = vsel %vm1452, %v4799, 0
        %v4829 = vsel %vm1452, %v4800, 0
        %v4832 = vsel %vm1452, %v4801, 0
        %v4835 = vsel %vm1452, %v4802, 0
        %v4838 = vsel %vm1452, %v4803, 0
        %v4841 = vsel %vm1452, %v4804, 0
        %v4844 = vsel %vm1452, %v4805, 0
        %v4847 = vsel %vm1452, %v4806, 0
        %v4850 = vsel %vm1452, %v4807, 0
        %v4853 = vsel %vm1452, %v4808, 0
        %v4856 = vsel %vm1452, %v4809, 0
        %v4859 = vsel %vm1501, %v4761, 0
        %4861 = vmatprep.subr.bf16.mxu0 0
        %4862 = vmatpush1.bf16.msra.mxu0 %v4859
        %4863 = vmatprep.subr.bf16.mxu0 0
        %4864 = vmatpush1.bf16.msra.mxu0 0
        %4865 = vmatprep.subr.bf16.mxu0 0
        %4866 = vmatpush1.bf16.msra.mxu0 0
        %4867 = vmatprep.subr.bf16.mxu0 0
        %4868 = vmatpush1.bf16.msra.mxu0 0
        %4869 = vmatprep.subr.bf16.mxu0 0
        %4870 = vmatpush1.bf16.msra.mxu0 0
        %4871 = vmatprep.subr.bf16.mxu0 0
        %4872 = vmatpush1.bf16.msra.mxu0 0
        %4873 = vmatprep.subr.bf16.mxu0 0
        %4874 = vmatpush1.bf16.msra.mxu0 0
        %4875 = vmatprep.subr.bf16.mxu0 0
        %4876 = vmatpush1.bf16.msra.mxu0 0
        %4877 = vmatprep.subr.bf16.mxu0 0
        %4878 = vmatpush1.bf16.msra.mxu0 0
        %4879 = vmatprep.subr.bf16.mxu0 0
        %4880 = vmatpush1.bf16.msra.mxu0 0
        %4881 = vmatprep.subr.bf16.mxu0 0
        %4882 = vmatpush1.bf16.msra.mxu0 0
        %4883 = vmatprep.subr.bf16.mxu0 0
        %4884 = vmatpush1.bf16.msra.mxu0 0
        %4885 = vmatprep.subr.bf16.mxu0 0
        %4886 = vmatpush1.bf16.msra.mxu0 0
        %4887 = vmatprep.subr.bf16.mxu0 0
        %4888 = vmatpush1.bf16.msra.mxu0 0
        %4889 = vmatprep.subr.bf16.mxu0 0
        %4890 = vmatpush1.bf16.msra.mxu0 0
        %4891 = vmatprep.subr.bf16.mxu0 0
        %4892 = vmatpush1.bf16.msra.mxu0 0
        %4893 = vmatprep.mubr.bf16.mxu0 0
        %4894 = vmatmul.mubr.bf16.gmra.mrb[0].mxu0 %v4811
        %v4895 = vpop.f32.mrb[0].mxu0
        %v4896 = vadd.f32 0.0, %v4895
        %v4897 = vpop.f32.mrb[0].mxu0
        %v4898 = vpop.f32.mrb[0].mxu0
        %v4899 = vadd.f32 0.0, %v4898
        %v4900 = vpop.f32.mrb[0].mxu0
        %4901 = vmatprep.mubr.bf16.mxu0 0
        %4902 = vmatmul.mubr.bf16.gmra.mrb[0].mxu0 %v4814
        %v4903 = vpop.f32.mrb[0].mxu0
        %v4904 = vadd.f32 0.0, %v4903
        %v4905 = vpop.f32.mrb[0].mxu0
        %v4906 = vpop.f32.mrb[0].mxu0
        %v4907 = vadd.f32 0.0, %v4906
        %v4908 = vpop.f32.mrb[0].mxu0
        %4909 = vmatprep.mubr.bf16.mxu0 0
        %4910 = vmatmul.mubr.bf16.gmra.mrb[0].mxu0 %v4817
        %v4911 = vpop.f32.mrb[0].mxu0
        %v4912 = vadd.f32 0.0, %v4911
        %v4913 = vpop.f32.mrb[0].mxu0
        %v4914 = vpop.f32.mrb[0].mxu0
        %v4915 = vadd.f32 0.0, %v4914
        %v4916 = vpop.f32.mrb[0].mxu0
        %4917 = vmatprep.mubr.bf16.mxu0 0
        %4918 = vmatmul.mubr.bf16.gmra.mrb[0].mxu0 %v4820
        %v4919 = vpop.f32.mrb[0].mxu0
        %v4920 = vadd.f32 0.0, %v4919
        %v4921 = vpop.f32.mrb[0].mxu0
        %v4922 = vpop.f32.mrb[0].mxu0
        %v4923 = vadd.f32 0.0, %v4922
        %v4924 = vpop.f32.mrb[0].mxu0
        %4925 = vmatprep.mubr.bf16.mxu0 0
        %4926 = vmatmul.mubr.bf16.gmra.mrb[0].mxu0 %v4823
        %v4927 = vpop.f32.mrb[0].mxu0
        %v4928 = vadd.f32 0.0, %v4927
        %v4929 = vpop.f32.mrb[0].mxu0
        %v4930 = vpop.f32.mrb[0].mxu0
        %v4931 = vadd.f32 0.0, %v4930
        %v4932 = vpop.f32.mrb[0].mxu0
        %4933 = vmatprep.mubr.bf16.mxu0 0
        %4934 = vmatmul.mubr.bf16.gmra.mrb[0].mxu0 %v4826
        %v4935 = vpop.f32.mrb[0].mxu0
        %v4936 = vadd.f32 0.0, %v4935
        %v4937 = vpop.f32.mrb[0].mxu0
        %v4938 = vpop.f32.mrb[0].mxu0
        %v4939 = vadd.f32 0.0, %v4938
        %v4940 = vpop.f32.mrb[0].mxu0
        %4941 = vmatprep.mubr.bf16.mxu0 0
        %4942 = vmatmul.mubr.bf16.gmra.mrb[0].mxu0 %v4829
        %v4943 = vpop.f32.mrb[0].mxu0
        %v4944 = vadd.f32 0.0, %v4943
        %v4945 = vpop.f32.mrb[0].mxu0
        %v4946 = vpop.f32.mrb[0].mxu0
        %v4947 = vadd.f32 0.0, %v4946
        %v4948 = vpop.f32.mrb[0].mxu0
        %4949 = vmatprep.mubr.bf16.mxu0 0
        %4950 = vmatmul.mubr.bf16.gmra.mrb[0].mxu0 %v4832
        %v4951 = vpop.f32.mrb[0].mxu0
        %v4952 = vadd.f32 0.0, %v4951
        %v4953 = vpop.f32.mrb[0].mxu0
        %v4954 = vpop.f32.mrb[0].mxu0
        %v4955 = vadd.f32 0.0, %v4954
        %v4956 = vpop.f32.mrb[0].mxu0
        %4957 = vmatprep.mubr.bf16.mxu0 0
        %4958 = vmatmul.mubr.bf16.gmra.mrb[0].mxu0 %v4835
        %v4959 = vpop.f32.mrb[0].mxu0
        %v4960 = vadd.f32 0.0, %v4959
        %v4961 = vpop.f32.mrb[0].mxu0
        %v4962 = vpop.f32.mrb[0].mxu0
        %v4963 = vadd.f32 0.0, %v4962
        %v4964 = vpop.f32.mrb[0].mxu0
        %4965 = vmatprep.mubr.bf16.mxu0 0
        %4966 = vmatmul.mubr.bf16.gmra.mrb[0].mxu0 %v4838
        %v4967 = vpop.f32.mrb[0].mxu0
        %v4968 = vadd.f32 0.0, %v4967
        %v4969 = vpop.f32.mrb[0].mxu0
        %v4970 = vpop.f32.mrb[0].mxu0
        %v4971 = vadd.f32 0.0, %v4970
        %v4972 = vpop.f32.mrb[0].mxu0
        %4973 = vmatprep.mubr.bf16.mxu0 0
        %4974 = vmatmul.mubr.bf16.gmra.mrb[0].mxu0 %v4841
        %v4975 = vpop.f32.mrb[0].mxu0
        %v4976 = vadd.f32 0.0, %v4975
        %v4977 = vpop.f32.mrb[0].mxu0
        %v4978 = vpop.f32.mrb[0].mxu0
        %v4979 = vadd.f32 0.0, %v4978
        %v4980 = vpop.f32.mrb[0].mxu0
        %4981 = vmatprep.mubr.bf16.mxu0 0
        %4982 = vmatmul.mubr.bf16.gmra.mrb[0].mxu0 %v4844
        %v4983 = vpop.f32.mrb[0].mxu0
        %v4984 = vadd.f32 0.0, %v4983
        %v4985 = vpop.f32.mrb[0].mxu0
        %v4986 = vpop.f32.mrb[0].mxu0
        %v4987 = vadd.f32 0.0, %v4986
        %v4988 = vpop.f32.mrb[0].mxu0
        %4989 = vmatprep.mubr.bf16.mxu0 0
        %4990 = vmatmul.mubr.bf16.gmra.mrb[0].mxu0 %v4847
        %v4991 = vpop.f32.mrb[0].mxu0
        %v4992 = vadd.f32 0.0, %v4991
        %v4993 = vpop.f32.mrb[0].mxu0
        %v4994 = vpop.f32.mrb[0].mxu0
        %v4995 = vadd.f32 0.0, %v4994
        %v4996 = vpop.f32.mrb[0].mxu0
        %4997 = vmatprep.mubr.bf16.mxu0 0
        %4998 = vmatmul.mubr.bf16.gmra.mrb[0].mxu0 %v4850
        %v4999 = vpop.f32.mrb[0].mxu0
        %v5000 = vadd.f32 0.0, %v4999
        %v5001 = vpop.f32.mrb[0].mxu0
        %v5002 = vpop.f32.mrb[0].mxu0
        %v5003 = vadd.f32 0.0, %v5002
        %v5004 = vpop.f32.mrb[0].mxu0
        %5005 = vmatprep.mubr.bf16.mxu0 0
        %5006 = vmatmul.mubr.bf16.gmra.mrb[0].mxu0 %v4853
        %v5007 = vpop.f32.mrb[0].mxu0
        %v5008 = vadd.f32 0.0, %v5007
        %v5009 = vpop.f32.mrb[0].mxu0
        %v5010 = vpop.f32.mrb[0].mxu0
        %v5011 = vadd.f32 0.0, %v5010
        %v5012 = vpop.f32.mrb[0].mxu0
        %5013 = vmatprep.mubr.bf16.mxu0 0
        %5014 = vmatmul.mubr.bf16.gmra.mrb[0].mxu0 %v4856
        %v5015 = vpop.f32.mrb[0].mxu0
        %v5016 = vadd.f32 0.0, %v5015
        %v5017 = vpop.f32.mrb[0].mxu0
        %v5018 = vpop.f32.mrb[0].mxu0
        %v5019 = vadd.f32 0.0, %v5018
        %v5020 = vpop.f32.mrb[0].mxu0
        %5021 = vdwg.mxu0
        %v5022 = vadd.f32 %v4296, %v4896
        %v5023 = vadd.f32 %v4297, %v4899
        %v5024 = vadd.f32 %v4298, %v4904
        %v5025 = vadd.f32 %v4299, %v4907
        %v5026 = vadd.f32 %v4300, %v4912
        %v5027 = vadd.f32 %v4301, %v4915
        %v5028 = vadd.f32 %v4302, %v4920
        %v5029 = vadd.f32 %v4303, %v4923
        %v5030 = vadd.f32 %v4304, %v4928
        %v5031 = vadd.f32 %v4305, %v4931
        %v5032 = vadd.f32 %v4306, %v4936
        %v5033 = vadd.f32 %v4307, %v4939
        %v5034 = vadd.f32 %v4308, %v4944
        %v5035 = vadd.f32 %v4309, %v4947
        %v5036 = vadd.f32 %v4310, %v4952
        %v5037 = vadd.f32 %v4311, %v4955
        %v5038 = vadd.f32 %v4312, %v4960
        %v5039 = vadd.f32 %v4313, %v4963
        %v5040 = vadd.f32 %v4314, %v4968
        %v5041 = vadd.f32 %v4315, %v4971
        %v5042 = vadd.f32 %v4316, %v4976
        %v5043 = vadd.f32 %v4317, %v4979
        %v5044 = vadd.f32 %v4318, %v4984
        %v5045 = vadd.f32 %v4319, %v4987
        %v5046 = vadd.f32 %v4320, %v4992
        %v5047 = vadd.f32 %v4321, %v4995
        %v5048 = vadd.f32 %v4322, %v5000
        %v5049 = vadd.f32 %v4323, %v5003
        %v5050 = vadd.f32 %v4324, %v5008
        %v5051 = vadd.f32 %v4325, %v5011
        %v5052 = vadd.f32 %v4326, %v5016
        %v5053 = vadd.f32 %v4327, %v5019
        %v5054 = vld [vmem:[%s3969] sm:$0xe]
        %v5055 = vld [vmem:[%s3969 + $0xc] sm:$0xe]
        %v5056 = vld [vmem:[%s3969 + $0x18] sm:$0xe]
        %v5057 = vld [vmem:[%s3969 + $0x24] sm:$0xe]
        %v5058 = vld [vmem:[%s3969 + $0x30] sm:$0xe]
        %v5059 = vld [vmem:[%s3969 + $0x3c] sm:$0xe]
        %v5060 = vld [vmem:[%s3969 + $0x48] sm:$0xe]
        %v5061 = vld [vmem:[%s3969 + $0x54] sm:$0xe]
        %v5062 = vld [vmem:[%s3969 + $0x60] sm:$0xe]
        %v5063 = vld [vmem:[%s3969 + $0x6c] sm:$0xe]
        %v5064 = vld [vmem:[%s3969 + $0x78] sm:$0xe]
        %v5065 = vld [vmem:[%s3969 + $0x84] sm:$0xe]
        %v5066 = vld [vmem:[%s3969 + $0x90] sm:$0xe]
        %v5067 = vld [vmem:[%s3969 + $0x9c] sm:$0xe]
        %v5068 = vld [vmem:[%s3969 + $0xa8] sm:$0xe]
        %v5069 = vld [vmem:[%s3969 + $0xb4] sm:$0xe]
        %v5118 = vrot.slane %v5054, 5
        %v5119 = vrot.slane %v5118, 4
        %v5120 = vrot.slane %v4329, 5
        %v5121 = vsel %vm2008, %v5119, %v5120
        %v5122 = vrot.slane %v5120, 4
        %v5123 = vrot.slane %v4330, 5
        %v5124 = vsel %vm2008, %v5122, %v5123
        %v5125 = vrot.slane %v5055, 5
        %v5126 = vrot.slane %v5125, 4
        %v5127 = vrot.slane %v4332, 5
        %v5128 = vsel %vm2008, %v5126, %v5127
        %v5129 = vrot.slane %v5127, 4
        %v5130 = vrot.slane %v4333, 5
        %v5131 = vsel %vm2008, %v5129, %v5130
        %v5132 = vrot.slane %v5056, 5
        %v5133 = vrot.slane %v5132, 4
        %v5134 = vrot.slane %v4335, 5
        %v5135 = vsel %vm2008, %v5133, %v5134
        %v5136 = vrot.slane %v5134, 4
        %v5137 = vrot.slane %v4336, 5
        %v5138 = vsel %vm2008, %v5136, %v5137
        %v5139 = vrot.slane %v5057, 5
        %v5140 = vrot.slane %v5139, 4
        %v5141 = vrot.slane %v4338, 5
        %v5142 = vsel %vm2008, %v5140, %v5141
        %v5143 = vrot.slane %v5141, 4
        %v5144 = vrot.slane %v4339, 5
        %v5145 = vsel %vm2008, %v5143, %v5144
        %v5146 = vrot.slane %v5058, 5
        %v5147 = vrot.slane %v5146, 4
        %v5148 = vrot.slane %v4341, 5
        %v5149 = vsel %vm2008, %v5147, %v5148
        %v5150 = vrot.slane %v5148, 4
        %v5151 = vrot.slane %v4342, 5
        %v5152 = vsel %vm2008, %v5150, %v5151
        %v5153 = vrot.slane %v5059, 5
        %v5154 = vrot.slane %v5153, 4
        %v5155 = vrot.slane %v4344, 5
        %v5156 = vsel %vm2008, %v5154, %v5155
        %v5157 = vrot.slane %v5155, 4
        %v5158 = vrot.slane %v4345, 5
        %v5159 = vsel %vm2008, %v5157, %v5158
        %v5160 = vrot.slane %v5060, 5
        %v5161 = vrot.slane %v5160, 4
        %v5162 = vrot.slane %v4347, 5
        %v5163 = vsel %vm2008, %v5161, %v5162
        %v5164 = vrot.slane %v5162, 4
        %v5165 = vrot.slane %v4348, 5
        %v5166 = vsel %vm2008, %v5164, %v5165
        %v5167 = vrot.slane %v5061, 5
        %v5168 = vrot.slane %v5167, 4
        %v5169 = vrot.slane %v4350, 5
        %v5170 = vsel %vm2008, %v5168, %v5169
        %v5171 = vrot.slane %v5169, 4
        %v5172 = vrot.slane %v4351, 5
        %v5173 = vsel %vm2008, %v5171, %v5172
        %v5174 = vrot.slane %v5062, 5
        %v5175 = vrot.slane %v5174, 4
        %v5176 = vrot.slane %v4353, 5
        %v5177 = vsel %vm2008, %v5175, %v5176
        %v5178 = vrot.slane %v5176, 4
        %v5179 = vrot.slane %v4354, 5
        %v5180 = vsel %vm2008, %v5178, %v5179
        %v5181 = vrot.slane %v5063, 5
        %v5182 = vrot.slane %v5181, 4
        %v5183 = vrot.slane %v4356, 5
        %v5184 = vsel %vm2008, %v5182, %v5183
        %v5185 = vrot.slane %v5183, 4
        %v5186 = vrot.slane %v4357, 5
        %v5187 = vsel %vm2008, %v5185, %v5186
        %v5188 = vrot.slane %v5064, 5
        %v5189 = vrot.slane %v5188, 4
        %v5190 = vrot.slane %v4359, 5
        %v5191 = vsel %vm2008, %v5189, %v5190
        %v5192 = vrot.slane %v5190, 4
        %v5193 = vrot.slane %v4360, 5
        %v5194 = vsel %vm2008, %v5192, %v5193
        %v5195 = vrot.slane %v5065, 5
        %v5196 = vrot.slane %v5195, 4
        %v5197 = vrot.slane %v4362, 5
        %v5198 = vsel %vm2008, %v5196, %v5197
        %v5199 = vrot.slane %v5197, 4
        %v5200 = vrot.slane %v4363, 5
        %v5201 = vsel %vm2008, %v5199, %v5200
        %v5202 = vrot.slane %v5066, 5
        %v5203 = vrot.slane %v5202, 4
        %v5204 = vrot.slane %v4365, 5
        %v5205 = vsel %vm2008, %v5203, %v5204
        %v5206 = vrot.slane %v5204, 4
        %v5207 = vrot.slane %v4366, 5
        %v5208 = vsel %vm2008, %v5206, %v5207
        %v5209 = vrot.slane %v5067, 5
        %v5210 = vrot.slane %v5209, 4
        %v5211 = vrot.slane %v4368, 5
        %v5212 = vsel %vm2008, %v5210, %v5211
        %v5213 = vrot.slane %v5211, 4
        %v5214 = vrot.slane %v4369, 5
        %v5215 = vsel %vm2008, %v5213, %v5214
        %v5216 = vrot.slane %v5068, 5
        %v5217 = vrot.slane %v5216, 4
        %v5218 = vrot.slane %v4371, 5
        %v5219 = vsel %vm2008, %v5217, %v5218
        %v5220 = vrot.slane %v5218, 4
        %v5221 = vrot.slane %v4372, 5
        %v5222 = vsel %vm2008, %v5220, %v5221
        %v5223 = vrot.slane %v5069, 5
        %v5224 = vrot.slane %v5223, 4
        %v5225 = vrot.slane %v4374, 5
        %v5226 = vsel %vm2008, %v5224, %v5225
        %v5227 = vrot.slane %v5225, 4
        %v5228 = vrot.slane %v4375, 5
        %v5229 = vsel %vm2008, %v5227, %v5228
        %s5230 = scalar_lea.vmem %s1, 16
        %v5231 = vld [vmem:[%s5230] sm:$0x3]
        %v5232 = vunpack.c.l.b16 %v5121
        %v5233 = vunpack.c.l.b16 %v5124
        %v5234 = vunpack.c.l.b16 %v5128
        %v5235 = vunpack.c.l.b16 %v5131
        %v5236 = vunpack.c.l.b16 %v5135
        %v5237 = vunpack.c.l.b16 %v5138
        %v5238 = vunpack.c.l.b16 %v5142
        %v5239 = vunpack.c.l.b16 %v5145
        %v5240 = vunpack.c.l.b16 %v5149
        %v5241 = vunpack.c.l.b16 %v5152
        %v5242 = vunpack.c.l.b16 %v5156
        %v5243 = vunpack.c.l.b16 %v5159
        %v5244 = vunpack.c.l.b16 %v5163
        %v5245 = vunpack.c.l.b16 %v5166
        %v5246 = vunpack.c.l.b16 %v5170
        %v5247 = vunpack.c.l.b16 %v5173
        %v5248 = vunpack.c.l.b16 %v5177
        %v5249 = vunpack.c.l.b16 %v5180
        %v5250 = vunpack.c.l.b16 %v5184
        %v5251 = vunpack.c.l.b16 %v5187
        %v5252 = vunpack.c.l.b16 %v5191
        %v5253 = vunpack.c.l.b16 %v5194
        %v5254 = vunpack.c.l.b16 %v5198
        %v5255 = vunpack.c.l.b16 %v5201
        %v5256 = vunpack.c.l.b16 %v5205
        %v5257 = vunpack.c.l.b16 %v5208
        %v5258 = vunpack.c.l.b16 %v5212
        %v5259 = vunpack.c.l.b16 %v5215
        %v5260 = vunpack.c.l.b16 %v5219
        %v5261 = vunpack.c.l.b16 %v5222
        %v5262 = vunpack.c.l.b16 %v5226
        %v5263 = vunpack.c.l.b16 %v5229
        %v5264 = vpack.c.b16 %v5233, %v5232
        %v5265 = vpack.c.b16 %v5235, %v5234
        %v5266 = vpack.c.b16 %v5237, %v5236
        %v5267 = vpack.c.b16 %v5239, %v5238
        %v5268 = vpack.c.b16 %v5241, %v5240
        %v5269 = vpack.c.b16 %v5243, %v5242
        %v5270 = vpack.c.b16 %v5245, %v5244
        %v5271 = vpack.c.b16 %v5247, %v5246
        %v5272 = vpack.c.b16 %v5249, %v5248
        %v5273 = vpack.c.b16 %v5251, %v5250
        %v5274 = vpack.c.b16 %v5253, %v5252
        %v5275 = vpack.c.b16 %v5255, %v5254
        %v5276 = vpack.c.b16 %v5257, %v5256
        %v5277 = vpack.c.b16 %v5259, %v5258
        %v5278 = vpack.c.b16 %v5261, %v5260
        %v5279 = vpack.c.b16 %v5263, %v5262
        %v5281 = vsel %vm1452, %v5264, 0
        %v5284 = vsel %vm1452, %v5265, 0
        %v5287 = vsel %vm1452, %v5266, 0
        %v5290 = vsel %vm1452, %v5267, 0
        %v5293 = vsel %vm1452, %v5268, 0
        %v5296 = vsel %vm1452, %v5269, 0
        %v5299 = vsel %vm1452, %v5270, 0
        %v5302 = vsel %vm1452, %v5271, 0
        %v5305 = vsel %vm1452, %v5272, 0
        %v5308 = vsel %vm1452, %v5273, 0
        %v5311 = vsel %vm1452, %v5274, 0
        %v5314 = vsel %vm1452, %v5275, 0
        %v5317 = vsel %vm1452, %v5276, 0
        %v5320 = vsel %vm1452, %v5277, 0
        %v5323 = vsel %vm1452, %v5278, 0
        %v5326 = vsel %vm1452, %v5279, 0
        %v5329 = vsel %vm1501, %v5231, 0
        %5331 = vmatprep.subr.bf16.mxu0 0
        %5332 = vmatpush1.bf16.msra.mxu0 %v5329
        %5333 = vmatprep.subr.bf16.mxu0 0
        %5334 = vmatpush1.bf16.msra.mxu0 0
        %5335 = vmatprep.subr.bf16.mxu0 0
        %5336 = vmatpush1.bf16.msra.mxu0 0
        %5337 = vmatprep.subr.bf16.mxu0 0
        %5338 = vmatpush1.bf16.msra.mxu0 0
        %5339 = vmatprep.subr.bf16.mxu0 0
        %5340 = vmatpush1.bf16.msra.mxu0 0
        %5341 = vmatprep.subr.bf16.mxu0 0
        %5342 = vmatpush1.bf16.msra.mxu0 0
        %5343 = vmatprep.subr.bf16.mxu0 0
        %5344 = vmatpush1.bf16.msra.mxu0 0
        %5345 = vmatprep.subr.bf16.mxu0 0
        %5346 = vmatpush1.bf16.msra.mxu0 0
        %5347 = vmatprep.subr.bf16.mxu0 0
        %5348 = vmatpush1.bf16.msra.mxu0 0
        %5349 = vmatprep.subr.bf16.mxu0 0
        %5350 = vmatpush1.bf16.msra.mxu0 0
        %5351 = vmatprep.subr.bf16.mxu0 0
        %5352 = vmatpush1.bf16.msra.mxu0 0
        %5353 = vmatprep.subr.bf16.mxu0 0
        %5354 = vmatpush1.bf16.msra.mxu0 0
        %5355 = vmatprep.subr.bf16.mxu0 0
        %5356 = vmatpush1.bf16.msra.mxu0 0
        %5357 = vmatprep.subr.bf16.mxu0 0
        %5358 = vmatpush1.bf16.msra.mxu0 0
        %5359 = vmatprep.subr.bf16.mxu0 0
        %5360 = vmatpush1.bf16.msra.mxu0 0
        %5361 = vmatprep.subr.bf16.mxu0 0
        %5362 = vmatpush1.bf16.msra.mxu0 0
        %5363 = vmatprep.mubr.bf16.mxu0 0
        %5364 = vmatmul.mubr.bf16.gmra.mrb[0].mxu0 %v5281
        %v5365 = vpop.f32.mrb[0].mxu0
        %v5366 = vadd.f32 0.0, %v5365
        %v5367 = vpop.f32.mrb[0].mxu0
        %v5368 = vpop.f32.mrb[0].mxu0
        %v5369 = vadd.f32 0.0, %v5368
        %v5370 = vpop.f32.mrb[0].mxu0
        %5371 = vmatprep.mubr.bf16.mxu0 0
        %5372 = vmatmul.mubr.bf16.gmra.mrb[0].mxu0 %v5284
        %v5373 = vpop.f32.mrb[0].mxu0
        %v5374 = vadd.f32 0.0, %v5373
        %v5375 = vpop.f32.mrb[0].mxu0
        %v5376 = vpop.f32.mrb[0].mxu0
        %v5377 = vadd.f32 0.0, %v5376
        %v5378 = vpop.f32.mrb[0].mxu0
        %5379 = vmatprep.mubr.bf16.mxu0 0
        %5380 = vmatmul.mubr.bf16.gmra.mrb[0].mxu0 %v5287
        %v5381 = vpop.f32.mrb[0].mxu0
        %v5382 = vadd.f32 0.0, %v5381
        %v5383 = vpop.f32.mrb[0].mxu0
        %v5384 = vpop.f32.mrb[0].mxu0
        %v5385 = vadd.f32 0.0, %v5384
        %v5386 = vpop.f32.mrb[0].mxu0
        %5387 = vmatprep.mubr.bf16.mxu0 0
        %5388 = vmatmul.mubr.bf16.gmra.mrb[0].mxu0 %v5290
        %v5389 = vpop.f32.mrb[0].mxu0
        %v5390 = vadd.f32 0.0, %v5389
        %v5391 = vpop.f32.mrb[0].mxu0
        %v5392 = vpop.f32.mrb[0].mxu0
        %v5393 = vadd.f32 0.0, %v5392
        %v5394 = vpop.f32.mrb[0].mxu0
        %5395 = vmatprep.mubr.bf16.mxu0 0
        %5396 = vmatmul.mubr.bf16.gmra.mrb[0].mxu0 %v5293
        %v5397 = vpop.f32.mrb[0].mxu0
        %v5398 = vadd.f32 0.0, %v5397
        %v5399 = vpop.f32.mrb[0].mxu0
        %v5400 = vpop.f32.mrb[0].mxu0
        %v5401 = vadd.f32 0.0, %v5400
        %v5402 = vpop.f32.mrb[0].mxu0
        %5403 = vmatprep.mubr.bf16.mxu0 0
        %5404 = vmatmul.mubr.bf16.gmra.mrb[0].mxu0 %v5296
        %v5405 = vpop.f32.mrb[0].mxu0
        %v5406 = vadd.f32 0.0, %v5405
        %v5407 = vpop.f32.mrb[0].mxu0
        %v5408 = vpop.f32.mrb[0].mxu0
        %v5409 = vadd.f32 0.0, %v5408
        %v5410 = vpop.f32.mrb[0].mxu0
        %5411 = vmatprep.mubr.bf16.mxu0 0
        %5412 = vmatmul.mubr.bf16.gmra.mrb[0].mxu0 %v5299
        %v5413 = vpop.f32.mrb[0].mxu0
        %v5414 = vadd.f32 0.0, %v5413
        %v5415 = vpop.f32.mrb[0].mxu0
        %v5416 = vpop.f32.mrb[0].mxu0
        %v5417 = vadd.f32 0.0, %v5416
        %v5418 = vpop.f32.mrb[0].mxu0
        %5419 = vmatprep.mubr.bf16.mxu0 0
        %5420 = vmatmul.mubr.bf16.gmra.mrb[0].mxu0 %v5302
        %v5421 = vpop.f32.mrb[0].mxu0
        %v5422 = vadd.f32 0.0, %v5421
        %v5423 = vpop.f32.mrb[0].mxu0
        %v5424 = vpop.f32.mrb[0].mxu0
        %v5425 = vadd.f32 0.0, %v5424
        %v5426 = vpop.f32.mrb[0].mxu0
        %5427 = vmatprep.mubr.bf16.mxu0 0
        %5428 = vmatmul.mubr.bf16.gmra.mrb[0].mxu0 %v5305
        %v5429 = vpop.f32.mrb[0].mxu0
        %v5430 = vadd.f32 0.0, %v5429
        %v5431 = vpop.f32.mrb[0].mxu0
        %v5432 = vpop.f32.mrb[0].mxu0
        %v5433 = vadd.f32 0.0, %v5432
        %v5434 = vpop.f32.mrb[0].mxu0
        %5435 = vmatprep.mubr.bf16.mxu0 0
        %5436 = vmatmul.mubr.bf16.gmra.mrb[0].mxu0 %v5308
        %v5437 = vpop.f32.mrb[0].mxu0
        %v5438 = vadd.f32 0.0, %v5437
        %v5439 = vpop.f32.mrb[0].mxu0
        %v5440 = vpop.f32.mrb[0].mxu0
        %v5441 = vadd.f32 0.0, %v5440
        %v5442 = vpop.f32.mrb[0].mxu0
        %5443 = vmatprep.mubr.bf16.mxu0 0
        %5444 = vmatmul.mubr.bf16.gmra.mrb[0].mxu0 %v5311
        %v5445 = vpop.f32.mrb[0].mxu0
        %v5446 = vadd.f32 0.0, %v5445
        %v5447 = vpop.f32.mrb[0].mxu0
        %v5448 = vpop.f32.mrb[0].mxu0
        %v5449 = vadd.f32 0.0, %v5448
        %v5450 = vpop.f32.mrb[0].mxu0
        %5451 = vmatprep.mubr.bf16.mxu0 0
        %5452 = vmatmul.mubr.bf16.gmra.mrb[0].mxu0 %v5314
        %v5453 = vpop.f32.mrb[0].mxu0
        %v5454 = vadd.f32 0.0, %v5453
        %v5455 = vpop.f32.mrb[0].mxu0
        %v5456 = vpop.f32.mrb[0].mxu0
        %v5457 = vadd.f32 0.0, %v5456
        %v5458 = vpop.f32.mrb[0].mxu0
        %5459 = vmatprep.mubr.bf16.mxu0 0
        %5460 = vmatmul.mubr.bf16.gmra.mrb[0].mxu0 %v5317
        %v5461 = vpop.f32.mrb[0].mxu0
        %v5462 = vadd.f32 0.0, %v5461
        %v5463 = vpop.f32.mrb[0].mxu0
        %v5464 = vpop.f32.mrb[0].mxu0
        %v5465 = vadd.f32 0.0, %v5464
        %v5466 = vpop.f32.mrb[0].mxu0
        %5467 = vmatprep.mubr.bf16.mxu0 0
        %5468 = vmatmul.mubr.bf16.gmra.mrb[0].mxu0 %v5320
        %v5469 = vpop.f32.mrb[0].mxu0
        %v5470 = vadd.f32 0.0, %v5469
        %v5471 = vpop.f32.mrb[0].mxu0
        %v5472 = vpop.f32.mrb[0].mxu0
        %v5473 = vadd.f32 0.0, %v5472
        %v5474 = vpop.f32.mrb[0].mxu0
        %5475 = vmatprep.mubr.bf16.mxu0 0
        %5476 = vmatmul.mubr.bf16.gmra.mrb[0].mxu0 %v5323
        %v5477 = vpop.f32.mrb[0].mxu0
        %v5478 = vadd.f32 0.0, %v5477
        %v5479 = vpop.f32.mrb[0].mxu0
        %v5480 = vpop.f32.mrb[0].mxu0
        %v5481 = vadd.f32 0.0, %v5480
        %v5482 = vpop.f32.mrb[0].mxu0
        %5483 = vmatprep.mubr.bf16.mxu0 0
        %5484 = vmatmul.mubr.bf16.gmra.mrb[0].mxu0 %v5326
        %v5485 = vpop.f32.mrb[0].mxu0
        %v5486 = vadd.f32 0.0, %v5485
        %v5487 = vpop.f32.mrb[0].mxu0
        %v5488 = vpop.f32.mrb[0].mxu0
        %v5489 = vadd.f32 0.0, %v5488
        %v5490 = vpop.f32.mrb[0].mxu0
        %5491 = vdwg.mxu0
        %v5492 = vadd.f32 %v5022, %v5366
        %v5493 = vadd.f32 %v5023, %v5369
        %v5494 = vadd.f32 %v5024, %v5374
        %v5495 = vadd.f32 %v5025, %v5377
        %v5496 = vadd.f32 %v5026, %v5382
        %v5497 = vadd.f32 %v5027, %v5385
        %v5498 = vadd.f32 %v5028, %v5390
        %v5499 = vadd.f32 %v5029, %v5393
        %v5500 = vadd.f32 %v5030, %v5398
        %v5501 = vadd.f32 %v5031, %v5401
        %v5502 = vadd.f32 %v5032, %v5406
        %v5503 = vadd.f32 %v5033, %v5409
        %v5504 = vadd.f32 %v5034, %v5414
        %v5505 = vadd.f32 %v5035, %v5417
        %v5506 = vadd.f32 %v5036, %v5422
        %v5507 = vadd.f32 %v5037, %v5425
        %v5508 = vadd.f32 %v5038, %v5430
        %v5509 = vadd.f32 %v5039, %v5433
        %v5510 = vadd.f32 %v5040, %v5438
        %v5511 = vadd.f32 %v5041, %v5441
        %v5512 = vadd.f32 %v5042, %v5446
        %v5513 = vadd.f32 %v5043, %v5449
        %v5514 = vadd.f32 %v5044, %v5454
        %v5515 = vadd.f32 %v5045, %v5457
        %v5516 = vadd.f32 %v5046, %v5462
        %v5517 = vadd.f32 %v5047, %v5465
        %v5518 = vadd.f32 %v5048, %v5470
        %v5519 = vadd.f32 %v5049, %v5473
        %v5520 = vadd.f32 %v5050, %v5478
        %v5521 = vadd.f32 %v5051, %v5481
        %v5522 = vadd.f32 %v5052, %v5486
        %v5523 = vadd.f32 %v5053, %v5489
        %v5524 = vld [vmem:[%s2] sm:$0x1]
        %v5526 = vlaneseq
        %v5527 = vshrl.u32 %v5526, 7
        %v5528 = vsub.s32 0, %v5527
        %v5529 = vrot.slane %v5524, %v5528
        %v5531 = vadd.f32 %v5492, %v5529
        %v5532 = vadd.f32 %v5493, %v5529
        %v5533 = vadd.f32 %v5494, %v5529
        %v5534 = vadd.f32 %v5495, %v5529
        %v5535 = vadd.f32 %v5496, %v5529
        %v5536 = vadd.f32 %v5497, %v5529
        %v5537 = vadd.f32 %v5498, %v5529
        %v5538 = vadd.f32 %v5499, %v5529
        %v5539 = vadd.f32 %v5500, %v5529
        %v5540 = vadd.f32 %v5501, %v5529
        %v5541 = vadd.f32 %v5502, %v5529
        %v5542 = vadd.f32 %v5503, %v5529
        %v5543 = vadd.f32 %v5504, %v5529
        %v5544 = vadd.f32 %v5505, %v5529
        %v5545 = vadd.f32 %v5506, %v5529
        %v5546 = vadd.f32 %v5507, %v5529
        %v5547 = vadd.f32 %v5508, %v5529
        %v5548 = vadd.f32 %v5509, %v5529
        %v5549 = vadd.f32 %v5510, %v5529
        %v5550 = vadd.f32 %v5511, %v5529
        %v5551 = vadd.f32 %v5512, %v5529
        %v5552 = vadd.f32 %v5513, %v5529
        %v5553 = vadd.f32 %v5514, %v5529
        %v5554 = vadd.f32 %v5515, %v5529
        %v5555 = vadd.f32 %v5516, %v5529
        %v5556 = vadd.f32 %v5517, %v5529
        %v5557 = vadd.f32 %v5518, %v5529
        %v5558 = vadd.f32 %v5519, %v5529
        %v5559 = vadd.f32 %v5520, %v5529
        %v5560 = vadd.f32 %v5521, %v5529
        %v5561 = vadd.f32 %v5522, %v5529
        %v5562 = vadd.f32 %v5523, %v5529
        %v5563 = vmax.f32 %v5531, 0.0
        %v5564 = vmax.f32 %v5532, 0.0
        %v5565 = vmax.f32 %v5533, 0.0
        %v5566 = vmax.f32 %v5534, 0.0
        %v5567 = vmax.f32 %v5535, 0.0
        %v5568 = vmax.f32 %v5536, 0.0
        %v5569 = vmax.f32 %v5537, 0.0
        %v5570 = vmax.f32 %v5538, 0.0
        %v5571 = vmax.f32 %v5539, 0.0
        %v5572 = vmax.f32 %v5540, 0.0
        %v5573 = vmax.f32 %v5541, 0.0
        %v5574 = vmax.f32 %v5542, 0.0
        %v5575 = vmax.f32 %v5543, 0.0
        %v5576 = vmax.f32 %v5544, 0.0
        %v5577 = vmax.f32 %v5545, 0.0
        %v5578 = vmax.f32 %v5546, 0.0
        %v5579 = vmax.f32 %v5547, 0.0
        %v5580 = vmax.f32 %v5548, 0.0
        %v5581 = vmax.f32 %v5549, 0.0
        %v5582 = vmax.f32 %v5550, 0.0
        %v5583 = vmax.f32 %v5551, 0.0
        %v5584 = vmax.f32 %v5552, 0.0
        %v5585 = vmax.f32 %v5553, 0.0
        %v5586 = vmax.f32 %v5554, 0.0
        %v5587 = vmax.f32 %v5555, 0.0
        %v5588 = vmax.f32 %v5556, 0.0
        %v5589 = vmax.f32 %v5557, 0.0
        %v5590 = vmax.f32 %v5558, 0.0
        %v5591 = vmax.f32 %v5559, 0.0
        %v5592 = vmax.f32 %v5560, 0.0
        %v5593 = vmax.f32 %v5561, 0.0
        %v5594 = vmax.f32 %v5562, 0.0
        %vm5595 = vcmask 257024
        %5596 = vst.msk [vmem:[#allocation3] sm:$0xf] %vm5595, 0
        %5597 = vst.msk [vmem:[#allocation3 + $0x4] sm:$0xf] %vm5595, 0
        %vm5598 = vcmask 253952
        %5599 = vst.msk [vmem:[#allocation3 + $0x8] sm:$0x1] %vm5598, 0
        %s5600 = scalar_lea.vmem [#allocation3], 204
        %5601 = vst.msk [vmem:[%s5600] sm:$0xf] %vm5595, 0
        %5602 = vst.msk [vmem:[%s5600 + $0x4] sm:$0xf] %vm5595, 0
        %5603 = vst.msk [vmem:[%s5600 + $0x8] sm:$0x1] %vm5598, 0
        %vm5604 = vcmask 253952
        %vm5605 = vmand %vm5604, %vm289
        %v5606 = vld [vmem:[#allocation3] sm:$0x1]
        %v5607 = vsel %vm5605, 0, %v5606
        %5608 = vst [vmem:[#allocation3] sm:$0x1] %v5607
        %v5609 = vld [vmem:[#allocation3 + $0xc] sm:$0x1]
        %v5610 = vsel %vm5605, 0, %v5609
        %5611 = vst [vmem:[#allocation3 + $0xc] sm:$0x1] %v5610
        %v5612 = vld [vmem:[#allocation3 + $0x18] sm:$0x1]
        %v5613 = vsel %vm5605, 0, %v5612
        %5614 = vst [vmem:[#allocation3 + $0x18] sm:$0x1] %v5613
        %v5615 = vld [vmem:[#allocation3 + $0x24] sm:$0x1]
        %v5616 = vsel %vm5605, 0, %v5615
        %5617 = vst [vmem:[#allocation3 + $0x24] sm:$0x1] %v5616
        %v5618 = vld [vmem:[#allocation3 + $0x30] sm:$0x1]
        %v5619 = vsel %vm5605, 0, %v5618
        %5620 = vst [vmem:[#allocation3 + $0x30] sm:$0x1] %v5619
        %v5621 = vld [vmem:[#allocation3 + $0x3c] sm:$0x1]
        %v5622 = vsel %vm5605, 0, %v5621
        %5623 = vst [vmem:[#allocation3 + $0x3c] sm:$0x1] %v5622
        %v5624 = vld [vmem:[#allocation3 + $0x48] sm:$0x1]
        %v5625 = vsel %vm5605, 0, %v5624
        %5626 = vst [vmem:[#allocation3 + $0x48] sm:$0x1] %v5625
        %v5627 = vld [vmem:[#allocation3 + $0x54] sm:$0x1]
        %v5628 = vsel %vm5605, 0, %v5627
        %5629 = vst [vmem:[#allocation3 + $0x54] sm:$0x1] %v5628
        %v5630 = vld [vmem:[#allocation3 + $0x60] sm:$0x1]
        %v5631 = vsel %vm5605, 0, %v5630
        %5632 = vst [vmem:[#allocation3 + $0x60] sm:$0x1] %v5631
        %v5633 = vld [vmem:[#allocation3 + $0x6c] sm:$0x1]
        %v5634 = vsel %vm5605, 0, %v5633
        %5635 = vst [vmem:[#allocation3 + $0x6c] sm:$0x1] %v5634
        %v5636 = vld [vmem:[#allocation3 + $0x78] sm:$0x1]
        %v5637 = vsel %vm5605, 0, %v5636
        %5638 = vst [vmem:[#allocation3 + $0x78] sm:$0x1] %v5637
        %v5639 = vld [vmem:[#allocation3 + $0x84] sm:$0x1]
        %v5640 = vsel %vm5605, 0, %v5639
        %5641 = vst [vmem:[#allocation3 + $0x84] sm:$0x1] %v5640
        %v5642 = vld [vmem:[#allocation3 + $0x90] sm:$0x1]
        %v5643 = vsel %vm5605, 0, %v5642
        %5644 = vst [vmem:[#allocation3 + $0x90] sm:$0x1] %v5643
        %v5645 = vld [vmem:[#allocation3 + $0x9c] sm:$0x1]
        %v5646 = vsel %vm5605, 0, %v5645
        %5647 = vst [vmem:[#allocation3 + $0x9c] sm:$0x1] %v5646
        %v5648 = vld [vmem:[#allocation3 + $0xa8] sm:$0x1]
        %v5649 = vsel %vm5605, 0, %v5648
        %5650 = vst [vmem:[#allocation3 + $0xa8] sm:$0x1] %v5649
        %v5651 = vld [vmem:[#allocation3 + $0xb4] sm:$0x1]
        %v5652 = vsel %vm5605, 0, %v5651
        %5653 = vst [vmem:[#allocation3 + $0xb4] sm:$0x1] %v5652
        %v5654 = vld [vmem:[#allocation3 + $0xc0] sm:$0x1]
        %v5655 = vsel %vm5605, 0, %v5654
        %5656 = vst [vmem:[#allocation3 + $0xc0] sm:$0x1] %v5655
        %v5657 = vld [vmem:[#allocation3 + $0xcc] sm:$0x1]
        %v5658 = vsel %vm5605, 0, %v5657
        %5659 = vst [vmem:[#allocation3 + $0xcc] sm:$0x1] %v5658
        %vm5660 = vmand %vm5604, %vm345
        %v5661 = vld [vmem:[#allocation3 + $0x8] sm:$0x1]
        %v5662 = vsel %vm5660, 0, %v5661
        %5663 = vst [vmem:[#allocation3 + $0x8] sm:$0x1] %v5662
        %v5664 = vld [vmem:[#allocation3 + $0x14] sm:$0x1]
        %v5665 = vsel %vm5660, 0, %v5664
        %5666 = vst [vmem:[#allocation3 + $0x14] sm:$0x1] %v5665
        %v5667 = vld [vmem:[#allocation3 + $0x20] sm:$0x1]
        %v5668 = vsel %vm5660, 0, %v5667
        %5669 = vst [vmem:[#allocation3 + $0x20] sm:$0x1] %v5668
        %v5670 = vld [vmem:[#allocation3 + $0x2c] sm:$0x1]
        %v5671 = vsel %vm5660, 0, %v5670
        %5672 = vst [vmem:[#allocation3 + $0x2c] sm:$0x1] %v5671
        %v5673 = vld [vmem:[#allocation3 + $0x38] sm:$0x1]
        %v5674 = vsel %vm5660, 0, %v5673
        %5675 = vst [vmem:[#allocation3 + $0x38] sm:$0x1] %v5674
        %v5676 = vld [vmem:[#allocation3 + $0x44] sm:$0x1]
        %v5677 = vsel %vm5660, 0, %v5676
        %5678 = vst [vmem:[#allocation3 + $0x44] sm:$0x1] %v5677
        %v5679 = vld [vmem:[#allocation3 + $0x50] sm:$0x1]
        %v5680 = vsel %vm5660, 0, %v5679
        %5681 = vst [vmem:[#allocation3 + $0x50] sm:$0x1] %v5680
        %v5682 = vld [vmem:[#allocation3 + $0x5c] sm:$0x1]
        %v5683 = vsel %vm5660, 0, %v5682
        %5684 = vst [vmem:[#allocation3 + $0x5c] sm:$0x1] %v5683
        %v5685 = vld [vmem:[#allocation3 + $0x68] sm:$0x1]
        %v5686 = vsel %vm5660, 0, %v5685
        %5687 = vst [vmem:[#allocation3 + $0x68] sm:$0x1] %v5686
        %v5688 = vld [vmem:[#allocation3 + $0x74] sm:$0x1]
        %v5689 = vsel %vm5660, 0, %v5688
        %5690 = vst [vmem:[#allocation3 + $0x74] sm:$0x1] %v5689
        %v5691 = vld [vmem:[#allocation3 + $0x80] sm:$0x1]
        %v5692 = vsel %vm5660, 0, %v5691
        %5693 = vst [vmem:[#allocation3 + $0x80] sm:$0x1] %v5692
        %v5694 = vld [vmem:[#allocation3 + $0x8c] sm:$0x1]
        %v5695 = vsel %vm5660, 0, %v5694
        %5696 = vst [vmem:[#allocation3 + $0x8c] sm:$0x1] %v5695
        %v5697 = vld [vmem:[#allocation3 + $0x98] sm:$0x1]
        %v5698 = vsel %vm5660, 0, %v5697
        %5699 = vst [vmem:[#allocation3 + $0x98] sm:$0x1] %v5698
        %v5700 = vld [vmem:[#allocation3 + $0xa4] sm:$0x1]
        %v5701 = vsel %vm5660, 0, %v5700
        %5702 = vst [vmem:[#allocation3 + $0xa4] sm:$0x1] %v5701
        %v5703 = vld [vmem:[#allocation3 + $0xb0] sm:$0x1]
        %v5704 = vsel %vm5660, 0, %v5703
        %5705 = vst [vmem:[#allocation3 + $0xb0] sm:$0x1] %v5704
        %v5706 = vld [vmem:[#allocation3 + $0xbc] sm:$0x1]
        %v5707 = vsel %vm5660, 0, %v5706
        %5708 = vst [vmem:[#allocation3 + $0xbc] sm:$0x1] %v5707
        %v5709 = vld [vmem:[#allocation3 + $0xc8] sm:$0x1]
        %v5710 = vsel %vm5660, 0, %v5709
        %5711 = vst [vmem:[#allocation3 + $0xc8] sm:$0x1] %v5710
        %v5712 = vld [vmem:[#allocation3 + $0xd4] sm:$0x1]
        %v5713 = vsel %vm5660, 0, %v5712
        %5714 = vst [vmem:[#allocation3 + $0xd4] sm:$0x1] %v5713
        %v5715 = vpack.c.bf16 %v5564, %v5563
        %v5716 = vpack.c.bf16 %v5566, %v5565
        %v5717 = vpack.c.bf16 %v5568, %v5567
        %v5718 = vpack.c.bf16 %v5570, %v5569
        %v5719 = vpack.c.bf16 %v5572, %v5571
        %v5720 = vpack.c.bf16 %v5574, %v5573
        %v5721 = vpack.c.bf16 %v5576, %v5575
        %v5722 = vpack.c.bf16 %v5578, %v5577
        %v5723 = vpack.c.bf16 %v5580, %v5579
        %v5724 = vpack.c.bf16 %v5582, %v5581
        %v5725 = vpack.c.bf16 %v5584, %v5583
        %v5726 = vpack.c.bf16 %v5586, %v5585
        %v5727 = vpack.c.bf16 %v5588, %v5587
        %v5728 = vpack.c.bf16 %v5590, %v5589
        %v5729 = vpack.c.bf16 %v5592, %v5591
        %v5730 = vpack.c.bf16 %v5594, %v5593
        %v5747 = vunpack.c.l.b16 %v5715
        %v5748 = vunpack.c.h.b16 %v5715
        %v5749 = vunpack.c.l.b16 %v5716
        %v5750 = vunpack.c.h.b16 %v5716
        %v5751 = vunpack.c.l.b16 %v5717
        %v5752 = vunpack.c.h.b16 %v5717
        %v5753 = vunpack.c.l.b16 %v5718
        %v5754 = vunpack.c.h.b16 %v5718
        %v5755 = vunpack.c.l.b16 %v5719
        %v5756 = vunpack.c.h.b16 %v5719
        %v5757 = vunpack.c.l.b16 %v5720
        %v5758 = vunpack.c.h.b16 %v5720
        %v5759 = vunpack.c.l.b16 %v5721
        %v5760 = vunpack.c.h.b16 %v5721
        %v5761 = vunpack.c.l.b16 %v5722
        %v5762 = vunpack.c.h.b16 %v5722
        %v5763 = vunpack.c.l.b16 %v5723
        %v5764 = vunpack.c.h.b16 %v5723
        %v5765 = vunpack.c.l.b16 %v5724
        %v5766 = vunpack.c.h.b16 %v5724
        %v5767 = vunpack.c.l.b16 %v5725
        %v5768 = vunpack.c.h.b16 %v5725
        %v5769 = vunpack.c.l.b16 %v5726
        %v5770 = vunpack.c.h.b16 %v5726
        %v5771 = vunpack.c.l.b16 %v5727
        %v5772 = vunpack.c.h.b16 %v5727
        %v5773 = vunpack.c.l.b16 %v5728
        %v5774 = vunpack.c.h.b16 %v5728
        %v5775 = vunpack.c.l.b16 %v5729
        %v5776 = vunpack.c.h.b16 %v5729
        %v5777 = vunpack.c.l.b16 %v5730
        %v5778 = vunpack.c.h.b16 %v5730
        %v5779 = vpack.c.b16 %v5747, %v5747
        %v5780 = vpack.c.b16 %v5748, %v5748
        %v5781 = vpack.c.b16 %v5749, %v5749
        %v5782 = vpack.c.b16 %v5750, %v5750
        %v5783 = vpack.c.b16 %v5751, %v5751
        %v5784 = vpack.c.b16 %v5752, %v5752
        %v5785 = vpack.c.b16 %v5753, %v5753
        %v5786 = vpack.c.b16 %v5754, %v5754
        %v5787 = vpack.c.b16 %v5755, %v5755
        %v5788 = vpack.c.b16 %v5756, %v5756
        %v5789 = vpack.c.b16 %v5757, %v5757
        %v5790 = vpack.c.b16 %v5758, %v5758
        %v5791 = vpack.c.b16 %v5759, %v5759
        %v5792 = vpack.c.b16 %v5760, %v5760
        %v5793 = vpack.c.b16 %v5761, %v5761
        %v5794 = vpack.c.b16 %v5762, %v5762
        %v5795 = vpack.c.b16 %v5763, %v5763
        %v5796 = vpack.c.b16 %v5764, %v5764
        %v5797 = vpack.c.b16 %v5765, %v5765
        %v5798 = vpack.c.b16 %v5766, %v5766
        %v5799 = vpack.c.b16 %v5767, %v5767
        %v5800 = vpack.c.b16 %v5768, %v5768
        %v5801 = vpack.c.b16 %v5769, %v5769
        %v5802 = vpack.c.b16 %v5770, %v5770
        %v5803 = vpack.c.b16 %v5771, %v5771
        %v5804 = vpack.c.b16 %v5772, %v5772
        %v5805 = vpack.c.b16 %v5773, %v5773
        %v5806 = vpack.c.b16 %v5774, %v5774
        %v5807 = vpack.c.b16 %v5775, %v5775
        %v5808 = vpack.c.b16 %v5776, %v5776
        %v5809 = vpack.c.b16 %v5777, %v5777
        %v5810 = vpack.c.b16 %v5778, %v5778
        %v5812 = vshrl.u32 %v5779, 16
        %v5814 = vrot.slane %v5812, 7
        %v5815 = vshll.u32 %v5779, 16
        %v5817 = vor.u32 %v5814, %v5815
        %v5818 = vrot.slane %v5814, 4
        %v5820 = vshrl.u32 %v5780, 16
        %v5822 = vrot.slane %v5820, 7
        %v5823 = vshll.u32 %v5780, 16
        %v5825 = vor.u32 %v5822, %v5823
        %v5826 = vsel %vm530, %v5818, %v5825
        %v5827 = vrot.slane %v5822, 4
        %v5829 = vshrl.u32 %v5781, 16
        %v5831 = vrot.slane %v5829, 7
        %v5832 = vshll.u32 %v5781, 16
        %v5834 = vor.u32 %v5831, %v5832
        %v5835 = vrot.slane %v5831, 4
        %v5837 = vshrl.u32 %v5782, 16
        %v5839 = vrot.slane %v5837, 7
        %v5840 = vshll.u32 %v5782, 16
        %v5842 = vor.u32 %v5839, %v5840
        %v5843 = vsel %vm530, %v5835, %v5842
        %v5844 = vrot.slane %v5839, 4
        %v5846 = vshrl.u32 %v5783, 16
        %v5848 = vrot.slane %v5846, 7
        %v5849 = vshll.u32 %v5783, 16
        %v5851 = vor.u32 %v5848, %v5849
        %v5852 = vrot.slane %v5848, 4
        %v5854 = vshrl.u32 %v5784, 16
        %v5856 = vrot.slane %v5854, 7
        %v5857 = vshll.u32 %v5784, 16
        %v5859 = vor.u32 %v5856, %v5857
        %v5860 = vsel %vm530, %v5852, %v5859
        %v5861 = vrot.slane %v5856, 4
        %v5863 = vshrl.u32 %v5785, 16
        %v5865 = vrot.slane %v5863, 7
        %v5866 = vshll.u32 %v5785, 16
        %v5868 = vor.u32 %v5865, %v5866
        %v5869 = vrot.slane %v5865, 4
        %v5871 = vshrl.u32 %v5786, 16
        %v5873 = vrot.slane %v5871, 7
        %v5874 = vshll.u32 %v5786, 16
        %v5876 = vor.u32 %v5873, %v5874
        %v5877 = vsel %vm530, %v5869, %v5876
        %v5878 = vrot.slane %v5873, 4
        %v5880 = vshrl.u32 %v5787, 16
        %v5882 = vrot.slane %v5880, 7
        %v5883 = vshll.u32 %v5787, 16
        %v5885 = vor.u32 %v5882, %v5883
        %v5886 = vrot.slane %v5882, 4
        %v5888 = vshrl.u32 %v5788, 16
        %v5890 = vrot.slane %v5888, 7
        %v5891 = vshll.u32 %v5788, 16
        %v5893 = vor.u32 %v5890, %v5891
        %v5894 = vsel %vm530, %v5886, %v5893
        %v5895 = vrot.slane %v5890, 4
        %v5897 = vshrl.u32 %v5789, 16
        %v5899 = vrot.slane %v5897, 7
        %v5900 = vshll.u32 %v5789, 16
        %v5902 = vor.u32 %v5899, %v5900
        %v5903 = vrot.slane %v5899, 4
        %v5905 = vshrl.u32 %v5790, 16
        %v5907 = vrot.slane %v5905, 7
        %v5908 = vshll.u32 %v5790, 16
        %v5910 = vor.u32 %v5907, %v5908
        %v5911 = vsel %vm530, %v5903, %v5910
        %v5912 = vrot.slane %v5907, 4
        %v5914 = vshrl.u32 %v5791, 16
        %v5916 = vrot.slane %v5914, 7
        %v5917 = vshll.u32 %v5791, 16
        %v5919 = vor.u32 %v5916, %v5917
        %v5920 = vrot.slane %v5916, 4
        %v5922 = vshrl.u32 %v5792, 16
        %v5924 = vrot.slane %v5922, 7
        %v5925 = vshll.u32 %v5792, 16
        %v5927 = vor.u32 %v5924, %v5925
        %v5928 = vsel %vm530, %v5920, %v5927
        %v5929 = vrot.slane %v5924, 4
        %v5931 = vshrl.u32 %v5793, 16
        %v5933 = vrot.slane %v5931, 7
        %v5934 = vshll.u32 %v5793, 16
        %v5936 = vor.u32 %v5933, %v5934
        %v5937 = vrot.slane %v5933, 4
        %v5939 = vshrl.u32 %v5794, 16
        %v5941 = vrot.slane %v5939, 7
        %v5942 = vshll.u32 %v5794, 16
        %v5944 = vor.u32 %v5941, %v5942
        %v5945 = vsel %vm530, %v5937, %v5944
        %v5946 = vrot.slane %v5941, 4
        %v5948 = vshrl.u32 %v5795, 16
        %v5950 = vrot.slane %v5948, 7
        %v5951 = vshll.u32 %v5795, 16
        %v5953 = vor.u32 %v5950, %v5951
        %v5954 = vrot.slane %v5950, 4
        %v5956 = vshrl.u32 %v5796, 16
        %v5958 = vrot.slane %v5956, 7
        %v5959 = vshll.u32 %v5796, 16
        %v5961 = vor.u32 %v5958, %v5959
        %v5962 = vsel %vm530, %v5954, %v5961
        %v5963 = vrot.slane %v5958, 4
        %v5965 = vshrl.u32 %v5797, 16
        %v5967 = vrot.slane %v5965, 7
        %v5968 = vshll.u32 %v5797, 16
        %v5970 = vor.u32 %v5967, %v5968
        %v5971 = vrot.slane %v5967, 4
        %v5973 = vshrl.u32 %v5798, 16
        %v5975 = vrot.slane %v5973, 7
        %v5976 = vshll.u32 %v5798, 16
        %v5978 = vor.u32 %v5975, %v5976
        %v5979 = vsel %vm530, %v5971, %v5978
        %v5980 = vrot.slane %v5975, 4
        %v5982 = vshrl.u32 %v5799, 16
        %v5984 = vrot.slane %v5982, 7
        %v5985 = vshll.u32 %v5799, 16
        %v5987 = vor.u32 %v5984, %v5985
        %v5988 = vrot.slane %v5984, 4
        %v5990 = vshrl.u32 %v5800, 16
        %v5992 = vrot.slane %v5990, 7
        %v5993 = vshll.u32 %v5800, 16
        %v5995 = vor.u32 %v5992, %v5993
        %v5996 = vsel %vm530, %v5988, %v5995
        %v5997 = vrot.slane %v5992, 4
        %v5999 = vshrl.u32 %v5801, 16
        %v6001 = vrot.slane %v5999, 7
        %v6002 = vshll.u32 %v5801, 16
        %v6004 = vor.u32 %v6001, %v6002
        %v6005 = vrot.slane %v6001, 4
        %v6007 = vshrl.u32 %v5802, 16
        %v6009 = vrot.slane %v6007, 7
        %v6010 = vshll.u32 %v5802, 16
        %v6012 = vor.u32 %v6009, %v6010
        %v6013 = vsel %vm530, %v6005, %v6012
        %v6014 = vrot.slane %v6009, 4
        %v6016 = vshrl.u32 %v5803, 16
        %v6018 = vrot.slane %v6016, 7
        %v6019 = vshll.u32 %v5803, 16
        %v6021 = vor.u32 %v6018, %v6019
        %v6022 = vrot.slane %v6018, 4
        %v6024 = vshrl.u32 %v5804, 16
        %v6026 = vrot.slane %v6024, 7
        %v6027 = vshll.u32 %v5804, 16
        %v6029 = vor.u32 %v6026, %v6027
        %v6030 = vsel %vm530, %v6022, %v6029
        %v6031 = vrot.slane %v6026, 4
        %v6033 = vshrl.u32 %v5805, 16
        %v6035 = vrot.slane %v6033, 7
        %v6036 = vshll.u32 %v5805, 16
        %v6038 = vor.u32 %v6035, %v6036
        %v6039 = vrot.slane %v6035, 4
        %v6041 = vshrl.u32 %v5806, 16
        %v6043 = vrot.slane %v6041, 7
        %v6044 = vshll.u32 %v5806, 16
        %v6046 = vor.u32 %v6043, %v6044
        %v6047 = vsel %vm530, %v6039, %v6046
        %v6048 = vrot.slane %v6043, 4
        %v6050 = vshrl.u32 %v5807, 16
        %v6052 = vrot.slane %v6050, 7
        %v6053 = vshll.u32 %v5807, 16
        %v6055 = vor.u32 %v6052, %v6053
        %v6056 = vrot.slane %v6052, 4
        %v6058 = vshrl.u32 %v5808, 16
        %v6060 = vrot.slane %v6058, 7
        %v6061 = vshll.u32 %v5808, 16
        %v6063 = vor.u32 %v6060, %v6061
        %v6064 = vsel %vm530, %v6056, %v6063
        %v6065 = vrot.slane %v6060, 4
        %v6067 = vshrl.u32 %v5809, 16
        %v6069 = vrot.slane %v6067, 7
        %v6070 = vshll.u32 %v5809, 16
        %v6072 = vor.u32 %v6069, %v6070
        %v6073 = vrot.slane %v6069, 4
        %v6075 = vshrl.u32 %v5810, 16
        %v6077 = vrot.slane %v6075, 7
        %v6078 = vshll.u32 %v5810, 16
        %v6080 = vor.u32 %v6077, %v6078
        %v6081 = vsel %vm530, %v6073, %v6080
        %v6082 = vrot.slane %v6077, 4
        %s6131 = scalar_lea.vmem [#allocation3], 12
        %vm6132 = vcmask 257024
        %vm6133 = vmand %vm6132, %vm345
        %v6134 = vld [vmem:[%s6131] sm:$0xf]
        %v6135 = vsel %vm6133, %v5817, %v6134
        %6136 = vst [vmem:[%s6131] sm:$0xf] %v6135
        %6137 = vst.msk [vmem:[%s6131 + $0x4] sm:$0xf] %vm5595, %v5826
        %v6138 = vld [vmem:[%s6131 + $0x8] sm:$0x1]
        %v6139 = vsel %vm5605, %v5827, %v6138
        %6140 = vst [vmem:[%s6131 + $0x8] sm:$0x1] %v6139
        %v6141 = vld [vmem:[%s6131 + $0xc] sm:$0xf]
        %v6142 = vsel %vm6133, %v5834, %v6141
        %6143 = vst [vmem:[%s6131 + $0xc] sm:$0xf] %v6142
        %6144 = vst.msk [vmem:[%s6131 + $0x10] sm:$0xf] %vm5595, %v5843
        %v6145 = vld [vmem:[%s6131 + $0x14] sm:$0x1]
        %v6146 = vsel %vm5605, %v5844, %v6145
        %6147 = vst [vmem:[%s6131 + $0x14] sm:$0x1] %v6146
        %v6148 = vld [vmem:[%s6131 + $0x18] sm:$0xf]
        %v6149 = vsel %vm6133, %v5851, %v6148
        %6150 = vst [vmem:[%s6131 + $0x18] sm:$0xf] %v6149
        %6151 = vst.msk [vmem:[%s6131 + $0x1c] sm:$0xf] %vm5595, %v5860
        %v6152 = vld [vmem:[%s6131 + $0x20] sm:$0x1]
        %v6153 = vsel %vm5605, %v5861, %v6152
        %6154 = vst [vmem:[%s6131 + $0x20] sm:$0x1] %v6153
        %v6155 = vld [vmem:[%s6131 + $0x24] sm:$0xf]
        %v6156 = vsel %vm6133, %v5868, %v6155
        %6157 = vst [vmem:[%s6131 + $0x24] sm:$0xf] %v6156
        %6158 = vst.msk [vmem:[%s6131 + $0x28] sm:$0xf] %vm5595, %v5877
        %v6159 = vld [vmem:[%s6131 + $0x2c] sm:$0x1]
        %v6160 = vsel %vm5605, %v5878, %v6159
        %6161 = vst [vmem:[%s6131 + $0x2c] sm:$0x1] %v6160
        %v6162 = vld [vmem:[%s6131 + $0x30] sm:$0xf]
        %v6163 = vsel %vm6133, %v5885, %v6162
        %6164 = vst [vmem:[%s6131 + $0x30] sm:$0xf] %v6163
        %6165 = vst.msk [vmem:[%s6131 + $0x34] sm:$0xf] %vm5595, %v5894
        %v6166 = vld [vmem:[%s6131 + $0x38] sm:$0x1]
        %v6167 = vsel %vm5605, %v5895, %v6166
        %6168 = vst [vmem:[%s6131 + $0x38] sm:$0x1] %v6167
        %v6169 = vld [vmem:[%s6131 + $0x3c] sm:$0xf]
        %v6170 = vsel %vm6133, %v5902, %v6169
        %6171 = vst [vmem:[%s6131 + $0x3c] sm:$0xf] %v6170
        %6172 = vst.msk [vmem:[%s6131 + $0x40] sm:$0xf] %vm5595, %v5911
        %v6173 = vld [vmem:[%s6131 + $0x44] sm:$0x1]
        %v6174 = vsel %vm5605, %v5912, %v6173
        %6175 = vst [vmem:[%s6131 + $0x44] sm:$0x1] %v6174
        %v6176 = vld [vmem:[%s6131 + $0x48] sm:$0xf]
        %v6177 = vsel %vm6133, %v5919, %v6176
        %6178 = vst [vmem:[%s6131 + $0x48] sm:$0xf] %v6177
        %6179 = vst.msk [vmem:[%s6131 + $0x4c] sm:$0xf] %vm5595, %v5928
        %v6180 = vld [vmem:[%s6131 + $0x50] sm:$0x1]
        %v6181 = vsel %vm5605, %v5929, %v6180
        %6182 = vst [vmem:[%s6131 + $0x50] sm:$0x1] %v6181
        %v6183 = vld [vmem:[%s6131 + $0x54] sm:$0xf]
        %v6184 = vsel %vm6133, %v5936, %v6183
        %6185 = vst [vmem:[%s6131 + $0x54] sm:$0xf] %v6184
        %6186 = vst.msk [vmem:[%s6131 + $0x58] sm:$0xf] %vm5595, %v5945
        %v6187 = vld [vmem:[%s6131 + $0x5c] sm:$0x1]
        %v6188 = vsel %vm5605, %v5946, %v6187
        %6189 = vst [vmem:[%s6131 + $0x5c] sm:$0x1] %v6188
        %v6190 = vld [vmem:[%s6131 + $0x60] sm:$0xf]
        %v6191 = vsel %vm6133, %v5953, %v6190
        %6192 = vst [vmem:[%s6131 + $0x60] sm:$0xf] %v6191
        %6193 = vst.msk [vmem:[%s6131 + $0x64] sm:$0xf] %vm5595, %v5962
        %v6194 = vld [vmem:[%s6131 + $0x68] sm:$0x1]
        %v6195 = vsel %vm5605, %v5963, %v6194
        %6196 = vst [vmem:[%s6131 + $0x68] sm:$0x1] %v6195
        %v6197 = vld [vmem:[%s6131 + $0x6c] sm:$0xf]
        %v6198 = vsel %vm6133, %v5970, %v6197
        %6199 = vst [vmem:[%s6131 + $0x6c] sm:$0xf] %v6198
        %6200 = vst.msk [vmem:[%s6131 + $0x70] sm:$0xf] %vm5595, %v5979
        %v6201 = vld [vmem:[%s6131 + $0x74] sm:$0x1]
        %v6202 = vsel %vm5605, %v5980, %v6201
        %6203 = vst [vmem:[%s6131 + $0x74] sm:$0x1] %v6202
        %v6204 = vld [vmem:[%s6131 + $0x78] sm:$0xf]
        %v6205 = vsel %vm6133, %v5987, %v6204
        %6206 = vst [vmem:[%s6131 + $0x78] sm:$0xf] %v6205
        %6207 = vst.msk [vmem:[%s6131 + $0x7c] sm:$0xf] %vm5595, %v5996
        %v6208 = vld [vmem:[%s6131 + $0x80] sm:$0x1]
        %v6209 = vsel %vm5605, %v5997, %v6208
        %6210 = vst [vmem:[%s6131 + $0x80] sm:$0x1] %v6209
        %v6211 = vld [vmem:[%s6131 + $0x84] sm:$0xf]
        %v6212 = vsel %vm6133, %v6004, %v6211
        %6213 = vst [vmem:[%s6131 + $0x84] sm:$0xf] %v6212
        %6214 = vst.msk [vmem:[%s6131 + $0x88] sm:$0xf] %vm5595, %v6013
        %v6215 = vld [vmem:[%s6131 + $0x8c] sm:$0x1]
        %v6216 = vsel %vm5605, %v6014, %v6215
        %6217 = vst [vmem:[%s6131 + $0x8c] sm:$0x1] %v6216
        %v6218 = vld [vmem:[%s6131 + $0x90] sm:$0xf]
        %v6219 = vsel %vm6133, %v6021, %v6218
        %6220 = vst [vmem:[%s6131 + $0x90] sm:$0xf] %v6219
        %6221 = vst.msk [vmem:[%s6131 + $0x94] sm:$0xf] %vm5595, %v6030
        %v6222 = vld [vmem:[%s6131 + $0x98] sm:$0x1]
        %v6223 = vsel %vm5605, %v6031, %v6222
        %6224 = vst [vmem:[%s6131 + $0x98] sm:$0x1] %v6223
        %v6225 = vld [vmem:[%s6131 + $0x9c] sm:$0xf]
        %v6226 = vsel %vm6133, %v6038, %v6225
        %6227 = vst [vmem:[%s6131 + $0x9c] sm:$0xf] %v6226
        %6228 = vst.msk [vmem:[%s6131 + $0xa0] sm:$0xf] %vm5595, %v6047
        %v6229 = vld [vmem:[%s6131 + $0xa4] sm:$0x1]
        %v6230 = vsel %vm5605, %v6048, %v6229
        %6231 = vst [vmem:[%s6131 + $0xa4] sm:$0x1] %v6230
        %v6232 = vld [vmem:[%s6131 + $0xa8] sm:$0xf]
        %v6233 = vsel %vm6133, %v6055, %v6232
        %6234 = vst [vmem:[%s6131 + $0xa8] sm:$0xf] %v6233
        %6235 = vst.msk [vmem:[%s6131 + $0xac] sm:$0xf] %vm5595, %v6064
        %v6236 = vld [vmem:[%s6131 + $0xb0] sm:$0x1]
        %v6237 = vsel %vm5605, %v6065, %v6236
        %6238 = vst [vmem:[%s6131 + $0xb0] sm:$0x1] %v6237
        %v6239 = vld [vmem:[%s6131 + $0xb4] sm:$0xf]
        %v6240 = vsel %vm6133, %v6072, %v6239
        %6241 = vst [vmem:[%s6131 + $0xb4] sm:$0xf] %v6240
        %6242 = vst.msk [vmem:[%s6131 + $0xb8] sm:$0xf] %vm5595, %v6081
        %v6243 = vld [vmem:[%s6131 + $0xbc] sm:$0x1]
        %v6244 = vsel %vm5605, %v6082, %v6243
        %6245 = vst [vmem:[%s6131 + $0xbc] sm:$0x1] %v6244
        %v6246 = vld [vmem:[#allocation3] sm:$0xf]
        %v6247 = vld [vmem:[#allocation3 + $0x4] sm:$0xf]
        %v6248 = vld [vmem:[#allocation3 + $0xc] sm:$0xf]
        %v6249 = vld [vmem:[#allocation3 + $0x10] sm:$0xf]
        %v6250 = vld [vmem:[#allocation3 + $0x18] sm:$0xf]
        %v6251 = vld [vmem:[#allocation3 + $0x1c] sm:$0xf]
        %v6252 = vld [vmem:[#allocation3 + $0x24] sm:$0xf]
        %v6253 = vld [vmem:[#allocation3 + $0x28] sm:$0xf]
        %v6254 = vld [vmem:[#allocation3 + $0x30] sm:$0xf]
        %v6255 = vld [vmem:[#allocation3 + $0x34] sm:$0xf]
        %v6256 = vld [vmem:[#allocation3 + $0x3c] sm:$0xf]
        %v6257 = vld [vmem:[#allocation3 + $0x40] sm:$0xf]
        %v6258 = vld [vmem:[#allocation3 + $0x48] sm:$0xf]
        %v6259 = vld [vmem:[#allocation3 + $0x4c] sm:$0xf]
        %v6260 = vld [vmem:[#allocation3 + $0x54] sm:$0xf]
        %v6261 = vld [vmem:[#allocation3 + $0x58] sm:$0xf]
        %v6262 = vld [vmem:[#allocation3 + $0x60] sm:$0xf]
        %v6263 = vld [vmem:[#allocation3 + $0x64] sm:$0xf]
        %v6264 = vld [vmem:[#allocation3 + $0x6c] sm:$0xf]
        %v6265 = vld [vmem:[#allocation3 + $0x70] sm:$0xf]
        %v6266 = vld [vmem:[#allocation3 + $0x78] sm:$0xf]
        %v6267 = vld [vmem:[#allocation3 + $0x7c] sm:$0xf]
        %v6268 = vld [vmem:[#allocation3 + $0x84] sm:$0xf]
        %v6269 = vld [vmem:[#allocation3 + $0x88] sm:$0xf]
        %v6270 = vld [vmem:[#allocation3 + $0x90] sm:$0xf]
        %v6271 = vld [vmem:[#allocation3 + $0x94] sm:$0xf]
        %v6272 = vld [vmem:[#allocation3 + $0x9c] sm:$0xf]
        %v6273 = vld [vmem:[#allocation3 + $0xa0] sm:$0xf]
        %v6274 = vld [vmem:[#allocation3 + $0xa8] sm:$0xf]
        %v6275 = vld [vmem:[#allocation3 + $0xac] sm:$0xf]
        %v6276 = vld [vmem:[#allocation3 + $0xb4] sm:$0xf]
        %v6277 = vld [vmem:[#allocation3 + $0xb8] sm:$0xf]
        %v6278 = vld [vmem:[%s3] sm:$0xf]
        %v6279 = vld [vmem:[%s3 + $0x4] sm:$0xf]
        %v6280 = vld [vmem:[%s3 + $0x8] sm:$0xf]
        %v6281 = vld [vmem:[%s3 + $0xc] sm:$0xf]
        %v6282 = vld [vmem:[#allocation3 + $0x8] sm:$0x1]
        %v6283 = vld [vmem:[#allocation3 + $0x14] sm:$0x1]
        %v6284 = vld [vmem:[#allocation3 + $0x20] sm:$0x1]
        %v6285 = vld [vmem:[#allocation3 + $0x2c] sm:$0x1]
        %v6286 = vld [vmem:[#allocation3 + $0x38] sm:$0x1]
        %v6287 = vld [vmem:[#allocation3 + $0x44] sm:$0x1]
        %v6288 = vld [vmem:[#allocation3 + $0x50] sm:$0x1]
        %v6289 = vld [vmem:[#allocation3 + $0x5c] sm:$0x1]
        %v6290 = vld [vmem:[#allocation3 + $0x68] sm:$0x1]
        %v6291 = vld [vmem:[#allocation3 + $0x74] sm:$0x1]
        %v6292 = vld [vmem:[#allocation3 + $0x80] sm:$0x1]
        %v6293 = vld [vmem:[#allocation3 + $0x8c] sm:$0x1]
        %v6294 = vld [vmem:[#allocation3 + $0x98] sm:$0x1]
        %v6295 = vld [vmem:[#allocation3 + $0xa4] sm:$0x1]
        %v6296 = vld [vmem:[#allocation3 + $0xb0] sm:$0x1]
        %v6297 = vld [vmem:[#allocation3 + $0xbc] sm:$0x1]
        %v6299 = vshrl.u32 %v6246, 16
        %v6301 = vrot.slane %v6299, 4
        %v6302 = vshll.u32 %v6246, 16
        %v6304 = vrot.slane %v6302, 5
        %v6305 = vor.u32 %v6301, %v6304
        %v6306 = vrot.slane %v6305, 4
        %v6308 = vshll.u32 %v6247, 16
        %v6310 = vrot.slane %v6308, 5
        %v6311 = vsel %vm1017, %v6306, %v6310
        %v6312 = vshrl.u32 %v6247, 16
        %v6314 = vrot.slane %v6312, 4
        %v6315 = vor.u32 %v6314, %v6310
        %v6316 = vrot.slane %v6315, 4
        %v6318 = vshll.u32 %v6282, 16
        %v6320 = vrot.slane %v6318, 5
        %v6321 = vsel %vm1017, %v6316, %v6320
        %v6323 = vshrl.u32 %v6248, 16
        %v6325 = vrot.slane %v6323, 4
        %v6326 = vshll.u32 %v6248, 16
        %v6328 = vrot.slane %v6326, 5
        %v6329 = vor.u32 %v6325, %v6328
        %v6330 = vrot.slane %v6329, 4
        %v6332 = vshll.u32 %v6249, 16
        %v6334 = vrot.slane %v6332, 5
        %v6335 = vsel %vm1017, %v6330, %v6334
        %v6336 = vshrl.u32 %v6249, 16
        %v6338 = vrot.slane %v6336, 4
        %v6339 = vor.u32 %v6338, %v6334
        %v6340 = vrot.slane %v6339, 4
        %v6342 = vshll.u32 %v6283, 16
        %v6344 = vrot.slane %v6342, 5
        %v6345 = vsel %vm1017, %v6340, %v6344
        %v6347 = vshrl.u32 %v6250, 16
        %v6349 = vrot.slane %v6347, 4
        %v6350 = vshll.u32 %v6250, 16
        %v6352 = vrot.slane %v6350, 5
        %v6353 = vor.u32 %v6349, %v6352
        %v6354 = vrot.slane %v6353, 4
        %v6356 = vshll.u32 %v6251, 16
        %v6358 = vrot.slane %v6356, 5
        %v6359 = vsel %vm1017, %v6354, %v6358
        %v6360 = vshrl.u32 %v6251, 16
        %v6362 = vrot.slane %v6360, 4
        %v6363 = vor.u32 %v6362, %v6358
        %v6364 = vrot.slane %v6363, 4
        %v6366 = vshll.u32 %v6284, 16
        %v6368 = vrot.slane %v6366, 5
        %v6369 = vsel %vm1017, %v6364, %v6368
        %v6371 = vshrl.u32 %v6252, 16
        %v6373 = vrot.slane %v6371, 4
        %v6374 = vshll.u32 %v6252, 16
        %v6376 = vrot.slane %v6374, 5
        %v6377 = vor.u32 %v6373, %v6376
        %v6378 = vrot.slane %v6377, 4
        %v6380 = vshll.u32 %v6253, 16
        %v6382 = vrot.slane %v6380, 5
        %v6383 = vsel %vm1017, %v6378, %v6382
        %v6384 = vshrl.u32 %v6253, 16
        %v6386 = vrot.slane %v6384, 4
        %v6387 = vor.u32 %v6386, %v6382
        %v6388 = vrot.slane %v6387, 4
        %v6390 = vshll.u32 %v6285, 16
        %v6392 = vrot.slane %v6390, 5
        %v6393 = vsel %vm1017, %v6388, %v6392
        %v6395 = vshrl.u32 %v6254, 16
        %v6397 = vrot.slane %v6395, 4
        %v6398 = vshll.u32 %v6254, 16
        %v6400 = vrot.slane %v6398, 5
        %v6401 = vor.u32 %v6397, %v6400
        %v6402 = vrot.slane %v6401, 4
        %v6404 = vshll.u32 %v6255, 16
        %v6406 = vrot.slane %v6404, 5
        %v6407 = vsel %vm1017, %v6402, %v6406
        %v6408 = vshrl.u32 %v6255, 16
        %v6410 = vrot.slane %v6408, 4
        %v6411 = vor.u32 %v6410, %v6406
        %v6412 = vrot.slane %v6411, 4
        %v6414 = vshll.u32 %v6286, 16
        %v6416 = vrot.slane %v6414, 5
        %v6417 = vsel %vm1017, %v6412, %v6416
        %v6419 = vshrl.u32 %v6256, 16
        %v6421 = vrot.slane %v6419, 4
        %v6422 = vshll.u32 %v6256, 16
        %v6424 = vrot.slane %v6422, 5
        %v6425 = vor.u32 %v6421, %v6424
        %v6426 = vrot.slane %v6425, 4
        %v6428 = vshll.u32 %v6257, 16
        %v6430 = vrot.slane %v6428, 5
        %v6431 = vsel %vm1017, %v6426, %v6430
        %v6432 = vshrl.u32 %v6257, 16
        %v6434 = vrot.slane %v6432, 4
        %v6435 = vor.u32 %v6434, %v6430
        %v6436 = vrot.slane %v6435, 4
        %v6438 = vshll.u32 %v6287, 16
        %v6440 = vrot.slane %v6438, 5
        %v6441 = vsel %vm1017, %v6436, %v6440
        %v6443 = vshrl.u32 %v6258, 16
        %v6445 = vrot.slane %v6443, 4
        %v6446 = vshll.u32 %v6258, 16
        %v6448 = vrot.slane %v6446, 5
        %v6449 = vor.u32 %v6445, %v6448
        %v6450 = vrot.slane %v6449, 4
        %v6452 = vshll.u32 %v6259, 16
        %v6454 = vrot.slane %v6452, 5
        %v6455 = vsel %vm1017, %v6450, %v6454
        %v6456 = vshrl.u32 %v6259, 16
        %v6458 = vrot.slane %v6456, 4
        %v6459 = vor.u32 %v6458, %v6454
        %v6460 = vrot.slane %v6459, 4
        %v6462 = vshll.u32 %v6288, 16
        %v6464 = vrot.slane %v6462, 5
        %v6465 = vsel %vm1017, %v6460, %v6464
        %v6467 = vshrl.u32 %v6260, 16
        %v6469 = vrot.slane %v6467, 4
        %v6470 = vshll.u32 %v6260, 16
        %v6472 = vrot.slane %v6470, 5
        %v6473 = vor.u32 %v6469, %v6472
        %v6474 = vrot.slane %v6473, 4
        %v6476 = vshll.u32 %v6261, 16
        %v6478 = vrot.slane %v6476, 5
        %v6479 = vsel %vm1017, %v6474, %v6478
        %v6480 = vshrl.u32 %v6261, 16
        %v6482 = vrot.slane %v6480, 4
        %v6483 = vor.u32 %v6482, %v6478
        %v6484 = vrot.slane %v6483, 4
        %v6486 = vshll.u32 %v6289, 16
        %v6488 = vrot.slane %v6486, 5
        %v6489 = vsel %vm1017, %v6484, %v6488
        %v6491 = vshrl.u32 %v6262, 16
        %v6493 = vrot.slane %v6491, 4
        %v6494 = vshll.u32 %v6262, 16
        %v6496 = vrot.slane %v6494, 5
        %v6497 = vor.u32 %v6493, %v6496
        %v6498 = vrot.slane %v6497, 4
        %v6500 = vshll.u32 %v6263, 16
        %v6502 = vrot.slane %v6500, 5
        %v6503 = vsel %vm1017, %v6498, %v6502
        %v6504 = vshrl.u32 %v6263, 16
        %v6506 = vrot.slane %v6504, 4
        %v6507 = vor.u32 %v6506, %v6502
        %v6508 = vrot.slane %v6507, 4
        %v6510 = vshll.u32 %v6290, 16
        %v6512 = vrot.slane %v6510, 5
        %v6513 = vsel %vm1017, %v6508, %v6512
        %v6515 = vshrl.u32 %v6264, 16
        %v6517 = vrot.slane %v6515, 4
        %v6518 = vshll.u32 %v6264, 16
        %v6520 = vrot.slane %v6518, 5
        %v6521 = vor.u32 %v6517, %v6520
        %v6522 = vrot.slane %v6521, 4
        %v6524 = vshll.u32 %v6265, 16
        %v6526 = vrot.slane %v6524, 5
        %v6527 = vsel %vm1017, %v6522, %v6526
        %v6528 = vshrl.u32 %v6265, 16
        %v6530 = vrot.slane %v6528, 4
        %v6531 = vor.u32 %v6530, %v6526
        %v6532 = vrot.slane %v6531, 4
        %v6534 = vshll.u32 %v6291, 16
        %v6536 = vrot.slane %v6534, 5
        %v6537 = vsel %vm1017, %v6532, %v6536
        %v6539 = vshrl.u32 %v6266, 16
        %v6541 = vrot.slane %v6539, 4
        %v6542 = vshll.u32 %v6266, 16
        %v6544 = vrot.slane %v6542, 5
        %v6545 = vor.u32 %v6541, %v6544
        %v6546 = vrot.slane %v6545, 4
        %v6548 = vshll.u32 %v6267, 16
        %v6550 = vrot.slane %v6548, 5
        %v6551 = vsel %vm1017, %v6546, %v6550
        %v6552 = vshrl.u32 %v6267, 16
        %v6554 = vrot.slane %v6552, 4
        %v6555 = vor.u32 %v6554, %v6550
        %v6556 = vrot.slane %v6555, 4
        %v6558 = vshll.u32 %v6292, 16
        %v6560 = vrot.slane %v6558, 5
        %v6561 = vsel %vm1017, %v6556, %v6560
        %v6563 = vshrl.u32 %v6268, 16
        %v6565 = vrot.slane %v6563, 4
        %v6566 = vshll.u32 %v6268, 16
        %v6568 = vrot.slane %v6566, 5
        %v6569 = vor.u32 %v6565, %v6568
        %v6570 = vrot.slane %v6569, 4
        %v6572 = vshll.u32 %v6269, 16
        %v6574 = vrot.slane %v6572, 5
        %v6575 = vsel %vm1017, %v6570, %v6574
        %v6576 = vshrl.u32 %v6269, 16
        %v6578 = vrot.slane %v6576, 4
        %v6579 = vor.u32 %v6578, %v6574
        %v6580 = vrot.slane %v6579, 4
        %v6582 = vshll.u32 %v6293, 16
        %v6584 = vrot.slane %v6582, 5
        %v6585 = vsel %vm1017, %v6580, %v6584
        %v6587 = vshrl.u32 %v6270, 16
        %v6589 = vrot.slane %v6587, 4
        %v6590 = vshll.u32 %v6270, 16
        %v6592 = vrot.slane %v6590, 5
        %v6593 = vor.u32 %v6589, %v6592
        %v6594 = vrot.slane %v6593, 4
        %v6596 = vshll.u32 %v6271, 16
        %v6598 = vrot.slane %v6596, 5
        %v6599 = vsel %vm1017, %v6594, %v6598
        %v6600 = vshrl.u32 %v6271, 16
        %v6602 = vrot.slane %v6600, 4
        %v6603 = vor.u32 %v6602, %v6598
        %v6604 = vrot.slane %v6603, 4
        %v6606 = vshll.u32 %v6294, 16
        %v6608 = vrot.slane %v6606, 5
        %v6609 = vsel %vm1017, %v6604, %v6608
        %v6611 = vshrl.u32 %v6272, 16
        %v6613 = vrot.slane %v6611, 4
        %v6614 = vshll.u32 %v6272, 16
        %v6616 = vrot.slane %v6614, 5
        %v6617 = vor.u32 %v6613, %v6616
        %v6618 = vrot.slane %v6617, 4
        %v6620 = vshll.u32 %v6273, 16
        %v6622 = vrot.slane %v6620, 5
        %v6623 = vsel %vm1017, %v6618, %v6622
        %v6624 = vshrl.u32 %v6273, 16
        %v6626 = vrot.slane %v6624, 4
        %v6627 = vor.u32 %v6626, %v6622
        %v6628 = vrot.slane %v6627, 4
        %v6630 = vshll.u32 %v6295, 16
        %v6632 = vrot.slane %v6630, 5
        %v6633 = vsel %vm1017, %v6628, %v6632
        %v6635 = vshrl.u32 %v6274, 16
        %v6637 = vrot.slane %v6635, 4
        %v6638 = vshll.u32 %v6274, 16
        %v6640 = vrot.slane %v6638, 5
        %v6641 = vor.u32 %v6637, %v6640
        %v6642 = vrot.slane %v6641, 4
        %v6644 = vshll.u32 %v6275, 16
        %v6646 = vrot.slane %v6644, 5
        %v6647 = vsel %vm1017, %v6642, %v6646
        %v6648 = vshrl.u32 %v6275, 16
        %v6650 = vrot.slane %v6648, 4
        %v6651 = vor.u32 %v6650, %v6646
        %v6652 = vrot.slane %v6651, 4
        %v6654 = vshll.u32 %v6296, 16
        %v6656 = vrot.slane %v6654, 5
        %v6657 = vsel %vm1017, %v6652, %v6656
        %v6659 = vshrl.u32 %v6276, 16
        %v6661 = vrot.slane %v6659, 4
        %v6662 = vshll.u32 %v6276, 16
        %v6664 = vrot.slane %v6662, 5
        %v6665 = vor.u32 %v6661, %v6664
        %v6666 = vrot.slane %v6665, 4
        %v6668 = vshll.u32 %v6277, 16
        %v6670 = vrot.slane %v6668, 5
        %v6671 = vsel %vm1017, %v6666, %v6670
        %v6672 = vshrl.u32 %v6277, 16
        %v6674 = vrot.slane %v6672, 4
        %v6675 = vor.u32 %v6674, %v6670
        %v6676 = vrot.slane %v6675, 4
        %v6678 = vshll.u32 %v6297, 16
        %v6680 = vrot.slane %v6678, 5
        %v6681 = vsel %vm1017, %v6676, %v6680
        %s6682 = scalar_lea.vmem %s3, 16
        %v6683 = vld [vmem:[%s6682] sm:$0xf]
        %v6684 = vld [vmem:[%s6682 + $0x4] sm:$0xf]
        %v6685 = vld [vmem:[%s6682 + $0x8] sm:$0xf]
        %v6686 = vld [vmem:[%s6682 + $0xc] sm:$0xf]
        %v6687 = vunpack.c.l.b16 %v6311
        %v6688 = vunpack.c.l.b16 %v6321
        %v6689 = vunpack.c.l.b16 %v6335
        %v6690 = vunpack.c.l.b16 %v6345
        %v6691 = vunpack.c.l.b16 %v6359
        %v6692 = vunpack.c.l.b16 %v6369
        %v6693 = vunpack.c.l.b16 %v6383
        %v6694 = vunpack.c.l.b16 %v6393
        %v6695 = vunpack.c.l.b16 %v6407
        %v6696 = vunpack.c.l.b16 %v6417
        %v6697 = vunpack.c.l.b16 %v6431
        %v6698 = vunpack.c.l.b16 %v6441
        %v6699 = vunpack.c.l.b16 %v6455
        %v6700 = vunpack.c.l.b16 %v6465
        %v6701 = vunpack.c.l.b16 %v6479
        %v6702 = vunpack.c.l.b16 %v6489
        %v6703 = vunpack.c.l.b16 %v6503
        %v6704 = vunpack.c.l.b16 %v6513
        %v6705 = vunpack.c.l.b16 %v6527
        %v6706 = vunpack.c.l.b16 %v6537
        %v6707 = vunpack.c.l.b16 %v6551
        %v6708 = vunpack.c.l.b16 %v6561
        %v6709 = vunpack.c.l.b16 %v6575
        %v6710 = vunpack.c.l.b16 %v6585
        %v6711 = vunpack.c.l.b16 %v6599
        %v6712 = vunpack.c.l.b16 %v6609
        %v6713 = vunpack.c.l.b16 %v6623
        %v6714 = vunpack.c.l.b16 %v6633
        %v6715 = vunpack.c.l.b16 %v6647
        %v6716 = vunpack.c.l.b16 %v6657
        %v6717 = vunpack.c.l.b16 %v6671
        %v6718 = vunpack.c.l.b16 %v6681
        %v6719 = vpack.c.b16 %v6688, %v6687
        %v6720 = vpack.c.b16 %v6690, %v6689
        %v6721 = vpack.c.b16 %v6692, %v6691
        %v6722 = vpack.c.b16 %v6694, %v6693
        %v6723 = vpack.c.b16 %v6696, %v6695
        %v6724 = vpack.c.b16 %v6698, %v6697
        %v6725 = vpack.c.b16 %v6700, %v6699
        %v6726 = vpack.c.b16 %v6702, %v6701
        %v6727 = vpack.c.b16 %v6704, %v6703
        %v6728 = vpack.c.b16 %v6706, %v6705
        %v6729 = vpack.c.b16 %v6708, %v6707
        %v6730 = vpack.c.b16 %v6710, %v6709
        %v6731 = vpack.c.b16 %v6712, %v6711
        %v6732 = vpack.c.b16 %v6714, %v6713
        %v6733 = vpack.c.b16 %v6716, %v6715
        %v6734 = vpack.c.b16 %v6718, %v6717
        %v6739 = vunpack.c.l.b16 %v6683
        %v6740 = vunpack.c.l.b16 %v6684
        %v6741 = vunpack.c.l.b16 %v6685
        %v6742 = vunpack.c.l.b16 %v6686
        %v6743 = vpack.c.b16 %v6740, %v6739
        %v6744 = vpack.c.b16 %v6742, %v6741
        %vm6747 = vcmask 261120
        %v6749 = vsel %vm6747, %v6719, 0
        %v6752 = vsel %vm6747, %v6720, 0
        %v6755 = vsel %vm6747, %v6721, 0
        %v6758 = vsel %vm6747, %v6722, 0
        %v6761 = vsel %vm6747, %v6723, 0
        %v6764 = vsel %vm6747, %v6724, 0
        %v6767 = vsel %vm6747, %v6725, 0
        %v6770 = vsel %vm6747, %v6726, 0
        %v6773 = vsel %vm6747, %v6727, 0
        %v6776 = vsel %vm6747, %v6728, 0
        %v6779 = vsel %vm6747, %v6729, 0
        %v6782 = vsel %vm6747, %v6730, 0
        %v6785 = vsel %vm6747, %v6731, 0
        %v6788 = vsel %vm6747, %v6732, 0
        %v6791 = vsel %vm6747, %v6733, 0
        %v6794 = vsel %vm6747, %v6734, 0
        %6796 = vmatprep.subr.bf16.mxu0 0
        %6797 = vmatpush1.bf16.msra.mxu0 %v6743
        %6798 = vmatprep.subr.bf16.mxu0 0
        %6799 = vmatpush1.bf16.msra.mxu0 %v6744
        %6800 = vmatprep.subr.bf16.mxu0 0
        %6801 = vmatpush1.bf16.msra.mxu0 0
        %6802 = vmatprep.subr.bf16.mxu0 0
        %6803 = vmatpush1.bf16.msra.mxu0 0
        %6804 = vmatprep.subr.bf16.mxu0 0
        %6805 = vmatpush1.bf16.msra.mxu0 0
        %6806 = vmatprep.subr.bf16.mxu0 0
        %6807 = vmatpush1.bf16.msra.mxu0 0
        %6808 = vmatprep.subr.bf16.mxu0 0
        %6809 = vmatpush1.bf16.msra.mxu0 0
        %6810 = vmatprep.subr.bf16.mxu0 0
        %6811 = vmatpush1.bf16.msra.mxu0 0
        %6812 = vmatprep.subr.bf16.mxu0 0
        %6813 = vmatpush1.bf16.msra.mxu0 0
        %6814 = vmatprep.subr.bf16.mxu0 0
        %6815 = vmatpush1.bf16.msra.mxu0 0
        %6816 = vmatprep.subr.bf16.mxu0 0
        %6817 = vmatpush1.bf16.msra.mxu0 0
        %6818 = vmatprep.subr.bf16.mxu0 0
        %6819 = vmatpush1.bf16.msra.mxu0 0
        %6820 = vmatprep.subr.bf16.mxu0 0
        %6821 = vmatpush1.bf16.msra.mxu0 0
        %6822 = vmatprep.subr.bf16.mxu0 0
        %6823 = vmatpush1.bf16.msra.mxu0 0
        %6824 = vmatprep.subr.bf16.mxu0 0
        %6825 = vmatpush1.bf16.msra.mxu0 0
        %6826 = vmatprep.subr.bf16.mxu0 0
        %6827 = vmatpush1.bf16.msra.mxu0 0
        %6828 = vmatprep.mubr.bf16.mxu0 0
        %6829 = vmatmul.mubr.bf16.gmra.mrb[0].mxu0 %v6749
        %v6830 = vpop.f32.mrb[0].mxu0
        %v6831 = vadd.f32 0.0, %v6830
        %v6832 = vpop.f32.mrb[0].mxu0
        %v6833 = vpop.f32.mrb[0].mxu0
        %v6834 = vadd.f32 0.0, %v6833
        %v6835 = vpop.f32.mrb[0].mxu0
        %6836 = vmatprep.mubr.bf16.mxu0 0
        %6837 = vmatmul.mubr.bf16.gmra.mrb[0].mxu0 %v6752
        %v6838 = vpop.f32.mrb[0].mxu0
        %v6839 = vadd.f32 0.0, %v6838
        %v6840 = vpop.f32.mrb[0].mxu0
        %v6841 = vpop.f32.mrb[0].mxu0
        %v6842 = vadd.f32 0.0, %v6841
        %v6843 = vpop.f32.mrb[0].mxu0
        %6844 = vmatprep.mubr.bf16.mxu0 0
        %6845 = vmatmul.mubr.bf16.gmra.mrb[0].mxu0 %v6755
        %v6846 = vpop.f32.mrb[0].mxu0
        %v6847 = vadd.f32 0.0, %v6846
        %v6848 = vpop.f32.mrb[0].mxu0
        %v6849 = vpop.f32.mrb[0].mxu0
        %v6850 = vadd.f32 0.0, %v6849
        %v6851 = vpop.f32.mrb[0].mxu0
        %6852 = vmatprep.mubr.bf16.mxu0 0
        %6853 = vmatmul.mubr.bf16.gmra.mrb[0].mxu0 %v6758
        %v6854 = vpop.f32.mrb[0].mxu0
        %v6855 = vadd.f32 0.0, %v6854
        %v6856 = vpop.f32.mrb[0].mxu0
        %v6857 = vpop.f32.mrb[0].mxu0
        %v6858 = vadd.f32 0.0, %v6857
        %v6859 = vpop.f32.mrb[0].mxu0
        %6860 = vmatprep.mubr.bf16.mxu0 0
        %6861 = vmatmul.mubr.bf16.gmra.mrb[0].mxu0 %v6761
        %v6862 = vpop.f32.mrb[0].mxu0
        %v6863 = vadd.f32 0.0, %v6862
        %v6864 = vpop.f32.mrb[0].mxu0
        %v6865 = vpop.f32.mrb[0].mxu0
        %v6866 = vadd.f32 0.0, %v6865
        %v6867 = vpop.f32.mrb[0].mxu0
        %6868 = vmatprep.mubr.bf16.mxu0 0
        %6869 = vmatmul.mubr.bf16.gmra.mrb[0].mxu0 %v6764
        %v6870 = vpop.f32.mrb[0].mxu0
        %v6871 = vadd.f32 0.0, %v6870
        %v6872 = vpop.f32.mrb[0].mxu0
        %v6873 = vpop.f32.mrb[0].mxu0
        %v6874 = vadd.f32 0.0, %v6873
        %v6875 = vpop.f32.mrb[0].mxu0
        %6876 = vmatprep.mubr.bf16.mxu0 0
        %6877 = vmatmul.mubr.bf16.gmra.mrb[0].mxu0 %v6767
        %v6878 = vpop.f32.mrb[0].mxu0
        %v6879 = vadd.f32 0.0, %v6878
        %v6880 = vpop.f32.mrb[0].mxu0
        %v6881 = vpop.f32.mrb[0].mxu0
        %v6882 = vadd.f32 0.0, %v6881
        %v6883 = vpop.f32.mrb[0].mxu0
        %6884 = vmatprep.mubr.bf16.mxu0 0
        %6885 = vmatmul.mubr.bf16.gmra.mrb[0].mxu0 %v6770
        %v6886 = vpop.f32.mrb[0].mxu0
        %v6887 = vadd.f32 0.0, %v6886
        %v6888 = vpop.f32.mrb[0].mxu0
        %v6889 = vpop.f32.mrb[0].mxu0
        %v6890 = vadd.f32 0.0, %v6889
        %v6891 = vpop.f32.mrb[0].mxu0
        %6892 = vmatprep.mubr.bf16.mxu0 0
        %6893 = vmatmul.mubr.bf16.gmra.mrb[0].mxu0 %v6773
        %v6894 = vpop.f32.mrb[0].mxu0
        %v6895 = vadd.f32 0.0, %v6894
        %v6896 = vpop.f32.mrb[0].mxu0
        %v6897 = vpop.f32.mrb[0].mxu0
        %v6898 = vadd.f32 0.0, %v6897
        %v6899 = vpop.f32.mrb[0].mxu0
        %6900 = vmatprep.mubr.bf16.mxu0 0
        %6901 = vmatmul.mubr.bf16.gmra.mrb[0].mxu0 %v6776
        %v6902 = vpop.f32.mrb[0].mxu0
        %v6903 = vadd.f32 0.0, %v6902
        %v6904 = vpop.f32.mrb[0].mxu0
        %v6905 = vpop.f32.mrb[0].mxu0
        %v6906 = vadd.f32 0.0, %v6905
        %v6907 = vpop.f32.mrb[0].mxu0
        %6908 = vmatprep.mubr.bf16.mxu0 0
        %6909 = vmatmul.mubr.bf16.gmra.mrb[0].mxu0 %v6779
        %v6910 = vpop.f32.mrb[0].mxu0
        %v6911 = vadd.f32 0.0, %v6910
        %v6912 = vpop.f32.mrb[0].mxu0
        %v6913 = vpop.f32.mrb[0].mxu0
        %v6914 = vadd.f32 0.0, %v6913
        %v6915 = vpop.f32.mrb[0].mxu0
        %6916 = vmatprep.mubr.bf16.mxu0 0
        %6917 = vmatmul.mubr.bf16.gmra.mrb[0].mxu0 %v6782
        %v6918 = vpop.f32.mrb[0].mxu0
        %v6919 = vadd.f32 0.0, %v6918
        %v6920 = vpop.f32.mrb[0].mxu0
        %v6921 = vpop.f32.mrb[0].mxu0
        %v6922 = vadd.f32 0.0, %v6921
        %v6923 = vpop.f32.mrb[0].mxu0
        %6924 = vmatprep.mubr.bf16.mxu0 0
        %6925 = vmatmul.mubr.bf16.gmra.mrb[0].mxu0 %v6785
        %v6926 = vpop.f32.mrb[0].mxu0
        %v6927 = vadd.f32 0.0, %v6926
        %v6928 = vpop.f32.mrb[0].mxu0
        %v6929 = vpop.f32.mrb[0].mxu0
        %v6930 = vadd.f32 0.0, %v6929
        %v6931 = vpop.f32.mrb[0].mxu0
        %6932 = vmatprep.mubr.bf16.mxu0 0
        %6933 = vmatmul.mubr.bf16.gmra.mrb[0].mxu0 %v6788
        %v6934 = vpop.f32.mrb[0].mxu0
        %v6935 = vadd.f32 0.0, %v6934
        %v6936 = vpop.f32.mrb[0].mxu0
        %v6937 = vpop.f32.mrb[0].mxu0
        %v6938 = vadd.f32 0.0, %v6937
        %v6939 = vpop.f32.mrb[0].mxu0
        %6940 = vmatprep.mubr.bf16.mxu0 0
        %6941 = vmatmul.mubr.bf16.gmra.mrb[0].mxu0 %v6791
        %v6942 = vpop.f32.mrb[0].mxu0
        %v6943 = vadd.f32 0.0, %v6942
        %v6944 = vpop.f32.mrb[0].mxu0
        %v6945 = vpop.f32.mrb[0].mxu0
        %v6946 = vadd.f32 0.0, %v6945
        %v6947 = vpop.f32.mrb[0].mxu0
        %6948 = vmatprep.mubr.bf16.mxu0 0
        %6949 = vmatmul.mubr.bf16.gmra.mrb[0].mxu0 %v6794
        %v6950 = vpop.f32.mrb[0].mxu0
        %v6951 = vadd.f32 0.0, %v6950
        %v6952 = vpop.f32.mrb[0].mxu0
        %v6953 = vpop.f32.mrb[0].mxu0
        %v6954 = vadd.f32 0.0, %v6953
        %v6955 = vpop.f32.mrb[0].mxu0
        %6956 = vdwg.mxu0
        %v6989 = vunpack.c.l.b16 %v6246
        %v6990 = vunpack.c.l.b16 %v6247
        %v6991 = vunpack.c.l.b16 %v6248
        %v6992 = vunpack.c.l.b16 %v6249
        %v6993 = vunpack.c.l.b16 %v6250
        %v6994 = vunpack.c.l.b16 %v6251
        %v6995 = vunpack.c.l.b16 %v6252
        %v6996 = vunpack.c.l.b16 %v6253
        %v6997 = vunpack.c.l.b16 %v6254
        %v6998 = vunpack.c.l.b16 %v6255
        %v6999 = vunpack.c.l.b16 %v6256
        %v7000 = vunpack.c.l.b16 %v6257
        %v7001 = vunpack.c.l.b16 %v6258
        %v7002 = vunpack.c.l.b16 %v6259
        %v7003 = vunpack.c.l.b16 %v6260
        %v7004 = vunpack.c.l.b16 %v6261
        %v7005 = vunpack.c.l.b16 %v6262
        %v7006 = vunpack.c.l.b16 %v6263
        %v7007 = vunpack.c.l.b16 %v6264
        %v7008 = vunpack.c.l.b16 %v6265
        %v7009 = vunpack.c.l.b16 %v6266
        %v7010 = vunpack.c.l.b16 %v6267
        %v7011 = vunpack.c.l.b16 %v6268
        %v7012 = vunpack.c.l.b16 %v6269
        %v7013 = vunpack.c.l.b16 %v6270
        %v7014 = vunpack.c.l.b16 %v6271
        %v7015 = vunpack.c.l.b16 %v6272
        %v7016 = vunpack.c.l.b16 %v6273
        %v7017 = vunpack.c.l.b16 %v6274
        %v7018 = vunpack.c.l.b16 %v6275
        %v7019 = vunpack.c.l.b16 %v6276
        %v7020 = vunpack.c.l.b16 %v6277
        %v7021 = vpack.c.b16 %v6990, %v6989
        %v7022 = vpack.c.b16 %v6992, %v6991
        %v7023 = vpack.c.b16 %v6994, %v6993
        %v7024 = vpack.c.b16 %v6996, %v6995
        %v7025 = vpack.c.b16 %v6998, %v6997
        %v7026 = vpack.c.b16 %v7000, %v6999
        %v7027 = vpack.c.b16 %v7002, %v7001
        %v7028 = vpack.c.b16 %v7004, %v7003
        %v7029 = vpack.c.b16 %v7006, %v7005
        %v7030 = vpack.c.b16 %v7008, %v7007
        %v7031 = vpack.c.b16 %v7010, %v7009
        %v7032 = vpack.c.b16 %v7012, %v7011
        %v7033 = vpack.c.b16 %v7014, %v7013
        %v7034 = vpack.c.b16 %v7016, %v7015
        %v7035 = vpack.c.b16 %v7018, %v7017
        %v7036 = vpack.c.b16 %v7020, %v7019
        %v7041 = vunpack.c.l.b16 %v6278
        %v7042 = vunpack.c.l.b16 %v6279
        %v7043 = vunpack.c.l.b16 %v6280
        %v7044 = vunpack.c.l.b16 %v6281
        %v7045 = vpack.c.b16 %v7042, %v7041
        %v7046 = vpack.c.b16 %v7044, %v7043
        %v7050 = vsel %vm6747, %v7021, 0
        %v7053 = vsel %vm6747, %v7022, 0
        %v7056 = vsel %vm6747, %v7023, 0
        %v7059 = vsel %vm6747, %v7024, 0
        %v7062 = vsel %vm6747, %v7025, 0
        %v7065 = vsel %vm6747, %v7026, 0
        %v7068 = vsel %vm6747, %v7027, 0
        %v7071 = vsel %vm6747, %v7028, 0
        %v7074 = vsel %vm6747, %v7029, 0
        %v7077 = vsel %vm6747, %v7030, 0
        %v7080 = vsel %vm6747, %v7031, 0
        %v7083 = vsel %vm6747, %v7032, 0
        %v7086 = vsel %vm6747, %v7033, 0
        %v7089 = vsel %vm6747, %v7034, 0
        %v7092 = vsel %vm6747, %v7035, 0
        %v7095 = vsel %vm6747, %v7036, 0
        %7097 = vmatprep.subr.bf16.mxu0 0
        %7098 = vmatpush1.bf16.msra.mxu0 %v7045
        %7099 = vmatprep.subr.bf16.mxu0 0
        %7100 = vmatpush1.bf16.msra.mxu0 %v7046
        %7101 = vmatprep.subr.bf16.mxu0 0
        %7102 = vmatpush1.bf16.msra.mxu0 0
        %7103 = vmatprep.subr.bf16.mxu0 0
        %7104 = vmatpush1.bf16.msra.mxu0 0
        %7105 = vmatprep.subr.bf16.mxu0 0
        %7106 = vmatpush1.bf16.msra.mxu0 0
        %7107 = vmatprep.subr.bf16.mxu0 0
        %7108 = vmatpush1.bf16.msra.mxu0 0
        %7109 = vmatprep.subr.bf16.mxu0 0
        %7110 = vmatpush1.bf16.msra.mxu0 0
        %7111 = vmatprep.subr.bf16.mxu0 0
        %7112 = vmatpush1.bf16.msra.mxu0 0
        %7113 = vmatprep.subr.bf16.mxu0 0
        %7114 = vmatpush1.bf16.msra.mxu0 0
        %7115 = vmatprep.subr.bf16.mxu0 0
        %7116 = vmatpush1.bf16.msra.mxu0 0
        %7117 = vmatprep.subr.bf16.mxu0 0
        %7118 = vmatpush1.bf16.msra.mxu0 0
        %7119 = vmatprep.subr.bf16.mxu0 0
        %7120 = vmatpush1.bf16.msra.mxu0 0
        %7121 = vmatprep.subr.bf16.mxu0 0
        %7122 = vmatpush1.bf16.msra.mxu0 0
        %7123 = vmatprep.subr.bf16.mxu0 0
        %7124 = vmatpush1.bf16.msra.mxu0 0
        %7125 = vmatprep.subr.bf16.mxu0 0
        %7126 = vmatpush1.bf16.msra.mxu0 0
        %7127 = vmatprep.subr.bf16.mxu0 0
        %7128 = vmatpush1.bf16.msra.mxu0 0
        %7129 = vmatprep.mubr.bf16.mxu0 0
        %7130 = vmatmul.mubr.bf16.gmra.mrb[0].mxu0 %v7050
        %v7131 = vpop.f32.mrb[0].mxu0
        %v7132 = vadd.f32 %v6831, %v7131
        %v7133 = vpop.f32.mrb[0].mxu0
        %v7134 = vpop.f32.mrb[0].mxu0
        %v7135 = vadd.f32 %v6834, %v7134
        %v7136 = vpop.f32.mrb[0].mxu0
        %7137 = vmatprep.mubr.bf16.mxu0 0
        %7138 = vmatmul.mubr.bf16.gmra.mrb[0].mxu0 %v7053
        %v7139 = vpop.f32.mrb[0].mxu0
        %v7140 = vadd.f32 %v6839, %v7139
        %v7141 = vpop.f32.mrb[0].mxu0
        %v7142 = vpop.f32.mrb[0].mxu0
        %v7143 = vadd.f32 %v6842, %v7142
        %v7144 = vpop.f32.mrb[0].mxu0
        %7145 = vmatprep.mubr.bf16.mxu0 0
        %7146 = vmatmul.mubr.bf16.gmra.mrb[0].mxu0 %v7056
        %v7147 = vpop.f32.mrb[0].mxu0
        %v7148 = vadd.f32 %v6847, %v7147
        %v7149 = vpop.f32.mrb[0].mxu0
        %v7150 = vpop.f32.mrb[0].mxu0
        %v7151 = vadd.f32 %v6850, %v7150
        %v7152 = vpop.f32.mrb[0].mxu0
        %7153 = vmatprep.mubr.bf16.mxu0 0
        %7154 = vmatmul.mubr.bf16.gmra.mrb[0].mxu0 %v7059
        %v7155 = vpop.f32.mrb[0].mxu0
        %v7156 = vadd.f32 %v6855, %v7155
        %v7157 = vpop.f32.mrb[0].mxu0
        %v7158 = vpop.f32.mrb[0].mxu0
        %v7159 = vadd.f32 %v6858, %v7158
        %v7160 = vpop.f32.mrb[0].mxu0
        %7161 = vmatprep.mubr.bf16.mxu0 0
        %7162 = vmatmul.mubr.bf16.gmra.mrb[0].mxu0 %v7062
        %v7163 = vpop.f32.mrb[0].mxu0
        %v7164 = vadd.f32 %v6863, %v7163
        %v7165 = vpop.f32.mrb[0].mxu0
        %v7166 = vpop.f32.mrb[0].mxu0
        %v7167 = vadd.f32 %v6866, %v7166
        %v7168 = vpop.f32.mrb[0].mxu0
        %7169 = vmatprep.mubr.bf16.mxu0 0
        %7170 = vmatmul.mubr.bf16.gmra.mrb[0].mxu0 %v7065
        %v7171 = vpop.f32.mrb[0].mxu0
        %v7172 = vadd.f32 %v6871, %v7171
        %v7173 = vpop.f32.mrb[0].mxu0
        %v7174 = vpop.f32.mrb[0].mxu0
        %v7175 = vadd.f32 %v6874, %v7174
        %v7176 = vpop.f32.mrb[0].mxu0
        %7177 = vmatprep.mubr.bf16.mxu0 0
        %7178 = vmatmul.mubr.bf16.gmra.mrb[0].mxu0 %v7068
        %v7179 = vpop.f32.mrb[0].mxu0
        %v7180 = vadd.f32 %v6879, %v7179
        %v7181 = vpop.f32.mrb[0].mxu0
        %v7182 = vpop.f32.mrb[0].mxu0
        %v7183 = vadd.f32 %v6882, %v7182
        %v7184 = vpop.f32.mrb[0].mxu0
        %7185 = vmatprep.mubr.bf16.mxu0 0
        %7186 = vmatmul.mubr.bf16.gmra.mrb[0].mxu0 %v7071
        %v7187 = vpop.f32.mrb[0].mxu0
        %v7188 = vadd.f32 %v6887, %v7187
        %v7189 = vpop.f32.mrb[0].mxu0
        %v7190 = vpop.f32.mrb[0].mxu0
        %v7191 = vadd.f32 %v6890, %v7190
        %v7192 = vpop.f32.mrb[0].mxu0
        %7193 = vmatprep.mubr.bf16.mxu0 0
        %7194 = vmatmul.mubr.bf16.gmra.mrb[0].mxu0 %v7074
        %v7195 = vpop.f32.mrb[0].mxu0
        %v7196 = vadd.f32 %v6895, %v7195
        %v7197 = vpop.f32.mrb[0].mxu0
        %v7198 = vpop.f32.mrb[0].mxu0
        %v7199 = vadd.f32 %v6898, %v7198
        %v7200 = vpop.f32.mrb[0].mxu0
        %7201 = vmatprep.mubr.bf16.mxu0 0
        %7202 = vmatmul.mubr.bf16.gmra.mrb[0].mxu0 %v7077
        %v7203 = vpop.f32.mrb[0].mxu0
        %v7204 = vadd.f32 %v6903, %v7203
        %v7205 = vpop.f32.mrb[0].mxu0
        %v7206 = vpop.f32.mrb[0].mxu0
        %v7207 = vadd.f32 %v6906, %v7206
        %v7208 = vpop.f32.mrb[0].mxu0
        %7209 = vmatprep.mubr.bf16.mxu0 0
        %7210 = vmatmul.mubr.bf16.gmra.mrb[0].mxu0 %v7080
        %v7211 = vpop.f32.mrb[0].mxu0
        %v7212 = vadd.f32 %v6911, %v7211
        %v7213 = vpop.f32.mrb[0].mxu0
        %v7214 = vpop.f32.mrb[0].mxu0
        %v7215 = vadd.f32 %v6914, %v7214
        %v7216 = vpop.f32.mrb[0].mxu0
        %7217 = vmatprep.mubr.bf16.mxu0 0
        %7218 = vmatmul.mubr.bf16.gmra.mrb[0].mxu0 %v7083
        %v7219 = vpop.f32.mrb[0].mxu0
        %v7220 = vadd.f32 %v6919, %v7219
        %v7221 = vpop.f32.mrb[0].mxu0
        %v7222 = vpop.f32.mrb[0].mxu0
        %v7223 = vadd.f32 %v6922, %v7222
        %v7224 = vpop.f32.mrb[0].mxu0
        %7225 = vmatprep.mubr.bf16.mxu0 0
        %7226 = vmatmul.mubr.bf16.gmra.mrb[0].mxu0 %v7086
        %v7227 = vpop.f32.mrb[0].mxu0
        %v7228 = vadd.f32 %v6927, %v7227
        %v7229 = vpop.f32.mrb[0].mxu0
        %v7230 = vpop.f32.mrb[0].mxu0
        %v7231 = vadd.f32 %v6930, %v7230
        %v7232 = vpop.f32.mrb[0].mxu0
        %7233 = vmatprep.mubr.bf16.mxu0 0
        %7234 = vmatmul.mubr.bf16.gmra.mrb[0].mxu0 %v7089
        %v7235 = vpop.f32.mrb[0].mxu0
        %v7236 = vadd.f32 %v6935, %v7235
        %v7237 = vpop.f32.mrb[0].mxu0
        %v7238 = vpop.f32.mrb[0].mxu0
        %v7239 = vadd.f32 %v6938, %v7238
        %v7240 = vpop.f32.mrb[0].mxu0
        %7241 = vmatprep.mubr.bf16.mxu0 0
        %7242 = vmatmul.mubr.bf16.gmra.mrb[0].mxu0 %v7092
        %v7243 = vpop.f32.mrb[0].mxu0
        %v7244 = vadd.f32 %v6943, %v7243
        %v7245 = vpop.f32.mrb[0].mxu0
        %v7246 = vpop.f32.mrb[0].mxu0
        %v7247 = vadd.f32 %v6946, %v7246
        %v7248 = vpop.f32.mrb[0].mxu0
        %7249 = vmatprep.mubr.bf16.mxu0 0
        %7250 = vmatmul.mubr.bf16.gmra.mrb[0].mxu0 %v7095
        %v7251 = vpop.f32.mrb[0].mxu0
        %v7252 = vadd.f32 %v6951, %v7251
        %v7253 = vpop.f32.mrb[0].mxu0
        %v7254 = vpop.f32.mrb[0].mxu0
        %v7255 = vadd.f32 %v6954, %v7254
        %v7256 = vpop.f32.mrb[0].mxu0
        %7257 = vdwg.mxu0
        %v7258 = vld [vmem:[#allocation3] sm:$0xe]
        %v7259 = vld [vmem:[#allocation3 + $0xc] sm:$0xe]
        %v7260 = vld [vmem:[#allocation3 + $0x18] sm:$0xe]
        %v7261 = vld [vmem:[#allocation3 + $0x24] sm:$0xe]
        %v7262 = vld [vmem:[#allocation3 + $0x30] sm:$0xe]
        %v7263 = vld [vmem:[#allocation3 + $0x3c] sm:$0xe]
        %v7264 = vld [vmem:[#allocation3 + $0x48] sm:$0xe]
        %v7265 = vld [vmem:[#allocation3 + $0x54] sm:$0xe]
        %v7266 = vld [vmem:[#allocation3 + $0x60] sm:$0xe]
        %v7267 = vld [vmem:[#allocation3 + $0x6c] sm:$0xe]
        %v7268 = vld [vmem:[#allocation3 + $0x78] sm:$0xe]
        %v7269 = vld [vmem:[#allocation3 + $0x84] sm:$0xe]
        %v7270 = vld [vmem:[#allocation3 + $0x90] sm:$0xe]
        %v7271 = vld [vmem:[#allocation3 + $0x9c] sm:$0xe]
        %v7272 = vld [vmem:[#allocation3 + $0xa8] sm:$0xe]
        %v7273 = vld [vmem:[#allocation3 + $0xb4] sm:$0xe]
        %v7306 = vrot.slane %v7258, 5
        %v7307 = vrot.slane %v7306, 4
        %v7308 = vrot.slane %v6247, 5
        %v7309 = vsel %vm2008, %v7307, %v7308
        %v7310 = vrot.slane %v7308, 4
        %v7311 = vrot.slane %v6282, 5
        %v7312 = vsel %vm2008, %v7310, %v7311
        %v7313 = vrot.slane %v7259, 5
        %v7314 = vrot.slane %v7313, 4
        %v7315 = vrot.slane %v6249, 5
        %v7316 = vsel %vm2008, %v7314, %v7315
        %v7317 = vrot.slane %v7315, 4
        %v7318 = vrot.slane %v6283, 5
        %v7319 = vsel %vm2008, %v7317, %v7318
        %v7320 = vrot.slane %v7260, 5
        %v7321 = vrot.slane %v7320, 4
        %v7322 = vrot.slane %v6251, 5
        %v7323 = vsel %vm2008, %v7321, %v7322
        %v7324 = vrot.slane %v7322, 4
        %v7325 = vrot.slane %v6284, 5
        %v7326 = vsel %vm2008, %v7324, %v7325
        %v7327 = vrot.slane %v7261, 5
        %v7328 = vrot.slane %v7327, 4
        %v7329 = vrot.slane %v6253, 5
        %v7330 = vsel %vm2008, %v7328, %v7329
        %v7331 = vrot.slane %v7329, 4
        %v7332 = vrot.slane %v6285, 5
        %v7333 = vsel %vm2008, %v7331, %v7332
        %v7334 = vrot.slane %v7262, 5
        %v7335 = vrot.slane %v7334, 4
        %v7336 = vrot.slane %v6255, 5
        %v7337 = vsel %vm2008, %v7335, %v7336
        %v7338 = vrot.slane %v7336, 4
        %v7339 = vrot.slane %v6286, 5
        %v7340 = vsel %vm2008, %v7338, %v7339
        %v7341 = vrot.slane %v7263, 5
        %v7342 = vrot.slane %v7341, 4
        %v7343 = vrot.slane %v6257, 5
        %v7344 = vsel %vm2008, %v7342, %v7343
        %v7345 = vrot.slane %v7343, 4
        %v7346 = vrot.slane %v6287, 5
        %v7347 = vsel %vm2008, %v7345, %v7346
        %v7348 = vrot.slane %v7264, 5
        %v7349 = vrot.slane %v7348, 4
        %v7350 = vrot.slane %v6259, 5
        %v7351 = vsel %vm2008, %v7349, %v7350
        %v7352 = vrot.slane %v7350, 4
        %v7353 = vrot.slane %v6288, 5
        %v7354 = vsel %vm2008, %v7352, %v7353
        %v7355 = vrot.slane %v7265, 5
        %v7356 = vrot.slane %v7355, 4
        %v7357 = vrot.slane %v6261, 5
        %v7358 = vsel %vm2008, %v7356, %v7357
        %v7359 = vrot.slane %v7357, 4
        %v7360 = vrot.slane %v6289, 5
        %v7361 = vsel %vm2008, %v7359, %v7360
        %v7362 = vrot.slane %v7266, 5
        %v7363 = vrot.slane %v7362, 4
        %v7364 = vrot.slane %v6263, 5
        %v7365 = vsel %vm2008, %v7363, %v7364
        %v7366 = vrot.slane %v7364, 4
        %v7367 = vrot.slane %v6290, 5
        %v7368 = vsel %vm2008, %v7366, %v7367
        %v7369 = vrot.slane %v7267, 5
        %v7370 = vrot.slane %v7369, 4
        %v7371 = vrot.slane %v6265, 5
        %v7372 = vsel %vm2008, %v7370, %v7371
        %v7373 = vrot.slane %v7371, 4
        %v7374 = vrot.slane %v6291, 5
        %v7375 = vsel %vm2008, %v7373, %v7374
        %v7376 = vrot.slane %v7268, 5
        %v7377 = vrot.slane %v7376, 4
        %v7378 = vrot.slane %v6267, 5
        %v7379 = vsel %vm2008, %v7377, %v7378
        %v7380 = vrot.slane %v7378, 4
        %v7381 = vrot.slane %v6292, 5
        %v7382 = vsel %vm2008, %v7380, %v7381
        %v7383 = vrot.slane %v7269, 5
        %v7384 = vrot.slane %v7383, 4
        %v7385 = vrot.slane %v6269, 5
        %v7386 = vsel %vm2008, %v7384, %v7385
        %v7387 = vrot.slane %v7385, 4
        %v7388 = vrot.slane %v6293, 5
        %v7389 = vsel %vm2008, %v7387, %v7388
        %v7390 = vrot.slane %v7270, 5
        %v7391 = vrot.slane %v7390, 4
        %v7392 = vrot.slane %v6271, 5
        %v7393 = vsel %vm2008, %v7391, %v7392
        %v7394 = vrot.slane %v7392, 4
        %v7395 = vrot.slane %v6294, 5
        %v7396 = vsel %vm2008, %v7394, %v7395
        %v7397 = vrot.slane %v7271, 5
        %v7398 = vrot.slane %v7397, 4
        %v7399 = vrot.slane %v6273, 5
        %v7400 = vsel %vm2008, %v7398, %v7399
        %v7401 = vrot.slane %v7399, 4
        %v7402 = vrot.slane %v6295, 5
        %v7403 = vsel %vm2008, %v7401, %v7402
        %v7404 = vrot.slane %v7272, 5
        %v7405 = vrot.slane %v7404, 4
        %v7406 = vrot.slane %v6275, 5
        %v7407 = vsel %vm2008, %v7405, %v7406
        %v7408 = vrot.slane %v7406, 4
        %v7409 = vrot.slane %v6296, 5
        %v7410 = vsel %vm2008, %v7408, %v7409
        %v7411 = vrot.slane %v7273, 5
        %v7412 = vrot.slane %v7411, 4
        %v7413 = vrot.slane %v6277, 5
        %v7414 = vsel %vm2008, %v7412, %v7413
        %v7415 = vrot.slane %v7413, 4
        %v7416 = vrot.slane %v6297, 5
        %v7417 = vsel %vm2008, %v7415, %v7416
        %s7418 = scalar_lea.vmem %s3, 32
        %v7419 = vld [vmem:[%s7418] sm:$0xf]
        %v7420 = vld [vmem:[%s7418 + $0x4] sm:$0xf]
        %v7421 = vld [vmem:[%s7418 + $0x8] sm:$0xf]
        %v7422 = vld [vmem:[%s7418 + $0xc] sm:$0xf]
        %v7423 = vunpack.c.l.b16 %v7309
        %v7424 = vunpack.c.l.b16 %v7312
        %v7425 = vunpack.c.l.b16 %v7316
        %v7426 = vunpack.c.l.b16 %v7319
        %v7427 = vunpack.c.l.b16 %v7323
        %v7428 = vunpack.c.l.b16 %v7326
        %v7429 = vunpack.c.l.b16 %v7330
        %v7430 = vunpack.c.l.b16 %v7333
        %v7431 = vunpack.c.l.b16 %v7337
        %v7432 = vunpack.c.l.b16 %v7340
        %v7433 = vunpack.c.l.b16 %v7344
        %v7434 = vunpack.c.l.b16 %v7347
        %v7435 = vunpack.c.l.b16 %v7351
        %v7436 = vunpack.c.l.b16 %v7354
        %v7437 = vunpack.c.l.b16 %v7358
        %v7438 = vunpack.c.l.b16 %v7361
        %v7439 = vunpack.c.l.b16 %v7365
        %v7440 = vunpack.c.l.b16 %v7368
        %v7441 = vunpack.c.l.b16 %v7372
        %v7442 = vunpack.c.l.b16 %v7375
        %v7443 = vunpack.c.l.b16 %v7379
        %v7444 = vunpack.c.l.b16 %v7382
        %v7445 = vunpack.c.l.b16 %v7386
        %v7446 = vunpack.c.l.b16 %v7389
        %v7447 = vunpack.c.l.b16 %v7393
        %v7448 = vunpack.c.l.b16 %v7396
        %v7449 = vunpack.c.l.b16 %v7400
        %v7450 = vunpack.c.l.b16 %v7403
        %v7451 = vunpack.c.l.b16 %v7407
        %v7452 = vunpack.c.l.b16 %v7410
        %v7453 = vunpack.c.l.b16 %v7414
        %v7454 = vunpack.c.l.b16 %v7417
        %v7455 = vpack.c.b16 %v7424, %v7423
        %v7456 = vpack.c.b16 %v7426, %v7425
        %v7457 = vpack.c.b16 %v7428, %v7427
        %v7458 = vpack.c.b16 %v7430, %v7429
        %v7459 = vpack.c.b16 %v7432, %v7431
        %v7460 = vpack.c.b16 %v7434, %v7433
        %v7461 = vpack.c.b16 %v7436, %v7435
        %v7462 = vpack.c.b16 %v7438, %v7437
        %v7463 = vpack.c.b16 %v7440, %v7439
        %v7464 = vpack.c.b16 %v7442, %v7441
        %v7465 = vpack.c.b16 %v7444, %v7443
        %v7466 = vpack.c.b16 %v7446, %v7445
        %v7467 = vpack.c.b16 %v7448, %v7447
        %v7468 = vpack.c.b16 %v7450, %v7449
        %v7469 = vpack.c.b16 %v7452, %v7451
        %v7470 = vpack.c.b16 %v7454, %v7453
        %v7475 = vunpack.c.l.b16 %v7419
        %v7476 = vunpack.c.l.b16 %v7420
        %v7477 = vunpack.c.l.b16 %v7421
        %v7478 = vunpack.c.l.b16 %v7422
        %v7479 = vpack.c.b16 %v7476, %v7475
        %v7480 = vpack.c.b16 %v7478, %v7477
        %v7484 = vsel %vm6747, %v7455, 0
        %v7487 = vsel %vm6747, %v7456, 0
        %v7490 = vsel %vm6747, %v7457, 0
        %v7493 = vsel %vm6747, %v7458, 0
        %v7496 = vsel %vm6747, %v7459, 0
        %v7499 = vsel %vm6747, %v7460, 0
        %v7502 = vsel %vm6747, %v7461, 0
        %v7505 = vsel %vm6747, %v7462, 0
        %v7508 = vsel %vm6747, %v7463, 0
        %v7511 = vsel %vm6747, %v7464, 0
        %v7514 = vsel %vm6747, %v7465, 0
        %v7517 = vsel %vm6747, %v7466, 0
        %v7520 = vsel %vm6747, %v7467, 0
        %v7523 = vsel %vm6747, %v7468, 0
        %v7526 = vsel %vm6747, %v7469, 0
        %v7529 = vsel %vm6747, %v7470, 0
        %7531 = vmatprep.subr.bf16.mxu0 0
        %7532 = vmatpush1.bf16.msra.mxu0 %v7479
        %7533 = vmatprep.subr.bf16.mxu0 0
        %7534 = vmatpush1.bf16.msra.mxu0 %v7480
        %7535 = vmatprep.subr.bf16.mxu0 0
        %7536 = vmatpush1.bf16.msra.mxu0 0
        %7537 = vmatprep.subr.bf16.mxu0 0
        %7538 = vmatpush1.bf16.msra.mxu0 0
        %7539 = vmatprep.subr.bf16.mxu0 0
        %7540 = vmatpush1.bf16.msra.mxu0 0
        %7541 = vmatprep.subr.bf16.mxu0 0
        %7542 = vmatpush1.bf16.msra.mxu0 0
        %7543 = vmatprep.subr.bf16.mxu0 0
        %7544 = vmatpush1.bf16.msra.mxu0 0
        %7545 = vmatprep.subr.bf16.mxu0 0
        %7546 = vmatpush1.bf16.msra.mxu0 0
        %7547 = vmatprep.subr.bf16.mxu0 0
        %7548 = vmatpush1.bf16.msra.mxu0 0
        %7549 = vmatprep.subr.bf16.mxu0 0
        %7550 = vmatpush1.bf16.msra.mxu0 0
        %7551 = vmatprep.subr.bf16.mxu0 0
        %7552 = vmatpush1.bf16.msra.mxu0 0
        %7553 = vmatprep.subr.bf16.mxu0 0
        %7554 = vmatpush1.bf16.msra.mxu0 0
        %7555 = vmatprep.subr.bf16.mxu0 0
        %7556 = vmatpush1.bf16.msra.mxu0 0
        %7557 = vmatprep.subr.bf16.mxu0 0
        %7558 = vmatpush1.bf16.msra.mxu0 0
        %7559 = vmatprep.subr.bf16.mxu0 0
        %7560 = vmatpush1.bf16.msra.mxu0 0
        %7561 = vmatprep.subr.bf16.mxu0 0
        %7562 = vmatpush1.bf16.msra.mxu0 0
        %7563 = vmatprep.mubr.bf16.mxu0 0
        %7564 = vmatmul.mubr.bf16.gmra.mrb[0].mxu0 %v7484
        %v7565 = vpop.f32.mrb[0].mxu0
        %v7566 = vadd.f32 0.0, %v7565
        %v7567 = vpop.f32.mrb[0].mxu0
        %v7568 = vpop.f32.mrb[0].mxu0
        %v7569 = vadd.f32 0.0, %v7568
        %v7570 = vpop.f32.mrb[0].mxu0
        %7571 = vmatprep.mubr.bf16.mxu0 0
        %7572 = vmatmul.mubr.bf16.gmra.mrb[0].mxu0 %v7487
        %v7573 = vpop.f32.mrb[0].mxu0
        %v7574 = vadd.f32 0.0, %v7573
        %v7575 = vpop.f32.mrb[0].mxu0
        %v7576 = vpop.f32.mrb[0].mxu0
        %v7577 = vadd.f32 0.0, %v7576
        %v7578 = vpop.f32.mrb[0].mxu0
        %7579 = vmatprep.mubr.bf16.mxu0 0
        %7580 = vmatmul.mubr.bf16.gmra.mrb[0].mxu0 %v7490
        %v7581 = vpop.f32.mrb[0].mxu0
        %v7582 = vadd.f32 0.0, %v7581
        %v7583 = vpop.f32.mrb[0].mxu0
        %v7584 = vpop.f32.mrb[0].mxu0
        %v7585 = vadd.f32 0.0, %v7584
        %v7586 = vpop.f32.mrb[0].mxu0
        %7587 = vmatprep.mubr.bf16.mxu0 0
        %7588 = vmatmul.mubr.bf16.gmra.mrb[0].mxu0 %v7493
        %v7589 = vpop.f32.mrb[0].mxu0
        %v7590 = vadd.f32 0.0, %v7589
        %v7591 = vpop.f32.mrb[0].mxu0
        %v7592 = vpop.f32.mrb[0].mxu0
        %v7593 = vadd.f32 0.0, %v7592
        %v7594 = vpop.f32.mrb[0].mxu0
        %7595 = vmatprep.mubr.bf16.mxu0 0
        %7596 = vmatmul.mubr.bf16.gmra.mrb[0].mxu0 %v7496
        %v7597 = vpop.f32.mrb[0].mxu0
        %v7598 = vadd.f32 0.0, %v7597
        %v7599 = vpop.f32.mrb[0].mxu0
        %v7600 = vpop.f32.mrb[0].mxu0
        %v7601 = vadd.f32 0.0, %v7600
        %v7602 = vpop.f32.mrb[0].mxu0
        %7603 = vmatprep.mubr.bf16.mxu0 0
        %7604 = vmatmul.mubr.bf16.gmra.mrb[0].mxu0 %v7499
        %v7605 = vpop.f32.mrb[0].mxu0
        %v7606 = vadd.f32 0.0, %v7605
        %v7607 = vpop.f32.mrb[0].mxu0
        %v7608 = vpop.f32.mrb[0].mxu0
        %v7609 = vadd.f32 0.0, %v7608
        %v7610 = vpop.f32.mrb[0].mxu0
        %7611 = vmatprep.mubr.bf16.mxu0 0
        %7612 = vmatmul.mubr.bf16.gmra.mrb[0].mxu0 %v7502
        %v7613 = vpop.f32.mrb[0].mxu0
        %v7614 = vadd.f32 0.0, %v7613
        %v7615 = vpop.f32.mrb[0].mxu0
        %v7616 = vpop.f32.mrb[0].mxu0
        %v7617 = vadd.f32 0.0, %v7616
        %v7618 = vpop.f32.mrb[0].mxu0
        %7619 = vmatprep.mubr.bf16.mxu0 0
        %7620 = vmatmul.mubr.bf16.gmra.mrb[0].mxu0 %v7505
        %v7621 = vpop.f32.mrb[0].mxu0
        %v7622 = vadd.f32 0.0, %v7621
        %v7623 = vpop.f32.mrb[0].mxu0
        %v7624 = vpop.f32.mrb[0].mxu0
        %v7625 = vadd.f32 0.0, %v7624
        %v7626 = vpop.f32.mrb[0].mxu0
        %7627 = vmatprep.mubr.bf16.mxu0 0
        %7628 = vmatmul.mubr.bf16.gmra.mrb[0].mxu0 %v7508
        %v7629 = vpop.f32.mrb[0].mxu0
        %v7630 = vadd.f32 0.0, %v7629
        %v7631 = vpop.f32.mrb[0].mxu0
        %v7632 = vpop.f32.mrb[0].mxu0
        %v7633 = vadd.f32 0.0, %v7632
        %v7634 = vpop.f32.mrb[0].mxu0
        %7635 = vmatprep.mubr.bf16.mxu0 0
        %7636 = vmatmul.mubr.bf16.gmra.mrb[0].mxu0 %v7511
        %v7637 = vpop.f32.mrb[0].mxu0
        %v7638 = vadd.f32 0.0, %v7637
        %v7639 = vpop.f32.mrb[0].mxu0
        %v7640 = vpop.f32.mrb[0].mxu0
        %v7641 = vadd.f32 0.0, %v7640
        %v7642 = vpop.f32.mrb[0].mxu0
        %7643 = vmatprep.mubr.bf16.mxu0 0
        %7644 = vmatmul.mubr.bf16.gmra.mrb[0].mxu0 %v7514
        %v7645 = vpop.f32.mrb[0].mxu0
        %v7646 = vadd.f32 0.0, %v7645
        %v7647 = vpop.f32.mrb[0].mxu0
        %v7648 = vpop.f32.mrb[0].mxu0
        %v7649 = vadd.f32 0.0, %v7648
        %v7650 = vpop.f32.mrb[0].mxu0
        %7651 = vmatprep.mubr.bf16.mxu0 0
        %7652 = vmatmul.mubr.bf16.gmra.mrb[0].mxu0 %v7517
        %v7653 = vpop.f32.mrb[0].mxu0
        %v7654 = vadd.f32 0.0, %v7653
        %v7655 = vpop.f32.mrb[0].mxu0
        %v7656 = vpop.f32.mrb[0].mxu0
        %v7657 = vadd.f32 0.0, %v7656
        %v7658 = vpop.f32.mrb[0].mxu0
        %7659 = vmatprep.mubr.bf16.mxu0 0
        %7660 = vmatmul.mubr.bf16.gmra.mrb[0].mxu0 %v7520
        %v7661 = vpop.f32.mrb[0].mxu0
        %v7662 = vadd.f32 0.0, %v7661
        %v7663 = vpop.f32.mrb[0].mxu0
        %v7664 = vpop.f32.mrb[0].mxu0
        %v7665 = vadd.f32 0.0, %v7664
        %v7666 = vpop.f32.mrb[0].mxu0
        %7667 = vmatprep.mubr.bf16.mxu0 0
        %7668 = vmatmul.mubr.bf16.gmra.mrb[0].mxu0 %v7523
        %v7669 = vpop.f32.mrb[0].mxu0
        %v7670 = vadd.f32 0.0, %v7669
        %v7671 = vpop.f32.mrb[0].mxu0
        %v7672 = vpop.f32.mrb[0].mxu0
        %v7673 = vadd.f32 0.0, %v7672
        %v7674 = vpop.f32.mrb[0].mxu0
        %7675 = vmatprep.mubr.bf16.mxu0 0
        %7676 = vmatmul.mubr.bf16.gmra.mrb[0].mxu0 %v7526
        %v7677 = vpop.f32.mrb[0].mxu0
        %v7678 = vadd.f32 0.0, %v7677
        %v7679 = vpop.f32.mrb[0].mxu0
        %v7680 = vpop.f32.mrb[0].mxu0
        %v7681 = vadd.f32 0.0, %v7680
        %v7682 = vpop.f32.mrb[0].mxu0
        %7683 = vmatprep.mubr.bf16.mxu0 0
        %7684 = vmatmul.mubr.bf16.gmra.mrb[0].mxu0 %v7529
        %v7685 = vpop.f32.mrb[0].mxu0
        %v7686 = vadd.f32 0.0, %v7685
        %v7687 = vpop.f32.mrb[0].mxu0
        %v7688 = vpop.f32.mrb[0].mxu0
        %v7689 = vadd.f32 0.0, %v7688
        %v7690 = vpop.f32.mrb[0].mxu0
        %7691 = vdwg.mxu0
        %v7692 = vadd.f32 %v7132, %v7566
        %v7693 = vadd.f32 %v7135, %v7569
        %v7694 = vadd.f32 %v7140, %v7574
        %v7695 = vadd.f32 %v7143, %v7577
        %v7696 = vadd.f32 %v7148, %v7582
        %v7697 = vadd.f32 %v7151, %v7585
        %v7698 = vadd.f32 %v7156, %v7590
        %v7699 = vadd.f32 %v7159, %v7593
        %v7700 = vadd.f32 %v7164, %v7598
        %v7701 = vadd.f32 %v7167, %v7601
        %v7702 = vadd.f32 %v7172, %v7606
        %v7703 = vadd.f32 %v7175, %v7609
        %v7704 = vadd.f32 %v7180, %v7614
        %v7705 = vadd.f32 %v7183, %v7617
        %v7706 = vadd.f32 %v7188, %v7622
        %v7707 = vadd.f32 %v7191, %v7625
        %v7708 = vadd.f32 %v7196, %v7630
        %v7709 = vadd.f32 %v7199, %v7633
        %v7710 = vadd.f32 %v7204, %v7638
        %v7711 = vadd.f32 %v7207, %v7641
        %v7712 = vadd.f32 %v7212, %v7646
        %v7713 = vadd.f32 %v7215, %v7649
        %v7714 = vadd.f32 %v7220, %v7654
        %v7715 = vadd.f32 %v7223, %v7657
        %v7716 = vadd.f32 %v7228, %v7662
        %v7717 = vadd.f32 %v7231, %v7665
        %v7718 = vadd.f32 %v7236, %v7670
        %v7719 = vadd.f32 %v7239, %v7673
        %v7720 = vadd.f32 %v7244, %v7678
        %v7721 = vadd.f32 %v7247, %v7681
        %v7722 = vadd.f32 %v7252, %v7686
        %v7723 = vadd.f32 %v7255, %v7689
        %v7724 = vld [vmem:[%s6131] sm:$0xf]
        %v7725 = vld [vmem:[%s6131 + $0x4] sm:$0xf]
        %v7726 = vld [vmem:[%s6131 + $0xc] sm:$0xf]
        %v7727 = vld [vmem:[%s6131 + $0x10] sm:$0xf]
        %v7728 = vld [vmem:[%s6131 + $0x18] sm:$0xf]
        %v7729 = vld [vmem:[%s6131 + $0x1c] sm:$0xf]
        %v7730 = vld [vmem:[%s6131 + $0x24] sm:$0xf]
        %v7731 = vld [vmem:[%s6131 + $0x28] sm:$0xf]
        %v7732 = vld [vmem:[%s6131 + $0x30] sm:$0xf]
        %v7733 = vld [vmem:[%s6131 + $0x34] sm:$0xf]
        %v7734 = vld [vmem:[%s6131 + $0x3c] sm:$0xf]
        %v7735 = vld [vmem:[%s6131 + $0x40] sm:$0xf]
        %v7736 = vld [vmem:[%s6131 + $0x48] sm:$0xf]
        %v7737 = vld [vmem:[%s6131 + $0x4c] sm:$0xf]
        %v7738 = vld [vmem:[%s6131 + $0x54] sm:$0xf]
        %v7739 = vld [vmem:[%s6131 + $0x58] sm:$0xf]
        %v7740 = vld [vmem:[%s6131 + $0x60] sm:$0xf]
        %v7741 = vld [vmem:[%s6131 + $0x64] sm:$0xf]
        %v7742 = vld [vmem:[%s6131 + $0x6c] sm:$0xf]
        %v7743 = vld [vmem:[%s6131 + $0x70] sm:$0xf]
        %v7744 = vld [vmem:[%s6131 + $0x78] sm:$0xf]
        %v7745 = vld [vmem:[%s6131 + $0x7c] sm:$0xf]
        %v7746 = vld [vmem:[%s6131 + $0x84] sm:$0xf]
        %v7747 = vld [vmem:[%s6131 + $0x88] sm:$0xf]
        %v7748 = vld [vmem:[%s6131 + $0x90] sm:$0xf]
        %v7749 = vld [vmem:[%s6131 + $0x94] sm:$0xf]
        %v7750 = vld [vmem:[%s6131 + $0x9c] sm:$0xf]
        %v7751 = vld [vmem:[%s6131 + $0xa0] sm:$0xf]
        %v7752 = vld [vmem:[%s6131 + $0xa8] sm:$0xf]
        %v7753 = vld [vmem:[%s6131 + $0xac] sm:$0xf]
        %v7754 = vld [vmem:[%s6131 + $0xb4] sm:$0xf]
        %v7755 = vld [vmem:[%s6131 + $0xb8] sm:$0xf]
        %s7756 = scalar_lea.vmem %s3, 48
        %v7757 = vld [vmem:[%s7756] sm:$0xf]
        %v7758 = vld [vmem:[%s7756 + $0x4] sm:$0xf]
        %v7759 = vld [vmem:[%s7756 + $0x8] sm:$0xf]
        %v7760 = vld [vmem:[%s7756 + $0xc] sm:$0xf]
        %v7793 = vunpack.c.l.b16 %v7724
        %v7794 = vunpack.c.l.b16 %v7725
        %v7795 = vunpack.c.l.b16 %v7726
        %v7796 = vunpack.c.l.b16 %v7727
        %v7797 = vunpack.c.l.b16 %v7728
        %v7798 = vunpack.c.l.b16 %v7729
        %v7799 = vunpack.c.l.b16 %v7730
        %v7800 = vunpack.c.l.b16 %v7731
        %v7801 = vunpack.c.l.b16 %v7732
        %v7802 = vunpack.c.l.b16 %v7733
        %v7803 = vunpack.c.l.b16 %v7734
        %v7804 = vunpack.c.l.b16 %v7735
        %v7805 = vunpack.c.l.b16 %v7736
        %v7806 = vunpack.c.l.b16 %v7737
        %v7807 = vunpack.c.l.b16 %v7738
        %v7808 = vunpack.c.l.b16 %v7739
        %v7809 = vunpack.c.l.b16 %v7740
        %v7810 = vunpack.c.l.b16 %v7741
        %v7811 = vunpack.c.l.b16 %v7742
        %v7812 = vunpack.c.l.b16 %v7743
        %v7813 = vunpack.c.l.b16 %v7744
        %v7814 = vunpack.c.l.b16 %v7745
        %v7815 = vunpack.c.l.b16 %v7746
        %v7816 = vunpack.c.l.b16 %v7747
        %v7817 = vunpack.c.l.b16 %v7748
        %v7818 = vunpack.c.l.b16 %v7749
        %v7819 = vunpack.c.l.b16 %v7750
        %v7820 = vunpack.c.l.b16 %v7751
        %v7821 = vunpack.c.l.b16 %v7752
        %v7822 = vunpack.c.l.b16 %v7753
        %v7823 = vunpack.c.l.b16 %v7754
        %v7824 = vunpack.c.l.b16 %v7755
        %v7825 = vpack.c.b16 %v7794, %v7793
        %v7826 = vpack.c.b16 %v7796, %v7795
        %v7827 = vpack.c.b16 %v7798, %v7797
        %v7828 = vpack.c.b16 %v7800, %v7799
        %v7829 = vpack.c.b16 %v7802, %v7801
        %v7830 = vpack.c.b16 %v7804, %v7803
        %v7831 = vpack.c.b16 %v7806, %v7805
        %v7832 = vpack.c.b16 %v7808, %v7807
        %v7833 = vpack.c.b16 %v7810, %v7809
        %v7834 = vpack.c.b16 %v7812, %v7811
        %v7835 = vpack.c.b16 %v7814, %v7813
        %v7836 = vpack.c.b16 %v7816, %v7815
        %v7837 = vpack.c.b16 %v7818, %v7817
        %v7838 = vpack.c.b16 %v7820, %v7819
        %v7839 = vpack.c.b16 %v7822, %v7821
        %v7840 = vpack.c.b16 %v7824, %v7823
        %v7845 = vunpack.c.l.b16 %v7757
        %v7846 = vunpack.c.l.b16 %v7758
        %v7847 = vunpack.c.l.b16 %v7759
        %v7848 = vunpack.c.l.b16 %v7760
        %v7849 = vpack.c.b16 %v7846, %v7845
        %v7850 = vpack.c.b16 %v7848, %v7847
        %v7854 = vsel %vm6747, %v7825, 0
        %v7857 = vsel %vm6747, %v7826, 0
        %v7860 = vsel %vm6747, %v7827, 0
        %v7863 = vsel %vm6747, %v7828, 0
        %v7866 = vsel %vm6747, %v7829, 0
        %v7869 = vsel %vm6747, %v7830, 0
        %v7872 = vsel %vm6747, %v7831, 0
        %v7875 = vsel %vm6747, %v7832, 0
        %v7878 = vsel %vm6747, %v7833, 0
        %v7881 = vsel %vm6747, %v7834, 0
        %v7884 = vsel %vm6747, %v7835, 0
        %v7887 = vsel %vm6747, %v7836, 0
        %v7890 = vsel %vm6747, %v7837, 0
        %v7893 = vsel %vm6747, %v7838, 0
        %v7896 = vsel %vm6747, %v7839, 0
        %v7899 = vsel %vm6747, %v7840, 0
        %7901 = vmatprep.subr.bf16.mxu0 0
        %7902 = vmatpush1.bf16.msra.mxu0 %v7849
        %7903 = vmatprep.subr.bf16.mxu0 0
        %7904 = vmatpush1.bf16.msra.mxu0 %v7850
        %7905 = vmatprep.subr.bf16.mxu0 0
        %7906 = vmatpush1.bf16.msra.mxu0 0
        %7907 = vmatprep.subr.bf16.mxu0 0
        %7908 = vmatpush1.bf16.msra.mxu0 0
        %7909 = vmatprep.subr.bf16.mxu0 0
        %7910 = vmatpush1.bf16.msra.mxu0 0
        %7911 = vmatprep.subr.bf16.mxu0 0
        %7912 = vmatpush1.bf16.msra.mxu0 0
        %7913 = vmatprep.subr.bf16.mxu0 0
        %7914 = vmatpush1.bf16.msra.mxu0 0
        %7915 = vmatprep.subr.bf16.mxu0 0
        %7916 = vmatpush1.bf16.msra.mxu0 0
        %7917 = vmatprep.subr.bf16.mxu0 0
        %7918 = vmatpush1.bf16.msra.mxu0 0
        %7919 = vmatprep.subr.bf16.mxu0 0
        %7920 = vmatpush1.bf16.msra.mxu0 0
        %7921 = vmatprep.subr.bf16.mxu0 0
        %7922 = vmatpush1.bf16.msra.mxu0 0
        %7923 = vmatprep.subr.bf16.mxu0 0
        %7924 = vmatpush1.bf16.msra.mxu0 0
        %7925 = vmatprep.subr.bf16.mxu0 0
        %7926 = vmatpush1.bf16.msra.mxu0 0
        %7927 = vmatprep.subr.bf16.mxu0 0
        %7928 = vmatpush1.bf16.msra.mxu0 0
        %7929 = vmatprep.subr.bf16.mxu0 0
        %7930 = vmatpush1.bf16.msra.mxu0 0
        %7931 = vmatprep.subr.bf16.mxu0 0
        %7932 = vmatpush1.bf16.msra.mxu0 0
        %7933 = vmatprep.mubr.bf16.mxu0 0
        %7934 = vmatmul.mubr.bf16.gmra.mrb[0].mxu0 %v7854
        %v7935 = vpop.f32.mrb[0].mxu0
        %v7936 = vadd.f32 0.0, %v7935
        %v7937 = vpop.f32.mrb[0].mxu0
        %v7938 = vpop.f32.mrb[0].mxu0
        %v7939 = vadd.f32 0.0, %v7938
        %v7940 = vpop.f32.mrb[0].mxu0
        %7941 = vmatprep.mubr.bf16.mxu0 0
        %7942 = vmatmul.mubr.bf16.gmra.mrb[0].mxu0 %v7857
        %v7943 = vpop.f32.mrb[0].mxu0
        %v7944 = vadd.f32 0.0, %v7943
        %v7945 = vpop.f32.mrb[0].mxu0
        %v7946 = vpop.f32.mrb[0].mxu0
        %v7947 = vadd.f32 0.0, %v7946
        %v7948 = vpop.f32.mrb[0].mxu0
        %7949 = vmatprep.mubr.bf16.mxu0 0
        %7950 = vmatmul.mubr.bf16.gmra.mrb[0].mxu0 %v7860
        %v7951 = vpop.f32.mrb[0].mxu0
        %v7952 = vadd.f32 0.0, %v7951
        %v7953 = vpop.f32.mrb[0].mxu0
        %v7954 = vpop.f32.mrb[0].mxu0
        %v7955 = vadd.f32 0.0, %v7954
        %v7956 = vpop.f32.mrb[0].mxu0
        %7957 = vmatprep.mubr.bf16.mxu0 0
        %7958 = vmatmul.mubr.bf16.gmra.mrb[0].mxu0 %v7863
        %v7959 = vpop.f32.mrb[0].mxu0
        %v7960 = vadd.f32 0.0, %v7959
        %v7961 = vpop.f32.mrb[0].mxu0
        %v7962 = vpop.f32.mrb[0].mxu0
        %v7963 = vadd.f32 0.0, %v7962
        %v7964 = vpop.f32.mrb[0].mxu0
        %7965 = vmatprep.mubr.bf16.mxu0 0
        %7966 = vmatmul.mubr.bf16.gmra.mrb[0].mxu0 %v7866
        %v7967 = vpop.f32.mrb[0].mxu0
        %v7968 = vadd.f32 0.0, %v7967
        %v7969 = vpop.f32.mrb[0].mxu0
        %v7970 = vpop.f32.mrb[0].mxu0
        %v7971 = vadd.f32 0.0, %v7970
        %v7972 = vpop.f32.mrb[0].mxu0
        %7973 = vmatprep.mubr.bf16.mxu0 0
        %7974 = vmatmul.mubr.bf16.gmra.mrb[0].mxu0 %v7869
        %v7975 = vpop.f32.mrb[0].mxu0
        %v7976 = vadd.f32 0.0, %v7975
        %v7977 = vpop.f32.mrb[0].mxu0
        %v7978 = vpop.f32.mrb[0].mxu0
        %v7979 = vadd.f32 0.0, %v7978
        %v7980 = vpop.f32.mrb[0].mxu0
        %7981 = vmatprep.mubr.bf16.mxu0 0
        %7982 = vmatmul.mubr.bf16.gmra.mrb[0].mxu0 %v7872
        %v7983 = vpop.f32.mrb[0].mxu0
        %v7984 = vadd.f32 0.0, %v7983
        %v7985 = vpop.f32.mrb[0].mxu0
        %v7986 = vpop.f32.mrb[0].mxu0
        %v7987 = vadd.f32 0.0, %v7986
        %v7988 = vpop.f32.mrb[0].mxu0
        %7989 = vmatprep.mubr.bf16.mxu0 0
        %7990 = vmatmul.mubr.bf16.gmra.mrb[0].mxu0 %v7875
        %v7991 = vpop.f32.mrb[0].mxu0
        %v7992 = vadd.f32 0.0, %v7991
        %v7993 = vpop.f32.mrb[0].mxu0
        %v7994 = vpop.f32.mrb[0].mxu0
        %v7995 = vadd.f32 0.0, %v7994
        %v7996 = vpop.f32.mrb[0].mxu0
        %7997 = vmatprep.mubr.bf16.mxu0 0
        %7998 = vmatmul.mubr.bf16.gmra.mrb[0].mxu0 %v7878
        %v7999 = vpop.f32.mrb[0].mxu0
        %v8000 = vadd.f32 0.0, %v7999
        %v8001 = vpop.f32.mrb[0].mxu0
        %v8002 = vpop.f32.mrb[0].mxu0
        %v8003 = vadd.f32 0.0, %v8002
        %v8004 = vpop.f32.mrb[0].mxu0
        %8005 = vmatprep.mubr.bf16.mxu0 0
        %8006 = vmatmul.mubr.bf16.gmra.mrb[0].mxu0 %v7881
        %v8007 = vpop.f32.mrb[0].mxu0
        %v8008 = vadd.f32 0.0, %v8007
        %v8009 = vpop.f32.mrb[0].mxu0
        %v8010 = vpop.f32.mrb[0].mxu0
        %v8011 = vadd.f32 0.0, %v8010
        %v8012 = vpop.f32.mrb[0].mxu0
        %8013 = vmatprep.mubr.bf16.mxu0 0
        %8014 = vmatmul.mubr.bf16.gmra.mrb[0].mxu0 %v7884
        %v8015 = vpop.f32.mrb[0].mxu0
        %v8016 = vadd.f32 0.0, %v8015
        %v8017 = vpop.f32.mrb[0].mxu0
        %v8018 = vpop.f32.mrb[0].mxu0
        %v8019 = vadd.f32 0.0, %v8018
        %v8020 = vpop.f32.mrb[0].mxu0
        %8021 = vmatprep.mubr.bf16.mxu0 0
        %8022 = vmatmul.mubr.bf16.gmra.mrb[0].mxu0 %v7887
        %v8023 = vpop.f32.mrb[0].mxu0
        %v8024 = vadd.f32 0.0, %v8023
        %v8025 = vpop.f32.mrb[0].mxu0
        %v8026 = vpop.f32.mrb[0].mxu0
        %v8027 = vadd.f32 0.0, %v8026
        %v8028 = vpop.f32.mrb[0].mxu0
        %8029 = vmatprep.mubr.bf16.mxu0 0
        %8030 = vmatmul.mubr.bf16.gmra.mrb[0].mxu0 %v7890
        %v8031 = vpop.f32.mrb[0].mxu0
        %v8032 = vadd.f32 0.0, %v8031
        %v8033 = vpop.f32.mrb[0].mxu0
        %v8034 = vpop.f32.mrb[0].mxu0
        %v8035 = vadd.f32 0.0, %v8034
        %v8036 = vpop.f32.mrb[0].mxu0
        %8037 = vmatprep.mubr.bf16.mxu0 0
        %8038 = vmatmul.mubr.bf16.gmra.mrb[0].mxu0 %v7893
        %v8039 = vpop.f32.mrb[0].mxu0
        %v8040 = vadd.f32 0.0, %v8039
        %v8041 = vpop.f32.mrb[0].mxu0
        %v8042 = vpop.f32.mrb[0].mxu0
        %v8043 = vadd.f32 0.0, %v8042
        %v8044 = vpop.f32.mrb[0].mxu0
        %8045 = vmatprep.mubr.bf16.mxu0 0
        %8046 = vmatmul.mubr.bf16.gmra.mrb[0].mxu0 %v7896
        %v8047 = vpop.f32.mrb[0].mxu0
        %v8048 = vadd.f32 0.0, %v8047
        %v8049 = vpop.f32.mrb[0].mxu0
        %v8050 = vpop.f32.mrb[0].mxu0
        %v8051 = vadd.f32 0.0, %v8050
        %v8052 = vpop.f32.mrb[0].mxu0
        %8053 = vmatprep.mubr.bf16.mxu0 0
        %8054 = vmatmul.mubr.bf16.gmra.mrb[0].mxu0 %v7899
        %v8055 = vpop.f32.mrb[0].mxu0
        %v8056 = vadd.f32 0.0, %v8055
        %v8057 = vpop.f32.mrb[0].mxu0
        %v8058 = vpop.f32.mrb[0].mxu0
        %v8059 = vadd.f32 0.0, %v8058
        %v8060 = vpop.f32.mrb[0].mxu0
        %8061 = vdwg.mxu0
        %v8062 = vadd.f32 %v7692, %v7936
        %v8063 = vadd.f32 %v7693, %v7939
        %v8064 = vadd.f32 %v7694, %v7944
        %v8065 = vadd.f32 %v7695, %v7947
        %v8066 = vadd.f32 %v7696, %v7952
        %v8067 = vadd.f32 %v7697, %v7955
        %v8068 = vadd.f32 %v7698, %v7960
        %v8069 = vadd.f32 %v7699, %v7963
        %v8070 = vadd.f32 %v7700, %v7968
        %v8071 = vadd.f32 %v7701, %v7971
        %v8072 = vadd.f32 %v7702, %v7976
        %v8073 = vadd.f32 %v7703, %v7979
        %v8074 = vadd.f32 %v7704, %v7984
        %v8075 = vadd.f32 %v7705, %v7987
        %v8076 = vadd.f32 %v7706, %v7992
        %v8077 = vadd.f32 %v7707, %v7995
        %v8078 = vadd.f32 %v7708, %v8000
        %v8079 = vadd.f32 %v7709, %v8003
        %v8080 = vadd.f32 %v7710, %v8008
        %v8081 = vadd.f32 %v7711, %v8011
        %v8082 = vadd.f32 %v7712, %v8016
        %v8083 = vadd.f32 %v7713, %v8019
        %v8084 = vadd.f32 %v7714, %v8024
        %v8085 = vadd.f32 %v7715, %v8027
        %v8086 = vadd.f32 %v7716, %v8032
        %v8087 = vadd.f32 %v7717, %v8035
        %v8088 = vadd.f32 %v7718, %v8040
        %v8089 = vadd.f32 %v7719, %v8043
        %v8090 = vadd.f32 %v7720, %v8048
        %v8091 = vadd.f32 %v7721, %v8051
        %v8092 = vadd.f32 %v7722, %v8056
        %v8093 = vadd.f32 %v7723, %v8059
        %v8094 = vld [vmem:[%s6131] sm:$0xf]
        %v8095 = vld [vmem:[%s6131 + $0x4] sm:$0xf]
        %v8096 = vld [vmem:[%s6131 + $0x8] sm:$0x1]
        %v8097 = vld [vmem:[%s6131 + $0xc] sm:$0xf]
        %v8098 = vld [vmem:[%s6131 + $0x10] sm:$0xf]
        %v8099 = vld [vmem:[%s6131 + $0x14] sm:$0x1]
        %v8100 = vld [vmem:[%s6131 + $0x18] sm:$0xf]
        %v8101 = vld [vmem:[%s6131 + $0x1c] sm:$0xf]
        %v8102 = vld [vmem:[%s6131 + $0x20] sm:$0x1]
        %v8103 = vld [vmem:[%s6131 + $0x24] sm:$0xf]
        %v8104 = vld [vmem:[%s6131 + $0x28] sm:$0xf]
        %v8105 = vld [vmem:[%s6131 + $0x2c] sm:$0x1]
        %v8106 = vld [vmem:[%s6131 + $0x30] sm:$0xf]
        %v8107 = vld [vmem:[%s6131 + $0x34] sm:$0xf]
        %v8108 = vld [vmem:[%s6131 + $0x38] sm:$0x1]
        %v8109 = vld [vmem:[%s6131 + $0x3c] sm:$0xf]
        %v8110 = vld [vmem:[%s6131 + $0x40] sm:$0xf]
        %v8111 = vld [vmem:[%s6131 + $0x44] sm:$0x1]
        %v8112 = vld [vmem:[%s6131 + $0x48] sm:$0xf]
        %v8113 = vld [vmem:[%s6131 + $0x4c] sm:$0xf]
        %v8114 = vld [vmem:[%s6131 + $0x50] sm:$0x1]
        %v8115 = vld [vmem:[%s6131 + $0x54] sm:$0xf]
        %v8116 = vld [vmem:[%s6131 + $0x58] sm:$0xf]
        %v8117 = vld [vmem:[%s6131 + $0x5c] sm:$0x1]
        %v8118 = vld [vmem:[%s6131 + $0x60] sm:$0xf]
        %v8119 = vld [vmem:[%s6131 + $0x64] sm:$0xf]
        %v8120 = vld [vmem:[%s6131 + $0x68] sm:$0x1]
        %v8121 = vld [vmem:[%s6131 + $0x6c] sm:$0xf]
        %v8122 = vld [vmem:[%s6131 + $0x70] sm:$0xf]
        %v8123 = vld [vmem:[%s6131 + $0x74] sm:$0x1]
        %v8124 = vld [vmem:[%s6131 + $0x78] sm:$0xf]
        %v8125 = vld [vmem:[%s6131 + $0x7c] sm:$0xf]
        %v8126 = vld [vmem:[%s6131 + $0x80] sm:$0x1]
        %v8127 = vld [vmem:[%s6131 + $0x84] sm:$0xf]
        %v8128 = vld [vmem:[%s6131 + $0x88] sm:$0xf]
        %v8129 = vld [vmem:[%s6131 + $0x8c] sm:$0x1]
        %v8130 = vld [vmem:[%s6131 + $0x90] sm:$0xf]
        %v8131 = vld [vmem:[%s6131 + $0x94] sm:$0xf]
        %v8132 = vld [vmem:[%s6131 + $0x98] sm:$0x1]
        %v8133 = vld [vmem:[%s6131 + $0x9c] sm:$0xf]
        %v8134 = vld [vmem:[%s6131 + $0xa0] sm:$0xf]
        %v8135 = vld [vmem:[%s6131 + $0xa4] sm:$0x1]
        %v8136 = vld [vmem:[%s6131 + $0xa8] sm:$0xf]
        %v8137 = vld [vmem:[%s6131 + $0xac] sm:$0xf]
        %v8138 = vld [vmem:[%s6131 + $0xb0] sm:$0x1]
        %v8139 = vld [vmem:[%s6131 + $0xb4] sm:$0xf]
        %v8140 = vld [vmem:[%s6131 + $0xb8] sm:$0xf]
        %v8141 = vld [vmem:[%s6131 + $0xbc] sm:$0x1]
        %v8143 = vshrl.u32 %v8094, 16
        %v8145 = vrot.slane %v8143, 4
        %v8146 = vshll.u32 %v8094, 16
        %v8148 = vrot.slane %v8146, 5
        %v8149 = vor.u32 %v8145, %v8148
        %v8150 = vrot.slane %v8149, 4
        %v8152 = vshll.u32 %v8095, 16
        %v8154 = vrot.slane %v8152, 5
        %v8155 = vsel %vm1017, %v8150, %v8154
        %v8156 = vshrl.u32 %v8095, 16
        %v8158 = vrot.slane %v8156, 4
        %v8159 = vor.u32 %v8158, %v8154
        %v8160 = vrot.slane %v8159, 4
        %v8162 = vshll.u32 %v8096, 16
        %v8164 = vrot.slane %v8162, 5
        %v8165 = vsel %vm1017, %v8160, %v8164
        %v8167 = vshrl.u32 %v8097, 16
        %v8169 = vrot.slane %v8167, 4
        %v8170 = vshll.u32 %v8097, 16
        %v8172 = vrot.slane %v8170, 5
        %v8173 = vor.u32 %v8169, %v8172
        %v8174 = vrot.slane %v8173, 4
        %v8176 = vshll.u32 %v8098, 16
        %v8178 = vrot.slane %v8176, 5
        %v8179 = vsel %vm1017, %v8174, %v8178
        %v8180 = vshrl.u32 %v8098, 16
        %v8182 = vrot.slane %v8180, 4
        %v8183 = vor.u32 %v8182, %v8178
        %v8184 = vrot.slane %v8183, 4
        %v8186 = vshll.u32 %v8099, 16
        %v8188 = vrot.slane %v8186, 5
        %v8189 = vsel %vm1017, %v8184, %v8188
        %v8191 = vshrl.u32 %v8100, 16
        %v8193 = vrot.slane %v8191, 4
        %v8194 = vshll.u32 %v8100, 16
        %v8196 = vrot.slane %v8194, 5
        %v8197 = vor.u32 %v8193, %v8196
        %v8198 = vrot.slane %v8197, 4
        %v8200 = vshll.u32 %v8101, 16
        %v8202 = vrot.slane %v8200, 5
        %v8203 = vsel %vm1017, %v8198, %v8202
        %v8204 = vshrl.u32 %v8101, 16
        %v8206 = vrot.slane %v8204, 4
        %v8207 = vor.u32 %v8206, %v8202
        %v8208 = vrot.slane %v8207, 4
        %v8210 = vshll.u32 %v8102, 16
        %v8212 = vrot.slane %v8210, 5
        %v8213 = vsel %vm1017, %v8208, %v8212
        %v8215 = vshrl.u32 %v8103, 16
        %v8217 = vrot.slane %v8215, 4
        %v8218 = vshll.u32 %v8103, 16
        %v8220 = vrot.slane %v8218, 5
        %v8221 = vor.u32 %v8217, %v8220
        %v8222 = vrot.slane %v8221, 4
        %v8224 = vshll.u32 %v8104, 16
        %v8226 = vrot.slane %v8224, 5
        %v8227 = vsel %vm1017, %v8222, %v8226
        %v8228 = vshrl.u32 %v8104, 16
        %v8230 = vrot.slane %v8228, 4
        %v8231 = vor.u32 %v8230, %v8226
        %v8232 = vrot.slane %v8231, 4
        %v8234 = vshll.u32 %v8105, 16
        %v8236 = vrot.slane %v8234, 5
        %v8237 = vsel %vm1017, %v8232, %v8236
        %v8239 = vshrl.u32 %v8106, 16
        %v8241 = vrot.slane %v8239, 4
        %v8242 = vshll.u32 %v8106, 16
        %v8244 = vrot.slane %v8242, 5
        %v8245 = vor.u32 %v8241, %v8244
        %v8246 = vrot.slane %v8245, 4
        %v8248 = vshll.u32 %v8107, 16
        %v8250 = vrot.slane %v8248, 5
        %v8251 = vsel %vm1017, %v8246, %v8250
        %v8252 = vshrl.u32 %v8107, 16
        %v8254 = vrot.slane %v8252, 4
        %v8255 = vor.u32 %v8254, %v8250
        %v8256 = vrot.slane %v8255, 4
        %v8258 = vshll.u32 %v8108, 16
        %v8260 = vrot.slane %v8258, 5
        %v8261 = vsel %vm1017, %v8256, %v8260
        %v8263 = vshrl.u32 %v8109, 16
        %v8265 = vrot.slane %v8263, 4
        %v8266 = vshll.u32 %v8109, 16
        %v8268 = vrot.slane %v8266, 5
        %v8269 = vor.u32 %v8265, %v8268
        %v8270 = vrot.slane %v8269, 4
        %v8272 = vshll.u32 %v8110, 16
        %v8274 = vrot.slane %v8272, 5
        %v8275 = vsel %vm1017, %v8270, %v8274
        %v8276 = vshrl.u32 %v8110, 16
        %v8278 = vrot.slane %v8276, 4
        %v8279 = vor.u32 %v8278, %v8274
        %v8280 = vrot.slane %v8279, 4
        %v8282 = vshll.u32 %v8111, 16
        %v8284 = vrot.slane %v8282, 5
        %v8285 = vsel %vm1017, %v8280, %v8284
        %v8287 = vshrl.u32 %v8112, 16
        %v8289 = vrot.slane %v8287, 4
        %v8290 = vshll.u32 %v8112, 16
        %v8292 = vrot.slane %v8290, 5
        %v8293 = vor.u32 %v8289, %v8292
        %v8294 = vrot.slane %v8293, 4
        %v8296 = vshll.u32 %v8113, 16
        %v8298 = vrot.slane %v8296, 5
        %v8299 = vsel %vm1017, %v8294, %v8298
        %v8300 = vshrl.u32 %v8113, 16
        %v8302 = vrot.slane %v8300, 4
        %v8303 = vor.u32 %v8302, %v8298
        %v8304 = vrot.slane %v8303, 4
        %v8306 = vshll.u32 %v8114, 16
        %v8308 = vrot.slane %v8306, 5
        %v8309 = vsel %vm1017, %v8304, %v8308
        %v8311 = vshrl.u32 %v8115, 16
        %v8313 = vrot.slane %v8311, 4
        %v8314 = vshll.u32 %v8115, 16
        %v8316 = vrot.slane %v8314, 5
        %v8317 = vor.u32 %v8313, %v8316
        %v8318 = vrot.slane %v8317, 4
        %v8320 = vshll.u32 %v8116, 16
        %v8322 = vrot.slane %v8320, 5
        %v8323 = vsel %vm1017, %v8318, %v8322
        %v8324 = vshrl.u32 %v8116, 16
        %v8326 = vrot.slane %v8324, 4
        %v8327 = vor.u32 %v8326, %v8322
        %v8328 = vrot.slane %v8327, 4
        %v8330 = vshll.u32 %v8117, 16
        %v8332 = vrot.slane %v8330, 5
        %v8333 = vsel %vm1017, %v8328, %v8332
        %v8335 = vshrl.u32 %v8118, 16
        %v8337 = vrot.slane %v8335, 4
        %v8338 = vshll.u32 %v8118, 16
        %v8340 = vrot.slane %v8338, 5
        %v8341 = vor.u32 %v8337, %v8340
        %v8342 = vrot.slane %v8341, 4
        %v8344 = vshll.u32 %v8119, 16
        %v8346 = vrot.slane %v8344, 5
        %v8347 = vsel %vm1017, %v8342, %v8346
        %v8348 = vshrl.u32 %v8119, 16
        %v8350 = vrot.slane %v8348, 4
        %v8351 = vor.u32 %v8350, %v8346
        %v8352 = vrot.slane %v8351, 4
        %v8354 = vshll.u32 %v8120, 16
        %v8356 = vrot.slane %v8354, 5
        %v8357 = vsel %vm1017, %v8352, %v8356
        %v8359 = vshrl.u32 %v8121, 16
        %v8361 = vrot.slane %v8359, 4
        %v8362 = vshll.u32 %v8121, 16
        %v8364 = vrot.slane %v8362, 5
        %v8365 = vor.u32 %v8361, %v8364
        %v8366 = vrot.slane %v8365, 4
        %v8368 = vshll.u32 %v8122, 16
        %v8370 = vrot.slane %v8368, 5
        %v8371 = vsel %vm1017, %v8366, %v8370
        %v8372 = vshrl.u32 %v8122, 16
        %v8374 = vrot.slane %v8372, 4
        %v8375 = vor.u32 %v8374, %v8370
        %v8376 = vrot.slane %v8375, 4
        %v8378 = vshll.u32 %v8123, 16
        %v8380 = vrot.slane %v8378, 5
        %v8381 = vsel %vm1017, %v8376, %v8380
        %v8383 = vshrl.u32 %v8124, 16
        %v8385 = vrot.slane %v8383, 4
        %v8386 = vshll.u32 %v8124, 16
        %v8388 = vrot.slane %v8386, 5
        %v8389 = vor.u32 %v8385, %v8388
        %v8390 = vrot.slane %v8389, 4
        %v8392 = vshll.u32 %v8125, 16
        %v8394 = vrot.slane %v8392, 5
        %v8395 = vsel %vm1017, %v8390, %v8394
        %v8396 = vshrl.u32 %v8125, 16
        %v8398 = vrot.slane %v8396, 4
        %v8399 = vor.u32 %v8398, %v8394
        %v8400 = vrot.slane %v8399, 4
        %v8402 = vshll.u32 %v8126, 16
        %v8404 = vrot.slane %v8402, 5
        %v8405 = vsel %vm1017, %v8400, %v8404
        %v8407 = vshrl.u32 %v8127, 16
        %v8409 = vrot.slane %v8407, 4
        %v8410 = vshll.u32 %v8127, 16
        %v8412 = vrot.slane %v8410, 5
        %v8413 = vor.u32 %v8409, %v8412
        %v8414 = vrot.slane %v8413, 4
        %v8416 = vshll.u32 %v8128, 16
        %v8418 = vrot.slane %v8416, 5
        %v8419 = vsel %vm1017, %v8414, %v8418
        %v8420 = vshrl.u32 %v8128, 16
        %v8422 = vrot.slane %v8420, 4
        %v8423 = vor.u32 %v8422, %v8418
        %v8424 = vrot.slane %v8423, 4
        %v8426 = vshll.u32 %v8129, 16
        %v8428 = vrot.slane %v8426, 5
        %v8429 = vsel %vm1017, %v8424, %v8428
        %v8431 = vshrl.u32 %v8130, 16
        %v8433 = vrot.slane %v8431, 4
        %v8434 = vshll.u32 %v8130, 16
        %v8436 = vrot.slane %v8434, 5
        %v8437 = vor.u32 %v8433, %v8436
        %v8438 = vrot.slane %v8437, 4
        %v8440 = vshll.u32 %v8131, 16
        %v8442 = vrot.slane %v8440, 5
        %v8443 = vsel %vm1017, %v8438, %v8442
        %v8444 = vshrl.u32 %v8131, 16
        %v8446 = vrot.slane %v8444, 4
        %v8447 = vor.u32 %v8446, %v8442
        %v8448 = vrot.slane %v8447, 4
        %v8450 = vshll.u32 %v8132, 16
        %v8452 = vrot.slane %v8450, 5
        %v8453 = vsel %vm1017, %v8448, %v8452
        %v8455 = vshrl.u32 %v8133, 16
        %v8457 = vrot.slane %v8455, 4
        %v8458 = vshll.u32 %v8133, 16
        %v8460 = vrot.slane %v8458, 5
        %v8461 = vor.u32 %v8457, %v8460
        %v8462 = vrot.slane %v8461, 4
        %v8464 = vshll.u32 %v8134, 16
        %v8466 = vrot.slane %v8464, 5
        %v8467 = vsel %vm1017, %v8462, %v8466
        %v8468 = vshrl.u32 %v8134, 16
        %v8470 = vrot.slane %v8468, 4
        %v8471 = vor.u32 %v8470, %v8466
        %v8472 = vrot.slane %v8471, 4
        %v8474 = vshll.u32 %v8135, 16
        %v8476 = vrot.slane %v8474, 5
        %v8477 = vsel %vm1017, %v8472, %v8476
        %v8479 = vshrl.u32 %v8136, 16
        %v8481 = vrot.slane %v8479, 4
        %v8482 = vshll.u32 %v8136, 16
        %v8484 = vrot.slane %v8482, 5
        %v8485 = vor.u32 %v8481, %v8484
        %v8486 = vrot.slane %v8485, 4
        %v8488 = vshll.u32 %v8137, 16
        %v8490 = vrot.slane %v8488, 5
        %v8491 = vsel %vm1017, %v8486, %v8490
        %v8492 = vshrl.u32 %v8137, 16
        %v8494 = vrot.slane %v8492, 4
        %v8495 = vor.u32 %v8494, %v8490
        %v8496 = vrot.slane %v8495, 4
        %v8498 = vshll.u32 %v8138, 16
        %v8500 = vrot.slane %v8498, 5
        %v8501 = vsel %vm1017, %v8496, %v8500
        %v8503 = vshrl.u32 %v8139, 16
        %v8505 = vrot.slane %v8503, 4
        %v8506 = vshll.u32 %v8139, 16
        %v8508 = vrot.slane %v8506, 5
        %v8509 = vor.u32 %v8505, %v8508
        %v8510 = vrot.slane %v8509, 4
        %v8512 = vshll.u32 %v8140, 16
        %v8514 = vrot.slane %v8512, 5
        %v8515 = vsel %vm1017, %v8510, %v8514
        %v8516 = vshrl.u32 %v8140, 16
        %v8518 = vrot.slane %v8516, 4
        %v8519 = vor.u32 %v8518, %v8514
        %v8520 = vrot.slane %v8519, 4
        %v8522 = vshll.u32 %v8141, 16
        %v8524 = vrot.slane %v8522, 5
        %v8525 = vsel %vm1017, %v8520, %v8524
        %s8526 = scalar_lea.vmem %s3, 64
        %v8527 = vld [vmem:[%s8526] sm:$0xf]
        %v8528 = vld [vmem:[%s8526 + $0x4] sm:$0xf]
        %v8529 = vld [vmem:[%s8526 + $0x8] sm:$0xf]
        %v8530 = vld [vmem:[%s8526 + $0xc] sm:$0xf]
        %v8531 = vunpack.c.l.b16 %v8155
        %v8532 = vunpack.c.l.b16 %v8165
        %v8533 = vunpack.c.l.b16 %v8179
        %v8534 = vunpack.c.l.b16 %v8189
        %v8535 = vunpack.c.l.b16 %v8203
        %v8536 = vunpack.c.l.b16 %v8213
        %v8537 = vunpack.c.l.b16 %v8227
        %v8538 = vunpack.c.l.b16 %v8237
        %v8539 = vunpack.c.l.b16 %v8251
        %v8540 = vunpack.c.l.b16 %v8261
        %v8541 = vunpack.c.l.b16 %v8275
        %v8542 = vunpack.c.l.b16 %v8285
        %v8543 = vunpack.c.l.b16 %v8299
        %v8544 = vunpack.c.l.b16 %v8309
        %v8545 = vunpack.c.l.b16 %v8323
        %v8546 = vunpack.c.l.b16 %v8333
        %v8547 = vunpack.c.l.b16 %v8347
        %v8548 = vunpack.c.l.b16 %v8357
        %v8549 = vunpack.c.l.b16 %v8371
        %v8550 = vunpack.c.l.b16 %v8381
        %v8551 = vunpack.c.l.b16 %v8395
        %v8552 = vunpack.c.l.b16 %v8405
        %v8553 = vunpack.c.l.b16 %v8419
        %v8554 = vunpack.c.l.b16 %v8429
        %v8555 = vunpack.c.l.b16 %v8443
        %v8556 = vunpack.c.l.b16 %v8453
        %v8557 = vunpack.c.l.b16 %v8467
        %v8558 = vunpack.c.l.b16 %v8477
        %v8559 = vunpack.c.l.b16 %v8491
        %v8560 = vunpack.c.l.b16 %v8501
        %v8561 = vunpack.c.l.b16 %v8515
        %v8562 = vunpack.c.l.b16 %v8525
        %v8563 = vpack.c.b16 %v8532, %v8531
        %v8564 = vpack.c.b16 %v8534, %v8533
        %v8565 = vpack.c.b16 %v8536, %v8535
        %v8566 = vpack.c.b16 %v8538, %v8537
        %v8567 = vpack.c.b16 %v8540, %v8539
        %v8568 = vpack.c.b16 %v8542, %v8541
        %v8569 = vpack.c.b16 %v8544, %v8543
        %v8570 = vpack.c.b16 %v8546, %v8545
        %v8571 = vpack.c.b16 %v8548, %v8547
        %v8572 = vpack.c.b16 %v8550, %v8549
        %v8573 = vpack.c.b16 %v8552, %v8551
        %v8574 = vpack.c.b16 %v8554, %v8553
        %v8575 = vpack.c.b16 %v8556, %v8555
        %v8576 = vpack.c.b16 %v8558, %v8557
        %v8577 = vpack.c.b16 %v8560, %v8559
        %v8578 = vpack.c.b16 %v8562, %v8561
        %v8583 = vunpack.c.l.b16 %v8527
        %v8584 = vunpack.c.l.b16 %v8528
        %v8585 = vunpack.c.l.b16 %v8529
        %v8586 = vunpack.c.l.b16 %v8530
        %v8587 = vpack.c.b16 %v8584, %v8583
        %v8588 = vpack.c.b16 %v8586, %v8585
        %v8592 = vsel %vm6747, %v8563, 0
        %v8595 = vsel %vm6747, %v8564, 0
        %v8598 = vsel %vm6747, %v8565, 0
        %v8601 = vsel %vm6747, %v8566, 0
        %v8604 = vsel %vm6747, %v8567, 0
        %v8607 = vsel %vm6747, %v8568, 0
        %v8610 = vsel %vm6747, %v8569, 0
        %v8613 = vsel %vm6747, %v8570, 0
        %v8616 = vsel %vm6747, %v8571, 0
        %v8619 = vsel %vm6747, %v8572, 0
        %v8622 = vsel %vm6747, %v8573, 0
        %v8625 = vsel %vm6747, %v8574, 0
        %v8628 = vsel %vm6747, %v8575, 0
        %v8631 = vsel %vm6747, %v8576, 0
        %v8634 = vsel %vm6747, %v8577, 0
        %v8637 = vsel %vm6747, %v8578, 0
        %8639 = vmatprep.subr.bf16.mxu0 0
        %8640 = vmatpush1.bf16.msra.mxu0 %v8587
        %8641 = vmatprep.subr.bf16.mxu0 0
        %8642 = vmatpush1.bf16.msra.mxu0 %v8588
        %8643 = vmatprep.subr.bf16.mxu0 0
        %8644 = vmatpush1.bf16.msra.mxu0 0
        %8645 = vmatprep.subr.bf16.mxu0 0
        %8646 = vmatpush1.bf16.msra.mxu0 0
        %8647 = vmatprep.subr.bf16.mxu0 0
        %8648 = vmatpush1.bf16.msra.mxu0 0
        %8649 = vmatprep.subr.bf16.mxu0 0
        %8650 = vmatpush1.bf16.msra.mxu0 0
        %8651 = vmatprep.subr.bf16.mxu0 0
        %8652 = vmatpush1.bf16.msra.mxu0 0
        %8653 = vmatprep.subr.bf16.mxu0 0
        %8654 = vmatpush1.bf16.msra.mxu0 0
        %8655 = vmatprep.subr.bf16.mxu0 0
        %8656 = vmatpush1.bf16.msra.mxu0 0
        %8657 = vmatprep.subr.bf16.mxu0 0
        %8658 = vmatpush1.bf16.msra.mxu0 0
        %8659 = vmatprep.subr.bf16.mxu0 0
        %8660 = vmatpush1.bf16.msra.mxu0 0
        %8661 = vmatprep.subr.bf16.mxu0 0
        %8662 = vmatpush1.bf16.msra.mxu0 0
        %8663 = vmatprep.subr.bf16.mxu0 0
        %8664 = vmatpush1.bf16.msra.mxu0 0
        %8665 = vmatprep.subr.bf16.mxu0 0
        %8666 = vmatpush1.bf16.msra.mxu0 0
        %8667 = vmatprep.subr.bf16.mxu0 0
        %8668 = vmatpush1.bf16.msra.mxu0 0
        %8669 = vmatprep.subr.bf16.mxu0 0
        %8670 = vmatpush1.bf16.msra.mxu0 0
        %8671 = vmatprep.mubr.bf16.mxu0 0
        %8672 = vmatmul.mubr.bf16.gmra.mrb[0].mxu0 %v8592
        %v8673 = vpop.f32.mrb[0].mxu0
        %v8674 = vadd.f32 0.0, %v8673
        %v8675 = vpop.f32.mrb[0].mxu0
        %v8676 = vpop.f32.mrb[0].mxu0
        %v8677 = vadd.f32 0.0, %v8676
        %v8678 = vpop.f32.mrb[0].mxu0
        %8679 = vmatprep.mubr.bf16.mxu0 0
        %8680 = vmatmul.mubr.bf16.gmra.mrb[0].mxu0 %v8595
        %v8681 = vpop.f32.mrb[0].mxu0
        %v8682 = vadd.f32 0.0, %v8681
        %v8683 = vpop.f32.mrb[0].mxu0
        %v8684 = vpop.f32.mrb[0].mxu0
        %v8685 = vadd.f32 0.0, %v8684
        %v8686 = vpop.f32.mrb[0].mxu0
        %8687 = vmatprep.mubr.bf16.mxu0 0
        %8688 = vmatmul.mubr.bf16.gmra.mrb[0].mxu0 %v8598
        %v8689 = vpop.f32.mrb[0].mxu0
        %v8690 = vadd.f32 0.0, %v8689
        %v8691 = vpop.f32.mrb[0].mxu0
        %v8692 = vpop.f32.mrb[0].mxu0
        %v8693 = vadd.f32 0.0, %v8692
        %v8694 = vpop.f32.mrb[0].mxu0
        %8695 = vmatprep.mubr.bf16.mxu0 0
        %8696 = vmatmul.mubr.bf16.gmra.mrb[0].mxu0 %v8601
        %v8697 = vpop.f32.mrb[0].mxu0
        %v8698 = vadd.f32 0.0, %v8697
        %v8699 = vpop.f32.mrb[0].mxu0
        %v8700 = vpop.f32.mrb[0].mxu0
        %v8701 = vadd.f32 0.0, %v8700
        %v8702 = vpop.f32.mrb[0].mxu0
        %8703 = vmatprep.mubr.bf16.mxu0 0
        %8704 = vmatmul.mubr.bf16.gmra.mrb[0].mxu0 %v8604
        %v8705 = vpop.f32.mrb[0].mxu0
        %v8706 = vadd.f32 0.0, %v8705
        %v8707 = vpop.f32.mrb[0].mxu0
        %v8708 = vpop.f32.mrb[0].mxu0
        %v8709 = vadd.f32 0.0, %v8708
        %v8710 = vpop.f32.mrb[0].mxu0
        %8711 = vmatprep.mubr.bf16.mxu0 0
        %8712 = vmatmul.mubr.bf16.gmra.mrb[0].mxu0 %v8607
        %v8713 = vpop.f32.mrb[0].mxu0
        %v8714 = vadd.f32 0.0, %v8713
        %v8715 = vpop.f32.mrb[0].mxu0
        %v8716 = vpop.f32.mrb[0].mxu0
        %v8717 = vadd.f32 0.0, %v8716
        %v8718 = vpop.f32.mrb[0].mxu0
        %8719 = vmatprep.mubr.bf16.mxu0 0
        %8720 = vmatmul.mubr.bf16.gmra.mrb[0].mxu0 %v8610
        %v8721 = vpop.f32.mrb[0].mxu0
        %v8722 = vadd.f32 0.0, %v8721
        %v8723 = vpop.f32.mrb[0].mxu0
        %v8724 = vpop.f32.mrb[0].mxu0
        %v8725 = vadd.f32 0.0, %v8724
        %v8726 = vpop.f32.mrb[0].mxu0
        %8727 = vmatprep.mubr.bf16.mxu0 0
        %8728 = vmatmul.mubr.bf16.gmra.mrb[0].mxu0 %v8613
        %v8729 = vpop.f32.mrb[0].mxu0
        %v8730 = vadd.f32 0.0, %v8729
        %v8731 = vpop.f32.mrb[0].mxu0
        %v8732 = vpop.f32.mrb[0].mxu0
        %v8733 = vadd.f32 0.0, %v8732
        %v8734 = vpop.f32.mrb[0].mxu0
        %8735 = vmatprep.mubr.bf16.mxu0 0
        %8736 = vmatmul.mubr.bf16.gmra.mrb[0].mxu0 %v8616
        %v8737 = vpop.f32.mrb[0].mxu0
        %v8738 = vadd.f32 0.0, %v8737
        %v8739 = vpop.f32.mrb[0].mxu0
        %v8740 = vpop.f32.mrb[0].mxu0
        %v8741 = vadd.f32 0.0, %v8740
        %v8742 = vpop.f32.mrb[0].mxu0
        %8743 = vmatprep.mubr.bf16.mxu0 0
        %8744 = vmatmul.mubr.bf16.gmra.mrb[0].mxu0 %v8619
        %v8745 = vpop.f32.mrb[0].mxu0
        %v8746 = vadd.f32 0.0, %v8745
        %v8747 = vpop.f32.mrb[0].mxu0
        %v8748 = vpop.f32.mrb[0].mxu0
        %v8749 = vadd.f32 0.0, %v8748
        %v8750 = vpop.f32.mrb[0].mxu0
        %8751 = vmatprep.mubr.bf16.mxu0 0
        %8752 = vmatmul.mubr.bf16.gmra.mrb[0].mxu0 %v8622
        %v8753 = vpop.f32.mrb[0].mxu0
        %v8754 = vadd.f32 0.0, %v8753
        %v8755 = vpop.f32.mrb[0].mxu0
        %v8756 = vpop.f32.mrb[0].mxu0
        %v8757 = vadd.f32 0.0, %v8756
        %v8758 = vpop.f32.mrb[0].mxu0
        %8759 = vmatprep.mubr.bf16.mxu0 0
        %8760 = vmatmul.mubr.bf16.gmra.mrb[0].mxu0 %v8625
        %v8761 = vpop.f32.mrb[0].mxu0
        %v8762 = vadd.f32 0.0, %v8761
        %v8763 = vpop.f32.mrb[0].mxu0
        %v8764 = vpop.f32.mrb[0].mxu0
        %v8765 = vadd.f32 0.0, %v8764
        %v8766 = vpop.f32.mrb[0].mxu0
        %8767 = vmatprep.mubr.bf16.mxu0 0
        %8768 = vmatmul.mubr.bf16.gmra.mrb[0].mxu0 %v8628
        %v8769 = vpop.f32.mrb[0].mxu0
        %v8770 = vadd.f32 0.0, %v8769
        %v8771 = vpop.f32.mrb[0].mxu0
        %v8772 = vpop.f32.mrb[0].mxu0
        %v8773 = vadd.f32 0.0, %v8772
        %v8774 = vpop.f32.mrb[0].mxu0
        %8775 = vmatprep.mubr.bf16.mxu0 0
        %8776 = vmatmul.mubr.bf16.gmra.mrb[0].mxu0 %v8631
        %v8777 = vpop.f32.mrb[0].mxu0
        %v8778 = vadd.f32 0.0, %v8777
        %v8779 = vpop.f32.mrb[0].mxu0
        %v8780 = vpop.f32.mrb[0].mxu0
        %v8781 = vadd.f32 0.0, %v8780
        %v8782 = vpop.f32.mrb[0].mxu0
        %8783 = vmatprep.mubr.bf16.mxu0 0
        %8784 = vmatmul.mubr.bf16.gmra.mrb[0].mxu0 %v8634
        %v8785 = vpop.f32.mrb[0].mxu0
        %v8786 = vadd.f32 0.0, %v8785
        %v8787 = vpop.f32.mrb[0].mxu0
        %v8788 = vpop.f32.mrb[0].mxu0
        %v8789 = vadd.f32 0.0, %v8788
        %v8790 = vpop.f32.mrb[0].mxu0
        %8791 = vmatprep.mubr.bf16.mxu0 0
        %8792 = vmatmul.mubr.bf16.gmra.mrb[0].mxu0 %v8637
        %v8793 = vpop.f32.mrb[0].mxu0
        %v8794 = vadd.f32 0.0, %v8793
        %v8795 = vpop.f32.mrb[0].mxu0
        %v8796 = vpop.f32.mrb[0].mxu0
        %v8797 = vadd.f32 0.0, %v8796
        %v8798 = vpop.f32.mrb[0].mxu0
        %8799 = vdwg.mxu0
        %v8800 = vadd.f32 %v8062, %v8674
        %v8801 = vadd.f32 %v8063, %v8677
        %v8802 = vadd.f32 %v8064, %v8682
        %v8803 = vadd.f32 %v8065, %v8685
        %v8804 = vadd.f32 %v8066, %v8690
        %v8805 = vadd.f32 %v8067, %v8693
        %v8806 = vadd.f32 %v8068, %v8698
        %v8807 = vadd.f32 %v8069, %v8701
        %v8808 = vadd.f32 %v8070, %v8706
        %v8809 = vadd.f32 %v8071, %v8709
        %v8810 = vadd.f32 %v8072, %v8714
        %v8811 = vadd.f32 %v8073, %v8717
        %v8812 = vadd.f32 %v8074, %v8722
        %v8813 = vadd.f32 %v8075, %v8725
        %v8814 = vadd.f32 %v8076, %v8730
        %v8815 = vadd.f32 %v8077, %v8733
        %v8816 = vadd.f32 %v8078, %v8738
        %v8817 = vadd.f32 %v8079, %v8741
        %v8818 = vadd.f32 %v8080, %v8746
        %v8819 = vadd.f32 %v8081, %v8749
        %v8820 = vadd.f32 %v8082, %v8754
        %v8821 = vadd.f32 %v8083, %v8757
        %v8822 = vadd.f32 %v8084, %v8762
        %v8823 = vadd.f32 %v8085, %v8765
        %v8824 = vadd.f32 %v8086, %v8770
        %v8825 = vadd.f32 %v8087, %v8773
        %v8826 = vadd.f32 %v8088, %v8778
        %v8827 = vadd.f32 %v8089, %v8781
        %v8828 = vadd.f32 %v8090, %v8786
        %v8829 = vadd.f32 %v8091, %v8789
        %v8830 = vadd.f32 %v8092, %v8794
        %v8831 = vadd.f32 %v8093, %v8797
        %v8832 = vld [vmem:[%s6131] sm:$0xe]
        %v8833 = vld [vmem:[%s6131 + $0xc] sm:$0xe]
        %v8834 = vld [vmem:[%s6131 + $0x18] sm:$0xe]
        %v8835 = vld [vmem:[%s6131 + $0x24] sm:$0xe]
        %v8836 = vld [vmem:[%s6131 + $0x30] sm:$0xe]
        %v8837 = vld [vmem:[%s6131 + $0x3c] sm:$0xe]
        %v8838 = vld [vmem:[%s6131 + $0x48] sm:$0xe]
        %v8839 = vld [vmem:[%s6131 + $0x54] sm:$0xe]
        %v8840 = vld [vmem:[%s6131 + $0x60] sm:$0xe]
        %v8841 = vld [vmem:[%s6131 + $0x6c] sm:$0xe]
        %v8842 = vld [vmem:[%s6131 + $0x78] sm:$0xe]
        %v8843 = vld [vmem:[%s6131 + $0x84] sm:$0xe]
        %v8844 = vld [vmem:[%s6131 + $0x90] sm:$0xe]
        %v8845 = vld [vmem:[%s6131 + $0x9c] sm:$0xe]
        %v8846 = vld [vmem:[%s6131 + $0xa8] sm:$0xe]
        %v8847 = vld [vmem:[%s6131 + $0xb4] sm:$0xe]
        %v8896 = vrot.slane %v8832, 5
        %v8897 = vrot.slane %v8896, 4
        %v8898 = vrot.slane %v8095, 5
        %v8899 = vsel %vm2008, %v8897, %v8898
        %v8900 = vrot.slane %v8898, 4
        %v8901 = vrot.slane %v8096, 5
        %v8902 = vsel %vm2008, %v8900, %v8901
        %v8903 = vrot.slane %v8833, 5
        %v8904 = vrot.slane %v8903, 4
        %v8905 = vrot.slane %v8098, 5
        %v8906 = vsel %vm2008, %v8904, %v8905
        %v8907 = vrot.slane %v8905, 4
        %v8908 = vrot.slane %v8099, 5
        %v8909 = vsel %vm2008, %v8907, %v8908
        %v8910 = vrot.slane %v8834, 5
        %v8911 = vrot.slane %v8910, 4
        %v8912 = vrot.slane %v8101, 5
        %v8913 = vsel %vm2008, %v8911, %v8912
        %v8914 = vrot.slane %v8912, 4
        %v8915 = vrot.slane %v8102, 5
        %v8916 = vsel %vm2008, %v8914, %v8915
        %v8917 = vrot.slane %v8835, 5
        %v8918 = vrot.slane %v8917, 4
        %v8919 = vrot.slane %v8104, 5
        %v8920 = vsel %vm2008, %v8918, %v8919
        %v8921 = vrot.slane %v8919, 4
        %v8922 = vrot.slane %v8105, 5
        %v8923 = vsel %vm2008, %v8921, %v8922
        %v8924 = vrot.slane %v8836, 5
        %v8925 = vrot.slane %v8924, 4
        %v8926 = vrot.slane %v8107, 5
        %v8927 = vsel %vm2008, %v8925, %v8926
        %v8928 = vrot.slane %v8926, 4
        %v8929 = vrot.slane %v8108, 5
        %v8930 = vsel %vm2008, %v8928, %v8929
        %v8931 = vrot.slane %v8837, 5
        %v8932 = vrot.slane %v8931, 4
        %v8933 = vrot.slane %v8110, 5
        %v8934 = vsel %vm2008, %v8932, %v8933
        %v8935 = vrot.slane %v8933, 4
        %v8936 = vrot.slane %v8111, 5
        %v8937 = vsel %vm2008, %v8935, %v8936
        %v8938 = vrot.slane %v8838, 5
        %v8939 = vrot.slane %v8938, 4
        %v8940 = vrot.slane %v8113, 5
        %v8941 = vsel %vm2008, %v8939, %v8940
        %v8942 = vrot.slane %v8940, 4
        %v8943 = vrot.slane %v8114, 5
        %v8944 = vsel %vm2008, %v8942, %v8943
        %v8945 = vrot.slane %v8839, 5
        %v8946 = vrot.slane %v8945, 4
        %v8947 = vrot.slane %v8116, 5
        %v8948 = vsel %vm2008, %v8946, %v8947
        %v8949 = vrot.slane %v8947, 4
        %v8950 = vrot.slane %v8117, 5
        %v8951 = vsel %vm2008, %v8949, %v8950
        %v8952 = vrot.slane %v8840, 5
        %v8953 = vrot.slane %v8952, 4
        %v8954 = vrot.slane %v8119, 5
        %v8955 = vsel %vm2008, %v8953, %v8954
        %v8956 = vrot.slane %v8954, 4
        %v8957 = vrot.slane %v8120, 5
        %v8958 = vsel %vm2008, %v8956, %v8957
        %v8959 = vrot.slane %v8841, 5
        %v8960 = vrot.slane %v8959, 4
        %v8961 = vrot.slane %v8122, 5
        %v8962 = vsel %vm2008, %v8960, %v8961
        %v8963 = vrot.slane %v8961, 4
        %v8964 = vrot.slane %v8123, 5
        %v8965 = vsel %vm2008, %v8963, %v8964
        %v8966 = vrot.slane %v8842, 5
        %v8967 = vrot.slane %v8966, 4
        %v8968 = vrot.slane %v8125, 5
        %v8969 = vsel %vm2008, %v8967, %v8968
        %v8970 = vrot.slane %v8968, 4
        %v8971 = vrot.slane %v8126, 5
        %v8972 = vsel %vm2008, %v8970, %v8971
        %v8973 = vrot.slane %v8843, 5
        %v8974 = vrot.slane %v8973, 4
        %v8975 = vrot.slane %v8128, 5
        %v8976 = vsel %vm2008, %v8974, %v8975
        %v8977 = vrot.slane %v8975, 4
        %v8978 = vrot.slane %v8129, 5
        %v8979 = vsel %vm2008, %v8977, %v8978
        %v8980 = vrot.slane %v8844, 5
        %v8981 = vrot.slane %v8980, 4
        %v8982 = vrot.slane %v8131, 5
        %v8983 = vsel %vm2008, %v8981, %v8982
        %v8984 = vrot.slane %v8982, 4
        %v8985 = vrot.slane %v8132, 5
        %v8986 = vsel %vm2008, %v8984, %v8985
        %v8987 = vrot.slane %v8845, 5
        %v8988 = vrot.slane %v8987, 4
        %v8989 = vrot.slane %v8134, 5
        %v8990 = vsel %vm2008, %v8988, %v8989
        %v8991 = vrot.slane %v8989, 4
        %v8992 = vrot.slane %v8135, 5
        %v8993 = vsel %vm2008, %v8991, %v8992
        %v8994 = vrot.slane %v8846, 5
        %v8995 = vrot.slane %v8994, 4
        %v8996 = vrot.slane %v8137, 5
        %v8997 = vsel %vm2008, %v8995, %v8996
        %v8998 = vrot.slane %v8996, 4
        %v8999 = vrot.slane %v8138, 5
        %v9000 = vsel %vm2008, %v8998, %v8999
        %v9001 = vrot.slane %v8847, 5
        %v9002 = vrot.slane %v9001, 4
        %v9003 = vrot.slane %v8140, 5
        %v9004 = vsel %vm2008, %v9002, %v9003
        %v9005 = vrot.slane %v9003, 4
        %v9006 = vrot.slane %v8141, 5
        %v9007 = vsel %vm2008, %v9005, %v9006
        %s9008 = scalar_lea.vmem %s3, 80
        %v9009 = vld [vmem:[%s9008] sm:$0xf]
        %v9010 = vld [vmem:[%s9008 + $0x4] sm:$0xf]
        %v9011 = vld [vmem:[%s9008 + $0x8] sm:$0xf]
        %v9012 = vld [vmem:[%s9008 + $0xc] sm:$0xf]
        %v9013 = vunpack.c.l.b16 %v8899
        %v9014 = vunpack.c.l.b16 %v8902
        %v9015 = vunpack.c.l.b16 %v8906
        %v9016 = vunpack.c.l.b16 %v8909
        %v9017 = vunpack.c.l.b16 %v8913
        %v9018 = vunpack.c.l.b16 %v8916
        %v9019 = vunpack.c.l.b16 %v8920
        %v9020 = vunpack.c.l.b16 %v8923
        %v9021 = vunpack.c.l.b16 %v8927
        %v9022 = vunpack.c.l.b16 %v8930
        %v9023 = vunpack.c.l.b16 %v8934
        %v9024 = vunpack.c.l.b16 %v8937
        %v9025 = vunpack.c.l.b16 %v8941
        %v9026 = vunpack.c.l.b16 %v8944
        %v9027 = vunpack.c.l.b16 %v8948
        %v9028 = vunpack.c.l.b16 %v8951
        %v9029 = vunpack.c.l.b16 %v8955
        %v9030 = vunpack.c.l.b16 %v8958
        %v9031 = vunpack.c.l.b16 %v8962
        %v9032 = vunpack.c.l.b16 %v8965
        %v9033 = vunpack.c.l.b16 %v8969
        %v9034 = vunpack.c.l.b16 %v8972
        %v9035 = vunpack.c.l.b16 %v8976
        %v9036 = vunpack.c.l.b16 %v8979
        %v9037 = vunpack.c.l.b16 %v8983
        %v9038 = vunpack.c.l.b16 %v8986
        %v9039 = vunpack.c.l.b16 %v8990
        %v9040 = vunpack.c.l.b16 %v8993
        %v9041 = vunpack.c.l.b16 %v8997
        %v9042 = vunpack.c.l.b16 %v9000
        %v9043 = vunpack.c.l.b16 %v9004
        %v9044 = vunpack.c.l.b16 %v9007
        %v9045 = vpack.c.b16 %v9014, %v9013
        %v9046 = vpack.c.b16 %v9016, %v9015
        %v9047 = vpack.c.b16 %v9018, %v9017
        %v9048 = vpack.c.b16 %v9020, %v9019
        %v9049 = vpack.c.b16 %v9022, %v9021
        %v9050 = vpack.c.b16 %v9024, %v9023
        %v9051 = vpack.c.b16 %v9026, %v9025
        %v9052 = vpack.c.b16 %v9028, %v9027
        %v9053 = vpack.c.b16 %v9030, %v9029
        %v9054 = vpack.c.b16 %v9032, %v9031
        %v9055 = vpack.c.b16 %v9034, %v9033
        %v9056 = vpack.c.b16 %v9036, %v9035
        %v9057 = vpack.c.b16 %v9038, %v9037
        %v9058 = vpack.c.b16 %v9040, %v9039
        %v9059 = vpack.c.b16 %v9042, %v9041
        %v9060 = vpack.c.b16 %v9044, %v9043
        %v9065 = vunpack.c.l.b16 %v9009
        %v9066 = vunpack.c.l.b16 %v9010
        %v9067 = vunpack.c.l.b16 %v9011
        %v9068 = vunpack.c.l.b16 %v9012
        %v9069 = vpack.c.b16 %v9066, %v9065
        %v9070 = vpack.c.b16 %v9068, %v9067
        %v9074 = vsel %vm6747, %v9045, 0
        %v9077 = vsel %vm6747, %v9046, 0
        %v9080 = vsel %vm6747, %v9047, 0
        %v9083 = vsel %vm6747, %v9048, 0
        %v9086 = vsel %vm6747, %v9049, 0
        %v9089 = vsel %vm6747, %v9050, 0
        %v9092 = vsel %vm6747, %v9051, 0
        %v9095 = vsel %vm6747, %v9052, 0
        %v9098 = vsel %vm6747, %v9053, 0
        %v9101 = vsel %vm6747, %v9054, 0
        %v9104 = vsel %vm6747, %v9055, 0
        %v9107 = vsel %vm6747, %v9056, 0
        %v9110 = vsel %vm6747, %v9057, 0
        %v9113 = vsel %vm6747, %v9058, 0
        %v9116 = vsel %vm6747, %v9059, 0
        %v9119 = vsel %vm6747, %v9060, 0
        %9121 = vmatprep.subr.bf16.mxu0 0
        %9122 = vmatpush1.bf16.msra.mxu0 %v9069
        %9123 = vmatprep.subr.bf16.mxu0 0
        %9124 = vmatpush1.bf16.msra.mxu0 %v9070
        %9125 = vmatprep.subr.bf16.mxu0 0
        %9126 = vmatpush1.bf16.msra.mxu0 0
        %9127 = vmatprep.subr.bf16.mxu0 0
        %9128 = vmatpush1.bf16.msra.mxu0 0
        %9129 = vmatprep.subr.bf16.mxu0 0
        %9130 = vmatpush1.bf16.msra.mxu0 0
        %9131 = vmatprep.subr.bf16.mxu0 0
        %9132 = vmatpush1.bf16.msra.mxu0 0
        %9133 = vmatprep.subr.bf16.mxu0 0
        %9134 = vmatpush1.bf16.msra.mxu0 0
        %9135 = vmatprep.subr.bf16.mxu0 0
        %9136 = vmatpush1.bf16.msra.mxu0 0
        %9137 = vmatprep.subr.bf16.mxu0 0
        %9138 = vmatpush1.bf16.msra.mxu0 0
        %9139 = vmatprep.subr.bf16.mxu0 0
        %9140 = vmatpush1.bf16.msra.mxu0 0
        %9141 = vmatprep.subr.bf16.mxu0 0
        %9142 = vmatpush1.bf16.msra.mxu0 0
        %9143 = vmatprep.subr.bf16.mxu0 0
        %9144 = vmatpush1.bf16.msra.mxu0 0
        %9145 = vmatprep.subr.bf16.mxu0 0
        %9146 = vmatpush1.bf16.msra.mxu0 0
        %9147 = vmatprep.subr.bf16.mxu0 0
        %9148 = vmatpush1.bf16.msra.mxu0 0
        %9149 = vmatprep.subr.bf16.mxu0 0
        %9150 = vmatpush1.bf16.msra.mxu0 0
        %9151 = vmatprep.subr.bf16.mxu0 0
        %9152 = vmatpush1.bf16.msra.mxu0 0
        %9153 = vmatprep.mubr.bf16.mxu0 0
        %9154 = vmatmul.mubr.bf16.gmra.mrb[0].mxu0 %v9074
        %v9155 = vpop.f32.mrb[0].mxu0
        %v9156 = vadd.f32 0.0, %v9155
        %v9157 = vpop.f32.mrb[0].mxu0
        %v9158 = vpop.f32.mrb[0].mxu0
        %v9159 = vadd.f32 0.0, %v9158
        %v9160 = vpop.f32.mrb[0].mxu0
        %9161 = vmatprep.mubr.bf16.mxu0 0
        %9162 = vmatmul.mubr.bf16.gmra.mrb[0].mxu0 %v9077
        %v9163 = vpop.f32.mrb[0].mxu0
        %v9164 = vadd.f32 0.0, %v9163
        %v9165 = vpop.f32.mrb[0].mxu0
        %v9166 = vpop.f32.mrb[0].mxu0
        %v9167 = vadd.f32 0.0, %v9166
        %v9168 = vpop.f32.mrb[0].mxu0
        %9169 = vmatprep.mubr.bf16.mxu0 0
        %9170 = vmatmul.mubr.bf16.gmra.mrb[0].mxu0 %v9080
        %v9171 = vpop.f32.mrb[0].mxu0
        %v9172 = vadd.f32 0.0, %v9171
        %v9173 = vpop.f32.mrb[0].mxu0
        %v9174 = vpop.f32.mrb[0].mxu0
        %v9175 = vadd.f32 0.0, %v9174
        %v9176 = vpop.f32.mrb[0].mxu0
        %9177 = vmatprep.mubr.bf16.mxu0 0
        %9178 = vmatmul.mubr.bf16.gmra.mrb[0].mxu0 %v9083
        %v9179 = vpop.f32.mrb[0].mxu0
        %v9180 = vadd.f32 0.0, %v9179
        %v9181 = vpop.f32.mrb[0].mxu0
        %v9182 = vpop.f32.mrb[0].mxu0
        %v9183 = vadd.f32 0.0, %v9182
        %v9184 = vpop.f32.mrb[0].mxu0
        %9185 = vmatprep.mubr.bf16.mxu0 0
        %9186 = vmatmul.mubr.bf16.gmra.mrb[0].mxu0 %v9086
        %v9187 = vpop.f32.mrb[0].mxu0
        %v9188 = vadd.f32 0.0, %v9187
        %v9189 = vpop.f32.mrb[0].mxu0
        %v9190 = vpop.f32.mrb[0].mxu0
        %v9191 = vadd.f32 0.0, %v9190
        %v9192 = vpop.f32.mrb[0].mxu0
        %9193 = vmatprep.mubr.bf16.mxu0 0
        %9194 = vmatmul.mubr.bf16.gmra.mrb[0].mxu0 %v9089
        %v9195 = vpop.f32.mrb[0].mxu0
        %v9196 = vadd.f32 0.0, %v9195
        %v9197 = vpop.f32.mrb[0].mxu0
        %v9198 = vpop.f32.mrb[0].mxu0
        %v9199 = vadd.f32 0.0, %v9198
        %v9200 = vpop.f32.mrb[0].mxu0
        %9201 = vmatprep.mubr.bf16.mxu0 0
        %9202 = vmatmul.mubr.bf16.gmra.mrb[0].mxu0 %v9092
        %v9203 = vpop.f32.mrb[0].mxu0
        %v9204 = vadd.f32 0.0, %v9203
        %v9205 = vpop.f32.mrb[0].mxu0
        %v9206 = vpop.f32.mrb[0].mxu0
        %v9207 = vadd.f32 0.0, %v9206
        %v9208 = vpop.f32.mrb[0].mxu0
        %9209 = vmatprep.mubr.bf16.mxu0 0
        %9210 = vmatmul.mubr.bf16.gmra.mrb[0].mxu0 %v9095
        %v9211 = vpop.f32.mrb[0].mxu0
        %v9212 = vadd.f32 0.0, %v9211
        %v9213 = vpop.f32.mrb[0].mxu0
        %v9214 = vpop.f32.mrb[0].mxu0
        %v9215 = vadd.f32 0.0, %v9214
        %v9216 = vpop.f32.mrb[0].mxu0
        %9217 = vmatprep.mubr.bf16.mxu0 0
        %9218 = vmatmul.mubr.bf16.gmra.mrb[0].mxu0 %v9098
        %v9219 = vpop.f32.mrb[0].mxu0
        %v9220 = vadd.f32 0.0, %v9219
        %v9221 = vpop.f32.mrb[0].mxu0
        %v9222 = vpop.f32.mrb[0].mxu0
        %v9223 = vadd.f32 0.0, %v9222
        %v9224 = vpop.f32.mrb[0].mxu0
        %9225 = vmatprep.mubr.bf16.mxu0 0
        %9226 = vmatmul.mubr.bf16.gmra.mrb[0].mxu0 %v9101
        %v9227 = vpop.f32.mrb[0].mxu0
        %v9228 = vadd.f32 0.0, %v9227
        %v9229 = vpop.f32.mrb[0].mxu0
        %v9230 = vpop.f32.mrb[0].mxu0
        %v9231 = vadd.f32 0.0, %v9230
        %v9232 = vpop.f32.mrb[0].mxu0
        %9233 = vmatprep.mubr.bf16.mxu0 0
        %9234 = vmatmul.mubr.bf16.gmra.mrb[0].mxu0 %v9104
        %v9235 = vpop.f32.mrb[0].mxu0
        %v9236 = vadd.f32 0.0, %v9235
        %v9237 = vpop.f32.mrb[0].mxu0
        %v9238 = vpop.f32.mrb[0].mxu0
        %v9239 = vadd.f32 0.0, %v9238
        %v9240 = vpop.f32.mrb[0].mxu0
        %9241 = vmatprep.mubr.bf16.mxu0 0
        %9242 = vmatmul.mubr.bf16.gmra.mrb[0].mxu0 %v9107
        %v9243 = vpop.f32.mrb[0].mxu0
        %v9244 = vadd.f32 0.0, %v9243
        %v9245 = vpop.f32.mrb[0].mxu0
        %v9246 = vpop.f32.mrb[0].mxu0
        %v9247 = vadd.f32 0.0, %v9246
        %v9248 = vpop.f32.mrb[0].mxu0
        %9249 = vmatprep.mubr.bf16.mxu0 0
        %9250 = vmatmul.mubr.bf16.gmra.mrb[0].mxu0 %v9110
        %v9251 = vpop.f32.mrb[0].mxu0
        %v9252 = vadd.f32 0.0, %v9251
        %v9253 = vpop.f32.mrb[0].mxu0
        %v9254 = vpop.f32.mrb[0].mxu0
        %v9255 = vadd.f32 0.0, %v9254
        %v9256 = vpop.f32.mrb[0].mxu0
        %9257 = vmatprep.mubr.bf16.mxu0 0
        %9258 = vmatmul.mubr.bf16.gmra.mrb[0].mxu0 %v9113
        %v9259 = vpop.f32.mrb[0].mxu0
        %v9260 = vadd.f32 0.0, %v9259
        %v9261 = vpop.f32.mrb[0].mxu0
        %v9262 = vpop.f32.mrb[0].mxu0
        %v9263 = vadd.f32 0.0, %v9262
        %v9264 = vpop.f32.mrb[0].mxu0
        %9265 = vmatprep.mubr.bf16.mxu0 0
        %9266 = vmatmul.mubr.bf16.gmra.mrb[0].mxu0 %v9116
        %v9267 = vpop.f32.mrb[0].mxu0
        %v9268 = vadd.f32 0.0, %v9267
        %v9269 = vpop.f32.mrb[0].mxu0
        %v9270 = vpop.f32.mrb[0].mxu0
        %v9271 = vadd.f32 0.0, %v9270
        %v9272 = vpop.f32.mrb[0].mxu0
        %9273 = vmatprep.mubr.bf16.mxu0 0
        %9274 = vmatmul.mubr.bf16.gmra.mrb[0].mxu0 %v9119
        %v9275 = vpop.f32.mrb[0].mxu0
        %v9276 = vadd.f32 0.0, %v9275
        %v9277 = vpop.f32.mrb[0].mxu0
        %v9278 = vpop.f32.mrb[0].mxu0
        %v9279 = vadd.f32 0.0, %v9278
        %v9280 = vpop.f32.mrb[0].mxu0
        %9281 = vdwg.mxu0
        %v9282 = vadd.f32 %v8800, %v9156
        %v9283 = vadd.f32 %v8801, %v9159
        %v9284 = vadd.f32 %v8802, %v9164
        %v9285 = vadd.f32 %v8803, %v9167
        %v9286 = vadd.f32 %v8804, %v9172
        %v9287 = vadd.f32 %v8805, %v9175
        %v9288 = vadd.f32 %v8806, %v9180
        %v9289 = vadd.f32 %v8807, %v9183
        %v9290 = vadd.f32 %v8808, %v9188
        %v9291 = vadd.f32 %v8809, %v9191
        %v9292 = vadd.f32 %v8810, %v9196
        %v9293 = vadd.f32 %v8811, %v9199
        %v9294 = vadd.f32 %v8812, %v9204
        %v9295 = vadd.f32 %v8813, %v9207
        %v9296 = vadd.f32 %v8814, %v9212
        %v9297 = vadd.f32 %v8815, %v9215
        %v9298 = vadd.f32 %v8816, %v9220
        %v9299 = vadd.f32 %v8817, %v9223
        %v9300 = vadd.f32 %v8818, %v9228
        %v9301 = vadd.f32 %v8819, %v9231
        %v9302 = vadd.f32 %v8820, %v9236
        %v9303 = vadd.f32 %v8821, %v9239
        %v9304 = vadd.f32 %v8822, %v9244
        %v9305 = vadd.f32 %v8823, %v9247
        %v9306 = vadd.f32 %v8824, %v9252
        %v9307 = vadd.f32 %v8825, %v9255
        %v9308 = vadd.f32 %v8826, %v9260
        %v9309 = vadd.f32 %v8827, %v9263
        %v9310 = vadd.f32 %v8828, %v9268
        %v9311 = vadd.f32 %v8829, %v9271
        %v9312 = vadd.f32 %v8830, %v9276
        %v9313 = vadd.f32 %v8831, %v9279
        %s9314 = scalar_lea.vmem [#allocation3], 24
        %v9315 = vld [vmem:[%s9314] sm:$0xf]
        %v9316 = vld [vmem:[%s9314 + $0x4] sm:$0xf]
        %v9317 = vld [vmem:[%s9314 + $0xc] sm:$0xf]
        %v9318 = vld [vmem:[%s9314 + $0x10] sm:$0xf]
        %v9319 = vld [vmem:[%s9314 + $0x18] sm:$0xf]
        %v9320 = vld [vmem:[%s9314 + $0x1c] sm:$0xf]
        %v9321 = vld [vmem:[%s9314 + $0x24] sm:$0xf]
        %v9322 = vld [vmem:[%s9314 + $0x28] sm:$0xf]
        %v9323 = vld [vmem:[%s9314 + $0x30] sm:$0xf]
        %v9324 = vld [vmem:[%s9314 + $0x34] sm:$0xf]
        %v9325 = vld [vmem:[%s9314 + $0x3c] sm:$0xf]
        %v9326 = vld [vmem:[%s9314 + $0x40] sm:$0xf]
        %v9327 = vld [vmem:[%s9314 + $0x48] sm:$0xf]
        %v9328 = vld [vmem:[%s9314 + $0x4c] sm:$0xf]
        %v9329 = vld [vmem:[%s9314 + $0x54] sm:$0xf]
        %v9330 = vld [vmem:[%s9314 + $0x58] sm:$0xf]
        %v9331 = vld [vmem:[%s9314 + $0x60] sm:$0xf]
        %v9332 = vld [vmem:[%s9314 + $0x64] sm:$0xf]
        %v9333 = vld [vmem:[%s9314 + $0x6c] sm:$0xf]
        %v9334 = vld [vmem:[%s9314 + $0x70] sm:$0xf]
        %v9335 = vld [vmem:[%s9314 + $0x78] sm:$0xf]
        %v9336 = vld [vmem:[%s9314 + $0x7c] sm:$0xf]
        %v9337 = vld [vmem:[%s9314 + $0x84] sm:$0xf]
        %v9338 = vld [vmem:[%s9314 + $0x88] sm:$0xf]
        %v9339 = vld [vmem:[%s9314 + $0x90] sm:$0xf]
        %v9340 = vld [vmem:[%s9314 + $0x94] sm:$0xf]
        %v9341 = vld [vmem:[%s9314 + $0x9c] sm:$0xf]
        %v9342 = vld [vmem:[%s9314 + $0xa0] sm:$0xf]
        %v9343 = vld [vmem:[%s9314 + $0xa8] sm:$0xf]
        %v9344 = vld [vmem:[%s9314 + $0xac] sm:$0xf]
        %v9345 = vld [vmem:[%s9314 + $0xb4] sm:$0xf]
        %v9346 = vld [vmem:[%s9314 + $0xb8] sm:$0xf]
        %s9347 = scalar_lea.vmem %s3, 96
        %v9348 = vld [vmem:[%s9347] sm:$0xf]
        %v9349 = vld [vmem:[%s9347 + $0x4] sm:$0xf]
        %v9350 = vld [vmem:[%s9347 + $0x8] sm:$0xf]
        %v9351 = vld [vmem:[%s9347 + $0xc] sm:$0xf]
        %v9384 = vunpack.c.l.b16 %v9315
        %v9385 = vunpack.c.l.b16 %v9316
        %v9386 = vunpack.c.l.b16 %v9317
        %v9387 = vunpack.c.l.b16 %v9318
        %v9388 = vunpack.c.l.b16 %v9319
        %v9389 = vunpack.c.l.b16 %v9320
        %v9390 = vunpack.c.l.b16 %v9321
        %v9391 = vunpack.c.l.b16 %v9322
        %v9392 = vunpack.c.l.b16 %v9323
        %v9393 = vunpack.c.l.b16 %v9324
        %v9394 = vunpack.c.l.b16 %v9325
        %v9395 = vunpack.c.l.b16 %v9326
        %v9396 = vunpack.c.l.b16 %v9327
        %v9397 = vunpack.c.l.b16 %v9328
        %v9398 = vunpack.c.l.b16 %v9329
        %v9399 = vunpack.c.l.b16 %v9330
        %v9400 = vunpack.c.l.b16 %v9331
        %v9401 = vunpack.c.l.b16 %v9332
        %v9402 = vunpack.c.l.b16 %v9333
        %v9403 = vunpack.c.l.b16 %v9334
        %v9404 = vunpack.c.l.b16 %v9335
        %v9405 = vunpack.c.l.b16 %v9336
        %v9406 = vunpack.c.l.b16 %v9337
        %v9407 = vunpack.c.l.b16 %v9338
        %v9408 = vunpack.c.l.b16 %v9339
        %v9409 = vunpack.c.l.b16 %v9340
        %v9410 = vunpack.c.l.b16 %v9341
        %v9411 = vunpack.c.l.b16 %v9342
        %v9412 = vunpack.c.l.b16 %v9343
        %v9413 = vunpack.c.l.b16 %v9344
        %v9414 = vunpack.c.l.b16 %v9345
        %v9415 = vunpack.c.l.b16 %v9346
        %v9416 = vpack.c.b16 %v9385, %v9384
        %v9417 = vpack.c.b16 %v9387, %v9386
        %v9418 = vpack.c.b16 %v9389, %v9388
        %v9419 = vpack.c.b16 %v9391, %v9390
        %v9420 = vpack.c.b16 %v9393, %v9392
        %v9421 = vpack.c.b16 %v9395, %v9394
        %v9422 = vpack.c.b16 %v9397, %v9396
        %v9423 = vpack.c.b16 %v9399, %v9398
        %v9424 = vpack.c.b16 %v9401, %v9400
        %v9425 = vpack.c.b16 %v9403, %v9402
        %v9426 = vpack.c.b16 %v9405, %v9404
        %v9427 = vpack.c.b16 %v9407, %v9406
        %v9428 = vpack.c.b16 %v9409, %v9408
        %v9429 = vpack.c.b16 %v9411, %v9410
        %v9430 = vpack.c.b16 %v9413, %v9412
        %v9431 = vpack.c.b16 %v9415, %v9414
        %v9436 = vunpack.c.l.b16 %v9348
        %v9437 = vunpack.c.l.b16 %v9349
        %v9438 = vunpack.c.l.b16 %v9350
        %v9439 = vunpack.c.l.b16 %v9351
        %v9440 = vpack.c.b16 %v9437, %v9436
        %v9441 = vpack.c.b16 %v9439, %v9438
        %v9445 = vsel %vm6747, %v9416, 0
        %v9448 = vsel %vm6747, %v9417, 0
        %v9451 = vsel %vm6747, %v9418, 0
        %v9454 = vsel %vm6747, %v9419, 0
        %v9457 = vsel %vm6747, %v9420, 0
        %v9460 = vsel %vm6747, %v9421, 0
        %v9463 = vsel %vm6747, %v9422, 0
        %v9466 = vsel %vm6747, %v9423, 0
        %v9469 = vsel %vm6747, %v9424, 0
        %v9472 = vsel %vm6747, %v9425, 0
        %v9475 = vsel %vm6747, %v9426, 0
        %v9478 = vsel %vm6747, %v9427, 0
        %v9481 = vsel %vm6747, %v9428, 0
        %v9484 = vsel %vm6747, %v9429, 0
        %v9487 = vsel %vm6747, %v9430, 0
        %v9490 = vsel %vm6747, %v9431, 0
        %9492 = vmatprep.subr.bf16.mxu0 0
        %9493 = vmatpush1.bf16.msra.mxu0 %v9440
        %9494 = vmatprep.subr.bf16.mxu0 0
        %9495 = vmatpush1.bf16.msra.mxu0 %v9441
        %9496 = vmatprep.subr.bf16.mxu0 0
        %9497 = vmatpush1.bf16.msra.mxu0 0
        %9498 = vmatprep.subr.bf16.mxu0 0
        %9499 = vmatpush1.bf16.msra.mxu0 0
        %9500 = vmatprep.subr.bf16.mxu0 0
        %9501 = vmatpush1.bf16.msra.mxu0 0
        %9502 = vmatprep.subr.bf16.mxu0 0
        %9503 = vmatpush1.bf16.msra.mxu0 0
        %9504 = vmatprep.subr.bf16.mxu0 0
        %9505 = vmatpush1.bf16.msra.mxu0 0
        %9506 = vmatprep.subr.bf16.mxu0 0
        %9507 = vmatpush1.bf16.msra.mxu0 0
        %9508 = vmatprep.subr.bf16.mxu0 0
        %9509 = vmatpush1.bf16.msra.mxu0 0
        %9510 = vmatprep.subr.bf16.mxu0 0
        %9511 = vmatpush1.bf16.msra.mxu0 0
        %9512 = vmatprep.subr.bf16.mxu0 0
        %9513 = vmatpush1.bf16.msra.mxu0 0
        %9514 = vmatprep.subr.bf16.mxu0 0
        %9515 = vmatpush1.bf16.msra.mxu0 0
        %9516 = vmatprep.subr.bf16.mxu0 0
        %9517 = vmatpush1.bf16.msra.mxu0 0
        %9518 = vmatprep.subr.bf16.mxu0 0
        %9519 = vmatpush1.bf16.msra.mxu0 0
        %9520 = vmatprep.subr.bf16.mxu0 0
        %9521 = vmatpush1.bf16.msra.mxu0 0
        %9522 = vmatprep.subr.bf16.mxu0 0
        %9523 = vmatpush1.bf16.msra.mxu0 0
        %9524 = vmatprep.mubr.bf16.mxu0 0
        %9525 = vmatmul.mubr.bf16.gmra.mrb[0].mxu0 %v9445
        %v9526 = vpop.f32.mrb[0].mxu0
        %v9527 = vadd.f32 0.0, %v9526
        %v9528 = vpop.f32.mrb[0].mxu0
        %v9529 = vpop.f32.mrb[0].mxu0
        %v9530 = vadd.f32 0.0, %v9529
        %v9531 = vpop.f32.mrb[0].mxu0
        %9532 = vmatprep.mubr.bf16.mxu0 0
        %9533 = vmatmul.mubr.bf16.gmra.mrb[0].mxu0 %v9448
        %v9534 = vpop.f32.mrb[0].mxu0
        %v9535 = vadd.f32 0.0, %v9534
        %v9536 = vpop.f32.mrb[0].mxu0
        %v9537 = vpop.f32.mrb[0].mxu0
        %v9538 = vadd.f32 0.0, %v9537
        %v9539 = vpop.f32.mrb[0].mxu0
        %9540 = vmatprep.mubr.bf16.mxu0 0
        %9541 = vmatmul.mubr.bf16.gmra.mrb[0].mxu0 %v9451
        %v9542 = vpop.f32.mrb[0].mxu0
        %v9543 = vadd.f32 0.0, %v9542
        %v9544 = vpop.f32.mrb[0].mxu0
        %v9545 = vpop.f32.mrb[0].mxu0
        %v9546 = vadd.f32 0.0, %v9545
        %v9547 = vpop.f32.mrb[0].mxu0
        %9548 = vmatprep.mubr.bf16.mxu0 0
        %9549 = vmatmul.mubr.bf16.gmra.mrb[0].mxu0 %v9454
        %v9550 = vpop.f32.mrb[0].mxu0
        %v9551 = vadd.f32 0.0, %v9550
        %v9552 = vpop.f32.mrb[0].mxu0
        %v9553 = vpop.f32.mrb[0].mxu0
        %v9554 = vadd.f32 0.0, %v9553
        %v9555 = vpop.f32.mrb[0].mxu0
        %9556 = vmatprep.mubr.bf16.mxu0 0
        %9557 = vmatmul.mubr.bf16.gmra.mrb[0].mxu0 %v9457
        %v9558 = vpop.f32.mrb[0].mxu0
        %v9559 = vadd.f32 0.0, %v9558
        %v9560 = vpop.f32.mrb[0].mxu0
        %v9561 = vpop.f32.mrb[0].mxu0
        %v9562 = vadd.f32 0.0, %v9561
        %v9563 = vpop.f32.mrb[0].mxu0
        %9564 = vmatprep.mubr.bf16.mxu0 0
        %9565 = vmatmul.mubr.bf16.gmra.mrb[0].mxu0 %v9460
        %v9566 = vpop.f32.mrb[0].mxu0
        %v9567 = vadd.f32 0.0, %v9566
        %v9568 = vpop.f32.mrb[0].mxu0
        %v9569 = vpop.f32.mrb[0].mxu0
        %v9570 = vadd.f32 0.0, %v9569
        %v9571 = vpop.f32.mrb[0].mxu0
        %9572 = vmatprep.mubr.bf16.mxu0 0
        %9573 = vmatmul.mubr.bf16.gmra.mrb[0].mxu0 %v9463
        %v9574 = vpop.f32.mrb[0].mxu0
        %v9575 = vadd.f32 0.0, %v9574
        %v9576 = vpop.f32.mrb[0].mxu0
        %v9577 = vpop.f32.mrb[0].mxu0
        %v9578 = vadd.f32 0.0, %v9577
        %v9579 = vpop.f32.mrb[0].mxu0
        %9580 = vmatprep.mubr.bf16.mxu0 0
        %9581 = vmatmul.mubr.bf16.gmra.mrb[0].mxu0 %v9466
        %v9582 = vpop.f32.mrb[0].mxu0
        %v9583 = vadd.f32 0.0, %v9582
        %v9584 = vpop.f32.mrb[0].mxu0
        %v9585 = vpop.f32.mrb[0].mxu0
        %v9586 = vadd.f32 0.0, %v9585
        %v9587 = vpop.f32.mrb[0].mxu0
        %9588 = vmatprep.mubr.bf16.mxu0 0
        %9589 = vmatmul.mubr.bf16.gmra.mrb[0].mxu0 %v9469
        %v9590 = vpop.f32.mrb[0].mxu0
        %v9591 = vadd.f32 0.0, %v9590
        %v9592 = vpop.f32.mrb[0].mxu0
        %v9593 = vpop.f32.mrb[0].mxu0
        %v9594 = vadd.f32 0.0, %v9593
        %v9595 = vpop.f32.mrb[0].mxu0
        %9596 = vmatprep.mubr.bf16.mxu0 0
        %9597 = vmatmul.mubr.bf16.gmra.mrb[0].mxu0 %v9472
        %v9598 = vpop.f32.mrb[0].mxu0
        %v9599 = vadd.f32 0.0, %v9598
        %v9600 = vpop.f32.mrb[0].mxu0
        %v9601 = vpop.f32.mrb[0].mxu0
        %v9602 = vadd.f32 0.0, %v9601
        %v9603 = vpop.f32.mrb[0].mxu0
        %9604 = vmatprep.mubr.bf16.mxu0 0
        %9605 = vmatmul.mubr.bf16.gmra.mrb[0].mxu0 %v9475
        %v9606 = vpop.f32.mrb[0].mxu0
        %v9607 = vadd.f32 0.0, %v9606
        %v9608 = vpop.f32.mrb[0].mxu0
        %v9609 = vpop.f32.mrb[0].mxu0
        %v9610 = vadd.f32 0.0, %v9609
        %v9611 = vpop.f32.mrb[0].mxu0
        %9612 = vmatprep.mubr.bf16.mxu0 0
        %9613 = vmatmul.mubr.bf16.gmra.mrb[0].mxu0 %v9478
        %v9614 = vpop.f32.mrb[0].mxu0
        %v9615 = vadd.f32 0.0, %v9614
        %v9616 = vpop.f32.mrb[0].mxu0
        %v9617 = vpop.f32.mrb[0].mxu0
        %v9618 = vadd.f32 0.0, %v9617
        %v9619 = vpop.f32.mrb[0].mxu0
        %9620 = vmatprep.mubr.bf16.mxu0 0
        %9621 = vmatmul.mubr.bf16.gmra.mrb[0].mxu0 %v9481
        %v9622 = vpop.f32.mrb[0].mxu0
        %v9623 = vadd.f32 0.0, %v9622
        %v9624 = vpop.f32.mrb[0].mxu0
        %v9625 = vpop.f32.mrb[0].mxu0
        %v9626 = vadd.f32 0.0, %v9625
        %v9627 = vpop.f32.mrb[0].mxu0
        %9628 = vmatprep.mubr.bf16.mxu0 0
        %9629 = vmatmul.mubr.bf16.gmra.mrb[0].mxu0 %v9484
        %v9630 = vpop.f32.mrb[0].mxu0
        %v9631 = vadd.f32 0.0, %v9630
        %v9632 = vpop.f32.mrb[0].mxu0
        %v9633 = vpop.f32.mrb[0].mxu0
        %v9634 = vadd.f32 0.0, %v9633
        %v9635 = vpop.f32.mrb[0].mxu0
        %9636 = vmatprep.mubr.bf16.mxu0 0
        %9637 = vmatmul.mubr.bf16.gmra.mrb[0].mxu0 %v9487
        %v9638 = vpop.f32.mrb[0].mxu0
        %v9639 = vadd.f32 0.0, %v9638
        %v9640 = vpop.f32.mrb[0].mxu0
        %v9641 = vpop.f32.mrb[0].mxu0
        %v9642 = vadd.f32 0.0, %v9641
        %v9643 = vpop.f32.mrb[0].mxu0
        %9644 = vmatprep.mubr.bf16.mxu0 0
        %9645 = vmatmul.mubr.bf16.gmra.mrb[0].mxu0 %v9490
        %v9646 = vpop.f32.mrb[0].mxu0
        %v9647 = vadd.f32 0.0, %v9646
        %v9648 = vpop.f32.mrb[0].mxu0
        %v9649 = vpop.f32.mrb[0].mxu0
        %v9650 = vadd.f32 0.0, %v9649
        %v9651 = vpop.f32.mrb[0].mxu0
        %9652 = vdwg.mxu0
        %v9653 = vadd.f32 %v9282, %v9527
        %v9654 = vadd.f32 %v9283, %v9530
        %v9655 = vadd.f32 %v9284, %v9535
        %v9656 = vadd.f32 %v9285, %v9538
        %v9657 = vadd.f32 %v9286, %v9543
        %v9658 = vadd.f32 %v9287, %v9546
        %v9659 = vadd.f32 %v9288, %v9551
        %v9660 = vadd.f32 %v9289, %v9554
        %v9661 = vadd.f32 %v9290, %v9559
        %v9662 = vadd.f32 %v9291, %v9562
        %v9663 = vadd.f32 %v9292, %v9567
        %v9664 = vadd.f32 %v9293, %v9570
        %v9665 = vadd.f32 %v9294, %v9575
        %v9666 = vadd.f32 %v9295, %v9578
        %v9667 = vadd.f32 %v9296, %v9583
        %v9668 = vadd.f32 %v9297, %v9586
        %v9669 = vadd.f32 %v9298, %v9591
        %v9670 = vadd.f32 %v9299, %v9594
        %v9671 = vadd.f32 %v9300, %v9599
        %v9672 = vadd.f32 %v9301, %v9602
        %v9673 = vadd.f32 %v9302, %v9607
        %v9674 = vadd.f32 %v9303, %v9610
        %v9675 = vadd.f32 %v9304, %v9615
        %v9676 = vadd.f32 %v9305, %v9618
        %v9677 = vadd.f32 %v9306, %v9623
        %v9678 = vadd.f32 %v9307, %v9626
        %v9679 = vadd.f32 %v9308, %v9631
        %v9680 = vadd.f32 %v9309, %v9634
        %v9681 = vadd.f32 %v9310, %v9639
        %v9682 = vadd.f32 %v9311, %v9642
        %v9683 = vadd.f32 %v9312, %v9647
        %v9684 = vadd.f32 %v9313, %v9650
        %v9685 = vld [vmem:[%s9314] sm:$0xf]
        %v9686 = vld [vmem:[%s9314 + $0x4] sm:$0xf]
        %v9687 = vld [vmem:[%s9314 + $0x8] sm:$0x1]
        %v9688 = vld [vmem:[%s9314 + $0xc] sm:$0xf]
        %v9689 = vld [vmem:[%s9314 + $0x10] sm:$0xf]
        %v9690 = vld [vmem:[%s9314 + $0x14] sm:$0x1]
        %v9691 = vld [vmem:[%s9314 + $0x18] sm:$0xf]
        %v9692 = vld [vmem:[%s9314 + $0x1c] sm:$0xf]
        %v9693 = vld [vmem:[%s9314 + $0x20] sm:$0x1]
        %v9694 = vld [vmem:[%s9314 + $0x24] sm:$0xf]
        %v9695 = vld [vmem:[%s9314 + $0x28] sm:$0xf]
        %v9696 = vld [vmem:[%s9314 + $0x2c] sm:$0x1]
        %v9697 = vld [vmem:[%s9314 + $0x30] sm:$0xf]
        %v9698 = vld [vmem:[%s9314 + $0x34] sm:$0xf]
        %v9699 = vld [vmem:[%s9314 + $0x38] sm:$0x1]
        %v9700 = vld [vmem:[%s9314 + $0x3c] sm:$0xf]
        %v9701 = vld [vmem:[%s9314 + $0x40] sm:$0xf]
        %v9702 = vld [vmem:[%s9314 + $0x44] sm:$0x1]
        %v9703 = vld [vmem:[%s9314 + $0x48] sm:$0xf]
        %v9704 = vld [vmem:[%s9314 + $0x4c] sm:$0xf]
        %v9705 = vld [vmem:[%s9314 + $0x50] sm:$0x1]
        %v9706 = vld [vmem:[%s9314 + $0x54] sm:$0xf]
        %v9707 = vld [vmem:[%s9314 + $0x58] sm:$0xf]
        %v9708 = vld [vmem:[%s9314 + $0x5c] sm:$0x1]
        %v9709 = vld [vmem:[%s9314 + $0x60] sm:$0xf]
        %v9710 = vld [vmem:[%s9314 + $0x64] sm:$0xf]
        %v9711 = vld [vmem:[%s9314 + $0x68] sm:$0x1]
        %v9712 = vld [vmem:[%s9314 + $0x6c] sm:$0xf]
        %v9713 = vld [vmem:[%s9314 + $0x70] sm:$0xf]
        %v9714 = vld [vmem:[%s9314 + $0x74] sm:$0x1]
        %v9715 = vld [vmem:[%s9314 + $0x78] sm:$0xf]
        %v9716 = vld [vmem:[%s9314 + $0x7c] sm:$0xf]
        %v9717 = vld [vmem:[%s9314 + $0x80] sm:$0x1]
        %v9718 = vld [vmem:[%s9314 + $0x84] sm:$0xf]
        %v9719 = vld [vmem:[%s9314 + $0x88] sm:$0xf]
        %v9720 = vld [vmem:[%s9314 + $0x8c] sm:$0x1]
        %v9721 = vld [vmem:[%s9314 + $0x90] sm:$0xf]
        %v9722 = vld [vmem:[%s9314 + $0x94] sm:$0xf]
        %v9723 = vld [vmem:[%s9314 + $0x98] sm:$0x1]
        %v9724 = vld [vmem:[%s9314 + $0x9c] sm:$0xf]
        %v9725 = vld [vmem:[%s9314 + $0xa0] sm:$0xf]
        %v9726 = vld [vmem:[%s9314 + $0xa4] sm:$0x1]
        %v9727 = vld [vmem:[%s9314 + $0xa8] sm:$0xf]
        %v9728 = vld [vmem:[%s9314 + $0xac] sm:$0xf]
        %v9729 = vld [vmem:[%s9314 + $0xb0] sm:$0x1]
        %v9730 = vld [vmem:[%s9314 + $0xb4] sm:$0xf]
        %v9731 = vld [vmem:[%s9314 + $0xb8] sm:$0xf]
        %v9732 = vld [vmem:[%s9314 + $0xbc] sm:$0x1]
        %v9734 = vshrl.u32 %v9685, 16
        %v9736 = vrot.slane %v9734, 4
        %v9737 = vshll.u32 %v9685, 16
        %v9739 = vrot.slane %v9737, 5
        %v9740 = vor.u32 %v9736, %v9739
        %v9741 = vrot.slane %v9740, 4
        %v9743 = vshll.u32 %v9686, 16
        %v9745 = vrot.slane %v9743, 5
        %v9746 = vsel %vm1017, %v9741, %v9745
        %v9747 = vshrl.u32 %v9686, 16
        %v9749 = vrot.slane %v9747, 4
        %v9750 = vor.u32 %v9749, %v9745
        %v9751 = vrot.slane %v9750, 4
        %v9753 = vshll.u32 %v9687, 16
        %v9755 = vrot.slane %v9753, 5
        %v9756 = vsel %vm1017, %v9751, %v9755
        %v9758 = vshrl.u32 %v9688, 16
        %v9760 = vrot.slane %v9758, 4
        %v9761 = vshll.u32 %v9688, 16
        %v9763 = vrot.slane %v9761, 5
        %v9764 = vor.u32 %v9760, %v9763
        %v9765 = vrot.slane %v9764, 4
        %v9767 = vshll.u32 %v9689, 16
        %v9769 = vrot.slane %v9767, 5
        %v9770 = vsel %vm1017, %v9765, %v9769
        %v9771 = vshrl.u32 %v9689, 16
        %v9773 = vrot.slane %v9771, 4
        %v9774 = vor.u32 %v9773, %v9769
        %v9775 = vrot.slane %v9774, 4
        %v9777 = vshll.u32 %v9690, 16
        %v9779 = vrot.slane %v9777, 5
        %v9780 = vsel %vm1017, %v9775, %v9779
        %v9782 = vshrl.u32 %v9691, 16
        %v9784 = vrot.slane %v9782, 4
        %v9785 = vshll.u32 %v9691, 16
        %v9787 = vrot.slane %v9785, 5
        %v9788 = vor.u32 %v9784, %v9787
        %v9789 = vrot.slane %v9788, 4
        %v9791 = vshll.u32 %v9692, 16
        %v9793 = vrot.slane %v9791, 5
        %v9794 = vsel %vm1017, %v9789, %v9793
        %v9795 = vshrl.u32 %v9692, 16
        %v9797 = vrot.slane %v9795, 4
        %v9798 = vor.u32 %v9797, %v9793
        %v9799 = vrot.slane %v9798, 4
        %v9801 = vshll.u32 %v9693, 16
        %v9803 = vrot.slane %v9801, 5
        %v9804 = vsel %vm1017, %v9799, %v9803
        %v9806 = vshrl.u32 %v9694, 16
        %v9808 = vrot.slane %v9806, 4
        %v9809 = vshll.u32 %v9694, 16
        %v9811 = vrot.slane %v9809, 5
        %v9812 = vor.u32 %v9808, %v9811
        %v9813 = vrot.slane %v9812, 4
        %v9815 = vshll.u32 %v9695, 16
        %v9817 = vrot.slane %v9815, 5
        %v9818 = vsel %vm1017, %v9813, %v9817
        %v9819 = vshrl.u32 %v9695, 16
        %v9821 = vrot.slane %v9819, 4
        %v9822 = vor.u32 %v9821, %v9817
        %v9823 = vrot.slane %v9822, 4
        %v9825 = vshll.u32 %v9696, 16
        %v9827 = vrot.slane %v9825, 5
        %v9828 = vsel %vm1017, %v9823, %v9827
        %v9830 = vshrl.u32 %v9697, 16
        %v9832 = vrot.slane %v9830, 4
        %v9833 = vshll.u32 %v9697, 16
        %v9835 = vrot.slane %v9833, 5
        %v9836 = vor.u32 %v9832, %v9835
        %v9837 = vrot.slane %v9836, 4
        %v9839 = vshll.u32 %v9698, 16
        %v9841 = vrot.slane %v9839, 5
        %v9842 = vsel %vm1017, %v9837, %v9841
        %v9843 = vshrl.u32 %v9698, 16
        %v9845 = vrot.slane %v9843, 4
        %v9846 = vor.u32 %v9845, %v9841
        %v9847 = vrot.slane %v9846, 4
        %v9849 = vshll.u32 %v9699, 16
        %v9851 = vrot.slane %v9849, 5
        %v9852 = vsel %vm1017, %v9847, %v9851
        %v9854 = vshrl.u32 %v9700, 16
        %v9856 = vrot.slane %v9854, 4
        %v9857 = vshll.u32 %v9700, 16
        %v9859 = vrot.slane %v9857, 5
        %v9860 = vor.u32 %v9856, %v9859
        %v9861 = vrot.slane %v9860, 4
        %v9863 = vshll.u32 %v9701, 16
        %v9865 = vrot.slane %v9863, 5
        %v9866 = vsel %vm1017, %v9861, %v9865
        %v9867 = vshrl.u32 %v9701, 16
        %v9869 = vrot.slane %v9867, 4
        %v9870 = vor.u32 %v9869, %v9865
        %v9871 = vrot.slane %v9870, 4
        %v9873 = vshll.u32 %v9702, 16
        %v9875 = vrot.slane %v9873, 5
        %v9876 = vsel %vm1017, %v9871, %v9875
        %v9878 = vshrl.u32 %v9703, 16
        %v9880 = vrot.slane %v9878, 4
        %v9881 = vshll.u32 %v9703, 16
        %v9883 = vrot.slane %v9881, 5
        %v9884 = vor.u32 %v9880, %v9883
        %v9885 = vrot.slane %v9884, 4
        %v9887 = vshll.u32 %v9704, 16
        %v9889 = vrot.slane %v9887, 5
        %v9890 = vsel %vm1017, %v9885, %v9889
        %v9891 = vshrl.u32 %v9704, 16
        %v9893 = vrot.slane %v9891, 4
        %v9894 = vor.u32 %v9893, %v9889
        %v9895 = vrot.slane %v9894, 4
        %v9897 = vshll.u32 %v9705, 16
        %v9899 = vrot.slane %v9897, 5
        %v9900 = vsel %vm1017, %v9895, %v9899
        %v9902 = vshrl.u32 %v9706, 16
        %v9904 = vrot.slane %v9902, 4
        %v9905 = vshll.u32 %v9706, 16
        %v9907 = vrot.slane %v9905, 5
        %v9908 = vor.u32 %v9904, %v9907
        %v9909 = vrot.slane %v9908, 4
        %v9911 = vshll.u32 %v9707, 16
        %v9913 = vrot.slane %v9911, 5
        %v9914 = vsel %vm1017, %v9909, %v9913
        %v9915 = vshrl.u32 %v9707, 16
        %v9917 = vrot.slane %v9915, 4
        %v9918 = vor.u32 %v9917, %v9913
        %v9919 = vrot.slane %v9918, 4
        %v9921 = vshll.u32 %v9708, 16
        %v9923 = vrot.slane %v9921, 5
        %v9924 = vsel %vm1017, %v9919, %v9923
        %v9926 = vshrl.u32 %v9709, 16
        %v9928 = vrot.slane %v9926, 4
        %v9929 = vshll.u32 %v9709, 16
        %v9931 = vrot.slane %v9929, 5
        %v9932 = vor.u32 %v9928, %v9931
        %v9933 = vrot.slane %v9932, 4
        %v9935 = vshll.u32 %v9710, 16
        %v9937 = vrot.slane %v9935, 5
        %v9938 = vsel %vm1017, %v9933, %v9937
        %v9939 = vshrl.u32 %v9710, 16
        %v9941 = vrot.slane %v9939, 4
        %v9942 = vor.u32 %v9941, %v9937
        %v9943 = vrot.slane %v9942, 4
        %v9945 = vshll.u32 %v9711, 16
        %v9947 = vrot.slane %v9945, 5
        %v9948 = vsel %vm1017, %v9943, %v9947
        %v9950 = vshrl.u32 %v9712, 16
        %v9952 = vrot.slane %v9950, 4
        %v9953 = vshll.u32 %v9712, 16
        %v9955 = vrot.slane %v9953, 5
        %v9956 = vor.u32 %v9952, %v9955
        %v9957 = vrot.slane %v9956, 4
        %v9959 = vshll.u32 %v9713, 16
        %v9961 = vrot.slane %v9959, 5
        %v9962 = vsel %vm1017, %v9957, %v9961
        %v9963 = vshrl.u32 %v9713, 16
        %v9965 = vrot.slane %v9963, 4
        %v9966 = vor.u32 %v9965, %v9961
        %v9967 = vrot.slane %v9966, 4
        %v9969 = vshll.u32 %v9714, 16
        %v9971 = vrot.slane %v9969, 5
        %v9972 = vsel %vm1017, %v9967, %v9971
        %v9974 = vshrl.u32 %v9715, 16
        %v9976 = vrot.slane %v9974, 4
        %v9977 = vshll.u32 %v9715, 16
        %v9979 = vrot.slane %v9977, 5
        %v9980 = vor.u32 %v9976, %v9979
        %v9981 = vrot.slane %v9980, 4
        %v9983 = vshll.u32 %v9716, 16
        %v9985 = vrot.slane %v9983, 5
        %v9986 = vsel %vm1017, %v9981, %v9985
        %v9987 = vshrl.u32 %v9716, 16
        %v9989 = vrot.slane %v9987, 4
        %v9990 = vor.u32 %v9989, %v9985
        %v9991 = vrot.slane %v9990, 4
        %v9993 = vshll.u32 %v9717, 16
        %v9995 = vrot.slane %v9993, 5
        %v9996 = vsel %vm1017, %v9991, %v9995
        %v9998 = vshrl.u32 %v9718, 16
        %v10000 = vrot.slane %v9998, 4
        %v10001 = vshll.u32 %v9718, 16
        %v10003 = vrot.slane %v10001, 5
        %v10004 = vor.u32 %v10000, %v10003
        %v10005 = vrot.slane %v10004, 4
        %v10007 = vshll.u32 %v9719, 16
        %v10009 = vrot.slane %v10007, 5
        %v10010 = vsel %vm1017, %v10005, %v10009
        %v10011 = vshrl.u32 %v9719, 16
        %v10013 = vrot.slane %v10011, 4
        %v10014 = vor.u32 %v10013, %v10009
        %v10015 = vrot.slane %v10014, 4
        %v10017 = vshll.u32 %v9720, 16
        %v10019 = vrot.slane %v10017, 5
        %v10020 = vsel %vm1017, %v10015, %v10019
        %v10022 = vshrl.u32 %v9721, 16
        %v10024 = vrot.slane %v10022, 4
        %v10025 = vshll.u32 %v9721, 16
        %v10027 = vrot.slane %v10025, 5
        %v10028 = vor.u32 %v10024, %v10027
        %v10029 = vrot.slane %v10028, 4
        %v10031 = vshll.u32 %v9722, 16
        %v10033 = vrot.slane %v10031, 5
        %v10034 = vsel %vm1017, %v10029, %v10033
        %v10035 = vshrl.u32 %v9722, 16
        %v10037 = vrot.slane %v10035, 4
        %v10038 = vor.u32 %v10037, %v10033
        %v10039 = vrot.slane %v10038, 4
        %v10041 = vshll.u32 %v9723, 16
        %v10043 = vrot.slane %v10041, 5
        %v10044 = vsel %vm1017, %v10039, %v10043
        %v10046 = vshrl.u32 %v9724, 16
        %v10048 = vrot.slane %v10046, 4
        %v10049 = vshll.u32 %v9724, 16
        %v10051 = vrot.slane %v10049, 5
        %v10052 = vor.u32 %v10048, %v10051
        %v10053 = vrot.slane %v10052, 4
        %v10055 = vshll.u32 %v9725, 16
        %v10057 = vrot.slane %v10055, 5
        %v10058 = vsel %vm1017, %v10053, %v10057
        %v10059 = vshrl.u32 %v9725, 16
        %v10061 = vrot.slane %v10059, 4
        %v10062 = vor.u32 %v10061, %v10057
        %v10063 = vrot.slane %v10062, 4
        %v10065 = vshll.u32 %v9726, 16
        %v10067 = vrot.slane %v10065, 5
        %v10068 = vsel %vm1017, %v10063, %v10067
        %v10070 = vshrl.u32 %v9727, 16
        %v10072 = vrot.slane %v10070, 4
        %v10073 = vshll.u32 %v9727, 16
        %v10075 = vrot.slane %v10073, 5
        %v10076 = vor.u32 %v10072, %v10075
        %v10077 = vrot.slane %v10076, 4
        %v10079 = vshll.u32 %v9728, 16
        %v10081 = vrot.slane %v10079, 5
        %v10082 = vsel %vm1017, %v10077, %v10081
        %v10083 = vshrl.u32 %v9728, 16
        %v10085 = vrot.slane %v10083, 4
        %v10086 = vor.u32 %v10085, %v10081
        %v10087 = vrot.slane %v10086, 4
        %v10089 = vshll.u32 %v9729, 16
        %v10091 = vrot.slane %v10089, 5
        %v10092 = vsel %vm1017, %v10087, %v10091
        %v10094 = vshrl.u32 %v9730, 16
        %v10096 = vrot.slane %v10094, 4
        %v10097 = vshll.u32 %v9730, 16
        %v10099 = vrot.slane %v10097, 5
        %v10100 = vor.u32 %v10096, %v10099
        %v10101 = vrot.slane %v10100, 4
        %v10103 = vshll.u32 %v9731, 16
        %v10105 = vrot.slane %v10103, 5
        %v10106 = vsel %vm1017, %v10101, %v10105
        %v10107 = vshrl.u32 %v9731, 16
        %v10109 = vrot.slane %v10107, 4
        %v10110 = vor.u32 %v10109, %v10105
        %v10111 = vrot.slane %v10110, 4
        %v10113 = vshll.u32 %v9732, 16
        %v10115 = vrot.slane %v10113, 5
        %v10116 = vsel %vm1017, %v10111, %v10115
        %s10117 = scalar_lea.vmem %s3, 112
        %v10118 = vld [vmem:[%s10117] sm:$0xf]
        %v10119 = vld [vmem:[%s10117 + $0x4] sm:$0xf]
        %v10120 = vld [vmem:[%s10117 + $0x8] sm:$0xf]
        %v10121 = vld [vmem:[%s10117 + $0xc] sm:$0xf]
        %v10122 = vunpack.c.l.b16 %v9746
        %v10123 = vunpack.c.l.b16 %v9756
        %v10124 = vunpack.c.l.b16 %v9770
        %v10125 = vunpack.c.l.b16 %v9780
        %v10126 = vunpack.c.l.b16 %v9794
        %v10127 = vunpack.c.l.b16 %v9804
        %v10128 = vunpack.c.l.b16 %v9818
        %v10129 = vunpack.c.l.b16 %v9828
        %v10130 = vunpack.c.l.b16 %v9842
        %v10131 = vunpack.c.l.b16 %v9852
        %v10132 = vunpack.c.l.b16 %v9866
        %v10133 = vunpack.c.l.b16 %v9876
        %v10134 = vunpack.c.l.b16 %v9890
        %v10135 = vunpack.c.l.b16 %v9900
        %v10136 = vunpack.c.l.b16 %v9914
        %v10137 = vunpack.c.l.b16 %v9924
        %v10138 = vunpack.c.l.b16 %v9938
        %v10139 = vunpack.c.l.b16 %v9948
        %v10140 = vunpack.c.l.b16 %v9962
        %v10141 = vunpack.c.l.b16 %v9972
        %v10142 = vunpack.c.l.b16 %v9986
        %v10143 = vunpack.c.l.b16 %v9996
        %v10144 = vunpack.c.l.b16 %v10010
        %v10145 = vunpack.c.l.b16 %v10020
        %v10146 = vunpack.c.l.b16 %v10034
        %v10147 = vunpack.c.l.b16 %v10044
        %v10148 = vunpack.c.l.b16 %v10058
        %v10149 = vunpack.c.l.b16 %v10068
        %v10150 = vunpack.c.l.b16 %v10082
        %v10151 = vunpack.c.l.b16 %v10092
        %v10152 = vunpack.c.l.b16 %v10106
        %v10153 = vunpack.c.l.b16 %v10116
        %v10154 = vpack.c.b16 %v10123, %v10122
        %v10155 = vpack.c.b16 %v10125, %v10124
        %v10156 = vpack.c.b16 %v10127, %v10126
        %v10157 = vpack.c.b16 %v10129, %v10128
        %v10158 = vpack.c.b16 %v10131, %v10130
        %v10159 = vpack.c.b16 %v10133, %v10132
        %v10160 = vpack.c.b16 %v10135, %v10134
        %v10161 = vpack.c.b16 %v10137, %v10136
        %v10162 = vpack.c.b16 %v10139, %v10138
        %v10163 = vpack.c.b16 %v10141, %v10140
        %v10164 = vpack.c.b16 %v10143, %v10142
        %v10165 = vpack.c.b16 %v10145, %v10144
        %v10166 = vpack.c.b16 %v10147, %v10146
        %v10167 = vpack.c.b16 %v10149, %v10148
        %v10168 = vpack.c.b16 %v10151, %v10150
        %v10169 = vpack.c.b16 %v10153, %v10152
        %v10174 = vunpack.c.l.b16 %v10118
        %v10175 = vunpack.c.l.b16 %v10119
        %v10176 = vunpack.c.l.b16 %v10120
        %v10177 = vunpack.c.l.b16 %v10121
        %v10178 = vpack.c.b16 %v10175, %v10174
        %v10179 = vpack.c.b16 %v10177, %v10176
        %v10183 = vsel %vm6747, %v10154, 0
        %v10186 = vsel %vm6747, %v10155, 0
        %v10189 = vsel %vm6747, %v10156, 0
        %v10192 = vsel %vm6747, %v10157, 0
        %v10195 = vsel %vm6747, %v10158, 0
        %v10198 = vsel %vm6747, %v10159, 0
        %v10201 = vsel %vm6747, %v10160, 0
        %v10204 = vsel %vm6747, %v10161, 0
        %v10207 = vsel %vm6747, %v10162, 0
        %v10210 = vsel %vm6747, %v10163, 0
        %v10213 = vsel %vm6747, %v10164, 0
        %v10216 = vsel %vm6747, %v10165, 0
        %v10219 = vsel %vm6747, %v10166, 0
        %v10222 = vsel %vm6747, %v10167, 0
        %v10225 = vsel %vm6747, %v10168, 0
        %v10228 = vsel %vm6747, %v10169, 0
        %10230 = vmatprep.subr.bf16.mxu0 0
        %10231 = vmatpush1.bf16.msra.mxu0 %v10178
        %10232 = vmatprep.subr.bf16.mxu0 0
        %10233 = vmatpush1.bf16.msra.mxu0 %v10179
        %10234 = vmatprep.subr.bf16.mxu0 0
        %10235 = vmatpush1.bf16.msra.mxu0 0
        %10236 = vmatprep.subr.bf16.mxu0 0
        %10237 = vmatpush1.bf16.msra.mxu0 0
        %10238 = vmatprep.subr.bf16.mxu0 0
        %10239 = vmatpush1.bf16.msra.mxu0 0
        %10240 = vmatprep.subr.bf16.mxu0 0
        %10241 = vmatpush1.bf16.msra.mxu0 0
        %10242 = vmatprep.subr.bf16.mxu0 0
        %10243 = vmatpush1.bf16.msra.mxu0 0
        %10244 = vmatprep.subr.bf16.mxu0 0
        %10245 = vmatpush1.bf16.msra.mxu0 0
        %10246 = vmatprep.subr.bf16.mxu0 0
        %10247 = vmatpush1.bf16.msra.mxu0 0
        %10248 = vmatprep.subr.bf16.mxu0 0
        %10249 = vmatpush1.bf16.msra.mxu0 0
        %10250 = vmatprep.subr.bf16.mxu0 0
        %10251 = vmatpush1.bf16.msra.mxu0 0
        %10252 = vmatprep.subr.bf16.mxu0 0
        %10253 = vmatpush1.bf16.msra.mxu0 0
        %10254 = vmatprep.subr.bf16.mxu0 0
        %10255 = vmatpush1.bf16.msra.mxu0 0
        %10256 = vmatprep.subr.bf16.mxu0 0
        %10257 = vmatpush1.bf16.msra.mxu0 0
        %10258 = vmatprep.subr.bf16.mxu0 0
        %10259 = vmatpush1.bf16.msra.mxu0 0
        %10260 = vmatprep.subr.bf16.mxu0 0
        %10261 = vmatpush1.bf16.msra.mxu0 0
        %10262 = vmatprep.mubr.bf16.mxu0 0
        %10263 = vmatmul.mubr.bf16.gmra.mrb[0].mxu0 %v10183
        %v10264 = vpop.f32.mrb[0].mxu0
        %v10265 = vadd.f32 0.0, %v10264
        %v10266 = vpop.f32.mrb[0].mxu0
        %v10267 = vpop.f32.mrb[0].mxu0
        %v10268 = vadd.f32 0.0, %v10267
        %v10269 = vpop.f32.mrb[0].mxu0
        %10270 = vmatprep.mubr.bf16.mxu0 0
        %10271 = vmatmul.mubr.bf16.gmra.mrb[0].mxu0 %v10186
        %v10272 = vpop.f32.mrb[0].mxu0
        %v10273 = vadd.f32 0.0, %v10272
        %v10274 = vpop.f32.mrb[0].mxu0
        %v10275 = vpop.f32.mrb[0].mxu0
        %v10276 = vadd.f32 0.0, %v10275
        %v10277 = vpop.f32.mrb[0].mxu0
        %10278 = vmatprep.mubr.bf16.mxu0 0
        %10279 = vmatmul.mubr.bf16.gmra.mrb[0].mxu0 %v10189
        %v10280 = vpop.f32.mrb[0].mxu0
        %v10281 = vadd.f32 0.0, %v10280
        %v10282 = vpop.f32.mrb[0].mxu0
        %v10283 = vpop.f32.mrb[0].mxu0
        %v10284 = vadd.f32 0.0, %v10283
        %v10285 = vpop.f32.mrb[0].mxu0
        %10286 = vmatprep.mubr.bf16.mxu0 0
        %10287 = vmatmul.mubr.bf16.gmra.mrb[0].mxu0 %v10192
        %v10288 = vpop.f32.mrb[0].mxu0
        %v10289 = vadd.f32 0.0, %v10288
        %v10290 = vpop.f32.mrb[0].mxu0
        %v10291 = vpop.f32.mrb[0].mxu0
        %v10292 = vadd.f32 0.0, %v10291
        %v10293 = vpop.f32.mrb[0].mxu0
        %10294 = vmatprep.mubr.bf16.mxu0 0
        %10295 = vmatmul.mubr.bf16.gmra.mrb[0].mxu0 %v10195
        %v10296 = vpop.f32.mrb[0].mxu0
        %v10297 = vadd.f32 0.0, %v10296
        %v10298 = vpop.f32.mrb[0].mxu0
        %v10299 = vpop.f32.mrb[0].mxu0
        %v10300 = vadd.f32 0.0, %v10299
        %v10301 = vpop.f32.mrb[0].mxu0
        %10302 = vmatprep.mubr.bf16.mxu0 0
        %10303 = vmatmul.mubr.bf16.gmra.mrb[0].mxu0 %v10198
        %v10304 = vpop.f32.mrb[0].mxu0
        %v10305 = vadd.f32 0.0, %v10304
        %v10306 = vpop.f32.mrb[0].mxu0
        %v10307 = vpop.f32.mrb[0].mxu0
        %v10308 = vadd.f32 0.0, %v10307
        %v10309 = vpop.f32.mrb[0].mxu0
        %10310 = vmatprep.mubr.bf16.mxu0 0
        %10311 = vmatmul.mubr.bf16.gmra.mrb[0].mxu0 %v10201
        %v10312 = vpop.f32.mrb[0].mxu0
        %v10313 = vadd.f32 0.0, %v10312
        %v10314 = vpop.f32.mrb[0].mxu0
        %v10315 = vpop.f32.mrb[0].mxu0
        %v10316 = vadd.f32 0.0, %v10315
        %v10317 = vpop.f32.mrb[0].mxu0
        %10318 = vmatprep.mubr.bf16.mxu0 0
        %10319 = vmatmul.mubr.bf16.gmra.mrb[0].mxu0 %v10204
        %v10320 = vpop.f32.mrb[0].mxu0
        %v10321 = vadd.f32 0.0, %v10320
        %v10322 = vpop.f32.mrb[0].mxu0
        %v10323 = vpop.f32.mrb[0].mxu0
        %v10324 = vadd.f32 0.0, %v10323
        %v10325 = vpop.f32.mrb[0].mxu0
        %10326 = vmatprep.mubr.bf16.mxu0 0
        %10327 = vmatmul.mubr.bf16.gmra.mrb[0].mxu0 %v10207
        %v10328 = vpop.f32.mrb[0].mxu0
        %v10329 = vadd.f32 0.0, %v10328
        %v10330 = vpop.f32.mrb[0].mxu0
        %v10331 = vpop.f32.mrb[0].mxu0
        %v10332 = vadd.f32 0.0, %v10331
        %v10333 = vpop.f32.mrb[0].mxu0
        %10334 = vmatprep.mubr.bf16.mxu0 0
        %10335 = vmatmul.mubr.bf16.gmra.mrb[0].mxu0 %v10210
        %v10336 = vpop.f32.mrb[0].mxu0
        %v10337 = vadd.f32 0.0, %v10336
        %v10338 = vpop.f32.mrb[0].mxu0
        %v10339 = vpop.f32.mrb[0].mxu0
        %v10340 = vadd.f32 0.0, %v10339
        %v10341 = vpop.f32.mrb[0].mxu0
        %10342 = vmatprep.mubr.bf16.mxu0 0
        %10343 = vmatmul.mubr.bf16.gmra.mrb[0].mxu0 %v10213
        %v10344 = vpop.f32.mrb[0].mxu0
        %v10345 = vadd.f32 0.0, %v10344
        %v10346 = vpop.f32.mrb[0].mxu0
        %v10347 = vpop.f32.mrb[0].mxu0
        %v10348 = vadd.f32 0.0, %v10347
        %v10349 = vpop.f32.mrb[0].mxu0
        %10350 = vmatprep.mubr.bf16.mxu0 0
        %10351 = vmatmul.mubr.bf16.gmra.mrb[0].mxu0 %v10216
        %v10352 = vpop.f32.mrb[0].mxu0
        %v10353 = vadd.f32 0.0, %v10352
        %v10354 = vpop.f32.mrb[0].mxu0
        %v10355 = vpop.f32.mrb[0].mxu0
        %v10356 = vadd.f32 0.0, %v10355
        %v10357 = vpop.f32.mrb[0].mxu0
        %10358 = vmatprep.mubr.bf16.mxu0 0
        %10359 = vmatmul.mubr.bf16.gmra.mrb[0].mxu0 %v10219
        %v10360 = vpop.f32.mrb[0].mxu0
        %v10361 = vadd.f32 0.0, %v10360
        %v10362 = vpop.f32.mrb[0].mxu0
        %v10363 = vpop.f32.mrb[0].mxu0
        %v10364 = vadd.f32 0.0, %v10363
        %v10365 = vpop.f32.mrb[0].mxu0
        %10366 = vmatprep.mubr.bf16.mxu0 0
        %10367 = vmatmul.mubr.bf16.gmra.mrb[0].mxu0 %v10222
        %v10368 = vpop.f32.mrb[0].mxu0
        %v10369 = vadd.f32 0.0, %v10368
        %v10370 = vpop.f32.mrb[0].mxu0
        %v10371 = vpop.f32.mrb[0].mxu0
        %v10372 = vadd.f32 0.0, %v10371
        %v10373 = vpop.f32.mrb[0].mxu0
        %10374 = vmatprep.mubr.bf16.mxu0 0
        %10375 = vmatmul.mubr.bf16.gmra.mrb[0].mxu0 %v10225
        %v10376 = vpop.f32.mrb[0].mxu0
        %v10377 = vadd.f32 0.0, %v10376
        %v10378 = vpop.f32.mrb[0].mxu0
        %v10379 = vpop.f32.mrb[0].mxu0
        %v10380 = vadd.f32 0.0, %v10379
        %v10381 = vpop.f32.mrb[0].mxu0
        %10382 = vmatprep.mubr.bf16.mxu0 0
        %10383 = vmatmul.mubr.bf16.gmra.mrb[0].mxu0 %v10228
        %v10384 = vpop.f32.mrb[0].mxu0
        %v10385 = vadd.f32 0.0, %v10384
        %v10386 = vpop.f32.mrb[0].mxu0
        %v10387 = vpop.f32.mrb[0].mxu0
        %v10388 = vadd.f32 0.0, %v10387
        %v10389 = vpop.f32.mrb[0].mxu0
        %10390 = vdwg.mxu0
        %v10391 = vadd.f32 %v9653, %v10265
        %v10392 = vadd.f32 %v9654, %v10268
        %v10393 = vadd.f32 %v9655, %v10273
        %v10394 = vadd.f32 %v9656, %v10276
        %v10395 = vadd.f32 %v9657, %v10281
        %v10396 = vadd.f32 %v9658, %v10284
        %v10397 = vadd.f32 %v9659, %v10289
        %v10398 = vadd.f32 %v9660, %v10292
        %v10399 = vadd.f32 %v9661, %v10297
        %v10400 = vadd.f32 %v9662, %v10300
        %v10401 = vadd.f32 %v9663, %v10305
        %v10402 = vadd.f32 %v9664, %v10308
        %v10403 = vadd.f32 %v9665, %v10313
        %v10404 = vadd.f32 %v9666, %v10316
        %v10405 = vadd.f32 %v9667, %v10321
        %v10406 = vadd.f32 %v9668, %v10324
        %v10407 = vadd.f32 %v9669, %v10329
        %v10408 = vadd.f32 %v9670, %v10332
        %v10409 = vadd.f32 %v9671, %v10337
        %v10410 = vadd.f32 %v9672, %v10340
        %v10411 = vadd.f32 %v9673, %v10345
        %v10412 = vadd.f32 %v9674, %v10348
        %v10413 = vadd.f32 %v9675, %v10353
        %v10414 = vadd.f32 %v9676, %v10356
        %v10415 = vadd.f32 %v9677, %v10361
        %v10416 = vadd.f32 %v9678, %v10364
        %v10417 = vadd.f32 %v9679, %v10369
        %v10418 = vadd.f32 %v9680, %v10372
        %v10419 = vadd.f32 %v9681, %v10377
        %v10420 = vadd.f32 %v9682, %v10380
        %v10421 = vadd.f32 %v9683, %v10385
        %v10422 = vadd.f32 %v9684, %v10388
        %v10423 = vld [vmem:[%s9314] sm:$0xe]
        %v10424 = vld [vmem:[%s9314 + $0xc] sm:$0xe]
        %v10425 = vld [vmem:[%s9314 + $0x18] sm:$0xe]
        %v10426 = vld [vmem:[%s9314 + $0x24] sm:$0xe]
        %v10427 = vld [vmem:[%s9314 + $0x30] sm:$0xe]
        %v10428 = vld [vmem:[%s9314 + $0x3c] sm:$0xe]
        %v10429 = vld [vmem:[%s9314 + $0x48] sm:$0xe]
        %v10430 = vld [vmem:[%s9314 + $0x54] sm:$0xe]
        %v10431 = vld [vmem:[%s9314 + $0x60] sm:$0xe]
        %v10432 = vld [vmem:[%s9314 + $0x6c] sm:$0xe]
        %v10433 = vld [vmem:[%s9314 + $0x78] sm:$0xe]
        %v10434 = vld [vmem:[%s9314 + $0x84] sm:$0xe]
        %v10435 = vld [vmem:[%s9314 + $0x90] sm:$0xe]
        %v10436 = vld [vmem:[%s9314 + $0x9c] sm:$0xe]
        %v10437 = vld [vmem:[%s9314 + $0xa8] sm:$0xe]
        %v10438 = vld [vmem:[%s9314 + $0xb4] sm:$0xe]
        %v10487 = vrot.slane %v10423, 5
        %v10488 = vrot.slane %v10487, 4
        %v10489 = vrot.slane %v9686, 5
        %v10490 = vsel %vm2008, %v10488, %v10489
        %v10491 = vrot.slane %v10489, 4
        %v10492 = vrot.slane %v9687, 5
        %v10493 = vsel %vm2008, %v10491, %v10492
        %v10494 = vrot.slane %v10424, 5
        %v10495 = vrot.slane %v10494, 4
        %v10496 = vrot.slane %v9689, 5
        %v10497 = vsel %vm2008, %v10495, %v10496
        %v10498 = vrot.slane %v10496, 4
        %v10499 = vrot.slane %v9690, 5
        %v10500 = vsel %vm2008, %v10498, %v10499
        %v10501 = vrot.slane %v10425, 5
        %v10502 = vrot.slane %v10501, 4
        %v10503 = vrot.slane %v9692, 5
        %v10504 = vsel %vm2008, %v10502, %v10503
        %v10505 = vrot.slane %v10503, 4
        %v10506 = vrot.slane %v9693, 5
        %v10507 = vsel %vm2008, %v10505, %v10506
        %v10508 = vrot.slane %v10426, 5
        %v10509 = vrot.slane %v10508, 4
        %v10510 = vrot.slane %v9695, 5
        %v10511 = vsel %vm2008, %v10509, %v10510
        %v10512 = vrot.slane %v10510, 4
        %v10513 = vrot.slane %v9696, 5
        %v10514 = vsel %vm2008, %v10512, %v10513
        %v10515 = vrot.slane %v10427, 5
        %v10516 = vrot.slane %v10515, 4
        %v10517 = vrot.slane %v9698, 5
        %v10518 = vsel %vm2008, %v10516, %v10517
        %v10519 = vrot.slane %v10517, 4
        %v10520 = vrot.slane %v9699, 5
        %v10521 = vsel %vm2008, %v10519, %v10520
        %v10522 = vrot.slane %v10428, 5
        %v10523 = vrot.slane %v10522, 4
        %v10524 = vrot.slane %v9701, 5
        %v10525 = vsel %vm2008, %v10523, %v10524
        %v10526 = vrot.slane %v10524, 4
        %v10527 = vrot.slane %v9702, 5
        %v10528 = vsel %vm2008, %v10526, %v10527
        %v10529 = vrot.slane %v10429, 5
        %v10530 = vrot.slane %v10529, 4
        %v10531 = vrot.slane %v9704, 5
        %v10532 = vsel %vm2008, %v10530, %v10531
        %v10533 = vrot.slane %v10531, 4
        %v10534 = vrot.slane %v9705, 5
        %v10535 = vsel %vm2008, %v10533, %v10534
        %v10536 = vrot.slane %v10430, 5
        %v10537 = vrot.slane %v10536, 4
        %v10538 = vrot.slane %v9707, 5
        %v10539 = vsel %vm2008, %v10537, %v10538
        %v10540 = vrot.slane %v10538, 4
        %v10541 = vrot.slane %v9708, 5
        %v10542 = vsel %vm2008, %v10540, %v10541
        %v10543 = vrot.slane %v10431, 5
        %v10544 = vrot.slane %v10543, 4
        %v10545 = vrot.slane %v9710, 5
        %v10546 = vsel %vm2008, %v10544, %v10545
        %v10547 = vrot.slane %v10545, 4
        %v10548 = vrot.slane %v9711, 5
        %v10549 = vsel %vm2008, %v10547, %v10548
        %v10550 = vrot.slane %v10432, 5
        %v10551 = vrot.slane %v10550, 4
        %v10552 = vrot.slane %v9713, 5
        %v10553 = vsel %vm2008, %v10551, %v10552
        %v10554 = vrot.slane %v10552, 4
        %v10555 = vrot.slane %v9714, 5
        %v10556 = vsel %vm2008, %v10554, %v10555
        %v10557 = vrot.slane %v10433, 5
        %v10558 = vrot.slane %v10557, 4
        %v10559 = vrot.slane %v9716, 5
        %v10560 = vsel %vm2008, %v10558, %v10559
        %v10561 = vrot.slane %v10559, 4
        %v10562 = vrot.slane %v9717, 5
        %v10563 = vsel %vm2008, %v10561, %v10562
        %v10564 = vrot.slane %v10434, 5
        %v10565 = vrot.slane %v10564, 4
        %v10566 = vrot.slane %v9719, 5
        %v10567 = vsel %vm2008, %v10565, %v10566
        %v10568 = vrot.slane %v10566, 4
        %v10569 = vrot.slane %v9720, 5
        %v10570 = vsel %vm2008, %v10568, %v10569
        %v10571 = vrot.slane %v10435, 5
        %v10572 = vrot.slane %v10571, 4
        %v10573 = vrot.slane %v9722, 5
        %v10574 = vsel %vm2008, %v10572, %v10573
        %v10575 = vrot.slane %v10573, 4
        %v10576 = vrot.slane %v9723, 5
        %v10577 = vsel %vm2008, %v10575, %v10576
        %v10578 = vrot.slane %v10436, 5
        %v10579 = vrot.slane %v10578, 4
        %v10580 = vrot.slane %v9725, 5
        %v10581 = vsel %vm2008, %v10579, %v10580
        %v10582 = vrot.slane %v10580, 4
        %v10583 = vrot.slane %v9726, 5
        %v10584 = vsel %vm2008, %v10582, %v10583
        %v10585 = vrot.slane %v10437, 5
        %v10586 = vrot.slane %v10585, 4
        %v10587 = vrot.slane %v9728, 5
        %v10588 = vsel %vm2008, %v10586, %v10587
        %v10589 = vrot.slane %v10587, 4
        %v10590 = vrot.slane %v9729, 5
        %v10591 = vsel %vm2008, %v10589, %v10590
        %v10592 = vrot.slane %v10438, 5
        %v10593 = vrot.slane %v10592, 4
        %v10594 = vrot.slane %v9731, 5
        %v10595 = vsel %vm2008, %v10593, %v10594
        %v10596 = vrot.slane %v10594, 4
        %v10597 = vrot.slane %v9732, 5
        %v10598 = vsel %vm2008, %v10596, %v10597
        %s10599 = scalar_lea.vmem %s3, 128
        %v10600 = vld [vmem:[%s10599] sm:$0xf]
        %v10601 = vld [vmem:[%s10599 + $0x4] sm:$0xf]
        %v10602 = vld [vmem:[%s10599 + $0x8] sm:$0xf]
        %v10603 = vld [vmem:[%s10599 + $0xc] sm:$0xf]
        %v10604 = vunpack.c.l.b16 %v10490
        %v10605 = vunpack.c.l.b16 %v10493
        %v10606 = vunpack.c.l.b16 %v10497
        %v10607 = vunpack.c.l.b16 %v10500
        %v10608 = vunpack.c.l.b16 %v10504
        %v10609 = vunpack.c.l.b16 %v10507
        %v10610 = vunpack.c.l.b16 %v10511
        %v10611 = vunpack.c.l.b16 %v10514
        %v10612 = vunpack.c.l.b16 %v10518
        %v10613 = vunpack.c.l.b16 %v10521
        %v10614 = vunpack.c.l.b16 %v10525
        %v10615 = vunpack.c.l.b16 %v10528
        %v10616 = vunpack.c.l.b16 %v10532
        %v10617 = vunpack.c.l.b16 %v10535
        %v10618 = vunpack.c.l.b16 %v10539
        %v10619 = vunpack.c.l.b16 %v10542
        %v10620 = vunpack.c.l.b16 %v10546
        %v10621 = vunpack.c.l.b16 %v10549
        %v10622 = vunpack.c.l.b16 %v10553
        %v10623 = vunpack.c.l.b16 %v10556
        %v10624 = vunpack.c.l.b16 %v10560
        %v10625 = vunpack.c.l.b16 %v10563
        %v10626 = vunpack.c.l.b16 %v10567
        %v10627 = vunpack.c.l.b16 %v10570
        %v10628 = vunpack.c.l.b16 %v10574
        %v10629 = vunpack.c.l.b16 %v10577
        %v10630 = vunpack.c.l.b16 %v10581
        %v10631 = vunpack.c.l.b16 %v10584
        %v10632 = vunpack.c.l.b16 %v10588
        %v10633 = vunpack.c.l.b16 %v10591
        %v10634 = vunpack.c.l.b16 %v10595
        %v10635 = vunpack.c.l.b16 %v10598
        %v10636 = vpack.c.b16 %v10605, %v10604
        %v10637 = vpack.c.b16 %v10607, %v10606
        %v10638 = vpack.c.b16 %v10609, %v10608
        %v10639 = vpack.c.b16 %v10611, %v10610
        %v10640 = vpack.c.b16 %v10613, %v10612
        %v10641 = vpack.c.b16 %v10615, %v10614
        %v10642 = vpack.c.b16 %v10617, %v10616
        %v10643 = vpack.c.b16 %v10619, %v10618
        %v10644 = vpack.c.b16 %v10621, %v10620
        %v10645 = vpack.c.b16 %v10623, %v10622
        %v10646 = vpack.c.b16 %v10625, %v10624
        %v10647 = vpack.c.b16 %v10627, %v10626
        %v10648 = vpack.c.b16 %v10629, %v10628
        %v10649 = vpack.c.b16 %v10631, %v10630
        %v10650 = vpack.c.b16 %v10633, %v10632
        %v10651 = vpack.c.b16 %v10635, %v10634
        %v10656 = vunpack.c.l.b16 %v10600
        %v10657 = vunpack.c.l.b16 %v10601
        %v10658 = vunpack.c.l.b16 %v10602
        %v10659 = vunpack.c.l.b16 %v10603
        %v10660 = vpack.c.b16 %v10657, %v10656
        %v10661 = vpack.c.b16 %v10659, %v10658
        %v10665 = vsel %vm6747, %v10636, 0
        %v10668 = vsel %vm6747, %v10637, 0
        %v10671 = vsel %vm6747, %v10638, 0
        %v10674 = vsel %vm6747, %v10639, 0
        %v10677 = vsel %vm6747, %v10640, 0
        %v10680 = vsel %vm6747, %v10641, 0
        %v10683 = vsel %vm6747, %v10642, 0
        %v10686 = vsel %vm6747, %v10643, 0
        %v10689 = vsel %vm6747, %v10644, 0
        %v10692 = vsel %vm6747, %v10645, 0
        %v10695 = vsel %vm6747, %v10646, 0
        %v10698 = vsel %vm6747, %v10647, 0
        %v10701 = vsel %vm6747, %v10648, 0
        %v10704 = vsel %vm6747, %v10649, 0
        %v10707 = vsel %vm6747, %v10650, 0
        %v10710 = vsel %vm6747, %v10651, 0
        %10712 = vmatprep.subr.bf16.mxu0 0
        %10713 = vmatpush1.bf16.msra.mxu0 %v10660
        %10714 = vmatprep.subr.bf16.mxu0 0
        %10715 = vmatpush1.bf16.msra.mxu0 %v10661
        %10716 = vmatprep.subr.bf16.mxu0 0
        %10717 = vmatpush1.bf16.msra.mxu0 0
        %10718 = vmatprep.subr.bf16.mxu0 0
        %10719 = vmatpush1.bf16.msra.mxu0 0
        %10720 = vmatprep.subr.bf16.mxu0 0
        %10721 = vmatpush1.bf16.msra.mxu0 0
        %10722 = vmatprep.subr.bf16.mxu0 0
        %10723 = vmatpush1.bf16.msra.mxu0 0
        %10724 = vmatprep.subr.bf16.mxu0 0
        %10725 = vmatpush1.bf16.msra.mxu0 0
        %10726 = vmatprep.subr.bf16.mxu0 0
        %10727 = vmatpush1.bf16.msra.mxu0 0
        %10728 = vmatprep.subr.bf16.mxu0 0
        %10729 = vmatpush1.bf16.msra.mxu0 0
        %10730 = vmatprep.subr.bf16.mxu0 0
        %10731 = vmatpush1.bf16.msra.mxu0 0
        %10732 = vmatprep.subr.bf16.mxu0 0
        %10733 = vmatpush1.bf16.msra.mxu0 0
        %10734 = vmatprep.subr.bf16.mxu0 0
        %10735 = vmatpush1.bf16.msra.mxu0 0
        %10736 = vmatprep.subr.bf16.mxu0 0
        %10737 = vmatpush1.bf16.msra.mxu0 0
        %10738 = vmatprep.subr.bf16.mxu0 0
        %10739 = vmatpush1.bf16.msra.mxu0 0
        %10740 = vmatprep.subr.bf16.mxu0 0
        %10741 = vmatpush1.bf16.msra.mxu0 0
        %10742 = vmatprep.subr.bf16.mxu0 0
        %10743 = vmatpush1.bf16.msra.mxu0 0
        %10744 = vmatprep.mubr.bf16.mxu0 0
        %10745 = vmatmul.mubr.bf16.gmra.mrb[0].mxu0 %v10665
        %v10746 = vpop.f32.mrb[0].mxu0
        %v10747 = vadd.f32 0.0, %v10746
        %v10748 = vpop.f32.mrb[0].mxu0
        %v10749 = vpop.f32.mrb[0].mxu0
        %v10750 = vadd.f32 0.0, %v10749
        %v10751 = vpop.f32.mrb[0].mxu0
        %10752 = vmatprep.mubr.bf16.mxu0 0
        %10753 = vmatmul.mubr.bf16.gmra.mrb[0].mxu0 %v10668
        %v10754 = vpop.f32.mrb[0].mxu0
        %v10755 = vadd.f32 0.0, %v10754
        %v10756 = vpop.f32.mrb[0].mxu0
        %v10757 = vpop.f32.mrb[0].mxu0
        %v10758 = vadd.f32 0.0, %v10757
        %v10759 = vpop.f32.mrb[0].mxu0
        %10760 = vmatprep.mubr.bf16.mxu0 0
        %10761 = vmatmul.mubr.bf16.gmra.mrb[0].mxu0 %v10671
        %v10762 = vpop.f32.mrb[0].mxu0
        %v10763 = vadd.f32 0.0, %v10762
        %v10764 = vpop.f32.mrb[0].mxu0
        %v10765 = vpop.f32.mrb[0].mxu0
        %v10766 = vadd.f32 0.0, %v10765
        %v10767 = vpop.f32.mrb[0].mxu0
        %10768 = vmatprep.mubr.bf16.mxu0 0
        %10769 = vmatmul.mubr.bf16.gmra.mrb[0].mxu0 %v10674
        %v10770 = vpop.f32.mrb[0].mxu0
        %v10771 = vadd.f32 0.0, %v10770
        %v10772 = vpop.f32.mrb[0].mxu0
        %v10773 = vpop.f32.mrb[0].mxu0
        %v10774 = vadd.f32 0.0, %v10773
        %v10775 = vpop.f32.mrb[0].mxu0
        %10776 = vmatprep.mubr.bf16.mxu0 0
        %10777 = vmatmul.mubr.bf16.gmra.mrb[0].mxu0 %v10677
        %v10778 = vpop.f32.mrb[0].mxu0
        %v10779 = vadd.f32 0.0, %v10778
        %v10780 = vpop.f32.mrb[0].mxu0
        %v10781 = vpop.f32.mrb[0].mxu0
        %v10782 = vadd.f32 0.0, %v10781
        %v10783 = vpop.f32.mrb[0].mxu0
        %10784 = vmatprep.mubr.bf16.mxu0 0
        %10785 = vmatmul.mubr.bf16.gmra.mrb[0].mxu0 %v10680
        %v10786 = vpop.f32.mrb[0].mxu0
        %v10787 = vadd.f32 0.0, %v10786
        %v10788 = vpop.f32.mrb[0].mxu0
        %v10789 = vpop.f32.mrb[0].mxu0
        %v10790 = vadd.f32 0.0, %v10789
        %v10791 = vpop.f32.mrb[0].mxu0
        %10792 = vmatprep.mubr.bf16.mxu0 0
        %10793 = vmatmul.mubr.bf16.gmra.mrb[0].mxu0 %v10683
        %v10794 = vpop.f32.mrb[0].mxu0
        %v10795 = vadd.f32 0.0, %v10794
        %v10796 = vpop.f32.mrb[0].mxu0
        %v10797 = vpop.f32.mrb[0].mxu0
        %v10798 = vadd.f32 0.0, %v10797
        %v10799 = vpop.f32.mrb[0].mxu0
        %10800 = vmatprep.mubr.bf16.mxu0 0
        %10801 = vmatmul.mubr.bf16.gmra.mrb[0].mxu0 %v10686
        %v10802 = vpop.f32.mrb[0].mxu0
        %v10803 = vadd.f32 0.0, %v10802
        %v10804 = vpop.f32.mrb[0].mxu0
        %v10805 = vpop.f32.mrb[0].mxu0
        %v10806 = vadd.f32 0.0, %v10805
        %v10807 = vpop.f32.mrb[0].mxu0
        %10808 = vmatprep.mubr.bf16.mxu0 0
        %10809 = vmatmul.mubr.bf16.gmra.mrb[0].mxu0 %v10689
        %v10810 = vpop.f32.mrb[0].mxu0
        %v10811 = vadd.f32 0.0, %v10810
        %v10812 = vpop.f32.mrb[0].mxu0
        %v10813 = vpop.f32.mrb[0].mxu0
        %v10814 = vadd.f32 0.0, %v10813
        %v10815 = vpop.f32.mrb[0].mxu0
        %10816 = vmatprep.mubr.bf16.mxu0 0
        %10817 = vmatmul.mubr.bf16.gmra.mrb[0].mxu0 %v10692
        %v10818 = vpop.f32.mrb[0].mxu0
        %v10819 = vadd.f32 0.0, %v10818
        %v10820 = vpop.f32.mrb[0].mxu0
        %v10821 = vpop.f32.mrb[0].mxu0
        %v10822 = vadd.f32 0.0, %v10821
        %v10823 = vpop.f32.mrb[0].mxu0
        %10824 = vmatprep.mubr.bf16.mxu0 0
        %10825 = vmatmul.mubr.bf16.gmra.mrb[0].mxu0 %v10695
        %v10826 = vpop.f32.mrb[0].mxu0
        %v10827 = vadd.f32 0.0, %v10826
        %v10828 = vpop.f32.mrb[0].mxu0
        %v10829 = vpop.f32.mrb[0].mxu0
        %v10830 = vadd.f32 0.0, %v10829
        %v10831 = vpop.f32.mrb[0].mxu0
        %10832 = vmatprep.mubr.bf16.mxu0 0
        %10833 = vmatmul.mubr.bf16.gmra.mrb[0].mxu0 %v10698
        %v10834 = vpop.f32.mrb[0].mxu0
        %v10835 = vadd.f32 0.0, %v10834
        %v10836 = vpop.f32.mrb[0].mxu0
        %v10837 = vpop.f32.mrb[0].mxu0
        %v10838 = vadd.f32 0.0, %v10837
        %v10839 = vpop.f32.mrb[0].mxu0
        %10840 = vmatprep.mubr.bf16.mxu0 0
        %10841 = vmatmul.mubr.bf16.gmra.mrb[0].mxu0 %v10701
        %v10842 = vpop.f32.mrb[0].mxu0
        %v10843 = vadd.f32 0.0, %v10842
        %v10844 = vpop.f32.mrb[0].mxu0
        %v10845 = vpop.f32.mrb[0].mxu0
        %v10846 = vadd.f32 0.0, %v10845
        %v10847 = vpop.f32.mrb[0].mxu0
        %10848 = vmatprep.mubr.bf16.mxu0 0
        %10849 = vmatmul.mubr.bf16.gmra.mrb[0].mxu0 %v10704
        %v10850 = vpop.f32.mrb[0].mxu0
        %v10851 = vadd.f32 0.0, %v10850
        %v10852 = vpop.f32.mrb[0].mxu0
        %v10853 = vpop.f32.mrb[0].mxu0
        %v10854 = vadd.f32 0.0, %v10853
        %v10855 = vpop.f32.mrb[0].mxu0
        %10856 = vmatprep.mubr.bf16.mxu0 0
        %10857 = vmatmul.mubr.bf16.gmra.mrb[0].mxu0 %v10707
        %v10858 = vpop.f32.mrb[0].mxu0
        %v10859 = vadd.f32 0.0, %v10858
        %v10860 = vpop.f32.mrb[0].mxu0
        %v10861 = vpop.f32.mrb[0].mxu0
        %v10862 = vadd.f32 0.0, %v10861
        %v10863 = vpop.f32.mrb[0].mxu0
        %10864 = vmatprep.mubr.bf16.mxu0 0
        %10865 = vmatmul.mubr.bf16.gmra.mrb[0].mxu0 %v10710
        %v10866 = vpop.f32.mrb[0].mxu0
        %v10867 = vadd.f32 0.0, %v10866
        %v10868 = vpop.f32.mrb[0].mxu0
        %v10869 = vpop.f32.mrb[0].mxu0
        %v10870 = vadd.f32 0.0, %v10869
        %v10871 = vpop.f32.mrb[0].mxu0
        %10872 = vdwg.mxu0
        %v10873 = vadd.f32 %v10391, %v10747
        %v10874 = vadd.f32 %v10392, %v10750
        %v10875 = vadd.f32 %v10393, %v10755
        %v10876 = vadd.f32 %v10394, %v10758
        %v10877 = vadd.f32 %v10395, %v10763
        %v10878 = vadd.f32 %v10396, %v10766
        %v10879 = vadd.f32 %v10397, %v10771
        %v10880 = vadd.f32 %v10398, %v10774
        %v10881 = vadd.f32 %v10399, %v10779
        %v10882 = vadd.f32 %v10400, %v10782
        %v10883 = vadd.f32 %v10401, %v10787
        %v10884 = vadd.f32 %v10402, %v10790
        %v10885 = vadd.f32 %v10403, %v10795
        %v10886 = vadd.f32 %v10404, %v10798
        %v10887 = vadd.f32 %v10405, %v10803
        %v10888 = vadd.f32 %v10406, %v10806
        %v10889 = vadd.f32 %v10407, %v10811
        %v10890 = vadd.f32 %v10408, %v10814
        %v10891 = vadd.f32 %v10409, %v10819
        %v10892 = vadd.f32 %v10410, %v10822
        %v10893 = vadd.f32 %v10411, %v10827
        %v10894 = vadd.f32 %v10412, %v10830
        %v10895 = vadd.f32 %v10413, %v10835
        %v10896 = vadd.f32 %v10414, %v10838
        %v10897 = vadd.f32 %v10415, %v10843
        %v10898 = vadd.f32 %v10416, %v10846
        %v10899 = vadd.f32 %v10417, %v10851
        %v10900 = vadd.f32 %v10418, %v10854
        %v10901 = vadd.f32 %v10419, %v10859
        %v10902 = vadd.f32 %v10420, %v10862
        %v10903 = vadd.f32 %v10421, %v10867
        %v10904 = vadd.f32 %v10422, %v10870
        %v10905 = vld [vmem:[%s4] sm:$0x1]
        %v10907 = vlaneseq
        %v10908 = vshrl.u32 %v10907, 7
        %v10909 = vsub.s32 0, %v10908
        %v10910 = vrot.slane %v10905, %v10909
        %v10912 = vadd.f32 %v10873, %v10910
        %v10913 = vadd.f32 %v10874, %v10910
        %v10914 = vadd.f32 %v10875, %v10910
        %v10915 = vadd.f32 %v10876, %v10910
        %v10916 = vadd.f32 %v10877, %v10910
        %v10917 = vadd.f32 %v10878, %v10910
        %v10918 = vadd.f32 %v10879, %v10910
        %v10919 = vadd.f32 %v10880, %v10910
        %v10920 = vadd.f32 %v10881, %v10910
        %v10921 = vadd.f32 %v10882, %v10910
        %v10922 = vadd.f32 %v10883, %v10910
        %v10923 = vadd.f32 %v10884, %v10910
        %v10924 = vadd.f32 %v10885, %v10910
        %v10925 = vadd.f32 %v10886, %v10910
        %v10926 = vadd.f32 %v10887, %v10910
        %v10927 = vadd.f32 %v10888, %v10910
        %v10928 = vadd.f32 %v10889, %v10910
        %v10929 = vadd.f32 %v10890, %v10910
        %v10930 = vadd.f32 %v10891, %v10910
        %v10931 = vadd.f32 %v10892, %v10910
        %v10932 = vadd.f32 %v10893, %v10910
        %v10933 = vadd.f32 %v10894, %v10910
        %v10934 = vadd.f32 %v10895, %v10910
        %v10935 = vadd.f32 %v10896, %v10910
        %v10936 = vadd.f32 %v10897, %v10910
        %v10937 = vadd.f32 %v10898, %v10910
        %v10938 = vadd.f32 %v10899, %v10910
        %v10939 = vadd.f32 %v10900, %v10910
        %v10940 = vadd.f32 %v10901, %v10910
        %v10941 = vadd.f32 %v10902, %v10910
        %v10942 = vadd.f32 %v10903, %v10910
        %v10943 = vadd.f32 %v10904, %v10910
        %v10944 = vmax.f32 %v10912, 0.0
        %v10945 = vmax.f32 %v10913, 0.0
        %v10946 = vmax.f32 %v10914, 0.0
        %v10947 = vmax.f32 %v10915, 0.0
        %v10948 = vmax.f32 %v10916, 0.0
        %v10949 = vmax.f32 %v10917, 0.0
        %v10950 = vmax.f32 %v10918, 0.0
        %v10951 = vmax.f32 %v10919, 0.0
        %v10952 = vmax.f32 %v10920, 0.0
        %v10953 = vmax.f32 %v10921, 0.0
        %v10954 = vmax.f32 %v10922, 0.0
        %v10955 = vmax.f32 %v10923, 0.0
        %v10956 = vmax.f32 %v10924, 0.0
        %v10957 = vmax.f32 %v10925, 0.0
        %v10958 = vmax.f32 %v10926, 0.0
        %v10959 = vmax.f32 %v10927, 0.0
        %v10960 = vmax.f32 %v10928, 0.0
        %v10961 = vmax.f32 %v10929, 0.0
        %v10962 = vmax.f32 %v10930, 0.0
        %v10963 = vmax.f32 %v10931, 0.0
        %v10964 = vmax.f32 %v10932, 0.0
        %v10965 = vmax.f32 %v10933, 0.0
        %v10966 = vmax.f32 %v10934, 0.0
        %v10967 = vmax.f32 %v10935, 0.0
        %v10968 = vmax.f32 %v10936, 0.0
        %v10969 = vmax.f32 %v10937, 0.0
        %v10970 = vmax.f32 %v10938, 0.0
        %v10971 = vmax.f32 %v10939, 0.0
        %v10972 = vmax.f32 %v10940, 0.0
        %v10973 = vmax.f32 %v10941, 0.0
        %v10974 = vmax.f32 %v10942, 0.0
        %v10975 = vmax.f32 %v10943, 0.0
        %v10976 = vsel %vm6747, %v10944, 0.0
        %v10977 = vsel %vm6747, %v10945, 0.0
        %v10978 = vadd.f32 %v10976, %v10977
        %v10979 = vsel %vm6747, %v10946, 0.0
        %v10980 = vadd.f32 %v10978, %v10979
        %v10981 = vsel %vm6747, %v10947, 0.0
        %v10982 = vadd.f32 %v10980, %v10981
        %v10983 = vsel %vm6747, %v10948, 0.0
        %v10984 = vadd.f32 %v10982, %v10983
        %v10985 = vsel %vm6747, %v10949, 0.0
        %v10986 = vadd.f32 %v10984, %v10985
        %v10987 = vsel %vm6747, %v10950, 0.0
        %v10988 = vadd.f32 %v10986, %v10987
        %v10989 = vsel %vm6747, %v10951, 0.0
        %v10990 = vadd.f32 %v10988, %v10989
        %v10991 = vsel %vm6747, %v10952, 0.0
        %v10992 = vadd.f32 %v10990, %v10991
        %v10993 = vsel %vm6747, %v10953, 0.0
        %v10994 = vadd.f32 %v10992, %v10993
        %v10995 = vsel %vm6747, %v10954, 0.0
        %v10996 = vadd.f32 %v10994, %v10995
        %v10997 = vsel %vm6747, %v10955, 0.0
        %v10998 = vadd.f32 %v10996, %v10997
        %v10999 = vsel %vm6747, %v10956, 0.0
        %v11000 = vadd.f32 %v10998, %v10999
        %v11001 = vsel %vm6747, %v10957, 0.0
        %v11002 = vadd.f32 %v11000, %v11001
        %v11003 = vsel %vm6747, %v10958, 0.0
        %v11004 = vadd.f32 %v11002, %v11003
        %v11005 = vsel %vm6747, %v10959, 0.0
        %v11006 = vadd.f32 %v11004, %v11005
        %v11007 = vsel %vm6747, %v10960, 0.0
        %v11008 = vadd.f32 %v11006, %v11007
        %v11009 = vsel %vm6747, %v10961, 0.0
        %v11010 = vadd.f32 %v11008, %v11009
        %v11011 = vsel %vm6747, %v10962, 0.0
        %v11012 = vadd.f32 %v11010, %v11011
        %v11013 = vsel %vm6747, %v10963, 0.0
        %v11014 = vadd.f32 %v11012, %v11013
        %v11015 = vsel %vm6747, %v10964, 0.0
        %v11016 = vadd.f32 %v11014, %v11015
        %v11017 = vsel %vm6747, %v10965, 0.0
        %v11018 = vadd.f32 %v11016, %v11017
        %v11019 = vsel %vm6747, %v10966, 0.0
        %v11020 = vadd.f32 %v11018, %v11019
        %v11021 = vsel %vm6747, %v10967, 0.0
        %v11022 = vadd.f32 %v11020, %v11021
        %v11023 = vsel %vm6747, %v10968, 0.0
        %v11024 = vadd.f32 %v11022, %v11023
        %v11025 = vsel %vm6747, %v10969, 0.0
        %v11026 = vadd.f32 %v11024, %v11025
        %v11027 = vsel %vm6747, %v10970, 0.0
        %v11028 = vadd.f32 %v11026, %v11027
        %v11029 = vsel %vm6747, %v10971, 0.0
        %v11030 = vadd.f32 %v11028, %v11029
        %v11031 = vsel %vm6747, %v10972, 0.0
        %v11032 = vadd.f32 %v11030, %v11031
        %v11033 = vsel %vm6747, %v10973, 0.0
        %v11034 = vadd.f32 %v11032, %v11033
        %v11035 = vsel %vm6747, %v10974, 0.0
        %v11036 = vadd.f32 %v11034, %v11035
        %v11037 = vsel %vm6747, %v10975, 0.0
        %v11038 = vadd.f32 %v11036, %v11037
        %v11039 = vrot.slane %v11038, 4
        %v11040 = vadd.f32 %v11038, %v11039
        %v11041 = vrot.slane %v11040, 2
        %v11042 = vadd.f32 %v11040, %v11041
        %v11043 = vrot.slane %v11042, 1
        %v11044 = vadd.f32 %v11042, %v11043
        %v11045 = vrcp.pop 256.0
        %v11046 = vmul.f32 %v11044, %v11045
        %v11047 = vld [vmem:[%s5] sm:$0xff]
        %v11048 = vld [vmem:[%s5 + $0x8] sm:$0xff]
        %v11049 = vld [vmem:[%s5 + $0x10] sm:$0xff]
        %v11050 = vld [vmem:[%s5 + $0x18] sm:$0xff]
        %v11052 = vsel %vm6747, %v11046, 0
        %11054 = vmatprep.subr.mxu0 0.0
        %11055 = vmatpush1.msra.mxu0 %v11047
        %11056 = vmatprep.subr.mxu0 0.0
        %11057 = vmatpush1.msra.mxu0 %v11048
        %11058 = vmatprep.subr.mxu0 0.0
        %11059 = vmatpush1.msra.mxu0 %v11049
        %11060 = vmatprep.subr.mxu0 0.0
        %11061 = vmatpush1.msra.mxu0 %v11050
        %11062 = vmatprep.subr.mxu0 0.0
        %11063 = vmatpush1.msra.mxu0 0.0
        %11064 = vmatprep.subr.mxu0 0.0
        %11065 = vmatpush1.msra.mxu0 0.0
        %11066 = vmatprep.subr.mxu0 0.0
        %11067 = vmatpush1.msra.mxu0 0.0
        %11068 = vmatprep.subr.mxu0 0.0
        %11069 = vmatpush1.msra.mxu0 0.0
        %11070 = vmatprep.subr.mxu0 0.0
        %11071 = vmatpush1.msra.mxu0 0.0
        %11072 = vmatprep.subr.mxu0 0.0
        %11073 = vmatpush1.msra.mxu0 0.0
        %11074 = vmatprep.subr.mxu0 0.0
        %11075 = vmatpush1.msra.mxu0 0.0
        %11076 = vmatprep.subr.mxu0 0.0
        %11077 = vmatpush1.msra.mxu0 0.0
        %11078 = vmatprep.subr.mxu0 0.0
        %11079 = vmatpush1.msra.mxu0 0.0
        %11080 = vmatprep.subr.mxu0 0.0
        %11081 = vmatpush1.msra.mxu0 0.0
        %11082 = vmatprep.subr.mxu0 0.0
        %11083 = vmatpush1.msra.mxu0 0.0
        %11084 = vmatprep.subr.mxu0 0.0
        %11085 = vmatpush1.msra.mxu0 0.0
        %11086 = vmatprep.subr.mxu0 0.0
        %11087 = vmatpush1.msra.mxu0 0.0
        %11088 = vmatprep.subr.mxu0 0.0
        %11089 = vmatpush1.msra.mxu0 0.0
        %11090 = vmatprep.subr.mxu0 0.0
        %11091 = vmatpush1.msra.mxu0 0.0
        %11092 = vmatprep.subr.mxu0 0.0
        %11093 = vmatpush1.msra.mxu0 0.0
        %11094 = vmatprep.subr.mxu0 0.0
        %11095 = vmatpush1.msra.mxu0 0.0
        %11096 = vmatprep.subr.mxu0 0.0
        %11097 = vmatpush1.msra.mxu0 0.0
        %11098 = vmatprep.subr.mxu0 0.0
        %11099 = vmatpush1.msra.mxu0 0.0
        %11100 = vmatprep.subr.mxu0 0.0
        %11101 = vmatpush1.msra.mxu0 0.0
        %11102 = vmatprep.subr.mxu0 0.0
        %11103 = vmatpush1.msra.mxu0 0.0
        %11104 = vmatprep.subr.mxu0 0.0
        %11105 = vmatpush1.msra.mxu0 0.0
        %11106 = vmatprep.subr.mxu0 0.0
        %11107 = vmatpush1.msra.mxu0 0.0
        %11108 = vmatprep.subr.mxu0 0.0
        %11109 = vmatpush1.msra.mxu0 0.0
        %11110 = vmatprep.subr.mxu0 0.0
        %11111 = vmatpush1.msra.mxu0 0.0
        %11112 = vmatprep.subr.mxu0 0.0
        %11113 = vmatpush1.msra.mxu0 0.0
        %11114 = vmatprep.subr.mxu0 0.0
        %11115 = vmatpush1.msra.mxu0 0.0
        %11116 = vmatprep.subr.mxu0 0.0
        %11117 = vmatpush1.msra.mxu0 0.0
        %11118 = vmatprep.mubr.f32.mxu0 0.0
        %11119 = vmatmul.mubr.f32.gmra.mrb[0].mxu0 %v11052
        %v11120 = vpop.f32.mrb[0].mxu0
        %v11121 = vadd.f32 0.0, %v11120
        %v11122 = vpop.f32.mrb[0].mxu0
        %11123 = vdwg.mxu0
        %v11124 = vmax.f32 %v11121, 0.0
        %v11125 = vld [vmem:[%s6] sm:$0x3]
        %vm11126 = vcmask 15360
        %v11128 = vsel %vm11126, %v11124, 0
        %v11131 = vsel %vm1501, %v11125, 0
        %11133 = vmatprep.subr.mxu0 0.0
        %11134 = vmatpush1.msra.mxu0 %v11131
        %11135 = vmatprep.subr.mxu0 0.0
        %11136 = vmatpush1.msra.mxu0 0.0
        %11137 = vmatprep.subr.mxu0 0.0
        %11138 = vmatpush1.msra.mxu0 0.0
        %11139 = vmatprep.subr.mxu0 0.0
        %11140 = vmatpush1.msra.mxu0 0.0
        %11141 = vmatprep.subr.mxu0 0.0
        %11142 = vmatpush1.msra.mxu0 0.0
        %11143 = vmatprep.subr.mxu0 0.0
        %11144 = vmatpush1.msra.mxu0 0.0
        %11145 = vmatprep.subr.mxu0 0.0
        %11146 = vmatpush1.msra.mxu0 0.0
        %11147 = vmatprep.subr.mxu0 0.0
        %11148 = vmatpush1.msra.mxu0 0.0
        %11149 = vmatprep.subr.mxu0 0.0
        %11150 = vmatpush1.msra.mxu0 0.0
        %11151 = vmatprep.subr.mxu0 0.0
        %11152 = vmatpush1.msra.mxu0 0.0
        %11153 = vmatprep.subr.mxu0 0.0
        %11154 = vmatpush1.msra.mxu0 0.0
        %11155 = vmatprep.subr.mxu0 0.0
        %11156 = vmatpush1.msra.mxu0 0.0
        %11157 = vmatprep.subr.mxu0 0.0
        %11158 = vmatpush1.msra.mxu0 0.0
        %11159 = vmatprep.subr.mxu0 0.0
        %11160 = vmatpush1.msra.mxu0 0.0
        %11161 = vmatprep.subr.mxu0 0.0
        %11162 = vmatpush1.msra.mxu0 0.0
        %11163 = vmatprep.subr.mxu0 0.0
        %11164 = vmatpush1.msra.mxu0 0.0
        %11165 = vmatprep.subr.mxu0 0.0
        %11166 = vmatpush1.msra.mxu0 0.0
        %11167 = vmatprep.subr.mxu0 0.0
        %11168 = vmatpush1.msra.mxu0 0.0
        %11169 = vmatprep.subr.mxu0 0.0
        %11170 = vmatpush1.msra.mxu0 0.0
        %11171 = vmatprep.subr.mxu0 0.0
        %11172 = vmatpush1.msra.mxu0 0.0
        %11173 = vmatprep.subr.mxu0 0.0
        %11174 = vmatpush1.msra.mxu0 0.0
        %11175 = vmatprep.subr.mxu0 0.0
        %11176 = vmatpush1.msra.mxu0 0.0
        %11177 = vmatprep.subr.mxu0 0.0
        %11178 = vmatpush1.msra.mxu0 0.0
        %11179 = vmatprep.subr.mxu0 0.0
        %11180 = vmatpush1.msra.mxu0 0.0
        %11181 = vmatprep.subr.mxu0 0.0
        %11182 = vmatpush1.msra.mxu0 0.0
        %11183 = vmatprep.subr.mxu0 0.0
        %11184 = vmatpush1.msra.mxu0 0.0
        %11185 = vmatprep.subr.mxu0 0.0
        %11186 = vmatpush1.msra.mxu0 0.0
        %11187 = vmatprep.subr.mxu0 0.0
        %11188 = vmatpush1.msra.mxu0 0.0
        %11189 = vmatprep.subr.mxu0 0.0
        %11190 = vmatpush1.msra.mxu0 0.0
        %11191 = vmatprep.subr.mxu0 0.0
        %11192 = vmatpush1.msra.mxu0 0.0
        %11193 = vmatprep.subr.mxu0 0.0
        %11194 = vmatpush1.msra.mxu0 0.0
        %11195 = vmatprep.subr.mxu0 0.0
        %11196 = vmatpush1.msra.mxu0 0.0
        %11197 = vmatprep.mubr.f32.mxu0 0.0
        %11198 = vmatmul.mubr.f32.gmra.mrb[0].mxu0 %v11128
        %v11199 = vpop.f32.mrb[0].mxu0
        %v11200 = vadd.f32 0.0, %v11199
        %v11201 = vpop.f32.mrb[0].mxu0
        %11202 = vdwg.mxu0
        %v11203 = vxor.u32 %v11200, 2147483648
        %v11204 = vmul.f32 %v11203, 1.442695
        %v11205 = vpow.pop %v11204
        %v11206 = vadd.f32 %v11205, 1.0
        %v11207 = vrcp.pop %v11206
        %v11208 = vmul.f32 1.0, %v11207
        %v11209 = vlaneseq
        %v11210 = vshrl.u32 %v11209, 7
        %v11211 = vsub.s32 0, %v11210
        %v11212 = vrot.slane %v11208, %v11211
        %v11213 = vmul.f32 %v10944, %v11212
        %v11214 = vmul.f32 %v10945, %v11212
        %v11215 = vmul.f32 %v10946, %v11212
        %v11216 = vmul.f32 %v10947, %v11212
        %v11217 = vmul.f32 %v10948, %v11212
        %v11218 = vmul.f32 %v10949, %v11212
        %v11219 = vmul.f32 %v10950, %v11212
        %v11220 = vmul.f32 %v10951, %v11212
        %v11221 = vmul.f32 %v10952, %v11212
        %v11222 = vmul.f32 %v10953, %v11212
        %v11223 = vmul.f32 %v10954, %v11212
        %v11224 = vmul.f32 %v10955, %v11212
        %v11225 = vmul.f32 %v10956, %v11212
        %v11226 = vmul.f32 %v10957, %v11212
        %v11227 = vmul.f32 %v10958, %v11212
        %v11228 = vmul.f32 %v10959, %v11212
        %v11229 = vmul.f32 %v10960, %v11212
        %v11230 = vmul.f32 %v10961, %v11212
        %v11231 = vmul.f32 %v10962, %v11212
        %v11232 = vmul.f32 %v10963, %v11212
        %v11233 = vmul.f32 %v10964, %v11212
        %v11234 = vmul.f32 %v10965, %v11212
        %v11235 = vmul.f32 %v10966, %v11212
        %v11236 = vmul.f32 %v10967, %v11212
        %v11237 = vmul.f32 %v10968, %v11212
        %v11238 = vmul.f32 %v10969, %v11212
        %v11239 = vmul.f32 %v10970, %v11212
        %v11240 = vmul.f32 %v10971, %v11212
        %v11241 = vmul.f32 %v10972, %v11212
        %v11242 = vmul.f32 %v10973, %v11212
        %v11243 = vmul.f32 %v10974, %v11212
        %v11244 = vmul.f32 %v10975, %v11212
        %11245 = vxpose.xlu0.b32.start [1/16] %v11213, 128
        %11246 = vxpose.xlu0.b32.cont [2/16] %v11214, 128
        %11247 = vxpose.xlu0.b32.cont [3/16] %v11215, 128
        %11248 = vxpose.xlu0.b32.cont [4/16] %v11216, 128
        %11249 = vxpose.xlu0.b32.cont [5/16] %v11217, 128
        %11250 = vxpose.xlu0.b32.cont [6/16] %v11218, 128
        %11251 = vxpose.xlu0.b32.cont [7/16] %v11219, 128
        %11252 = vxpose.xlu0.b32.cont [8/16] %v11220, 128
        %11253 = vxpose.xlu0.b32.cont [9/16] %v11221, 128
        %11254 = vxpose.xlu0.b32.cont [10/16] %v11222, 128
        %11255 = vxpose.xlu0.b32.cont [11/16] %v11223, 128
        %11256 = vxpose.xlu0.b32.cont [12/16] %v11224, 128
        %11257 = vxpose.xlu0.b32.cont [13/16] %v11225, 128
        %11258 = vxpose.xlu0.b32.cont [14/16] %v11226, 128
        %11259 = vxpose.xlu0.b32.cont [15/16] %v11227, 128
        %11260 = vxpose.xlu0.b32.end [16/16] %v11228, 128
        %v11261 = vpop.trf.xlu0
        %v11262 = vpop.trf.xlu0
        %v11263 = vpop.trf.xlu0
        %v11264 = vpop.trf.xlu0
        %v11265 = vpop.trf.xlu0
        %v11266 = vpop.trf.xlu0
        %v11267 = vpop.trf.xlu0
        %v11268 = vpop.trf.xlu0
        %v11269 = vpop.trf.xlu0
        %v11270 = vpop.trf.xlu0
        %v11271 = vpop.trf.xlu0
        %v11272 = vpop.trf.xlu0
        %v11273 = vpop.trf.xlu0
        %v11274 = vpop.trf.xlu0
        %v11275 = vpop.trf.xlu0
        %v11276 = vpop.trf.xlu0
        %11277 = vxpose.xlu0.b32.start [1/16] %v11229, 128
        %11278 = vxpose.xlu0.b32.cont [2/16] %v11230, 128
        %11279 = vxpose.xlu0.b32.cont [3/16] %v11231, 128
        %11280 = vxpose.xlu0.b32.cont [4/16] %v11232, 128
        %11281 = vxpose.xlu0.b32.cont [5/16] %v11233, 128
        %11282 = vxpose.xlu0.b32.cont [6/16] %v11234, 128
        %11283 = vxpose.xlu0.b32.cont [7/16] %v11235, 128
        %11284 = vxpose.xlu0.b32.cont [8/16] %v11236, 128
        %11285 = vxpose.xlu0.b32.cont [9/16] %v11237, 128
        %11286 = vxpose.xlu0.b32.cont [10/16] %v11238, 128
        %11287 = vxpose.xlu0.b32.cont [11/16] %v11239, 128
        %11288 = vxpose.xlu0.b32.cont [12/16] %v11240, 128
        %11289 = vxpose.xlu0.b32.cont [13/16] %v11241, 128
        %11290 = vxpose.xlu0.b32.cont [14/16] %v11242, 128
        %11291 = vxpose.xlu0.b32.cont [15/16] %v11243, 128
        %11292 = vxpose.xlu0.b32.end [16/16] %v11244, 128
        %v11293 = vpop.trf.xlu0
        %v11294 = vpop.trf.xlu0
        %v11295 = vpop.trf.xlu0
        %v11296 = vpop.trf.xlu0
        %v11297 = vpop.trf.xlu0
        %v11298 = vpop.trf.xlu0
        %v11299 = vpop.trf.xlu0
        %v11300 = vpop.trf.xlu0
        %v11301 = vpop.trf.xlu0
        %v11302 = vpop.trf.xlu0
        %v11303 = vpop.trf.xlu0
        %v11304 = vpop.trf.xlu0
        %v11305 = vpop.trf.xlu0
        %v11306 = vpop.trf.xlu0
        %v11307 = vpop.trf.xlu0
        %v11308 = vpop.trf.xlu0
        %11309 = vst [vmem:[%s271] sm:$0xff] %v11261
        %11310 = vst [vmem:[%s271 + $0x8] sm:$0xff] %v11293
        %11311 = vst [vmem:[%s271 + $0x10] sm:$0xff] %v11262
        %11312 = vst [vmem:[%s271 + $0x18] sm:$0xff] %v11294
        %11313 = vst [vmem:[%s271 + $0x20] sm:$0xff] %v11263
        %11314 = vst [vmem:[%s271 + $0x28] sm:$0xff] %v11295
        %11315 = vst [vmem:[%s271 + $0x30] sm:$0xff] %v11264
        %11316 = vst [vmem:[%s271 + $0x38] sm:$0xff] %v11296
        %s11317 = sand.u32 %s181, 1
        %s11318 = scalar_lea.sflag [#allocation5], %s11317
        %s11319 = sand.u32 %s181, 1
        %s11320 = smul.addr %s11319, 64
        %s11321 = scalar_lea.vmem [#allocation4], %s11320
        // Predicated region
        $region49: #{tpu_custom_call.1} parent=47 // pred_check
          %p11322 = pneg %p191
        $region50: #{tpu_custom_call.1} parent=47 // pred_check_branch
          %11324 = sbr.rel (%p11322) target = $region52
        $region51: #{tpu_custom_call.1} parent=47 // pred_region
          %s11325 = smul.u32 4, %s21
          %s11327 = ssub.s32 1024, 1024
          %11328 = vsyncadd %s11318, %s11327
          %s11329 = smul.addr %s11325, 2
          %s11330 = smul.addr %s11329, 128
          %s11331 = scalar_lea.hbm %s7, %s11330
          %s11332 = sshll.u32 %s11321, 4
          %s11333 = int_to_ptr.vmem [resolvable:$true] %s11332
          %11338 = dma.vmem_to_hbm [thread:$0]  %s11333, 1024, %s11331, %s11318, 256, 256, 16
        $region52: #{tpu_custom_call.1} parent=47 // pred_fallthru
          _
      $region48: #{tpu_custom_call.1} parent=5 // pred_fallthru
        _
      %p11339 = scmp.le.s32.totalorder 2, %s16
      // Predicated region
      $region53: #{tpu_custom_call.1} parent=5 // pred_check
        %p11340 = pneg %p11339
      $region54: #{tpu_custom_call.1} parent=5 // pred_check_branch
        %11342 = sbr.rel (%p11340) target = $region56
      $region55: #{tpu_custom_call.1} parent=5 // pred_region
        %s11343 = ssub.s32 %s16, 2
        // Predicated region
        $region57: #{tpu_custom_call.1} parent=55 // pred_check
          %p11344 = pneg %p197
        $region58: #{tpu_custom_call.1} parent=55 // pred_check_branch
          %11346 = sbr.rel (%p11344) target = $region60
        $region59: #{tpu_custom_call.1} parent=55 // pred_region
          %s11347 = sand.u32 %s182, 1
          %s11348 = scalar_lea.sflag [#allocation5], %s11347
          %s11349 = sand.u32 %s182, 1
          %s11350 = smul.addr %s11349, 64
          %s11351 = scalar_lea.vmem [#allocation4], %s11350
          %11352 = dma.done %s11348, 1024
        $region60: #{tpu_custom_call.1} parent=55 // pred_fallthru
          _
      $region56: #{tpu_custom_call.1} parent=5 // pred_fallthru
        _
    $region6: #{tpu_custom_call.1} parent=1 // loop_footer
      %s20 = sadd.s32 1, %s16
    $region7: #{tpu_custom_call.1} parent=1 // loop_footer_branch
      %15 = sbr.rel target = $region3
    $region8: #{tpu_custom_call.1} parent=1 // loop_exit
      _
    %11353 = vsyncpa [#allocation5], 1
    %s11354 = scalar_lea.sflag [#allocation5], 1
    %11355 = vsyncpa %s11354, 1

</llo_original>
